<compile_context>
chip_gen: v6e
topology: v6e:2x2x1
jax: 0.10.0
libtpu: 0.0.40
codegen_flags: <defaults>
</compile_context>

<pallas_src>
import functools

import jax
import jax.numpy as jnp
from jax.experimental import pallas as pl
from jax.experimental.pallas import tpu as pltpu


# ----------------------------------------------------------------------------
# Spatial model kernel: conv3d (im2col matmul) + ReLU + GAP (matmul) + FC + ReLU
# ----------------------------------------------------------------------------
def spatial_kernel(patches_ref, poolmat_ref, wconv_ref, bconv_ref,
                   wfc_ref, bfc_ref, out_ref):
    # patches_ref: (27, N) with N = T*B*P lane-dense; wconv_ref: (C, 27)
    conv = jnp.dot(wconv_ref[...], patches_ref[...],
                   preferred_element_type=jnp.float32)            # (C, N)
    conv = jnp.maximum(conv + bconv_ref[...], 0.0)                # ReLU
    # Global average pool over each volume's P voxels, expressed as a matmul
    # with a block-averaging matrix (keeps everything lane-dense, no reshape).
    pooled = jnp.dot(conv, poolmat_ref[...],
                     preferred_element_type=jnp.float32)          # (C, T*B)
    feat = jnp.dot(wfc_ref[...], pooled,
                   preferred_element_type=jnp.float32) + bfc_ref[...]
    out_ref[...] = jnp.maximum(feat, 0.0)                         # (F, T*B)


def run_spatial_model(patches, poolmat, wconv_t, bconv, wfc_t, bfc):
    F = wfc_t.shape[0]
    TB = poolmat.shape[1]
    return pl.pallas_call(
        spatial_kernel,
        out_shape=jax.ShapeDtypeStruct((F, TB), jnp.float32),
    )(patches, poolmat, wconv_t, bconv, wfc_t, bfc)


# ----------------------------------------------------------------------------
# Fused bidirectional GRU + classifier kernel (single invocation)
# ----------------------------------------------------------------------------
def gru_clf_kernel(x_ref, wi_ref, wh_ref, bi_ref, bh_ref, wclf_ref, bclf_ref,
                   out_ref, hf_scr, hb_scr):
    T, B, F = x_ref.shape
    H = hf_scr.shape[-1]

    wi = wi_ref[...]          # (2F, 3H) = [wi_fwd ; wi_bwd]
    wh = wh_ref[...]          # (2H, 3H) = [wh_fwd ; wh_bwd]
    bi = bi_ref[...]          # (2B, 3H) rows: fwd x B, bwd x B
    bh = bh_ref[...]          # (2B, 3H)
    # hoisted constants (avoid re-materializing per loop iteration)
    zeros_bf = jnp.zeros((B, F), jnp.float32)
    zeros_bh = jnp.zeros((B, H), jnp.float32)

    def step(t, h):           # h: (2B, H), rows [fwd batch ; bwd batch]
        x_f = x_ref[t]                          # (B, F) forward input
        x_b = x_ref[T - 1 - t]                  # (B, F) backward input
        # block-diagonal packing -> one MXU push for both directions
        xin = jnp.concatenate(
            [jnp.concatenate([x_f, zeros_bf], axis=1),
             jnp.concatenate([zeros_bf, x_b], axis=1)], axis=0)   # (2B, 2F)
        hin = jnp.concatenate(
            [jnp.concatenate([h[:B], zeros_bh], axis=1),
             jnp.concatenate([zeros_bh, h[B:]], axis=1)], axis=0)  # (2B, 2H)
        gi = jnp.dot(xin, wi, preferred_element_type=jnp.float32) + bi
        gh = jnp.dot(hin, wh, preferred_element_type=jnp.float32) + bh
        # PyTorch nn.GRU gate order: r, z, n
        r = jax.nn.sigmoid(gi[:, 0:H] + gh[:, 0:H])
        z = jax.nn.sigmoid(gi[:, H:2 * H] + gh[:, H:2 * H])
        n = jnp.tanh(gi[:, 2 * H:3 * H] + r * gh[:, 2 * H:3 * H])
        h_new = (1.0 - z) * n + z * h
        hf_scr[t] = h_new[:B]                   # forward hidden for time t
        hb_scr[T - 1 - t] = h_new[B:]           # backward hidden for time T-1-t
        return h_new

    h0 = jnp.zeros((2 * B, H), jnp.float32)
    jax.lax.fori_loop(0, T, step, h0, unroll=True)

    # Classifier epilogue (fused; static unrolled over T).
    wclf = wclf_ref[...]                        # (2H, NC)
    bclf = bclf_ref[...]                        # (1, NC)
    w_f = wclf[0:H]
    w_b = wclf[H:2 * H]
    for t in range(T):
        out_ref[t] = (jnp.dot(hf_scr[t], w_f, preferred_element_type=jnp.float32)
                      + jnp.dot(hb_scr[t], w_b, preferred_element_type=jnp.float32)
                      + bclf)


def run_gru_classifier(x_seq, wi_blk, wh_blk, bi_full, bh_full, wclf, bclf):
    T, B, _ = x_seq.shape
    H = wh_blk.shape[0] // 2
    NC = wclf.shape[1]
    return pl.pallas_call(
        gru_clf_kernel,
        out_shape=jax.ShapeDtypeStruct((T, B, NC), jnp.float32),
        scratch_shapes=[pltpu.VMEM((T, B, H), jnp.float32),
                        pltpu.VMEM((T, B, H), jnp.float32)],
    )(x_seq, wi_blk, wh_blk, bi_full, bh_full, wclf, bclf)


# ----------------------------------------------------------------------------
# Glue: lane-dense im2col for conv3d (k=3, stride=1, pad=1)
# ----------------------------------------------------------------------------
def extract_patches_lanedense(x):
    # x: (B, T, D, H, W) -> (27, T*B*D*H*W): kernel-tap index on sublanes,
    # flattened (t, b, voxel) on lanes.  n = (t*B+b)*P + voxel.
    B, T, D, H, W = x.shape
    vol = jnp.transpose(x, (1, 0, 2, 3, 4)).reshape(T * B, D, H, W)
    padded = jnp.pad(vol, ((0, 0), (1, 1), (1, 1), (1, 1)))
    slabs = []
    for kd in range(3):
        for kh in range(3):
            for kw in range(3):
                slabs.append(padded[:, kd:kd + D, kh:kh + H, kw:kw + W])
    p = jnp.stack(slabs, axis=0)               # (27, T*B, D, H, W)
    return p.reshape(27, T * B * D * H * W)


# ----------------------------------------------------------------------------
# Full forward (mirrors SpatialTemporalModel.forward)
# ----------------------------------------------------------------------------
@functools.partial(jax.jit, static_argnames=("bidirectional",))
def spatial_temporal_forward(x, weights, bidirectional=True):
    if not bidirectional:
        # TODO(synk): unidirectional GRU path not implemented; this script's
        # module configuration uses bidirectional=True.
        raise NotImplementedError("only bidirectional=True is implemented")

    B, T, D, H, W = x.shape
    P = D * H * W
    TB = T * B
    N = TB * P

    # --- spatial model: one lane-dense kernel for all (t, b) volumes --------
    patches = extract_patches_lanedense(x)                        # (27, N)
    poolmat = ((jnp.arange(N)[:, None] // P) ==
               jnp.arange(TB)[None, :]).astype(jnp.float32) / P   # (N, TB)
    feat_ft = run_spatial_model(patches, poolmat,
                                weights["wconv"], weights["bconv"],
                                weights["wfc"], weights["bfc"])   # (F, TB)
    Fdim = feat_ft.shape[0]
    spatial_features = feat_ft.T.reshape(T, B, Fdim)              # (T, B, F)

    # --- temporal model (bidirectional GRU) + classifier: one kernel --------
    wi_blk = jnp.concatenate([weights["gru_wi_f"], weights["gru_wi_b"]], axis=0)
    wh_blk = jnp.concatenate([weights["gru_wh_f"], weights["gru_wh_b"]], axis=0)
    G = weights["gru_bi_f"].shape[0]
    bi_full = jnp.concatenate(
        [jnp.broadcast_to(weights["gru_bi_f"][None, :], (B, G)),
         jnp.broadcast_to(weights["gru_bi_b"][None, :], (B, G))], axis=0)
    bh_full = jnp.concatenate(
        [jnp.broadcast_to(weights["gru_bh_f"][None, :], (B, G)),
         jnp.broadcast_to(weights["gru_bh_b"][None, :], (B, G))], axis=0)

    logits_tbn = run_gru_classifier(spatial_features, wi_blk, wh_blk,
                                    bi_full, bh_full,
                                    weights["wclf"], weights["bclf"])  # (T,B,NC)
    return jnp.transpose(logits_tbn, (1, 0, 2))                   # (B, T, NC)


# ----------------------------------------------------------------------------
# Deterministic parameter construction
# ----------------------------------------------------------------------------
def make_weights(key, conv_channels, feature_dim, hidden_dim, num_classes,
                 bidirectional=True):
    ks = jax.random.split(key, 16)
    s = 0.1
    C, F, Hd = conv_channels, feature_dim, hidden_dim
    w = {
        # spatial stem (kernel-friendly transposed layouts)
        "wconv": jax.random.normal(ks[0], (C, 27), jnp.float32) * s,
        "bconv": jax.random.normal(ks[1], (C, 1), jnp.float32) * s,
        "wfc": jax.random.normal(ks[2], (F, C), jnp.float32) * s,
        "bfc": jax.random.normal(ks[3], (F, 1), jnp.float32) * s,
        # GRU weights with gates concatenated along the output dim (r, z, n)
        "gru_wi_f": jax.random.normal(ks[4], (F, 3 * Hd), jnp.float32) * s,
        "gru_wh_f": jax.random.normal(ks[5], (Hd, 3 * Hd), jnp.float32) * s,
        "gru_bi_f": jax.random.normal(ks[6], (3 * Hd,), jnp.float32) * s,
        "gru_bh_f": jax.random.normal(ks[7], (3 * Hd,), jnp.float32) * s,
        "gru_wi_b": jax.random.normal(ks[8], (F, 3 * Hd), jnp.float32) * s,
        "gru_wh_b": jax.random.normal(ks[9], (Hd, 3 * Hd), jnp.float32) * s,
        "gru_bi_b": jax.random.normal(ks[10], (3 * Hd,), jnp.float32) * s,
        "gru_bh_b": jax.random.normal(ks[11], (3 * Hd,), jnp.float32) * s,
    }
    clf_in = Hd * (2 if bidirectional else 1)
    w["wclf"] = jax.random.normal(ks[12], (clf_in, num_classes), jnp.float32) * s
    w["bclf"] = jax.random.normal(ks[13], (1, num_classes), jnp.float32) * s
    return w


if __name__ == "__main__":
    B, T, D, H, W = 2, 8, 4, 8, 8
    conv_channels, feature_dim, hidden_dim = 8, 32, 32
    num_classes = 5
    bidirectional = True

    key = jax.random.PRNGKey(0)
    k_x, k_w = jax.random.split(key)
    x = jax.random.normal(k_x, (B, T, D, H, W), jnp.float32)
    weights = make_weights(k_w, conv_channels, feature_dim, hidden_dim,
                           num_classes, bidirectional)

    out = spatial_temporal_forward(x, weights, bidirectional=bidirectional)
    out = jax.block_until_ready(out)

    assert out.shape == (B, T, num_classes), out.shape
    assert jnp.all(jnp.isfinite(out))
    print("KERNEL_OK")
</pallas_src>

<mosaic_0001>
module attributes {stable_mosaic.version = 11 : i64} {
  func.func @spatial_kernel(%arg0: memref<27x4096xf32, #tpu.memory_space<vmem>>, %arg1: memref<4096x16xf32, #tpu.memory_space<vmem>>, %arg2: memref<8x27xf32, #tpu.memory_space<vmem>>, %arg3: memref<8x1xf32, #tpu.memory_space<vmem>>, %arg4: memref<32x8xf32, #tpu.memory_space<vmem>>, %arg5: memref<32x1xf32, #tpu.memory_space<vmem>>, %arg6: memref<32x16xf32, #tpu.memory_space<vmem>>) attributes {dimension_semantics = [], scalar_prefetch = 0 : i64, scratch_operands = 0 : i64, tpu.core_type = #tpu.core_type<tc>} {
    %c0 = arith.constant 0 : index
    %c0_0 = arith.constant 0 : index
    %0 = vector.load %arg2[%c0, %c0_0] : memref<8x27xf32, #tpu.memory_space<vmem>>, vector<8x27xf32>
    %c0_1 = arith.constant 0 : index
    %c0_2 = arith.constant 0 : index
    %1 = vector.load %arg0[%c0_1, %c0_2] : memref<27x4096xf32, #tpu.memory_space<vmem>>, vector<27x4096xf32>
    %cst = arith.constant dense<0.000000e+00> : vector<8x4096xf32>
    %2 = tpu.matmul %0, %1, %cst {dimension_numbers = #tpu.dot_dimension_numbers<[1], [0], [0], [1], [0, 0, 1, 1], [], []>} : vector<8x27xf32>, vector<27x4096xf32>, vector<8x4096xf32> -> vector<8x4096xf32>
    %c0_3 = arith.constant 0 : index
    %c0_4 = arith.constant 0 : index
    %3 = vector.load %arg3[%c0_3, %c0_4] : memref<8x1xf32, #tpu.memory_space<vmem>>, vector<8x1xf32>
    %4 = vector.broadcast %3 : vector<8x1xf32> to vector<8x4096xf32>
    %5 = arith.addf %2, %4 : vector<8x4096xf32>
    %cst_5 = arith.constant 0.000000e+00 : f32
    %6 = vector.broadcast %cst_5 : f32 to vector<8x4096xf32>
    %7 = arith.maximumf %5, %6 : vector<8x4096xf32>
    %c0_6 = arith.constant 0 : index
    %c0_7 = arith.constant 0 : index
    %8 = vector.load %arg1[%c0_6, %c0_7] : memref<4096x16xf32, #tpu.memory_space<vmem>>, vector<4096x16xf32>
    %cst_8 = arith.constant dense<0.000000e+00> : vector<8x16xf32>
    %9 = tpu.matmul %7, %8, %cst_8 {dimension_numbers = #tpu.dot_dimension_numbers<[1], [0], [0], [1], [0, 0, 1, 1], [], []>} : vector<8x4096xf32>, vector<4096x16xf32>, vector<8x16xf32> -> vector<8x16xf32>
    %c0_9 = arith.constant 0 : index
    %c0_10 = arith.constant 0 : index
    %10 = vector.load %arg4[%c0_9, %c0_10] : memref<32x8xf32, #tpu.memory_space<vmem>>, vector<32x8xf32>
    %cst_11 = arith.constant dense<0.000000e+00> : vector<32x16xf32>
    %11 = tpu.matmul %10, %9, %cst_11 {dimension_numbers = #tpu.dot_dimension_numbers<[1], [0], [0], [1], [0, 0, 1, 1], [], []>} : vector<32x8xf32>, vector<8x16xf32>, vector<32x16xf32> -> vector<32x16xf32>
    %c0_12 = arith.constant 0 : index
    %c0_13 = arith.constant 0 : index
    %12 = vector.load %arg5[%c0_12, %c0_13] : memref<32x1xf32, #tpu.memory_space<vmem>>, vector<32x1xf32>
    %13 = vector.broadcast %12 : vector<32x1xf32> to vector<32x16xf32>
    %14 = arith.addf %11, %13 : vector<32x16xf32>
    %cst_14 = arith.constant 0.000000e+00 : f32
    %15 = vector.broadcast %cst_14 : f32 to vector<32x16xf32>
    %16 = arith.maximumf %14, %15 : vector<32x16xf32>
    %c0_15 = arith.constant 0 : index
    %c0_16 = arith.constant 0 : index
    %17 = vector.load %arg6[%c0_15, %c0_16] : memref<32x16xf32, #tpu.memory_space<vmem>>, vector<32x16xf32>
    tpu.vector_store %arg6[%c0_15, %c0_16], %16 {strides = array<i32>} : memref<32x16xf32, #tpu.memory_space<vmem>>, vector<32x16xf32>,
    return
  }
}

module attributes {stable_mosaic.version = 11 : i64} {
  func.func @gru_clf_kernel(%arg0: memref<8x2x32xf32, #tpu.memory_space<vmem>>, %arg1: memref<64x96xf32, #tpu.memory_space<vmem>>, %arg2: memref<64x96xf32, #tpu.memory_space<vmem>>, %arg3: memref<4x96xf32, #tpu.memory_space<vmem>>, %arg4: memref<4x96xf32, #tpu.memory_space<vmem>>, %arg5: memref<64x5xf32, #tpu.memory_space<vmem>>, %arg6: memref<1x5xf32, #tpu.memory_space<vmem>>, %arg7: memref<8x2x5xf32, #tpu.memory_space<vmem>>, %arg8: memref<8x2x32xf32, #tpu.memory_space<vmem>>, %arg9: memref<8x2x32xf32, #tpu.memory_space<vmem>>) attributes {dimension_semantics = [], scalar_prefetch = 0 : i64, scratch_operands = 2 : i64, tpu.core_type = #tpu.core_type<tc>} {
    %c0 = arith.constant 0 : index
    %c0_0 = arith.constant 0 : index
    %0 = vector.load %arg1[%c0, %c0_0] : memref<64x96xf32, #tpu.memory_space<vmem>>, vector<64x96xf32>
    %c0_1 = arith.constant 0 : index
    %c0_2 = arith.constant 0 : index
    %1 = vector.load %arg2[%c0_1, %c0_2] : memref<64x96xf32, #tpu.memory_space<vmem>>, vector<64x96xf32>
    %c0_3 = arith.constant 0 : index
    %c0_4 = arith.constant 0 : index
    %2 = vector.load %arg3[%c0_3, %c0_4] : memref<4x96xf32, #tpu.memory_space<vmem>>, vector<4x96xf32>
    %c0_5 = arith.constant 0 : index
    %c0_6 = arith.constant 0 : index
    %3 = vector.load %arg4[%c0_5, %c0_6] : memref<4x96xf32, #tpu.memory_space<vmem>>, vector<4x96xf32>
    %cst = arith.constant 0.000000e+00 : f32
    %4 = vector.broadcast %cst : f32 to vector<2x32xf32>
    %cst_7 = arith.constant 0.000000e+00 : f32
    %5 = vector.broadcast %cst_7 : f32 to vector<2x32xf32>
    %cst_8 = arith.constant 0.000000e+00 : f32
    %6 = vector.broadcast %cst_8 : f32 to vector<4x32xf32>
    %c0_i32 = arith.constant 0 : i32
    %7 = arith.index_cast %c0_i32 : i32 to index
    %c0_9 = arith.constant 0 : index
    %c0_10 = arith.constant 0 : index
    %8 = vector.load %arg0[%7, %c0_9, %c0_10] : memref<8x2x32xf32, #tpu.memory_space<vmem>>, vector<1x2x32xf32>
    %9 = vector.shape_cast %8 : vector<1x2x32xf32> to vector<2x32xf32>
    %c7_i32 = arith.constant 7 : i32
    %10 = arith.subi %c7_i32, %c0_i32 : i32
    %11 = arith.index_cast %10 : i32 to index
    %c0_11 = arith.constant 0 : index
    %c0_12 = arith.constant 0 : index
    %12 = vector.load %arg0[%11, %c0_11, %c0_12] : memref<8x2x32xf32, #tpu.memory_space<vmem>>, vector<1x2x32xf32>
    %13 = vector.shape_cast %12 : vector<1x2x32xf32> to vector<2x32xf32>
    %14 = tpu.concatenate %9, %4 in 1 : vector<2x32xf32>, vector<2x32xf32> -> vector<2x64xf32>
    %15 = tpu.concatenate %4, %13 in 1 : vector<2x32xf32>, vector<2x32xf32> -> vector<2x64xf32>
    %16 = tpu.concatenate %14, %15 in 0 : vector<2x64xf32>, vector<2x64xf32> -> vector<4x64xf32>
    %17 = vector.extract_strided_slice %6 {offsets = [0, 0], sizes = [2, 32], strides = [1, 1]} : vector<4x32xf32> to vector<2x32xf32>
    %18 = tpu.concatenate %17, %5 in 1 : vector<2x32xf32>, vector<2x32xf32> -> vector<2x64xf32>
    %19 = vector.extract_strided_slice %6 {offsets = [2, 0], sizes = [2, 32], strides = [1, 1]} : vector<4x32xf32> to vector<2x32xf32>
    %20 = tpu.concatenate %5, %19 in 1 : vector<2x32xf32>, vector<2x32xf32> -> vector<2x64xf32>
    %21 = tpu.concatenate %18, %20 in 0 : vector<2x64xf32>, vector<2x64xf32> -> vector<4x64xf32>
    %cst_13 = arith.constant dense<0.000000e+00> : vector<4x96xf32>
    %22 = tpu.matmul %16, %0, %cst_13 {dimension_numbers = #tpu.dot_dimension_numbers<[1], [0], [0], [1], [0, 0, 1, 1], [], []>} : vector<4x64xf32>, vector<64x96xf32>, vector<4x96xf32> -> vector<4x96xf32>
    %23 = arith.addf %22, %2 : vector<4x96xf32>
    %cst_14 = arith.constant dense<0.000000e+00> : vector<4x96xf32>
    %24 = tpu.matmul %21, %1, %cst_14 {dimension_numbers = #tpu.dot_dimension_numbers<[1], [0], [0], [1], [0, 0, 1, 1], [], []>} : vector<4x64xf32>, vector<64x96xf32>, vector<4x96xf32> -> vector<4x96xf32>
    %25 = arith.addf %24, %3 : vector<4x96xf32>
    %26 = vector.extract_strided_slice %23 {offsets = [0, 0], sizes = [4, 32], strides = [1, 1]} : vector<4x96xf32> to vector<4x32xf32>
    %27 = vector.extract_strided_slice %25 {offsets = [0, 0], sizes = [4, 32], strides = [1, 1]} : vector<4x96xf32> to vector<4x32xf32>
    %28 = arith.addf %26, %27 : vector<4x32xf32>
    %29 = arith.negf %28 : vector<4x32xf32>
    %30 = math.exp %29 : vector<4x32xf32>
    %cst_15 = arith.constant 1.000000e+00 : f32
    %31 = vector.broadcast %cst_15 : f32 to vector<4x32xf32>
    %32 = arith.addf %31, %30 : vector<4x32xf32>
    %33 = arith.divf %31, %32 : vector<4x32xf32>
    %34 = vector.extract_strided_slice %23 {offsets = [0, 32], sizes = [4, 32], strides = [1, 1]} : vector<4x96xf32> to vector<4x32xf32>
    %35 = vector.extract_strided_slice %25 {offsets = [0, 32], sizes = [4, 32], strides = [1, 1]} : vector<4x96xf32> to vector<4x32xf32>
    %36 = arith.addf %34, %35 : vector<4x32xf32>
    %37 = arith.negf %36 : vector<4x32xf32>
    %38 = math.exp %37 : vector<4x32xf32>
    %cst_16 = arith.constant 1.000000e+00 : f32
    %39 = vector.broadcast %cst_16 : f32 to vector<4x32xf32>
    %40 = arith.addf %39, %38 : vector<4x32xf32>
    %41 = arith.divf %39, %40 : vector<4x32xf32>
    %42 = vector.extract_strided_slice %23 {offsets = [0, 64], sizes = [4, 32], strides = [1, 1]} : vector<4x96xf32> to vector<4x32xf32>
    %43 = vector.extract_strided_slice %25 {offsets = [0, 64], sizes = [4, 32], strides = [1, 1]} : vector<4x96xf32> to vector<4x32xf32>
    %44 = arith.mulf %33, %43 : vector<4x32xf32>
    %45 = arith.addf %42, %44 : vector<4x32xf32>
    %46 = math.tanh %45 : vector<4x32xf32>
    %cst_17 = arith.constant 1.000000e+00 : f32
    %47 = vector.broadcast %cst_17 : f32 to vector<4x32xf32>
    %48 = arith.subf %47, %41 : vector<4x32xf32>
    %49 = arith.mulf %48, %46 : vector<4x32xf32>
    %50 = arith.mulf %41, %6 : vector<4x32xf32>
    %51 = arith.addf %49, %50 : vector<4x32xf32>
    %52 = vector.extract_strided_slice %51 {offsets = [0, 0], sizes = [2, 32], strides = [1, 1]} : vector<4x32xf32> to vector<2x32xf32>
    %53 = arith.index_cast %c0_i32 : i32 to index
    %c0_18 = arith.constant 0 : index
    %c0_19 = arith.constant 0 : index
    %54 = vector.load %arg8[%53, %c0_18, %c0_19] : memref<8x2x32xf32, #tpu.memory_space<vmem>>, vector<1x2x32xf32>
    %55 = vector.shape_cast %54 : vector<1x2x32xf32> to vector<2x32xf32>
    %56 = vector.shape_cast %52 : vector<2x32xf32> to vector<1x2x32xf32>
    tpu.vector_store %arg8[%53, %c0_18, %c0_19], %56 {strides = array<i32>} : memref<8x2x32xf32, #tpu.memory_space<vmem>>, vector<1x2x32xf32>,
    %57 = vector.extract_strided_slice %51 {offsets = [2, 0], sizes = [2, 32], strides = [1, 1]} : vector<4x32xf32> to vector<2x32xf32>
    %c7_i32_20 = arith.constant 7 : i32
    %58 = arith.subi %c7_i32_20, %c0_i32 : i32
    %59 = arith.index_cast %58 : i32 to index
    %c0_21 = arith.constant 0 : index
    %c0_22 = arith.constant 0 : index
    %60 = vector.load %arg9[%59, %c0_21, %c0_22] : memref<8x2x32xf32, #tpu.memory_space<vmem>>, vector<1x2x32xf32>
    %61 = vector.shape_cast %60 : vector<1x2x32xf32> to vector<2x32xf32>
    %62 = vector.shape_cast %57 : vector<2x32xf32> to vector<1x2x32xf32>
    tpu.vector_store %arg9[%59, %c0_21, %c0_22], %62 {strides = array<i32>} : memref<8x2x32xf32, #tpu.memory_space<vmem>>, vector<1x2x32xf32>,
    %c1_i32 = arith.constant 1 : i32
    %63 = arith.index_cast %c1_i32 : i32 to index
    %c0_23 = arith.constant 0 : index
    %c0_24 = arith.constant 0 : index
    %64 = vector.load %arg0[%63, %c0_23, %c0_24] : memref<8x2x32xf32, #tpu.memory_space<vmem>>, vector<1x2x32xf32>
    %65 = vector.shape_cast %64 : vector<1x2x32xf32> to vector<2x32xf32>
    %c7_i32_25 = arith.constant 7 : i32
    %66 = arith.subi %c7_i32_25, %c1_i32 : i32
    %67 = arith.index_cast %66 : i32 to index
    %c0_26 = arith.constant 0 : index
    %c0_27 = arith.constant 0 : index
    %68 = vector.load %arg0[%67, %c0_26, %c0_27] : memref<8x2x32xf32, #tpu.memory_space<vmem>>, vector<1x2x32xf32>
    %69 = vector.shape_cast %68 : vector<1x2x32xf32> to vector<2x32xf32>
    %70 = tpu.concatenate %65, %4 in 1 : vector<2x32xf32>, vector<2x32xf32> -> vector<2x64xf32>
    %71 = tpu.concatenate %4, %69 in 1 : vector<2x32xf32>, vector<2x32xf32> -> vector<2x64xf32>
    %72 = tpu.concatenate %70, %71 in 0 : vector<2x64xf32>, vector<2x64xf32> -> vector<4x64xf32>
    %73 = vector.extract_strided_slice %51 {offsets = [0, 0], sizes = [2, 32], strides = [1, 1]} : vector<4x32xf32> to vector<2x32xf32>
    %74 = tpu.concatenate %73, %5 in 1 : vector<2x32xf32>, vector<2x32xf32> -> vector<2x64xf32>
    %75 = vector.extract_strided_slice %51 {offsets = [2, 0], sizes = [2, 32], strides = [1, 1]} : vector<4x32xf32> to vector<2x32xf32>
    %76 = tpu.concatenate %5, %75 in 1 : vector<2x32xf32>, vector<2x32xf32> -> vector<2x64xf32>
    %77 = tpu.concatenate %74, %76 in 0 : vector<2x64xf32>, vector<2x64xf32> -> vector<4x64xf32>
    %cst_28 = arith.constant dense<0.000000e+00> : vector<4x96xf32>
    %78 = tpu.matmul %72, %0, %cst_28 {dimension_numbers = #tpu.dot_dimension_numbers<[1], [0], [0], [1], [0, 0, 1, 1], [], []>} : vector<4x64xf32>, vector<64x96xf32>, vector<4x96xf32> -> vector<4x96xf32>
    %79 = arith.addf %78, %2 : vector<4x96xf32>
    %cst_29 = arith.constant dense<0.000000e+00> : vector<4x96xf32>
    %80 = tpu.matmul %77, %1, %cst_29 {dimension_numbers = #tpu.dot_dimension_numbers<[1], [0], [0], [1], [0, 0, 1, 1], [], []>} : vector<4x64xf32>, vector<64x96xf32>, vector<4x96xf32> -> vector<4x96xf32>
    %81 = arith.addf %80, %3 : vector<4x96xf32>
    %82 = vector.extract_strided_slice %79 {offsets = [0, 0], sizes = [4, 32], strides = [1, 1]} : vector<4x96xf32> to vector<4x32xf32>
    %83 = vector.extract_strided_slice %81 {offsets = [0, 0], sizes = [4, 32], strides = [1, 1]} : vector<4x96xf32> to vector<4x32xf32>
    %84 = arith.addf %82, %83 : vector<4x32xf32>
    %85 = arith.negf %84 : vector<4x32xf32>
    %86 = math.exp %85 : vector<4x32xf32>
    %cst_30 = arith.constant 1.000000e+00 : f32
    %87 = vector.broadcast %cst_30 : f32 to vector<4x32xf32>
    %88 = arith.addf %87, %86 : vector<4x32xf32>
    %89 = arith.divf %87, %88 : vector<4x32xf32>
    %90 = vector.extract_strided_slice %79 {offsets = [0, 32], sizes = [4, 32], strides = [1, 1]} : vector<4x96xf32> to vector<4x32xf32>
    %91 = vector.extract_strided_slice %81 {offsets = [0, 32], sizes = [4, 32], strides = [1, 1]} : vector<4x96xf32> to vector<4x32xf32>
    %92 = arith.addf %90, %91 : vector<4x32xf32>
    %93 = arith.negf %92 : vector<4x32xf32>
    %94 = math.exp %93 : vector<4x32xf32>
    %cst_31 = arith.constant 1.000000e+00 : f32
    %95 = vector.broadcast %cst_31 : f32 to vector<4x32xf32>
    %96 = arith.addf %95, %94 : vector<4x32xf32>
    %97 = arith.divf %95, %96 : vector<4x32xf32>
    %98 = vector.extract_strided_slice %79 {offsets = [0, 64], sizes = [4, 32], strides = [1, 1]} : vector<4x96xf32> to vector<4x32xf32>
    %99 = vector.extract_strided_slice %81 {offsets = [0, 64], sizes = [4, 32], strides = [1, 1]} : vector<4x96xf32> to vector<4x32xf32>
    %100 = arith.mulf %89, %99 : vector<4x32xf32>
    %101 = arith.addf %98, %100 : vector<4x32xf32>
    %102 = math.tanh %101 : vector<4x32xf32>
    %cst_32 = arith.constant 1.000000e+00 : f32
    %103 = vector.broadcast %cst_32 : f32 to vector<4x32xf32>
    %104 = arith.subf %103, %97 : vector<4x32xf32>
    %105 = arith.mulf %104, %102 : vector<4x32xf32>
    %106 = arith.mulf %97, %51 : vector<4x32xf32>
    %107 = arith.addf %105, %106 : vector<4x32xf32>
    %108 = vector.extract_strided_slice %107 {offsets = [0, 0], sizes = [2, 32], strides = [1, 1]} : vector<4x32xf32> to vector<2x32xf32>
    %109 = arith.index_cast %c1_i32 : i32 to index
    %c0_33 = arith.constant 0 : index
    %c0_34 = arith.constant 0 : index
    %110 = vector.load %arg8[%109, %c0_33, %c0_34] : memref<8x2x32xf32, #tpu.memory_space<vmem>>, vector<1x2x32xf32>
    %111 = vector.shape_cast %110 : vector<1x2x32xf32> to vector<2x32xf32>
    %112 = vector.shape_cast %108 : vector<2x32xf32> to vector<1x2x32xf32>
    tpu.vector_store %arg8[%109, %c0_33, %c0_34], %112 {strides = array<i32>} : memref<8x2x32xf32, #tpu.memory_space<vmem>>, vector<1x2x32xf32>,
    %113 = vector.extract_strided_slice %107 {offsets = [2, 0], sizes = [2, 32], strides = [1, 1]} : vector<4x32xf32> to vector<2x32xf32>
    %c7_i32_35 = arith.constant 7 : i32
    %114 = arith.subi %c7_i32_35, %c1_i32 : i32
    %115 = arith.index_cast %114 : i32 to index
    %c0_36 = arith.constant 0 : index
    %c0_37 = arith.constant 0 : index
    %116 = vector.load %arg9[%115, %c0_36, %c0_37] : memref<8x2x32xf32, #tpu.memory_space<vmem>>, vector<1x2x32xf32>
    %117 = vector.shape_cast %116 : vector<1x2x32xf32> to vector<2x32xf32>
    %118 = vector.shape_cast %113 : vector<2x32xf32> to vector<1x2x32xf32>
    tpu.vector_store %arg9[%115, %c0_36, %c0_37], %118 {strides = array<i32>} : memref<8x2x32xf32, #tpu.memory_space<vmem>>, vector<1x2x32xf32>,
    %c2_i32 = arith.constant 2 : i32
    %119 = arith.index_cast %c2_i32 : i32 to index
    %c0_38 = arith.constant 0 : index
    %c0_39 = arith.constant 0 : index
    %120 = vector.load %arg0[%119, %c0_38, %c0_39] : memref<8x2x32xf32, #tpu.memory_space<vmem>>, vector<1x2x32xf32>
    %121 = vector.shape_cast %120 : vector<1x2x32xf32> to vector<2x32xf32>
    %c7_i32_40 = arith.constant 7 : i32
    %122 = arith.subi %c7_i32_40, %c2_i32 : i32
    %123 = arith.index_cast %122 : i32 to index
    %c0_41 = arith.constant 0 : index
    %c0_42 = arith.constant 0 : index
    %124 = vector.load %arg0[%123, %c0_41, %c0_42] : memref<8x2x32xf32, #tpu.memory_space<vmem>>, vector<1x2x32xf32>
    %125 = vector.shape_cast %124 : vector<1x2x32xf32> to vector<2x32xf32>
    %126 = tpu.concatenate %121, %4 in 1 : vector<2x32xf32>, vector<2x32xf32> -> vector<2x64xf32>
    %127 = tpu.concatenate %4, %125 in 1 : vector<2x32xf32>, vector<2x32xf32> -> vector<2x64xf32>
    %128 = tpu.concatenate %126, %127 in 0 : vector<2x64xf32>, vector<2x64xf32> -> vector<4x64xf32>
    %129 = vector.extract_strided_slice %107 {offsets = [0, 0], sizes = [2, 32], strides = [1, 1]} : vector<4x32xf32> to vector<2x32xf32>
    %130 = tpu.concatenate %129, %5 in 1 : vector<2x32xf32>, vector<2x32xf32> -> vector<2x64xf32>
    %131 = vector.extract_strided_slice %107 {offsets = [2, 0], sizes = [2, 32], strides = [1, 1]} : vector<4x32xf32> to vector<2x32xf32>
    %132 = tpu.concatenate %5, %131 in 1 : vector<2x32xf32>, vector<2x32xf32> -> vector<2x64xf32>
    %133 = tpu.concatenate %130, %132 in 0 : vector<2x64xf32>, vector<2x64xf32> -> vector<4x64xf32>
    %cst_43 = arith.constant dense<0.000000e+00> : vector<4x96xf32>
    %134 = tpu.matmul %128, %0, %cst_43 {dimension_numbers = #tpu.dot_dimension_numbers<[1], [0], [0], [1], [0, 0, 1, 1], [], []>} : vector<4x64xf32>, vector<64x96xf32>, vector<4x96xf32> -> vector<4x96xf32>
    %135 = arith.addf %134, %2 : vector<4x96xf32>
    %cst_44 = arith.constant dense<0.000000e+00> : vector<4x96xf32>
    %136 = tpu.matmul %133, %1, %cst_44 {dimension_numbers = #tpu.dot_dimension_numbers<[1], [0], [0], [1], [0, 0, 1, 1], [], []>} : vector<4x64xf32>, vector<64x96xf32>, vector<4x96xf32> -> vector<4x96xf32>
    %137 = arith.addf %136, %3 : vector<4x96xf32>
    %138 = vector.extract_strided_slice %135 {offsets = [0, 0], sizes = [4, 32], strides = [1, 1]} : vector<4x96xf32> to vector<4x32xf32>
    %139 = vector.extract_strided_slice %137 {offsets = [0, 0], sizes = [4, 32], strides = [1, 1]} : vector<4x96xf32> to vector<4x32xf32>
    %140 = arith.addf %138, %139 : vector<4x32xf32>
    %141 = arith.negf %140 : vector<4x32xf32>
    %142 = math.exp %141 : vector<4x32xf32>
    %cst_45 = arith.constant 1.000000e+00 : f32
    %143 = vector.broadcast %cst_45 : f32 to vector<4x32xf32>
    %144 = arith.addf %143, %142 : vector<4x32xf32>
    %145 = arith.divf %143, %144 : vector<4x32xf32>
    %146 = vector.extract_strided_slice %135 {offsets = [0, 32], sizes = [4, 32], strides = [1, 1]} : vector<4x96xf32> to vector<4x32xf32>
    %147 = vector.extract_strided_slice %137 {offsets = [0, 32], sizes = [4, 32], strides = [1, 1]} : vector<4x96xf32> to vector<4x32xf32>
    %148 = arith.addf %146, %147 : vector<4x32xf32>
    %149 = arith.negf %148 : vector<4x32xf32>
    %150 = math.exp %149 : vector<4x32xf32>
    %cst_46 = arith.constant 1.000000e+00 : f32
    %151 = vector.broadcast %cst_46 : f32 to vector<4x32xf32>
    %152 = arith.addf %151, %150 : vector<4x32xf32>
    %153 = arith.divf %151, %152 : vector<4x32xf32>
    %154 = vector.extract_strided_slice %135 {offsets = [0, 64], sizes = [4, 32], strides = [1, 1]} : vector<4x96xf32> to vector<4x32xf32>
    %155 = vector.extract_strided_slice %137 {offsets = [0, 64], sizes = [4, 32], strides = [1, 1]} : vector<4x96xf32> to vector<4x32xf32>
    %156 = arith.mulf %145, %155 : vector<4x32xf32>
    %157 = arith.addf %154, %156 : vector<4x32xf32>
    %158 = math.tanh %157 : vector<4x32xf32>
    %cst_47 = arith.constant 1.000000e+00 : f32
    %159 = vector.broadcast %cst_47 : f32 to vector<4x32xf32>
    %160 = arith.subf %159, %153 : vector<4x32xf32>
    %161 = arith.mulf %160, %158 : vector<4x32xf32>
    %162 = arith.mulf %153, %107 : vector<4x32xf32>
    %163 = arith.addf %161, %162 : vector<4x32xf32>
    %164 = vector.extract_strided_slice %163 {offsets = [0, 0], sizes = [2, 32], strides = [1, 1]} : vector<4x32xf32> to vector<2x32xf32>
    %165 = arith.index_cast %c2_i32 : i32 to index
    %c0_48 = arith.constant 0 : index
    %c0_49 = arith.constant 0 : index
    %166 = vector.load %arg8[%165, %c0_48, %c0_49] : memref<8x2x32xf32, #tpu.memory_space<vmem>>, vector<1x2x32xf32>
    %167 = vector.shape_cast %166 : vector<1x2x32xf32> to vector<2x32xf32>
    %168 = vector.shape_cast %164 : vector<2x32xf32> to vector<1x2x32xf32>
    tpu.vector_store %arg8[%165, %c0_48, %c0_49], %168 {strides = array<i32>} : memref<8x2x32xf32, #tpu.memory_space<vmem>>, vector<1x2x32xf32>,
    %169 = vector.extract_strided_slice %163 {offsets = [2, 0], sizes = [2, 32], strides = [1, 1]} : vector<4x32xf32> to vector<2x32xf32>
    %c7_i32_50 = arith.constant 7 : i32
    %170 = arith.subi %c7_i32_50, %c2_i32 : i32
    %171 = arith.index_cast %170 : i32 to index
    %c0_51 = arith.constant 0 : index
    %c0_52 = arith.constant 0 : index
    %172 = vector.load %arg9[%171, %c0_51, %c0_52] : memref<8x2x32xf32, #tpu.memory_space<vmem>>, vector<1x2x32xf32>
    %173 = vector.shape_cast %172 : vector<1x2x32xf32> to vector<2x32xf32>
    %174 = vector.shape_cast %169 : vector<2x32xf32> to vector<1x2x32xf32>
    tpu.vector_store %arg9[%171, %c0_51, %c0_52], %174 {strides = array<i32>} : memref<8x2x32xf32, #tpu.memory_space<vmem>>, vector<1x2x32xf32>,
    %c3_i32 = arith.constant 3 : i32
    %175 = arith.index_cast %c3_i32 : i32 to index
    %c0_53 = arith.constant 0 : index
    %c0_54 = arith.constant 0 : index
    %176 = vector.load %arg0[%175, %c0_53, %c0_54] : memref<8x2x32xf32, #tpu.memory_space<vmem>>, vector<1x2x32xf32>
    %177 = vector.shape_cast %176 : vector<1x2x32xf32> to vector<2x32xf32>
    %c7_i32_55 = arith.constant 7 : i32
    %178 = arith.subi %c7_i32_55, %c3_i32 : i32
    %179 = arith.index_cast %178 : i32 to index
    %c0_56 = arith.constant 0 : index
    %c0_57 = arith.constant 0 : index
    %180 = vector.load %arg0[%179, %c0_56, %c0_57] : memref<8x2x32xf32, #tpu.memory_space<vmem>>, vector<1x2x32xf32>
    %181 = vector.shape_cast %180 : vector<1x2x32xf32> to vector<2x32xf32>
    %182 = tpu.concatenate %177, %4 in 1 : vector<2x32xf32>, vector<2x32xf32> -> vector<2x64xf32>
    %183 = tpu.concatenate %4, %181 in 1 : vector<2x32xf32>, vector<2x32xf32> -> vector<2x64xf32>
    %184 = tpu.concatenate %182, %183 in 0 : vector<2x64xf32>, vector<2x64xf32> -> vector<4x64xf32>
    %185 = vector.extract_strided_slice %163 {offsets = [0, 0], sizes = [2, 32], strides = [1, 1]} : vector<4x32xf32> to vector<2x32xf32>
    %186 = tpu.concatenate %185, %5 in 1 : vector<2x32xf32>, vector<2x32xf32> -> vector<2x64xf32>
    %187 = vector.extract_strided_slice %163 {offsets = [2, 0], sizes = [2, 32], strides = [1, 1]} : vector<4x32xf32> to vector<2x32xf32>
    %188 = tpu.concatenate %5, %187 in 1 : vector<2x32xf32>, vector<2x32xf32> -> vector<2x64xf32>
    %189 = tpu.concatenate %186, %188 in 0 : vector<2x64xf32>, vector<2x64xf32> -> vector<4x64xf32>
    %cst_58 = arith.constant dense<0.000000e+00> : vector<4x96xf32>
    %190 = tpu.matmul %184, %0, %cst_58 {dimension_numbers = #tpu.dot_dimension_numbers<[1], [0], [0], [1], [0, 0, 1, 1], [], []>} : vector<4x64xf32>, vector<64x96xf32>, vector<4x96xf32> -> vector<4x96xf32>
    %191 = arith.addf %190, %2 : vector<4x96xf32>
    %cst_59 = arith.constant dense<0.000000e+00> : vector<4x96xf32>
    %192 = tpu.matmul %189, %1, %cst_59 {dimension_numbers = #tpu.dot_dimension_numbers<[1], [0], [0], [1], [0, 0, 1, 1], [], []>} : vector<4x64xf32>, vector<64x96xf32>, vector<4x96xf32> -> vector<4x96xf32>
    %193 = arith.addf %192, %3 : vector<4x96xf32>
    %194 = vector.extract_strided_slice %191 {offsets = [0, 0], sizes = [4, 32], strides = [1, 1]} : vector<4x96xf32> to vector<4x32xf32>
    %195 = vector.extract_strided_slice %193 {offsets = [0, 0], sizes = [4, 32], strides = [1, 1]} : vector<4x96xf32> to vector<4x32xf32>
    %196 = arith.addf %194, %195 : vector<4x32xf32>
    %197 = arith.negf %196 : vector<4x32xf32>
    %198 = math.exp %197 : vector<4x32xf32>
    %cst_60 = arith.constant 1.000000e+00 : f32
    %199 = vector.broadcast %cst_60 : f32 to vector<4x32xf32>
    %200 = arith.addf %199, %198 : vector<4x32xf32>
    %201 = arith.divf %199, %200 : vector<4x32xf32>
    %202 = vector.extract_strided_slice %191 {offsets = [0, 32], sizes = [4, 32], strides = [1, 1]} : vector<4x96xf32> to vector<4x32xf32>
    %203 = vector.extract_strided_slice %193 {offsets = [0, 32], sizes = [4, 32], strides = [1, 1]} : vector<4x96xf32> to vector<4x32xf32>
    %204 = arith.addf %202, %203 : vector<4x32xf32>
    %205 = arith.negf %204 : vector<4x32xf32>
    %206 = math.exp %205 : vector<4x32xf32>
    %cst_61 = arith.constant 1.000000e+00 : f32
    %207 = vector.broadcast %cst_61 : f32 to vector<4x32xf32>
    %208 = arith.addf %207, %206 : vector<4x32xf32>
    %209 = arith.divf %207, %208 : vector<4x32xf32>
    %210 = vector.extract_strided_slice %191 {offsets = [0, 64], sizes = [4, 32], strides = [1, 1]} : vector<4x96xf32> to vector<4x32xf32>
    %211 = vector.extract_strided_slice %193 {offsets = [0, 64], sizes = [4, 32], strides = [1, 1]} : vector<4x96xf32> to vector<4x32xf32>
    %212 = arith.mulf %201, %211 : vector<4x32xf32>
    %213 = arith.addf %210, %212 : vector<4x32xf32>
    %214 = math.tanh %213 : vector<4x32xf32>
    %cst_62 = arith.constant 1.000000e+00 : f32
    %215 = vector.broadcast %cst_62 : f32 to vector<4x32xf32>
    %216 = arith.subf %215, %209 : vector<4x32xf32>
    %217 = arith.mulf %216, %214 : vector<4x32xf32>
    %218 = arith.mulf %209, %163 : vector<4x32xf32>
    %219 = arith.addf %217, %218 : vector<4x32xf32>
    %220 = vector.extract_strided_slice %219 {offsets = [0, 0], sizes = [2, 32], strides = [1, 1]} : vector<4x32xf32> to vector<2x32xf32>
    %221 = arith.index_cast %c3_i32 : i32 to index
    %c0_63 = arith.constant 0 : index
    %c0_64 = arith.constant 0 : index
    %222 = vector.load %arg8[%221, %c0_63, %c0_64] : memref<8x2x32xf32, #tpu.memory_space<vmem>>, vector<1x2x32xf32>
    %223 = vector.shape_cast %222 : vector<1x2x32xf32> to vector<2x32xf32>
    %224 = vector.shape_cast %220 : vector<2x32xf32> to vector<1x2x32xf32>
    tpu.vector_store %arg8[%221, %c0_63, %c0_64], %224 {strides = array<i32>} : memref<8x2x32xf32, #tpu.memory_space<vmem>>, vector<1x2x32xf32>,
    %225 = vector.extract_strided_slice %219 {offsets = [2, 0], sizes = [2, 32], strides = [1, 1]} : vector<4x32xf32> to vector<2x32xf32>
    %c7_i32_65 = arith.constant 7 : i32
    %226 = arith.subi %c7_i32_65, %c3_i32 : i32
    %227 = arith.index_cast %226 : i32 to index
    %c0_66 = arith.constant 0 : index
    %c0_67 = arith.constant 0 : index
    %228 = vector.load %arg9[%227, %c0_66, %c0_67] : memref<8x2x32xf32, #tpu.memory_space<vmem>>, vector<1x2x32xf32>
    %229 = vector.shape_cast %228 : vector<1x2x32xf32> to vector<2x32xf32>
    %230 = vector.shape_cast %225 : vector<2x32xf32> to vector<1x2x32xf32>
    tpu.vector_store %arg9[%227, %c0_66, %c0_67], %230 {strides = array<i32>} : memref<8x2x32xf32, #tpu.memory_space<vmem>>, vector<1x2x32xf32>,
    %c4_i32 = arith.constant 4 : i32
    %231 = arith.index_cast %c4_i32 : i32 to index
    %c0_68 = arith.constant 0 : index
    %c0_69 = arith.constant 0 : index
    %232 = vector.load %arg0[%231, %c0_68, %c0_69] : memref<8x2x32xf32, #tpu.memory_space<vmem>>, vector<1x2x32xf32>
    %233 = vector.shape_cast %232 : vector<1x2x32xf32> to vector<2x32xf32>
    %c7_i32_70 = arith.constant 7 : i32
    %234 = arith.subi %c7_i32_70, %c4_i32 : i32
    %235 = arith.index_cast %234 : i32 to index
    %c0_71 = arith.constant 0 : index
    %c0_72 = arith.constant 0 : index
    %236 = vector.load %arg0[%235, %c0_71, %c0_72] : memref<8x2x32xf32, #tpu.memory_space<vmem>>, vector<1x2x32xf32>
    %237 = vector.shape_cast %236 : vector<1x2x32xf32> to vector<2x32xf32>
    %238 = tpu.concatenate %233, %4 in 1 : vector<2x32xf32>, vector<2x32xf32> -> vector<2x64xf32>
    %239 = tpu.concatenate %4, %237 in 1 : vector<2x32xf32>, vector<2x32xf32> -> vector<2x64xf32>
    %240 = tpu.concatenate %238, %239 in 0 : vector<2x64xf32>, vector<2x64xf32> -> vector<4x64xf32>
    %241 = vector.extract_strided_slice %219 {offsets = [0, 0], sizes = [2, 32], strides = [1, 1]} : vector<4x32xf32> to vector<2x32xf32>
    %242 = tpu.concatenate %241, %5 in 1 : vector<2x32xf32>, vector<2x32xf32> -> vector<2x64xf32>
    %243 = vector.extract_strided_slice %219 {offsets = [2, 0], sizes = [2, 32], strides = [1, 1]} : vector<4x32xf32> to vector<2x32xf32>
    %244 = tpu.concatenate %5, %243 in 1 : vector<2x32xf32>, vector<2x32xf32> -> vector<2x64xf32>
    %245 = tpu.concatenate %242, %244 in 0 : vector<2x64xf32>, vector<2x64xf32> -> vector<4x64xf32>
    %cst_73 = arith.constant dense<0.000000e+00> : vector<4x96xf32>
    %246 = tpu.matmul %240, %0, %cst_73 {dimension_numbers = #tpu.dot_dimension_numbers<[1], [0], [0], [1], [0, 0, 1, 1], [], []>} : vector<4x64xf32>, vector<64x96xf32>, vector<4x96xf32> -> vector<4x96xf32>
    %247 = arith.addf %246, %2 : vector<4x96xf32>
    %cst_74 = arith.constant dense<0.000000e+00> : vector<4x96xf32>
    %248 = tpu.matmul %245, %1, %cst_74 {dimension_numbers = #tpu.dot_dimension_numbers<[1], [0], [0], [1], [0, 0, 1, 1], [], []>} : vector<4x64xf32>, vector<64x96xf32>, vector<4x96xf32> -> vector<4x96xf32>
    %249 = arith.addf %248, %3 : vector<4x96xf32>
    %250 = vector.extract_strided_slice %247 {offsets = [0, 0], sizes = [4, 32], strides = [1, 1]} : vector<4x96xf32> to vector<4x32xf32>
    %251 = vector.extract_strided_slice %249 {offsets = [0, 0], sizes = [4, 32], strides = [1, 1]} : vector<4x96xf32> to vector<4x32xf32>
    %252 = arith.addf %250, %251 : vector<4x32xf32>
    %253 = arith.negf %252 : vector<4x32xf32>
    %254 = math.exp %253 : vector<4x32xf32>
    %cst_75 = arith.constant 1.000000e+00 : f32
    %255 = vector.broadcast %cst_75 : f32 to vector<4x32xf32>
    %256 = arith.addf %255, %254 : vector<4x32xf32>
    %257 = arith.divf %255, %256 : vector<4x32xf32>
    %258 = vector.extract_strided_slice %247 {offsets = [0, 32], sizes = [4, 32], strides = [1, 1]} : vector<4x96xf32> to vector<4x32xf32>
    %259 = vector.extract_strided_slice %249 {offsets = [0, 32], sizes = [4, 32], strides = [1, 1]} : vector<4x96xf32> to vector<4x32xf32>
    %260 = arith.addf %258, %259 : vector<4x32xf32>
    %261 = arith.negf %260 : vector<4x32xf32>
    %262 = math.exp %261 : vector<4x32xf32>
    %cst_76 = arith.constant 1.000000e+00 : f32
    %263 = vector.broadcast %cst_76 : f32 to vector<4x32xf32>
    %264 = arith.addf %263, %262 : vector<4x32xf32>
    %265 = arith.divf %263, %264 : vector<4x32xf32>
    %266 = vector.extract_strided_slice %247 {offsets = [0, 64], sizes = [4, 32], strides = [1, 1]} : vector<4x96xf32> to vector<4x32xf32>
    %267 = vector.extract_strided_slice %249 {offsets = [0, 64], sizes = [4, 32], strides = [1, 1]} : vector<4x96xf32> to vector<4x32xf32>
    %268 = arith.mulf %257, %267 : vector<4x32xf32>
    %269 = arith.addf %266, %268 : vector<4x32xf32>
    %270 = math.tanh %269 : vector<4x32xf32>
    %cst_77 = arith.constant 1.000000e+00 : f32
    %271 = vector.broadcast %cst_77 : f32 to vector<4x32xf32>
    %272 = arith.subf %271, %265 : vector<4x32xf32>
    %273 = arith.mulf %272, %270 : vector<4x32xf32>
    %274 = arith.mulf %265, %219 : vector<4x32xf32>
    %275 = arith.addf %273, %274 : vector<4x32xf32>
    %276 = vector.extract_strided_slice %275 {offsets = [0, 0], sizes = [2, 32], strides = [1, 1]} : vector<4x32xf32> to vector<2x32xf32>
    %277 = arith.index_cast %c4_i32 : i32 to index
    %c0_78 = arith.constant 0 : index
    %c0_79 = arith.constant 0 : index
    %278 = vector.load %arg8[%277, %c0_78, %c0_79] : memref<8x2x32xf32, #tpu.memory_space<vmem>>, vector<1x2x32xf32>
    %279 = vector.shape_cast %278 : vector<1x2x32xf32> to vector<2x32xf32>
    %280 = vector.shape_cast %276 : vector<2x32xf32> to vector<1x2x32xf32>
    tpu.vector_store %arg8[%277, %c0_78, %c0_79], %280 {strides = array<i32>} : memref<8x2x32xf32, #tpu.memory_space<vmem>>, vector<1x2x32xf32>,
    %281 = vector.extract_strided_slice %275 {offsets = [2, 0], sizes = [2, 32], strides = [1, 1]} : vector<4x32xf32> to vector<2x32xf32>
    %c7_i32_80 = arith.constant 7 : i32
    %282 = arith.subi %c7_i32_80, %c4_i32 : i32
    %283 = arith.index_cast %282 : i32 to index
    %c0_81 = arith.constant 0 : index
    %c0_82 = arith.constant 0 : index
    %284 = vector.load %arg9[%283, %c0_81, %c0_82] : memref<8x2x32xf32, #tpu.memory_space<vmem>>, vector<1x2x32xf32>
    %285 = vector.shape_cast %284 : vector<1x2x32xf32> to vector<2x32xf32>
    %286 = vector.shape_cast %281 : vector<2x32xf32> to vector<1x2x32xf32>
    tpu.vector_store %arg9[%283, %c0_81, %c0_82], %286 {strides = array<i32>} : memref<8x2x32xf32, #tpu.memory_space<vmem>>, vector<1x2x32xf32>,
    %c5_i32 = arith.constant 5 : i32
    %287 = arith.index_cast %c5_i32 : i32 to index
    %c0_83 = arith.constant 0 : index
    %c0_84 = arith.constant 0 : index
    %288 = vector.load %arg0[%287, %c0_83, %c0_84] : memref<8x2x32xf32, #tpu.memory_space<vmem>>, vector<1x2x32xf32>
    %289 = vector.shape_cast %288 : vector<1x2x32xf32> to vector<2x32xf32>
    %c7_i32_85 = arith.constant 7 : i32
    %290 = arith.subi %c7_i32_85, %c5_i32 : i32
    %291 = arith.index_cast %290 : i32 to index
    %c0_86 = arith.constant 0 : index
    %c0_87 = arith.constant 0 : index
    %292 = vector.load %arg0[%291, %c0_86, %c0_87] : memref<8x2x32xf32, #tpu.memory_space<vmem>>, vector<1x2x32xf32>
    %293 = vector.shape_cast %292 : vector<1x2x32xf32> to vector<2x32xf32>
    %294 = tpu.concatenate %289, %4 in 1 : vector<2x32xf32>, vector<2x32xf32> -> vector<2x64xf32>
    %295 = tpu.concatenate %4, %293 in 1 : vector<2x32xf32>, vector<2x32xf32> -> vector<2x64xf32>
    %296 = tpu.concatenate %294, %295 in 0 : vector<2x64xf32>, vector<2x64xf32> -> vector<4x64xf32>
    %297 = vector.extract_strided_slice %275 {offsets = [0, 0], sizes = [2, 32], strides = [1, 1]} : vector<4x32xf32> to vector<2x32xf32>
    %298 = tpu.concatenate %297, %5 in 1 : vector<2x32xf32>, vector<2x32xf32> -> vector<2x64xf32>
    %299 = vector.extract_strided_slice %275 {offsets = [2, 0], sizes = [2, 32], strides = [1, 1]} : vector<4x32xf32> to vector<2x32xf32>
    %300 = tpu.concatenate %5, %299 in 1 : vector<2x32xf32>, vector<2x32xf32> -> vector<2x64xf32>
    %301 = tpu.concatenate %298, %300 in 0 : vector<2x64xf32>, vector<2x64xf32> -> vector<4x64xf32>
    %cst_88 = arith.constant dense<0.000000e+00> : vector<4x96xf32>
    %302 = tpu.matmul %296, %0, %cst_88 {dimension_numbers = #tpu.dot_dimension_numbers<[1], [0], [0], [1], [0, 0, 1, 1], [], []>} : vector<4x64xf32>, vector<64x96xf32>, vector<4x96xf32> -> vector<4x96xf32>
    %303 = arith.addf %302, %2 : vector<4x96xf32>
    %cst_89 = arith.constant dense<0.000000e+00> : vector<4x96xf32>
    %304 = tpu.matmul %301, %1, %cst_89 {dimension_numbers = #tpu.dot_dimension_numbers<[1], [0], [0], [1], [0, 0, 1, 1], [], []>} : vector<4x64xf32>, vector<64x96xf32>, vector<4x96xf32> -> vector<4x96xf32>
    %305 = arith.addf %304, %3 : vector<4x96xf32>
    %306 = vector.extract_strided_slice %303 {offsets = [0, 0], sizes = [4, 32], strides = [1, 1]} : vector<4x96xf32> to vector<4x32xf32>
    %307 = vector.extract_strided_slice %305 {offsets = [0, 0], sizes = [4, 32], strides = [1, 1]} : vector<4x96xf32> to vector<4x32xf32>
    %308 = arith.addf %306, %307 : vector<4x32xf32>
    %309 = arith.negf %308 : vector<4x32xf32>
    %310 = math.exp %309 : vector<4x32xf32>
    %cst_90 = arith.constant 1.000000e+00 : f32
    %311 = vector.broadcast %cst_90 : f32 to vector<4x32xf32>
    %312 = arith.addf %311, %310 : vector<4x32xf32>
    %313 = arith.divf %311, %312 : vector<4x32xf32>
    %314 = vector.extract_strided_slice %303 {offsets = [0, 32], sizes = [4, 32], strides = [1, 1]} : vector<4x96xf32> to vector<4x32xf32>
    %315 = vector.extract_strided_slice %305 {offsets = [0, 32], sizes = [4, 32], strides = [1, 1]} : vector<4x96xf32> to vector<4x32xf32>
    %316 = arith.addf %314, %315 : vector<4x32xf32>
    %317 = arith.negf %316 : vector<4x32xf32>
    %318 = math.exp %317 : vector<4x32xf32>
    %cst_91 = arith.constant 1.000000e+00 : f32
    %319 = vector.broadcast %cst_91 : f32 to vector<4x32xf32>
    %320 = arith.addf %319, %318 : vector<4x32xf32>
    %321 = arith.divf %319, %320 : vector<4x32xf32>
    %322 = vector.extract_strided_slice %303 {offsets = [0, 64], sizes = [4, 32], strides = [1, 1]} : vector<4x96xf32> to vector<4x32xf32>
    %323 = vector.extract_strided_slice %305 {offsets = [0, 64], sizes = [4, 32], strides = [1, 1]} : vector<4x96xf32> to vector<4x32xf32>
    %324 = arith.mulf %313, %323 : vector<4x32xf32>
    %325 = arith.addf %322, %324 : vector<4x32xf32>
    %326 = math.tanh %325 : vector<4x32xf32>
    %cst_92 = arith.constant 1.000000e+00 : f32
    %327 = vector.broadcast %cst_92 : f32 to vector<4x32xf32>
    %328 = arith.subf %327, %321 : vector<4x32xf32>
    %329 = arith.mulf %328, %326 : vector<4x32xf32>
    %330 = arith.mulf %321, %275 : vector<4x32xf32>
    %331 = arith.addf %329, %330 : vector<4x32xf32>
    %332 = vector.extract_strided_slice %331 {offsets = [0, 0], sizes = [2, 32], strides = [1, 1]} : vector<4x32xf32> to vector<2x32xf32>
    %333 = arith.index_cast %c5_i32 : i32 to index
    %c0_93 = arith.constant 0 : index
    %c0_94 = arith.constant 0 : index
    %334 = vector.load %arg8[%333, %c0_93, %c0_94] : memref<8x2x32xf32, #tpu.memory_space<vmem>>, vector<1x2x32xf32>
    %335 = vector.shape_cast %334 : vector<1x2x32xf32> to vector<2x32xf32>
    %336 = vector.shape_cast %332 : vector<2x32xf32> to vector<1x2x32xf32>
    tpu.vector_store %arg8[%333, %c0_93, %c0_94], %336 {strides = array<i32>} : memref<8x2x32xf32, #tpu.memory_space<vmem>>, vector<1x2x32xf32>,
    %337 = vector.extract_strided_slice %331 {offsets = [2, 0], sizes = [2, 32], strides = [1, 1]} : vector<4x32xf32> to vector<2x32xf32>
    %c7_i32_95 = arith.constant 7 : i32
    %338 = arith.subi %c7_i32_95, %c5_i32 : i32
    %339 = arith.index_cast %338 : i32 to index
    %c0_96 = arith.constant 0 : index
    %c0_97 = arith.constant 0 : index
    %340 = vector.load %arg9[%339, %c0_96, %c0_97] : memref<8x2x32xf32, #tpu.memory_space<vmem>>, vector<1x2x32xf32>
    %341 = vector.shape_cast %340 : vector<1x2x32xf32> to vector<2x32xf32>
    %342 = vector.shape_cast %337 : vector<2x32xf32> to vector<1x2x32xf32>
    tpu.vector_store %arg9[%339, %c0_96, %c0_97], %342 {strides = array<i32>} : memref<8x2x32xf32, #tpu.memory_space<vmem>>, vector<1x2x32xf32>,
    %c6_i32 = arith.constant 6 : i32
    %343 = arith.index_cast %c6_i32 : i32 to index
    %c0_98 = arith.constant 0 : index
    %c0_99 = arith.constant 0 : index
    %344 = vector.load %arg0[%343, %c0_98, %c0_99] : memref<8x2x32xf32, #tpu.memory_space<vmem>>, vector<1x2x32xf32>
    %345 = vector.shape_cast %344 : vector<1x2x32xf32> to vector<2x32xf32>
    %c7_i32_100 = arith.constant 7 : i32
    %346 = arith.subi %c7_i32_100, %c6_i32 : i32
    %347 = arith.index_cast %346 : i32 to index
    %c0_101 = arith.constant 0 : index
    %c0_102 = arith.constant 0 : index
    %348 = vector.load %arg0[%347, %c0_101, %c0_102] : memref<8x2x32xf32, #tpu.memory_space<vmem>>, vector<1x2x32xf32>
    %349 = vector.shape_cast %348 : vector<1x2x32xf32> to vector<2x32xf32>
    %350 = tpu.concatenate %345, %4 in 1 : vector<2x32xf32>, vector<2x32xf32> -> vector<2x64xf32>
    %351 = tpu.concatenate %4, %349 in 1 : vector<2x32xf32>, vector<2x32xf32> -> vector<2x64xf32>
    %352 = tpu.concatenate %350, %351 in 0 : vector<2x64xf32>, vector<2x64xf32> -> vector<4x64xf32>
    %353 = vector.extract_strided_slice %331 {offsets = [0, 0], sizes = [2, 32], strides = [1, 1]} : vector<4x32xf32> to vector<2x32xf32>
    %354 = tpu.concatenate %353, %5 in 1 : vector<2x32xf32>, vector<2x32xf32> -> vector<2x64xf32>
    %355 = vector.extract_strided_slice %331 {offsets = [2, 0], sizes = [2, 32], strides = [1, 1]} : vector<4x32xf32> to vector<2x32xf32>
    %356 = tpu.concatenate %5, %355 in 1 : vector<2x32xf32>, vector<2x32xf32> -> vector<2x64xf32>
    %357 = tpu.concatenate %354, %356 in 0 : vector<2x64xf32>, vector<2x64xf32> -> vector<4x64xf32>
    %cst_103 = arith.constant dense<0.000000e+00> : vector<4x96xf32>
    %358 = tpu.matmul %352, %0, %cst_103 {dimension_numbers = #tpu.dot_dimension_numbers<[1], [0], [0], [1], [0, 0, 1, 1], [], []>} : vector<4x64xf32>, vector<64x96xf32>, vector<4x96xf32> -> vector<4x96xf32>
    %359 = arith.addf %358, %2 : vector<4x96xf32>
    %cst_104 = arith.constant dense<0.000000e+00> : vector<4x96xf32>
    %360 = tpu.matmul %357, %1, %cst_104 {dimension_numbers = #tpu.dot_dimension_numbers<[1], [0], [0], [1], [0, 0, 1, 1], [], []>} : vector<4x64xf32>, vector<64x96xf32>, vector<4x96xf32> -> vector<4x96xf32>
    %361 = arith.addf %360, %3 : vector<4x96xf32>
    %362 = vector.extract_strided_slice %359 {offsets = [0, 0], sizes = [4, 32], strides = [1, 1]} : vector<4x96xf32> to vector<4x32xf32>
    %363 = vector.extract_strided_slice %361 {offsets = [0, 0], sizes = [4, 32], strides = [1, 1]} : vector<4x96xf32> to vector<4x32xf32>
    %364 = arith.addf %362, %363 : vector<4x32xf32>
    %365 = arith.negf %364 : vector<4x32xf32>
    %366 = math.exp %365 : vector<4x32xf32>
    %cst_105 = arith.constant 1.000000e+00 : f32
    %367 = vector.broadcast %cst_105 : f32 to vector<4x32xf32>
    %368 = arith.addf %367, %366 : vector<4x32xf32>
    %369 = arith.divf %367, %368 : vector<4x32xf32>
    %370 = vector.extract_strided_slice %359 {offsets = [0, 32], sizes = [4, 32], strides = [1, 1]} : vector<4x96xf32> to vector<4x32xf32>
    %371 = vector.extract_strided_slice %361 {offsets = [0, 32], sizes = [4, 32], strides = [1, 1]} : vector<4x96xf32> to vector<4x32xf32>
    %372 = arith.addf %370, %371 : vector<4x32xf32>
    %373 = arith.negf %372 : vector<4x32xf32>
    %374 = math.exp %373 : vector<4x32xf32>
    %cst_106 = arith.constant 1.000000e+00 : f32
    %375 = vector.broadcast %cst_106 : f32 to vector<4x32xf32>
    %376 = arith.addf %375, %374 : vector<4x32xf32>
    %377 = arith.divf %375, %376 : vector<4x32xf32>
    %378 = vector.extract_strided_slice %359 {offsets = [0, 64], sizes = [4, 32], strides = [1, 1]} : vector<4x96xf32> to vector<4x32xf32>
    %379 = vector.extract_strided_slice %361 {offsets = [0, 64], sizes = [4, 32], strides = [1, 1]} : vector<4x96xf32> to vector<4x32xf32>
    %380 = arith.mulf %369, %379 : vector<4x32xf32>
    %381 = arith.addf %378, %380 : vector<4x32xf32>
    %382 = math.tanh %381 : vector<4x32xf32>
    %cst_107 = arith.constant 1.000000e+00 : f32
    %383 = vector.broadcast %cst_107 : f32 to vector<4x32xf32>
    %384 = arith.subf %383, %377 : vector<4x32xf32>
    %385 = arith.mulf %384, %382 : vector<4x32xf32>
    %386 = arith.mulf %377, %331 : vector<4x32xf32>
    %387 = arith.addf %385, %386 : vector<4x32xf32>
    %388 = vector.extract_strided_slice %387 {offsets = [0, 0], sizes = [2, 32], strides = [1, 1]} : vector<4x32xf32> to vector<2x32xf32>
    %389 = arith.index_cast %c6_i32 : i32 to index
    %c0_108 = arith.constant 0 : index
    %c0_109 = arith.constant 0 : index
    %390 = vector.load %arg8[%389, %c0_108, %c0_109] : memref<8x2x32xf32, #tpu.memory_space<vmem>>, vector<1x2x32xf32>
    %391 = vector.shape_cast %390 : vector<1x2x32xf32> to vector<2x32xf32>
    %392 = vector.shape_cast %388 : vector<2x32xf32> to vector<1x2x32xf32>
    tpu.vector_store %arg8[%389, %c0_108, %c0_109], %392 {strides = array<i32>} : memref<8x2x32xf32, #tpu.memory_space<vmem>>, vector<1x2x32xf32>,
    %393 = vector.extract_strided_slice %387 {offsets = [2, 0], sizes = [2, 32], strides = [1, 1]} : vector<4x32xf32> to vector<2x32xf32>
    %c7_i32_110 = arith.constant 7 : i32
    %394 = arith.subi %c7_i32_110, %c6_i32 : i32
    %395 = arith.index_cast %394 : i32 to index
    %c0_111 = arith.constant 0 : index
    %c0_112 = arith.constant 0 : index
    %396 = vector.load %arg9[%395, %c0_111, %c0_112] : memref<8x2x32xf32, #tpu.memory_space<vmem>>, vector<1x2x32xf32>
    %397 = vector.shape_cast %396 : vector<1x2x32xf32> to vector<2x32xf32>
    %398 = vector.shape_cast %393 : vector<2x32xf32> to vector<1x2x32xf32>
    tpu.vector_store %arg9[%395, %c0_111, %c0_112], %398 {strides = array<i32>} : memref<8x2x32xf32, #tpu.memory_space<vmem>>, vector<1x2x32xf32>,
    %c7_i32_113 = arith.constant 7 : i32
    %399 = arith.index_cast %c7_i32_113 : i32 to index
    %c0_114 = arith.constant 0 : index
    %c0_115 = arith.constant 0 : index
    %400 = vector.load %arg0[%399, %c0_114, %c0_115] : memref<8x2x32xf32, #tpu.memory_space<vmem>>, vector<1x2x32xf32>
    %401 = vector.shape_cast %400 : vector<1x2x32xf32> to vector<2x32xf32>
    %c7_i32_116 = arith.constant 7 : i32
    %402 = arith.subi %c7_i32_116, %c7_i32_113 : i32
    %403 = arith.index_cast %402 : i32 to index
    %c0_117 = arith.constant 0 : index
    %c0_118 = arith.constant 0 : index
    %404 = vector.load %arg0[%403, %c0_117, %c0_118] : memref<8x2x32xf32, #tpu.memory_space<vmem>>, vector<1x2x32xf32>
    %405 = vector.shape_cast %404 : vector<1x2x32xf32> to vector<2x32xf32>
    %406 = tpu.concatenate %401, %4 in 1 : vector<2x32xf32>, vector<2x32xf32> -> vector<2x64xf32>
    %407 = tpu.concatenate %4, %405 in 1 : vector<2x32xf32>, vector<2x32xf32> -> vector<2x64xf32>
    %408 = tpu.concatenate %406, %407 in 0 : vector<2x64xf32>, vector<2x64xf32> -> vector<4x64xf32>
    %409 = vector.extract_strided_slice %387 {offsets = [0, 0], sizes = [2, 32], strides = [1, 1]} : vector<4x32xf32> to vector<2x32xf32>
    %410 = tpu.concatenate %409, %5 in 1 : vector<2x32xf32>, vector<2x32xf32> -> vector<2x64xf32>
    %411 = vector.extract_strided_slice %387 {offsets = [2, 0], sizes = [2, 32], strides = [1, 1]} : vector<4x32xf32> to vector<2x32xf32>
    %412 = tpu.concatenate %5, %411 in 1 : vector<2x32xf32>, vector<2x32xf32> -> vector<2x64xf32>
    %413 = tpu.concatenate %410, %412 in 0 : vector<2x64xf32>, vector<2x64xf32> -> vector<4x64xf32>
    %cst_119 = arith.constant dense<0.000000e+00> : vector<4x96xf32>
    %414 = tpu.matmul %408, %0, %cst_119 {dimension_numbers = #tpu.dot_dimension_numbers<[1], [0], [0], [1], [0, 0, 1, 1], [], []>} : vector<4x64xf32>, vector<64x96xf32>, vector<4x96xf32> -> vector<4x96xf32>
    %415 = arith.addf %414, %2 : vector<4x96xf32>
    %cst_120 = arith.constant dense<0.000000e+00> : vector<4x96xf32>
    %416 = tpu.matmul %413, %1, %cst_120 {dimension_numbers = #tpu.dot_dimension_numbers<[1], [0], [0], [1], [0, 0, 1, 1], [], []>} : vector<4x64xf32>, vector<64x96xf32>, vector<4x96xf32> -> vector<4x96xf32>
    %417 = arith.addf %416, %3 : vector<4x96xf32>
    %418 = vector.extract_strided_slice %415 {offsets = [0, 0], sizes = [4, 32], strides = [1, 1]} : vector<4x96xf32> to vector<4x32xf32>
    %419 = vector.extract_strided_slice %417 {offsets = [0, 0], sizes = [4, 32], strides = [1, 1]} : vector<4x96xf32> to vector<4x32xf32>
    %420 = arith.addf %418, %419 : vector<4x32xf32>
    %421 = arith.negf %420 : vector<4x32xf32>
    %422 = math.exp %421 : vector<4x32xf32>
    %cst_121 = arith.constant 1.000000e+00 : f32
    %423 = vector.broadcast %cst_121 : f32 to vector<4x32xf32>
    %424 = arith.addf %423, %422 : vector<4x32xf32>
    %425 = arith.divf %423, %424 : vector<4x32xf32>
    %426 = vector.extract_strided_slice %415 {offsets = [0, 32], sizes = [4, 32], strides = [1, 1]} : vector<4x96xf32> to vector<4x32xf32>
    %427 = vector.extract_strided_slice %417 {offsets = [0, 32], sizes = [4, 32], strides = [1, 1]} : vector<4x96xf32> to vector<4x32xf32>
    %428 = arith.addf %426, %427 : vector<4x32xf32>
    %429 = arith.negf %428 : vector<4x32xf32>
    %430 = math.exp %429 : vector<4x32xf32>
    %cst_122 = arith.constant 1.000000e+00 : f32
    %431 = vector.broadcast %cst_122 : f32 to vector<4x32xf32>
    %432 = arith.addf %431, %430 : vector<4x32xf32>
    %433 = arith.divf %431, %432 : vector<4x32xf32>
    %434 = vector.extract_strided_slice %415 {offsets = [0, 64], sizes = [4, 32], strides = [1, 1]} : vector<4x96xf32> to vector<4x32xf32>
    %435 = vector.extract_strided_slice %417 {offsets = [0, 64], sizes = [4, 32], strides = [1, 1]} : vector<4x96xf32> to vector<4x32xf32>
    %436 = arith.mulf %425, %435 : vector<4x32xf32>
    %437 = arith.addf %434, %436 : vector<4x32xf32>
    %438 = math.tanh %437 : vector<4x32xf32>
    %cst_123 = arith.constant 1.000000e+00 : f32
    %439 = vector.broadcast %cst_123 : f32 to vector<4x32xf32>
    %440 = arith.subf %439, %433 : vector<4x32xf32>
    %441 = arith.mulf %440, %438 : vector<4x32xf32>
    %442 = arith.mulf %433, %387 : vector<4x32xf32>
    %443 = arith.addf %441, %442 : vector<4x32xf32>
    %444 = vector.extract_strided_slice %443 {offsets = [0, 0], sizes = [2, 32], strides = [1, 1]} : vector<4x32xf32> to vector<2x32xf32>
    %445 = arith.index_cast %c7_i32_113 : i32 to index
    %c0_124 = arith.constant 0 : index
    %c0_125 = arith.constant 0 : index
    %446 = vector.load %arg8[%445, %c0_124, %c0_125] : memref<8x2x32xf32, #tpu.memory_space<vmem>>, vector<1x2x32xf32>
    %447 = vector.shape_cast %446 : vector<1x2x32xf32> to vector<2x32xf32>
    %448 = vector.shape_cast %444 : vector<2x32xf32> to vector<1x2x32xf32>
    tpu.vector_store %arg8[%445, %c0_124, %c0_125], %448 {strides = array<i32>} : memref<8x2x32xf32, #tpu.memory_space<vmem>>, vector<1x2x32xf32>,
    %449 = vector.extract_strided_slice %443 {offsets = [2, 0], sizes = [2, 32], strides = [1, 1]} : vector<4x32xf32> to vector<2x32xf32>
    %c7_i32_126 = arith.constant 7 : i32
    %450 = arith.subi %c7_i32_126, %c7_i32_113 : i32
    %451 = arith.index_cast %450 : i32 to index
    %c0_127 = arith.constant 0 : index
    %c0_128 = arith.constant 0 : index
    %452 = vector.load %arg9[%451, %c0_127, %c0_128] : memref<8x2x32xf32, #tpu.memory_space<vmem>>, vector<1x2x32xf32>
    %453 = vector.shape_cast %452 : vector<1x2x32xf32> to vector<2x32xf32>
    %454 = vector.shape_cast %449 : vector<2x32xf32> to vector<1x2x32xf32>
    tpu.vector_store %arg9[%451, %c0_127, %c0_128], %454 {strides = array<i32>} : memref<8x2x32xf32, #tpu.memory_space<vmem>>, vector<1x2x32xf32>,
    %c8_i32 = arith.constant 8 : i32
    %c0_129 = arith.constant 0 : index
    %c0_130 = arith.constant 0 : index
    %455 = vector.load %arg5[%c0_129, %c0_130] : memref<64x5xf32, #tpu.memory_space<vmem>>, vector<64x5xf32>
    %c0_131 = arith.constant 0 : index
    %c0_132 = arith.constant 0 : index
    %456 = vector.load %arg6[%c0_131, %c0_132] : memref<1x5xf32, #tpu.memory_space<vmem>>, vector<1x5xf32>
    %457 = vector.extract_strided_slice %455 {offsets = [0, 0], sizes = [32, 5], strides = [1, 1]} : vector<64x5xf32> to vector<32x5xf32>
    %458 = vector.extract_strided_slice %455 {offsets = [32, 0], sizes = [32, 5], strides = [1, 1]} : vector<64x5xf32> to vector<32x5xf32>
    %c0_133 = arith.constant 0 : index
    %c0_134 = arith.constant 0 : index
    %c0_135 = arith.constant 0 : index
    %459 = vector.load %arg8[%c0_133, %c0_134, %c0_135] : memref<8x2x32xf32, #tpu.memory_space<vmem>>, vector<1x2x32xf32>
    %460 = vector.shape_cast %459 : vector<1x2x32xf32> to vector<2x32xf32>
    %cst_136 = arith.constant dense<0.000000e+00> : vector<2x5xf32>
    %461 = tpu.matmul %460, %457, %cst_136 {dimension_numbers = #tpu.dot_dimension_numbers<[1], [0], [0], [1], [0, 0, 1, 1], [], []>} : vector<2x32xf32>, vector<32x5xf32>, vector<2x5xf32> -> vector<2x5xf32>
    %c0_137 = arith.constant 0 : index
    %c0_138 = arith.constant 0 : index
    %c0_139 = arith.constant 0 : index
    %462 = vector.load %arg9[%c0_137, %c0_138, %c0_139] : memref<8x2x32xf32, #tpu.memory_space<vmem>>, vector<1x2x32xf32>
    %463 = vector.shape_cast %462 : vector<1x2x32xf32> to vector<2x32xf32>
    %cst_140 = arith.constant dense<0.000000e+00> : vector<2x5xf32>
    %464 = tpu.matmul %463, %458, %cst_140 {dimension_numbers = #tpu.dot_dimension_numbers<[1], [0], [0], [1], [0, 0, 1, 1], [], []>} : vector<2x32xf32>, vector<32x5xf32>, vector<2x5xf32> -> vector<2x5xf32>
    %465 = arith.addf %461, %464 : vector<2x5xf32>
    %466 = vector.broadcast %456 : vector<1x5xf32> to vector<2x5xf32>
    %467 = arith.addf %465, %466 : vector<2x5xf32>
    %c0_141 = arith.constant 0 : index
    %c0_142 = arith.constant 0 : index
    %c0_143 = arith.constant 0 : index
    %468 = vector.load %arg7[%c0_141, %c0_142, %c0_143] : memref<8x2x5xf32, #tpu.memory_space<vmem>>, vector<1x2x5xf32>
    %469 = vector.shape_cast %468 : vector<1x2x5xf32> to vector<2x5xf32>
    %470 = vector.shape_cast %467 : vector<2x5xf32> to vector<1x2x5xf32>
    tpu.vector_store %arg7[%c0_141, %c0_142, %c0_143], %470 {strides = array<i32>} : memref<8x2x5xf32, #tpu.memory_space<vmem>>, vector<1x2x5xf32>,
    %c1 = arith.constant 1 : index
    %c0_144 = arith.constant 0 : index
    %c0_145 = arith.constant 0 : index
    %471 = vector.load %arg8[%c1, %c0_144, %c0_145] : memref<8x2x32xf32, #tpu.memory_space<vmem>>, vector<1x2x32xf32>
    %472 = vector.shape_cast %471 : vector<1x2x32xf32> to vector<2x32xf32>
    %cst_146 = arith.constant dense<0.000000e+00> : vector<2x5xf32>
    %473 = tpu.matmul %472, %457, %cst_146 {dimension_numbers = #tpu.dot_dimension_numbers<[1], [0], [0], [1], [0, 0, 1, 1], [], []>} : vector<2x32xf32>, vector<32x5xf32>, vector<2x5xf32> -> vector<2x5xf32>
    %c1_147 = arith.constant 1 : index
    %c0_148 = arith.constant 0 : index
    %c0_149 = arith.constant 0 : index
    %474 = vector.load %arg9[%c1_147, %c0_148, %c0_149] : memref<8x2x32xf32, #tpu.memory_space<vmem>>, vector<1x2x32xf32>
    %475 = vector.shape_cast %474 : vector<1x2x32xf32> to vector<2x32xf32>
    %cst_150 = arith.constant dense<0.000000e+00> : vector<2x5xf32>
    %476 = tpu.matmul %475, %458, %cst_150 {dimension_numbers = #tpu.dot_dimension_numbers<[1], [0], [0], [1], [0, 0, 1, 1], [], []>} : vector<2x32xf32>, vector<32x5xf32>, vector<2x5xf32> -> vector<2x5xf32>
    %477 = arith.addf %473, %476 : vector<2x5xf32>
    %478 = vector.broadcast %456 : vector<1x5xf32> to vector<2x5xf32>
    %479 = arith.addf %477, %478 : vector<2x5xf32>
    %c1_151 = arith.constant 1 : index
    %c0_152 = arith.constant 0 : index
    %c0_153 = arith.constant 0 : index
    %480 = vector.load %arg7[%c1_151, %c0_152, %c0_153] : memref<8x2x5xf32, #tpu.memory_space<vmem>>, vector<1x2x5xf32>
    %481 = vector.shape_cast %480 : vector<1x2x5xf32> to vector<2x5xf32>
    %482 = vector.shape_cast %479 : vector<2x5xf32> to vector<1x2x5xf32>
    tpu.vector_store %arg7[%c1_151, %c0_152, %c0_153], %482 {strides = array<i32>} : memref<8x2x5xf32, #tpu.memory_space<vmem>>, vector<1x2x5xf32>,
    %c2 = arith.constant 2 : index
    %c0_154 = arith.constant 0 : index
    %c0_155 = arith.constant 0 : index
    %483 = vector.load %arg8[%c2, %c0_154, %c0_155] : memref<8x2x32xf32, #tpu.memory_space<vmem>>, vector<1x2x32xf32>
    %484 = vector.shape_cast %483 : vector<1x2x32xf32> to vector<2x32xf32>
    %cst_156 = arith.constant dense<0.000000e+00> : vector<2x5xf32>
    %485 = tpu.matmul %484, %457, %cst_156 {dimension_numbers = #tpu.dot_dimension_numbers<[1], [0], [0], [1], [0, 0, 1, 1], [], []>} : vector<2x32xf32>, vector<32x5xf32>, vector<2x5xf32> -> vector<2x5xf32>
    %c2_157 = arith.constant 2 : index
    %c0_158 = arith.constant 0 : index
    %c0_159 = arith.constant 0 : index
    %486 = vector.load %arg9[%c2_157, %c0_158, %c0_159] : memref<8x2x32xf32, #tpu.memory_space<vmem>>, vector<1x2x32xf32>
    %487 = vector.shape_cast %486 : vector<1x2x32xf32> to vector<2x32xf32>
    %cst_160 = arith.constant dense<0.000000e+00> : vector<2x5xf32>
    %488 = tpu.matmul %487, %458, %cst_160 {dimension_numbers = #tpu.dot_dimension_numbers<[1], [0], [0], [1], [0, 0, 1, 1], [], []>} : vector<2x32xf32>, vector<32x5xf32>, vector<2x5xf32> -> vector<2x5xf32>
    %489 = arith.addf %485, %488 : vector<2x5xf32>
    %490 = vector.broadcast %456 : vector<1x5xf32> to vector<2x5xf32>
    %491 = arith.addf %489, %490 : vector<2x5xf32>
    %c2_161 = arith.constant 2 : index
    %c0_162 = arith.constant 0 : index
    %c0_163 = arith.constant 0 : index
    %492 = vector.load %arg7[%c2_161, %c0_162, %c0_163] : memref<8x2x5xf32, #tpu.memory_space<vmem>>, vector<1x2x5xf32>
    %493 = vector.shape_cast %492 : vector<1x2x5xf32> to vector<2x5xf32>
    %494 = vector.shape_cast %491 : vector<2x5xf32> to vector<1x2x5xf32>
    tpu.vector_store %arg7[%c2_161, %c0_162, %c0_163], %494 {strides = array<i32>} : memref<8x2x5xf32, #tpu.memory_space<vmem>>, vector<1x2x5xf32>,
    %c3 = arith.constant 3 : index
    %c0_164 = arith.constant 0 : index
    %c0_165 = arith.constant 0 : index
    %495 = vector.load %arg8[%c3, %c0_164, %c0_165] : memref<8x2x32xf32, #tpu.memory_space<vmem>>, vector<1x2x32xf32>
    %496 = vector.shape_cast %495 : vector<1x2x32xf32> to vector<2x32xf32>
    %cst_166 = arith.constant dense<0.000000e+00> : vector<2x5xf32>
    %497 = tpu.matmul %496, %457, %cst_166 {dimension_numbers = #tpu.dot_dimension_numbers<[1], [0], [0], [1], [0, 0, 1, 1], [], []>} : vector<2x32xf32>, vector<32x5xf32>, vector<2x5xf32> -> vector<2x5xf32>
    %c3_167 = arith.constant 3 : index
    %c0_168 = arith.constant 0 : index
    %c0_169 = arith.constant 0 : index
    %498 = vector.load %arg9[%c3_167, %c0_168, %c0_169] : memref<8x2x32xf32, #tpu.memory_space<vmem>>, vector<1x2x32xf32>
    %499 = vector.shape_cast %498 : vector<1x2x32xf32> to vector<2x32xf32>
    %cst_170 = arith.constant dense<0.000000e+00> : vector<2x5xf32>
    %500 = tpu.matmul %499, %458, %cst_170 {dimension_numbers = #tpu.dot_dimension_numbers<[1], [0], [0], [1], [0, 0, 1, 1], [], []>} : vector<2x32xf32>, vector<32x5xf32>, vector<2x5xf32> -> vector<2x5xf32>
    %501 = arith.addf %497, %500 : vector<2x5xf32>
    %502 = vector.broadcast %456 : vector<1x5xf32> to vector<2x5xf32>
    %503 = arith.addf %501, %502 : vector<2x5xf32>
    %c3_171 = arith.constant 3 : index
    %c0_172 = arith.constant 0 : index
    %c0_173 = arith.constant 0 : index
    %504 = vector.load %arg7[%c3_171, %c0_172, %c0_173] : memref<8x2x5xf32, #tpu.memory_space<vmem>>, vector<1x2x5xf32>
    %505 = vector.shape_cast %504 : vector<1x2x5xf32> to vector<2x5xf32>
    %506 = vector.shape_cast %503 : vector<2x5xf32> to vector<1x2x5xf32>
    tpu.vector_store %arg7[%c3_171, %c0_172, %c0_173], %506 {strides = array<i32>} : memref<8x2x5xf32, #tpu.memory_space<vmem>>, vector<1x2x5xf32>,
    %c4 = arith.constant 4 : index
    %c0_174 = arith.constant 0 : index
    %c0_175 = arith.constant 0 : index
    %507 = vector.load %arg8[%c4, %c0_174, %c0_175] : memref<8x2x32xf32, #tpu.memory_space<vmem>>, vector<1x2x32xf32>
    %508 = vector.shape_cast %507 : vector<1x2x32xf32> to vector<2x32xf32>
    %cst_176 = arith.constant dense<0.000000e+00> : vector<2x5xf32>
    %509 = tpu.matmul %508, %457, %cst_176 {dimension_numbers = #tpu.dot_dimension_numbers<[1], [0], [0], [1], [0, 0, 1, 1], [], []>} : vector<2x32xf32>, vector<32x5xf32>, vector<2x5xf32> -> vector<2x5xf32>
    %c4_177 = arith.constant 4 : index
    %c0_178 = arith.constant 0 : index
    %c0_179 = arith.constant 0 : index
    %510 = vector.load %arg9[%c4_177, %c0_178, %c0_179] : memref<8x2x32xf32, #tpu.memory_space<vmem>>, vector<1x2x32xf32>
    %511 = vector.shape_cast %510 : vector<1x2x32xf32> to vector<2x32xf32>
    %cst_180 = arith.constant dense<0.000000e+00> : vector<2x5xf32>
    %512 = tpu.matmul %511, %458, %cst_180 {dimension_numbers = #tpu.dot_dimension_numbers<[1], [0], [0], [1], [0, 0, 1, 1], [], []>} : vector<2x32xf32>, vector<32x5xf32>, vector<2x5xf32> -> vector<2x5xf32>
    %513 = arith.addf %509, %512 : vector<2x5xf32>
    %514 = vector.broadcast %456 : vector<1x5xf32> to vector<2x5xf32>
    %515 = arith.addf %513, %514 : vector<2x5xf32>
    %c4_181 = arith.constant 4 : index
    %c0_182 = arith.constant 0 : index
    %c0_183 = arith.constant 0 : index
    %516 = vector.load %arg7[%c4_181, %c0_182, %c0_183] : memref<8x2x5xf32, #tpu.memory_space<vmem>>, vector<1x2x5xf32>
    %517 = vector.shape_cast %516 : vector<1x2x5xf32> to vector<2x5xf32>
    %518 = vector.shape_cast %515 : vector<2x5xf32> to vector<1x2x5xf32>
    tpu.vector_store %arg7[%c4_181, %c0_182, %c0_183], %518 {strides = array<i32>} : memref<8x2x5xf32, #tpu.memory_space<vmem>>, vector<1x2x5xf32>,
    %c5 = arith.constant 5 : index
    %c0_184 = arith.constant 0 : index
    %c0_185 = arith.constant 0 : index
    %519 = vector.load %arg8[%c5, %c0_184, %c0_185] : memref<8x2x32xf32, #tpu.memory_space<vmem>>, vector<1x2x32xf32>
    %520 = vector.shape_cast %519 : vector<1x2x32xf32> to vector<2x32xf32>
    %cst_186 = arith.constant dense<0.000000e+00> : vector<2x5xf32>
    %521 = tpu.matmul %520, %457, %cst_186 {dimension_numbers = #tpu.dot_dimension_numbers<[1], [0], [0], [1], [0, 0, 1, 1], [], []>} : vector<2x32xf32>, vector<32x5xf32>, vector<2x5xf32> -> vector<2x5xf32>
    %c5_187 = arith.constant 5 : index
    %c0_188 = arith.constant 0 : index
    %c0_189 = arith.constant 0 : index
    %522 = vector.load %arg9[%c5_187, %c0_188, %c0_189] : memref<8x2x32xf32, #tpu.memory_space<vmem>>, vector<1x2x32xf32>
    %523 = vector.shape_cast %522 : vector<1x2x32xf32> to vector<2x32xf32>
    %cst_190 = arith.constant dense<0.000000e+00> : vector<2x5xf32>
    %524 = tpu.matmul %523, %458, %cst_190 {dimension_numbers = #tpu.dot_dimension_numbers<[1], [0], [0], [1], [0, 0, 1, 1], [], []>} : vector<2x32xf32>, vector<32x5xf32>, vector<2x5xf32> -> vector<2x5xf32>
    %525 = arith.addf %521, %524 : vector<2x5xf32>
    %526 = vector.broadcast %456 : vector<1x5xf32> to vector<2x5xf32>
    %527 = arith.addf %525, %526 : vector<2x5xf32>
    %c5_191 = arith.constant 5 : index
    %c0_192 = arith.constant 0 : index
    %c0_193 = arith.constant 0 : index
    %528 = vector.load %arg7[%c5_191, %c0_192, %c0_193] : memref<8x2x5xf32, #tpu.memory_space<vmem>>, vector<1x2x5xf32>
    %529 = vector.shape_cast %528 : vector<1x2x5xf32> to vector<2x5xf32>
    %530 = vector.shape_cast %527 : vector<2x5xf32> to vector<1x2x5xf32>
    tpu.vector_store %arg7[%c5_191, %c0_192, %c0_193], %530 {strides = array<i32>} : memref<8x2x5xf32, #tpu.memory_space<vmem>>, vector<1x2x5xf32>,
    %c6 = arith.constant 6 : index
    %c0_194 = arith.constant 0 : index
    %c0_195 = arith.constant 0 : index
    %531 = vector.load %arg8[%c6, %c0_194, %c0_195] : memref<8x2x32xf32, #tpu.memory_space<vmem>>, vector<1x2x32xf32>
    %532 = vector.shape_cast %531 : vector<1x2x32xf32> to vector<2x32xf32>
    %cst_196 = arith.constant dense<0.000000e+00> : vector<2x5xf32>
    %533 = tpu.matmul %532, %457, %cst_196 {dimension_numbers = #tpu.dot_dimension_numbers<[1], [0], [0], [1], [0, 0, 1, 1], [], []>} : vector<2x32xf32>, vector<32x5xf32>, vector<2x5xf32> -> vector<2x5xf32>
    %c6_197 = arith.constant 6 : index
    %c0_198 = arith.constant 0 : index
    %c0_199 = arith.constant 0 : index
    %534 = vector.load %arg9[%c6_197, %c0_198, %c0_199] : memref<8x2x32xf32, #tpu.memory_space<vmem>>, vector<1x2x32xf32>
    %535 = vector.shape_cast %534 : vector<1x2x32xf32> to vector<2x32xf32>
    %cst_200 = arith.constant dense<0.000000e+00> : vector<2x5xf32>
    %536 = tpu.matmul %535, %458, %cst_200 {dimension_numbers = #tpu.dot_dimension_numbers<[1], [0], [0], [1], [0, 0, 1, 1], [], []>} : vector<2x32xf32>, vector<32x5xf32>, vector<2x5xf32> -> vector<2x5xf32>
    %537 = arith.addf %533, %536 : vector<2x5xf32>
    %538 = vector.broadcast %456 : vector<1x5xf32> to vector<2x5xf32>
    %539 = arith.addf %537, %538 : vector<2x5xf32>
    %c6_201 = arith.constant 6 : index
    %c0_202 = arith.constant 0 : index
    %c0_203 = arith.constant 0 : index
    %540 = vector.load %arg7[%c6_201, %c0_202, %c0_203] : memref<8x2x5xf32, #tpu.memory_space<vmem>>, vector<1x2x5xf32>
    %541 = vector.shape_cast %540 : vector<1x2x5xf32> to vector<2x5xf32>
    %542 = vector.shape_cast %539 : vector<2x5xf32> to vector<1x2x5xf32>
    tpu.vector_store %arg7[%c6_201, %c0_202, %c0_203], %542 {strides = array<i32>} : memref<8x2x5xf32, #tpu.memory_space<vmem>>, vector<1x2x5xf32>,
    %c7 = arith.constant 7 : index
    %c0_204 = arith.constant 0 : index
    %c0_205 = arith.constant 0 : index
    %543 = vector.load %arg8[%c7, %c0_204, %c0_205] : memref<8x2x32xf32, #tpu.memory_space<vmem>>, vector<1x2x32xf32>
    %544 = vector.shape_cast %543 : vector<1x2x32xf32> to vector<2x32xf32>
    %cst_206 = arith.constant dense<0.000000e+00> : vector<2x5xf32>
    %545 = tpu.matmul %544, %457, %cst_206 {dimension_numbers = #tpu.dot_dimension_numbers<[1], [0], [0], [1], [0, 0, 1, 1], [], []>} : vector<2x32xf32>, vector<32x5xf32>, vector<2x5xf32> -> vector<2x5xf32>
    %c7_207 = arith.constant 7 : index
    %c0_208 = arith.constant 0 : index
    %c0_209 = arith.constant 0 : index
    %546 = vector.load %arg9[%c7_207, %c0_208, %c0_209] : memref<8x2x32xf32, #tpu.memory_space<vmem>>, vector<1x2x32xf32>
    %547 = vector.shape_cast %546 : vector<1x2x32xf32> to vector<2x32xf32>
    %cst_210 = arith.constant dense<0.000000e+00> : vector<2x5xf32>
    %548 = tpu.matmul %547, %458, %cst_210 {dimension_numbers = #tpu.dot_dimension_numbers<[1], [0], [0], [1], [0, 0, 1, 1], [], []>} : vector<2x32xf32>, vector<32x5xf32>, vector<2x5xf32> -> vector<2x5xf32>
    %549 = arith.addf %545, %548 : vector<2x5xf32>
    %550 = vector.broadcast %456 : vector<1x5xf32> to vector<2x5xf32>
    %551 = arith.addf %549, %550 : vector<2x5xf32>
    %c7_211 = arith.constant 7 : index
    %c0_212 = arith.constant 0 : index
    %c0_213 = arith.constant 0 : index
    %552 = vector.load %arg7[%c7_211, %c0_212, %c0_213] : memref<8x2x5xf32, #tpu.memory_space<vmem>>, vector<1x2x5xf32>
    %553 = vector.shape_cast %552 : vector<1x2x5xf32> to vector<2x5xf32>
    %554 = vector.shape_cast %551 : vector<2x5xf32> to vector<1x2x5xf32>
    tpu.vector_store %arg7[%c7_211, %c0_212, %c0_213], %554 {strides = array<i32>} : memref<8x2x5xf32, #tpu.memory_space<vmem>>, vector<1x2x5xf32>,
    return
  }
}

</mosaic_0001>

<llo_original>
// kernel: spatial_temporal_forward.2
$region0: #{spatial_temporal_forward.2}
  #allocation0 [shape = 'u32[]', space=smem, size = 0x4, offset = 0x4, fixed_abs, tag = 'smem constant byte address 0x4 - core index']
  #allocation1 [shape = 'u32[144,128]{1,0:T(1,128)}', space=vmem, size = 0x12000, scoped, tag = 'internal scratch']
  %s0 = inlined_call_operand.vmem [shape: f32[27,4096], index: 0, kind: input, shape index: {}]
  %s1 = inlined_call_operand.vmem [shape: f32[4096,16], index: 1, kind: input, shape index: {}]
  %s2 = inlined_call_operand.vmem [shape: f32[8,27], index: 2, kind: input, shape index: {}]
  %s3 = inlined_call_operand.vmem [shape: f32[8,1], index: 3, kind: input, shape index: {}]
  %s4 = inlined_call_operand.vmem [shape: f32[32,8], index: 4, kind: input, shape index: {}]
  %s5 = inlined_call_operand.vmem [shape: f32[32,1], index: 5, kind: input, shape index: {}]
  %s6 = inlined_call_operand.vmem [shape: f32[32,16], index: 6, kind: output, shape index: {}]
  %s7 = sld [smem:[#allocation0]]
  $region34: #{spatial_temporal_forward.2} parent=0
    _
  %s9 = ssub.s32 1, %s7
  %s10 = scalar_select 0, %s9, %s7
  // Predicated region
  $region2: #{spatial_temporal_forward.2} parent=0 // pred_check
    _
  $region3: #{spatial_temporal_forward.2} parent=0 // pred_check_branch
    %12 = sbr.rel (0) target = $region5
  $region4: #{spatial_temporal_forward.2} parent=0 // pred_region
    _
  $region5: #{spatial_temporal_forward.2} parent=0 // pred_fallthru
    _
  // Predicated region
  $region6: #{spatial_temporal_forward.2} parent=0 // pred_check
    _
  $region7: #{spatial_temporal_forward.2} parent=0 // pred_check_branch
    %14 = sbr.rel (0) target = $region9
  $region8: #{spatial_temporal_forward.2} parent=0 // pred_region
    _
  $region9: #{spatial_temporal_forward.2} parent=0 // pred_fallthru
    _
  // Predicated region
  $region10: #{spatial_temporal_forward.2} parent=0 // pred_check
    _
  $region11: #{spatial_temporal_forward.2} parent=0 // pred_check_branch
    %16 = sbr.rel (0) target = $region13
  $region12: #{spatial_temporal_forward.2} parent=0 // pred_region
    _
  $region13: #{spatial_temporal_forward.2} parent=0 // pred_fallthru
    _
  // Predicated region
  $region14: #{spatial_temporal_forward.2} parent=0 // pred_check
    _
  $region15: #{spatial_temporal_forward.2} parent=0 // pred_check_branch
    %18 = sbr.rel (0) target = $region17
  $region16: #{spatial_temporal_forward.2} parent=0 // pred_region
    _
  $region17: #{spatial_temporal_forward.2} parent=0 // pred_fallthru
    _
  // Predicated region
  $region18: #{spatial_temporal_forward.2} parent=0 // pred_check
    _
  $region19: #{spatial_temporal_forward.2} parent=0 // pred_check_branch
    %20 = sbr.rel (0) target = $region21
  $region20: #{spatial_temporal_forward.2} parent=0 // pred_region
    _
  $region21: #{spatial_temporal_forward.2} parent=0 // pred_fallthru
    _
  // Predicated region
  $region22: #{spatial_temporal_forward.2} parent=0 // pred_check
    _
  $region23: #{spatial_temporal_forward.2} parent=0 // pred_check_branch
    %22 = sbr.rel (0) target = $region25
  $region24: #{spatial_temporal_forward.2} parent=0 // pred_region
    _
  $region25: #{spatial_temporal_forward.2} parent=0 // pred_fallthru
    _
  %v23 = vld [vmem:[%s2] sm:$0xff]
  %v24 = vld [vmem:[%s0] sm:$0xff]
  %v25 = vld [vmem:[%s0 + $0x8] sm:$0xff]
  %v26 = vld [vmem:[%s0 + $0x10] sm:$0xff]
  %v27 = vld [vmem:[%s0 + $0x18] sm:$0xff]
  %v28 = vld [vmem:[%s0 + $0x20] sm:$0xff]
  %v29 = vld [vmem:[%s0 + $0x28] sm:$0xff]
  %v30 = vld [vmem:[%s0 + $0x30] sm:$0xff]
  %v31 = vld [vmem:[%s0 + $0x38] sm:$0xff]
  %v32 = vld [vmem:[%s0 + $0x40] sm:$0xff]
  %v33 = vld [vmem:[%s0 + $0x48] sm:$0xff]
  %v34 = vld [vmem:[%s0 + $0x50] sm:$0xff]
  %v35 = vld [vmem:[%s0 + $0x58] sm:$0xff]
  %v36 = vld [vmem:[%s0 + $0x60] sm:$0xff]
  %v37 = vld [vmem:[%s0 + $0x68] sm:$0xff]
  %v38 = vld [vmem:[%s0 + $0x70] sm:$0xff]
  %v39 = vld [vmem:[%s0 + $0x78] sm:$0xff]
  %v40 = vld [vmem:[%s0 + $0x80] sm:$0xff]
  %v41 = vld [vmem:[%s0 + $0x88] sm:$0xff]
  %v42 = vld [vmem:[%s0 + $0x90] sm:$0xff]
  %v43 = vld [vmem:[%s0 + $0x98] sm:$0xff]
  %v44 = vld [vmem:[%s0 + $0xa0] sm:$0xff]
  %v45 = vld [vmem:[%s0 + $0xa8] sm:$0xff]
  %v46 = vld [vmem:[%s0 + $0xb0] sm:$0xff]
  %v47 = vld [vmem:[%s0 + $0xb8] sm:$0xff]
  %v48 = vld [vmem:[%s0 + $0xc0] sm:$0xff]
  %v49 = vld [vmem:[%s0 + $0xc8] sm:$0xff]
  %v50 = vld [vmem:[%s0 + $0xd0] sm:$0xff]
  %v51 = vld [vmem:[%s0 + $0xd8] sm:$0xff]
  %v52 = vld [vmem:[%s0 + $0xe0] sm:$0xff]
  %v53 = vld [vmem:[%s0 + $0xe8] sm:$0xff]
  %v54 = vld [vmem:[%s0 + $0xf0] sm:$0xff]
  %v55 = vld [vmem:[%s0 + $0xf8] sm:$0xff]
  %v56 = vld [vmem:[%s0 + $0x100] sm:$0xff]
  %v57 = vld [vmem:[%s0 + $0x108] sm:$0xff]
  %v58 = vld [vmem:[%s0 + $0x110] sm:$0xff]
  %v59 = vld [vmem:[%s0 + $0x118] sm:$0xff]
  %v60 = vld [vmem:[%s0 + $0x120] sm:$0xff]
  %v61 = vld [vmem:[%s0 + $0x128] sm:$0xff]
  %v62 = vld [vmem:[%s0 + $0x130] sm:$0xff]
  %v63 = vld [vmem:[%s0 + $0x138] sm:$0xff]
  %v64 = vld [vmem:[%s0 + $0x140] sm:$0xff]
  %v65 = vld [vmem:[%s0 + $0x148] sm:$0xff]
  %v66 = vld [vmem:[%s0 + $0x150] sm:$0xff]
  %v67 = vld [vmem:[%s0 + $0x158] sm:$0xff]
  %v68 = vld [vmem:[%s0 + $0x160] sm:$0xff]
  %v69 = vld [vmem:[%s0 + $0x168] sm:$0xff]
  %v70 = vld [vmem:[%s0 + $0x170] sm:$0xff]
  %v71 = vld [vmem:[%s0 + $0x178] sm:$0xff]
  %v72 = vld [vmem:[%s0 + $0x180] sm:$0xff]
  %v73 = vld [vmem:[%s0 + $0x188] sm:$0xff]
  %v74 = vld [vmem:[%s0 + $0x190] sm:$0xff]
  %v75 = vld [vmem:[%s0 + $0x198] sm:$0xff]
  %v76 = vld [vmem:[%s0 + $0x1a0] sm:$0xff]
  %v77 = vld [vmem:[%s0 + $0x1a8] sm:$0xff]
  %v78 = vld [vmem:[%s0 + $0x1b0] sm:$0xff]
  %v79 = vld [vmem:[%s0 + $0x1b8] sm:$0xff]
  %v80 = vld [vmem:[%s0 + $0x1c0] sm:$0xff]
  %v81 = vld [vmem:[%s0 + $0x1c8] sm:$0xff]
  %v82 = vld [vmem:[%s0 + $0x1d0] sm:$0xff]
  %v83 = vld [vmem:[%s0 + $0x1d8] sm:$0xff]
  %v84 = vld [vmem:[%s0 + $0x1e0] sm:$0xff]
  %v85 = vld [vmem:[%s0 + $0x1e8] sm:$0xff]
  %v86 = vld [vmem:[%s0 + $0x1f0] sm:$0xff]
  %v87 = vld [vmem:[%s0 + $0x1f8] sm:$0xff]
  %v88 = vld [vmem:[%s0 + $0x200] sm:$0xff]
  %v89 = vld [vmem:[%s0 + $0x208] sm:$0xff]
  %v90 = vld [vmem:[%s0 + $0x210] sm:$0xff]
  %v91 = vld [vmem:[%s0 + $0x218] sm:$0xff]
  %v92 = vld [vmem:[%s0 + $0x220] sm:$0xff]
  %v93 = vld [vmem:[%s0 + $0x228] sm:$0xff]
  %v94 = vld [vmem:[%s0 + $0x230] sm:$0xff]
  %v95 = vld [vmem:[%s0 + $0x238] sm:$0xff]
  %v96 = vld [vmem:[%s0 + $0x240] sm:$0xff]
  %v97 = vld [vmem:[%s0 + $0x248] sm:$0xff]
  %v98 = vld [vmem:[%s0 + $0x250] sm:$0xff]
  %v99 = vld [vmem:[%s0 + $0x258] sm:$0xff]
  %v100 = vld [vmem:[%s0 + $0x260] sm:$0xff]
  %v101 = vld [vmem:[%s0 + $0x268] sm:$0xff]
  %v102 = vld [vmem:[%s0 + $0x270] sm:$0xff]
  %v103 = vld [vmem:[%s0 + $0x278] sm:$0xff]
  %v104 = vld [vmem:[%s0 + $0x280] sm:$0xff]
  %v105 = vld [vmem:[%s0 + $0x288] sm:$0xff]
  %v106 = vld [vmem:[%s0 + $0x290] sm:$0xff]
  %v107 = vld [vmem:[%s0 + $0x298] sm:$0xff]
  %v108 = vld [vmem:[%s0 + $0x2a0] sm:$0xff]
  %v109 = vld [vmem:[%s0 + $0x2a8] sm:$0xff]
  %v110 = vld [vmem:[%s0 + $0x2b0] sm:$0xff]
  %v111 = vld [vmem:[%s0 + $0x2b8] sm:$0xff]
  %v112 = vld [vmem:[%s0 + $0x2c0] sm:$0xff]
  %v113 = vld [vmem:[%s0 + $0x2c8] sm:$0xff]
  %v114 = vld [vmem:[%s0 + $0x2d0] sm:$0xff]
  %v115 = vld [vmem:[%s0 + $0x2d8] sm:$0xff]
  %v116 = vld [vmem:[%s0 + $0x2e0] sm:$0xff]
  %v117 = vld [vmem:[%s0 + $0x2e8] sm:$0xff]
  %v118 = vld [vmem:[%s0 + $0x2f0] sm:$0xff]
  %v119 = vld [vmem:[%s0 + $0x2f8] sm:$0xff]
  %v120 = vld [vmem:[%s0 + $0x300] sm:$0x7]
  %v121 = vld [vmem:[%s0 + $0x308] sm:$0x7]
  %v122 = vld [vmem:[%s0 + $0x310] sm:$0x7]
  %v123 = vld [vmem:[%s0 + $0x318] sm:$0x7]
  %v124 = vld [vmem:[%s0 + $0x320] sm:$0x7]
  %v125 = vld [vmem:[%s0 + $0x328] sm:$0x7]
  %v126 = vld [vmem:[%s0 + $0x330] sm:$0x7]
  %v127 = vld [vmem:[%s0 + $0x338] sm:$0x7]
  %v128 = vld [vmem:[%s0 + $0x340] sm:$0x7]
  %v129 = vld [vmem:[%s0 + $0x348] sm:$0x7]
  %v130 = vld [vmem:[%s0 + $0x350] sm:$0x7]
  %v131 = vld [vmem:[%s0 + $0x358] sm:$0x7]
  %v132 = vld [vmem:[%s0 + $0x360] sm:$0x7]
  %v133 = vld [vmem:[%s0 + $0x368] sm:$0x7]
  %v134 = vld [vmem:[%s0 + $0x370] sm:$0x7]
  %v135 = vld [vmem:[%s0 + $0x378] sm:$0x7]
  %v136 = vld [vmem:[%s0 + $0x380] sm:$0x7]
  %v137 = vld [vmem:[%s0 + $0x388] sm:$0x7]
  %v138 = vld [vmem:[%s0 + $0x390] sm:$0x7]
  %v139 = vld [vmem:[%s0 + $0x398] sm:$0x7]
  %v140 = vld [vmem:[%s0 + $0x3a0] sm:$0x7]
  %v141 = vld [vmem:[%s0 + $0x3a8] sm:$0x7]
  %v142 = vld [vmem:[%s0 + $0x3b0] sm:$0x7]
  %v143 = vld [vmem:[%s0 + $0x3b8] sm:$0x7]
  %v144 = vld [vmem:[%s0 + $0x3c0] sm:$0x7]
  %v145 = vld [vmem:[%s0 + $0x3c8] sm:$0x7]
  %v146 = vld [vmem:[%s0 + $0x3d0] sm:$0x7]
  %v147 = vld [vmem:[%s0 + $0x3d8] sm:$0x7]
  %v148 = vld [vmem:[%s0 + $0x3e0] sm:$0x7]
  %v149 = vld [vmem:[%s0 + $0x3e8] sm:$0x7]
  %v150 = vld [vmem:[%s0 + $0x3f0] sm:$0x7]
  %v151 = vld [vmem:[%s0 + $0x3f8] sm:$0x7]
  %v152 = vld [vmem:[%s3] sm:$0xff]
  %154 = vset.pattern.permute.xlu0 0
  %155 = vperm.xlu0 %154, %v152
  %v156 = vpop.permute.xlu0 %155
  %vm158 = vcmask 220160
  %v160 = vsel %vm158, %v23, 0
  %vm162 = vcmask 1042432
  %v164 = vsel %vm162, %v120, 0
  %v167 = vsel %vm162, %v121, 0
  %v170 = vsel %vm162, %v122, 0
  %v173 = vsel %vm162, %v123, 0
  %v176 = vsel %vm162, %v124, 0
  %v179 = vsel %vm162, %v125, 0
  %v182 = vsel %vm162, %v126, 0
  %v185 = vsel %vm162, %v127, 0
  %v188 = vsel %vm162, %v128, 0
  %v191 = vsel %vm162, %v129, 0
  %v194 = vsel %vm162, %v130, 0
  %v197 = vsel %vm162, %v131, 0
  %v200 = vsel %vm162, %v132, 0
  %v203 = vsel %vm162, %v133, 0
  %v206 = vsel %vm162, %v134, 0
  %v209 = vsel %vm162, %v135, 0
  %v212 = vsel %vm162, %v136, 0
  %v215 = vsel %vm162, %v137, 0
  %v218 = vsel %vm162, %v138, 0
  %v221 = vsel %vm162, %v139, 0
  %v224 = vsel %vm162, %v140, 0
  %v227 = vsel %vm162, %v141, 0
  %v230 = vsel %vm162, %v142, 0
  %v233 = vsel %vm162, %v143, 0
  %v236 = vsel %vm162, %v144, 0
  %v239 = vsel %vm162, %v145, 0
  %v242 = vsel %vm162, %v146, 0
  %v245 = vsel %vm162, %v147, 0
  %v248 = vsel %vm162, %v148, 0
  %v251 = vsel %vm162, %v149, 0
  %v254 = vsel %vm162, %v150, 0
  %v257 = vsel %vm162, %v151, 0
  %259 = vmatprep.subr.mxu0 0.0
  %260 = vmatpush1.msra.mxu0 0.0
  %261 = vmatprep.subr.mxu0 0.0
  %262 = vmatpush1.msra.mxu0 0.0
  %263 = vmatprep.subr.mxu0 0.0
  %264 = vmatpush1.msra.mxu0 0.0
  %265 = vmatprep.subr.mxu0 0.0
  %266 = vmatpush1.msra.mxu0 0.0
  %267 = vmatprep.subr.mxu0 0.0
  %268 = vmatpush1.msra.mxu0 0.0
  %269 = vmatprep.subr.mxu0 0.0
  %270 = vmatpush1.msra.mxu0 0.0
  %271 = vmatprep.subr.mxu0 0.0
  %272 = vmatpush1.msra.mxu0 0.0
  %273 = vmatprep.subr.mxu0 0.0
  %274 = vmatpush1.msra.mxu0 0.0
  %275 = vmatprep.subr.mxu0 0.0
  %276 = vmatpush1.msra.mxu0 0.0
  %277 = vmatprep.subr.mxu0 0.0
  %278 = vmatpush1.msra.mxu0 0.0
  %279 = vmatprep.subr.mxu0 0.0
  %280 = vmatpush1.msra.mxu0 0.0
  %281 = vmatprep.subr.mxu0 0.0
  %282 = vmatpush1.msra.mxu0 0.0
  %283 = vmatprep.subr.mxu0 %v167
  %284 = vmatpush1.msra.mxu0 %v164
  %285 = vmatprep.subr.mxu0 %v89
  %286 = vmatpush1.msra.mxu0 %v88
  %287 = vmatprep.subr.mxu0 %v57
  %288 = vmatpush1.msra.mxu0 %v56
  %289 = vmatprep.subr.mxu0 %v25
  %290 = vmatpush1.msra.mxu0 %v24
  %291 = vmatprep.subr.mxu0 0.0
  %292 = vmatpush2.msra.mxu0 0.0
  %293 = vmatprep.subr.mxu0 0.0
  %294 = vmatpush2.msra.mxu0 0.0
  %295 = vmatprep.subr.mxu0 0.0
  %296 = vmatpush2.msra.mxu0 0.0
  %297 = vmatprep.subr.mxu0 0.0
  %298 = vmatpush2.msra.mxu0 0.0
  %299 = vmatprep.subr.mxu0 0.0
  %300 = vmatpush2.msra.mxu0 0.0
  %301 = vmatprep.subr.mxu0 0.0
  %302 = vmatpush2.msra.mxu0 0.0
  %303 = vmatprep.subr.mxu0 0.0
  %304 = vmatpush2.msra.mxu0 0.0
  %305 = vmatprep.subr.mxu0 0.0
  %306 = vmatpush2.msra.mxu0 0.0
  %307 = vmatprep.subr.mxu0 0.0
  %308 = vmatpush2.msra.mxu0 0.0
  %309 = vmatprep.subr.mxu0 0.0
  %310 = vmatpush2.msra.mxu0 0.0
  %311 = vmatprep.subr.mxu0 0.0
  %312 = vmatpush2.msra.mxu0 0.0
  %313 = vmatprep.subr.mxu0 0.0
  %314 = vmatpush2.msra.mxu0 0.0
  %315 = vmatprep.subr.mxu0 0.0
  %316 = vmatpush2.msra.mxu0 0.0
  %317 = vmatprep.subr.mxu0 0.0
  %318 = vmatpush2.msra.mxu0 0.0
  %319 = vmatprep.subr.mxu0 0.0
  %320 = vmatpush2.msra.mxu0 0.0
  %321 = vmatprep.subr.mxu0 0.0
  %322 = vmatpush2.msra.mxu0 0.0
  %323 = vmatprep.mubr.f32.mxu0 0.0
  %324 = vmatmul.mubr.f32.gmra.mxu0 %v160
  %v325 = vpop.f32.mrf.mxu0
  %v326 = vadd.f32 %v156, %v325
  %v327 = vpop.f32.mrf.mxu0
  %v328 = vadd.f32 %v156, %v327
  %329 = vdwg.mxu0
  %330 = vmatprep.subr.mxu0 0.0
  %331 = vmatpush1.msra.mxu0 0.0
  %332 = vmatprep.subr.mxu0 0.0
  %333 = vmatpush1.msra.mxu0 0.0
  %334 = vmatprep.subr.mxu0 0.0
  %335 = vmatpush1.msra.mxu0 0.0
  %336 = vmatprep.subr.mxu0 0.0
  %337 = vmatpush1.msra.mxu0 0.0
  %338 = vmatprep.subr.mxu0 0.0
  %339 = vmatpush1.msra.mxu0 0.0
  %340 = vmatprep.subr.mxu0 0.0
  %341 = vmatpush1.msra.mxu0 0.0
  %342 = vmatprep.subr.mxu0 0.0
  %343 = vmatpush1.msra.mxu0 0.0
  %344 = vmatprep.subr.mxu0 0.0
  %345 = vmatpush1.msra.mxu0 0.0
  %346 = vmatprep.subr.mxu0 0.0
  %347 = vmatpush1.msra.mxu0 0.0
  %348 = vmatprep.subr.mxu0 0.0
  %349 = vmatpush1.msra.mxu0 0.0
  %350 = vmatprep.subr.mxu0 0.0
  %351 = vmatpush1.msra.mxu0 0.0
  %352 = vmatprep.subr.mxu0 0.0
  %353 = vmatpush1.msra.mxu0 0.0
  %354 = vmatprep.subr.mxu0 %v173
  %355 = vmatpush1.msra.mxu0 %v170
  %356 = vmatprep.subr.mxu0 %v91
  %357 = vmatpush1.msra.mxu0 %v90
  %358 = vmatprep.subr.mxu0 %v59
  %359 = vmatpush1.msra.mxu0 %v58
  %360 = vmatprep.subr.mxu0 %v27
  %361 = vmatpush1.msra.mxu0 %v26
  %362 = vmatprep.subr.mxu0 0.0
  %363 = vmatpush2.msra.mxu0 0.0
  %364 = vmatprep.subr.mxu0 0.0
  %365 = vmatpush2.msra.mxu0 0.0
  %366 = vmatprep.subr.mxu0 0.0
  %367 = vmatpush2.msra.mxu0 0.0
  %368 = vmatprep.subr.mxu0 0.0
  %369 = vmatpush2.msra.mxu0 0.0
  %370 = vmatprep.subr.mxu0 0.0
  %371 = vmatpush2.msra.mxu0 0.0
  %372 = vmatprep.subr.mxu0 0.0
  %373 = vmatpush2.msra.mxu0 0.0
  %374 = vmatprep.subr.mxu0 0.0
  %375 = vmatpush2.msra.mxu0 0.0
  %376 = vmatprep.subr.mxu0 0.0
  %377 = vmatpush2.msra.mxu0 0.0
  %378 = vmatprep.subr.mxu0 0.0
  %379 = vmatpush2.msra.mxu0 0.0
  %380 = vmatprep.subr.mxu0 0.0
  %381 = vmatpush2.msra.mxu0 0.0
  %382 = vmatprep.subr.mxu0 0.0
  %383 = vmatpush2.msra.mxu0 0.0
  %384 = vmatprep.subr.mxu0 0.0
  %385 = vmatpush2.msra.mxu0 0.0
  %386 = vmatprep.subr.mxu0 0.0
  %387 = vmatpush2.msra.mxu0 0.0
  %388 = vmatprep.subr.mxu0 0.0
  %389 = vmatpush2.msra.mxu0 0.0
  %390 = vmatprep.subr.mxu0 0.0
  %391 = vmatpush2.msra.mxu0 0.0
  %392 = vmatprep.subr.mxu0 0.0
  %393 = vmatpush2.msra.mxu0 0.0
  %394 = vmatprep.mubr.f32.mxu0 0.0
  %395 = vmatmul.mubr.f32.gmra.mxu0 %v160
  %v396 = vpop.f32.mrf.mxu0
  %v397 = vadd.f32 %v156, %v396
  %v398 = vpop.f32.mrf.mxu0
  %v399 = vadd.f32 %v156, %v398
  %400 = vdwg.mxu0
  %401 = vmatprep.subr.mxu0 0.0
  %402 = vmatpush1.msra.mxu0 0.0
  %403 = vmatprep.subr.mxu0 0.0
  %404 = vmatpush1.msra.mxu0 0.0
  %405 = vmatprep.subr.mxu0 0.0
  %406 = vmatpush1.msra.mxu0 0.0
  %407 = vmatprep.subr.mxu0 0.0
  %408 = vmatpush1.msra.mxu0 0.0
  %409 = vmatprep.subr.mxu0 0.0
  %410 = vmatpush1.msra.mxu0 0.0
  %411 = vmatprep.subr.mxu0 0.0
  %412 = vmatpush1.msra.mxu0 0.0
  %413 = vmatprep.subr.mxu0 0.0
  %414 = vmatpush1.msra.mxu0 0.0
  %415 = vmatprep.subr.mxu0 0.0
  %416 = vmatpush1.msra.mxu0 0.0
  %417 = vmatprep.subr.mxu0 0.0
  %418 = vmatpush1.msra.mxu0 0.0
  %419 = vmatprep.subr.mxu0 0.0
  %420 = vmatpush1.msra.mxu0 0.0
  %421 = vmatprep.subr.mxu0 0.0
  %422 = vmatpush1.msra.mxu0 0.0
  %423 = vmatprep.subr.mxu0 0.0
  %424 = vmatpush1.msra.mxu0 0.0
  %425 = vmatprep.subr.mxu0 %v179
  %426 = vmatpush1.msra.mxu0 %v176
  %427 = vmatprep.subr.mxu0 %v93
  %428 = vmatpush1.msra.mxu0 %v92
  %429 = vmatprep.subr.mxu0 %v61
  %430 = vmatpush1.msra.mxu0 %v60
  %431 = vmatprep.subr.mxu0 %v29
  %432 = vmatpush1.msra.mxu0 %v28
  %433 = vmatprep.subr.mxu0 0.0
  %434 = vmatpush2.msra.mxu0 0.0
  %435 = vmatprep.subr.mxu0 0.0
  %436 = vmatpush2.msra.mxu0 0.0
  %437 = vmatprep.subr.mxu0 0.0
  %438 = vmatpush2.msra.mxu0 0.0
  %439 = vmatprep.subr.mxu0 0.0
  %440 = vmatpush2.msra.mxu0 0.0
  %441 = vmatprep.subr.mxu0 0.0
  %442 = vmatpush2.msra.mxu0 0.0
  %443 = vmatprep.subr.mxu0 0.0
  %444 = vmatpush2.msra.mxu0 0.0
  %445 = vmatprep.subr.mxu0 0.0
  %446 = vmatpush2.msra.mxu0 0.0
  %447 = vmatprep.subr.mxu0 0.0
  %448 = vmatpush2.msra.mxu0 0.0
  %449 = vmatprep.subr.mxu0 0.0
  %450 = vmatpush2.msra.mxu0 0.0
  %451 = vmatprep.subr.mxu0 0.0
  %452 = vmatpush2.msra.mxu0 0.0
  %453 = vmatprep.subr.mxu0 0.0
  %454 = vmatpush2.msra.mxu0 0.0
  %455 = vmatprep.subr.mxu0 0.0
  %456 = vmatpush2.msra.mxu0 0.0
  %457 = vmatprep.subr.mxu0 0.0
  %458 = vmatpush2.msra.mxu0 0.0
  %459 = vmatprep.subr.mxu0 0.0
  %460 = vmatpush2.msra.mxu0 0.0
  %461 = vmatprep.subr.mxu0 0.0
  %462 = vmatpush2.msra.mxu0 0.0
  %463 = vmatprep.subr.mxu0 0.0
  %464 = vmatpush2.msra.mxu0 0.0
  %465 = vmatprep.mubr.f32.mxu0 0.0
  %466 = vmatmul.mubr.f32.gmra.mxu0 %v160
  %v467 = vpop.f32.mrf.mxu0
  %v468 = vadd.f32 %v156, %v467
  %v469 = vpop.f32.mrf.mxu0
  %v470 = vadd.f32 %v156, %v469
  %471 = vdwg.mxu0
  %472 = vmatprep.subr.mxu0 0.0
  %473 = vmatpush1.msra.mxu0 0.0
  %474 = vmatprep.subr.mxu0 0.0
  %475 = vmatpush1.msra.mxu0 0.0
  %476 = vmatprep.subr.mxu0 0.0
  %477 = vmatpush1.msra.mxu0 0.0
  %478 = vmatprep.subr.mxu0 0.0
  %479 = vmatpush1.msra.mxu0 0.0
  %480 = vmatprep.subr.mxu0 0.0
  %481 = vmatpush1.msra.mxu0 0.0
  %482 = vmatprep.subr.mxu0 0.0
  %483 = vmatpush1.msra.mxu0 0.0
  %484 = vmatprep.subr.mxu0 0.0
  %485 = vmatpush1.msra.mxu0 0.0
  %486 = vmatprep.subr.mxu0 0.0
  %487 = vmatpush1.msra.mxu0 0.0
  %488 = vmatprep.subr.mxu0 0.0
  %489 = vmatpush1.msra.mxu0 0.0
  %490 = vmatprep.subr.mxu0 0.0
  %491 = vmatpush1.msra.mxu0 0.0
  %492 = vmatprep.subr.mxu0 0.0
  %493 = vmatpush1.msra.mxu0 0.0
  %494 = vmatprep.subr.mxu0 0.0
  %495 = vmatpush1.msra.mxu0 0.0
  %496 = vmatprep.subr.mxu0 %v185
  %497 = vmatpush1.msra.mxu0 %v182
  %498 = vmatprep.subr.mxu0 %v95
  %499 = vmatpush1.msra.mxu0 %v94
  %500 = vmatprep.subr.mxu0 %v63
  %501 = vmatpush1.msra.mxu0 %v62
  %502 = vmatprep.subr.mxu0 %v31
  %503 = vmatpush1.msra.mxu0 %v30
  %504 = vmatprep.subr.mxu0 0.0
  %505 = vmatpush2.msra.mxu0 0.0
  %506 = vmatprep.subr.mxu0 0.0
  %507 = vmatpush2.msra.mxu0 0.0
  %508 = vmatprep.subr.mxu0 0.0
  %509 = vmatpush2.msra.mxu0 0.0
  %510 = vmatprep.subr.mxu0 0.0
  %511 = vmatpush2.msra.mxu0 0.0
  %512 = vmatprep.subr.mxu0 0.0
  %513 = vmatpush2.msra.mxu0 0.0
  %514 = vmatprep.subr.mxu0 0.0
  %515 = vmatpush2.msra.mxu0 0.0
  %516 = vmatprep.subr.mxu0 0.0
  %517 = vmatpush2.msra.mxu0 0.0
  %518 = vmatprep.subr.mxu0 0.0
  %519 = vmatpush2.msra.mxu0 0.0
  %520 = vmatprep.subr.mxu0 0.0
  %521 = vmatpush2.msra.mxu0 0.0
  %522 = vmatprep.subr.mxu0 0.0
  %523 = vmatpush2.msra.mxu0 0.0
  %524 = vmatprep.subr.mxu0 0.0
  %525 = vmatpush2.msra.mxu0 0.0
  %526 = vmatprep.subr.mxu0 0.0
  %527 = vmatpush2.msra.mxu0 0.0
  %528 = vmatprep.subr.mxu0 0.0
  %529 = vmatpush2.msra.mxu0 0.0
  %530 = vmatprep.subr.mxu0 0.0
  %531 = vmatpush2.msra.mxu0 0.0
  %532 = vmatprep.subr.mxu0 0.0
  %533 = vmatpush2.msra.mxu0 0.0
  %534 = vmatprep.subr.mxu0 0.0
  %535 = vmatpush2.msra.mxu0 0.0
  %536 = vmatprep.mubr.f32.mxu0 0.0
  %537 = vmatmul.mubr.f32.gmra.mxu0 %v160
  %v538 = vpop.f32.mrf.mxu0
  %v539 = vadd.f32 %v156, %v538
  %v540 = vpop.f32.mrf.mxu0
  %v541 = vadd.f32 %v156, %v540
  %542 = vdwg.mxu0
  %543 = vmatprep.subr.mxu0 0.0
  %544 = vmatpush1.msra.mxu0 0.0
  %545 = vmatprep.subr.mxu0 0.0
  %546 = vmatpush1.msra.mxu0 0.0
  %547 = vmatprep.subr.mxu0 0.0
  %548 = vmatpush1.msra.mxu0 0.0
  %549 = vmatprep.subr.mxu0 0.0
  %550 = vmatpush1.msra.mxu0 0.0
  %551 = vmatprep.subr.mxu0 0.0
  %552 = vmatpush1.msra.mxu0 0.0
  %553 = vmatprep.subr.mxu0 0.0
  %554 = vmatpush1.msra.mxu0 0.0
  %555 = vmatprep.subr.mxu0 0.0
  %556 = vmatpush1.msra.mxu0 0.0
  %557 = vmatprep.subr.mxu0 0.0
  %558 = vmatpush1.msra.mxu0 0.0
  %559 = vmatprep.subr.mxu0 0.0
  %560 = vmatpush1.msra.mxu0 0.0
  %561 = vmatprep.subr.mxu0 0.0
  %562 = vmatpush1.msra.mxu0 0.0
  %563 = vmatprep.subr.mxu0 0.0
  %564 = vmatpush1.msra.mxu0 0.0
  %565 = vmatprep.subr.mxu0 0.0
  %566 = vmatpush1.msra.mxu0 0.0
  %567 = vmatprep.subr.mxu0 %v191
  %568 = vmatpush1.msra.mxu0 %v188
  %569 = vmatprep.subr.mxu0 %v97
  %570 = vmatpush1.msra.mxu0 %v96
  %571 = vmatprep.subr.mxu0 %v65
  %572 = vmatpush1.msra.mxu0 %v64
  %573 = vmatprep.subr.mxu0 %v33
  %574 = vmatpush1.msra.mxu0 %v32
  %575 = vmatprep.subr.mxu0 0.0
  %576 = vmatpush2.msra.mxu0 0.0
  %577 = vmatprep.subr.mxu0 0.0
  %578 = vmatpush2.msra.mxu0 0.0
  %579 = vmatprep.subr.mxu0 0.0
  %580 = vmatpush2.msra.mxu0 0.0
  %581 = vmatprep.subr.mxu0 0.0
  %582 = vmatpush2.msra.mxu0 0.0
  %583 = vmatprep.subr.mxu0 0.0
  %584 = vmatpush2.msra.mxu0 0.0
  %585 = vmatprep.subr.mxu0 0.0
  %586 = vmatpush2.msra.mxu0 0.0
  %587 = vmatprep.subr.mxu0 0.0
  %588 = vmatpush2.msra.mxu0 0.0
  %589 = vmatprep.subr.mxu0 0.0
  %590 = vmatpush2.msra.mxu0 0.0
  %591 = vmatprep.subr.mxu0 0.0
  %592 = vmatpush2.msra.mxu0 0.0
  %593 = vmatprep.subr.mxu0 0.0
  %594 = vmatpush2.msra.mxu0 0.0
  %595 = vmatprep.subr.mxu0 0.0
  %596 = vmatpush2.msra.mxu0 0.0
  %597 = vmatprep.subr.mxu0 0.0
  %598 = vmatpush2.msra.mxu0 0.0
  %599 = vmatprep.subr.mxu0 0.0
  %600 = vmatpush2.msra.mxu0 0.0
  %601 = vmatprep.subr.mxu0 0.0
  %602 = vmatpush2.msra.mxu0 0.0
  %603 = vmatprep.subr.mxu0 0.0
  %604 = vmatpush2.msra.mxu0 0.0
  %605 = vmatprep.subr.mxu0 0.0
  %606 = vmatpush2.msra.mxu0 0.0
  %607 = vmatprep.mubr.f32.mxu0 0.0
  %608 = vmatmul.mubr.f32.gmra.mxu0 %v160
  %v609 = vpop.f32.mrf.mxu0
  %v610 = vadd.f32 %v156, %v609
  %v611 = vpop.f32.mrf.mxu0
  %v612 = vadd.f32 %v156, %v611
  %613 = vdwg.mxu0
  %614 = vmatprep.subr.mxu0 0.0
  %615 = vmatpush1.msra.mxu0 0.0
  %616 = vmatprep.subr.mxu0 0.0
  %617 = vmatpush1.msra.mxu0 0.0
  %618 = vmatprep.subr.mxu0 0.0
  %619 = vmatpush1.msra.mxu0 0.0
  %620 = vmatprep.subr.mxu0 0.0
  %621 = vmatpush1.msra.mxu0 0.0
  %622 = vmatprep.subr.mxu0 0.0
  %623 = vmatpush1.msra.mxu0 0.0
  %624 = vmatprep.subr.mxu0 0.0
  %625 = vmatpush1.msra.mxu0 0.0
  %626 = vmatprep.subr.mxu0 0.0
  %627 = vmatpush1.msra.mxu0 0.0
  %628 = vmatprep.subr.mxu0 0.0
  %629 = vmatpush1.msra.mxu0 0.0
  %630 = vmatprep.subr.mxu0 0.0
  %631 = vmatpush1.msra.mxu0 0.0
  %632 = vmatprep.subr.mxu0 0.0
  %633 = vmatpush1.msra.mxu0 0.0
  %634 = vmatprep.subr.mxu0 0.0
  %635 = vmatpush1.msra.mxu0 0.0
  %636 = vmatprep.subr.mxu0 0.0
  %637 = vmatpush1.msra.mxu0 0.0
  %638 = vmatprep.subr.mxu0 %v197
  %639 = vmatpush1.msra.mxu0 %v194
  %640 = vmatprep.subr.mxu0 %v99
  %641 = vmatpush1.msra.mxu0 %v98
  %642 = vmatprep.subr.mxu0 %v67
  %643 = vmatpush1.msra.mxu0 %v66
  %644 = vmatprep.subr.mxu0 %v35
  %645 = vmatpush1.msra.mxu0 %v34
  %646 = vmatprep.subr.mxu0 0.0
  %647 = vmatpush2.msra.mxu0 0.0
  %648 = vmatprep.subr.mxu0 0.0
  %649 = vmatpush2.msra.mxu0 0.0
  %650 = vmatprep.subr.mxu0 0.0
  %651 = vmatpush2.msra.mxu0 0.0
  %652 = vmatprep.subr.mxu0 0.0
  %653 = vmatpush2.msra.mxu0 0.0
  %654 = vmatprep.subr.mxu0 0.0
  %655 = vmatpush2.msra.mxu0 0.0
  %656 = vmatprep.subr.mxu0 0.0
  %657 = vmatpush2.msra.mxu0 0.0
  %658 = vmatprep.subr.mxu0 0.0
  %659 = vmatpush2.msra.mxu0 0.0
  %660 = vmatprep.subr.mxu0 0.0
  %661 = vmatpush2.msra.mxu0 0.0
  %662 = vmatprep.subr.mxu0 0.0
  %663 = vmatpush2.msra.mxu0 0.0
  %664 = vmatprep.subr.mxu0 0.0
  %665 = vmatpush2.msra.mxu0 0.0
  %666 = vmatprep.subr.mxu0 0.0
  %667 = vmatpush2.msra.mxu0 0.0
  %668 = vmatprep.subr.mxu0 0.0
  %669 = vmatpush2.msra.mxu0 0.0
  %670 = vmatprep.subr.mxu0 0.0
  %671 = vmatpush2.msra.mxu0 0.0
  %672 = vmatprep.subr.mxu0 0.0
  %673 = vmatpush2.msra.mxu0 0.0
  %674 = vmatprep.subr.mxu0 0.0
  %675 = vmatpush2.msra.mxu0 0.0
  %676 = vmatprep.subr.mxu0 0.0
  %677 = vmatpush2.msra.mxu0 0.0
  %678 = vmatprep.mubr.f32.mxu0 0.0
  %679 = vmatmul.mubr.f32.gmra.mxu0 %v160
  %v680 = vpop.f32.mrf.mxu0
  %v681 = vadd.f32 %v156, %v680
  %v682 = vpop.f32.mrf.mxu0
  %v683 = vadd.f32 %v156, %v682
  %684 = vdwg.mxu0
  %685 = vmatprep.subr.mxu0 0.0
  %686 = vmatpush1.msra.mxu0 0.0
  %687 = vmatprep.subr.mxu0 0.0
  %688 = vmatpush1.msra.mxu0 0.0
  %689 = vmatprep.subr.mxu0 0.0
  %690 = vmatpush1.msra.mxu0 0.0
  %691 = vmatprep.subr.mxu0 0.0
  %692 = vmatpush1.msra.mxu0 0.0
  %693 = vmatprep.subr.mxu0 0.0
  %694 = vmatpush1.msra.mxu0 0.0
  %695 = vmatprep.subr.mxu0 0.0
  %696 = vmatpush1.msra.mxu0 0.0
  %697 = vmatprep.subr.mxu0 0.0
  %698 = vmatpush1.msra.mxu0 0.0
  %699 = vmatprep.subr.mxu0 0.0
  %700 = vmatpush1.msra.mxu0 0.0
  %701 = vmatprep.subr.mxu0 0.0
  %702 = vmatpush1.msra.mxu0 0.0
  %703 = vmatprep.subr.mxu0 0.0
  %704 = vmatpush1.msra.mxu0 0.0
  %705 = vmatprep.subr.mxu0 0.0
  %706 = vmatpush1.msra.mxu0 0.0
  %707 = vmatprep.subr.mxu0 0.0
  %708 = vmatpush1.msra.mxu0 0.0
  %709 = vmatprep.subr.mxu0 %v203
  %710 = vmatpush1.msra.mxu0 %v200
  %711 = vmatprep.subr.mxu0 %v101
  %712 = vmatpush1.msra.mxu0 %v100
  %713 = vmatprep.subr.mxu0 %v69
  %714 = vmatpush1.msra.mxu0 %v68
  %715 = vmatprep.subr.mxu0 %v37
  %716 = vmatpush1.msra.mxu0 %v36
  %717 = vmatprep.subr.mxu0 0.0
  %718 = vmatpush2.msra.mxu0 0.0
  %719 = vmatprep.subr.mxu0 0.0
  %720 = vmatpush2.msra.mxu0 0.0
  %721 = vmatprep.subr.mxu0 0.0
  %722 = vmatpush2.msra.mxu0 0.0
  %723 = vmatprep.subr.mxu0 0.0
  %724 = vmatpush2.msra.mxu0 0.0
  %725 = vmatprep.subr.mxu0 0.0
  %726 = vmatpush2.msra.mxu0 0.0
  %727 = vmatprep.subr.mxu0 0.0
  %728 = vmatpush2.msra.mxu0 0.0
  %729 = vmatprep.subr.mxu0 0.0
  %730 = vmatpush2.msra.mxu0 0.0
  %731 = vmatprep.subr.mxu0 0.0
  %732 = vmatpush2.msra.mxu0 0.0
  %733 = vmatprep.subr.mxu0 0.0
  %734 = vmatpush2.msra.mxu0 0.0
  %735 = vmatprep.subr.mxu0 0.0
  %736 = vmatpush2.msra.mxu0 0.0
  %737 = vmatprep.subr.mxu0 0.0
  %738 = vmatpush2.msra.mxu0 0.0
  %739 = vmatprep.subr.mxu0 0.0
  %740 = vmatpush2.msra.mxu0 0.0
  %741 = vmatprep.subr.mxu0 0.0
  %742 = vmatpush2.msra.mxu0 0.0
  %743 = vmatprep.subr.mxu0 0.0
  %744 = vmatpush2.msra.mxu0 0.0
  %745 = vmatprep.subr.mxu0 0.0
  %746 = vmatpush2.msra.mxu0 0.0
  %747 = vmatprep.subr.mxu0 0.0
  %748 = vmatpush2.msra.mxu0 0.0
  %749 = vmatprep.mubr.f32.mxu0 0.0
  %750 = vmatmul.mubr.f32.gmra.mxu0 %v160
  %v751 = vpop.f32.mrf.mxu0
  %v752 = vadd.f32 %v156, %v751
  %v753 = vpop.f32.mrf.mxu0
  %v754 = vadd.f32 %v156, %v753
  %755 = vdwg.mxu0
  %756 = vmatprep.subr.mxu0 0.0
  %757 = vmatpush1.msra.mxu0 0.0
  %758 = vmatprep.subr.mxu0 0.0
  %759 = vmatpush1.msra.mxu0 0.0
  %760 = vmatprep.subr.mxu0 0.0
  %761 = vmatpush1.msra.mxu0 0.0
  %762 = vmatprep.subr.mxu0 0.0
  %763 = vmatpush1.msra.mxu0 0.0
  %764 = vmatprep.subr.mxu0 0.0
  %765 = vmatpush1.msra.mxu0 0.0
  %766 = vmatprep.subr.mxu0 0.0
  %767 = vmatpush1.msra.mxu0 0.0
  %768 = vmatprep.subr.mxu0 0.0
  %769 = vmatpush1.msra.mxu0 0.0
  %770 = vmatprep.subr.mxu0 0.0
  %771 = vmatpush1.msra.mxu0 0.0
  %772 = vmatprep.subr.mxu0 0.0
  %773 = vmatpush1.msra.mxu0 0.0
  %774 = vmatprep.subr.mxu0 0.0
  %775 = vmatpush1.msra.mxu0 0.0
  %776 = vmatprep.subr.mxu0 0.0
  %777 = vmatpush1.msra.mxu0 0.0
  %778 = vmatprep.subr.mxu0 0.0
  %779 = vmatpush1.msra.mxu0 0.0
  %780 = vmatprep.subr.mxu0 %v209
  %781 = vmatpush1.msra.mxu0 %v206
  %782 = vmatprep.subr.mxu0 %v103
  %783 = vmatpush1.msra.mxu0 %v102
  %784 = vmatprep.subr.mxu0 %v71
  %785 = vmatpush1.msra.mxu0 %v70
  %786 = vmatprep.subr.mxu0 %v39
  %787 = vmatpush1.msra.mxu0 %v38
  %788 = vmatprep.subr.mxu0 0.0
  %789 = vmatpush2.msra.mxu0 0.0
  %790 = vmatprep.subr.mxu0 0.0
  %791 = vmatpush2.msra.mxu0 0.0
  %792 = vmatprep.subr.mxu0 0.0
  %793 = vmatpush2.msra.mxu0 0.0
  %794 = vmatprep.subr.mxu0 0.0
  %795 = vmatpush2.msra.mxu0 0.0
  %796 = vmatprep.subr.mxu0 0.0
  %797 = vmatpush2.msra.mxu0 0.0
  %798 = vmatprep.subr.mxu0 0.0
  %799 = vmatpush2.msra.mxu0 0.0
  %800 = vmatprep.subr.mxu0 0.0
  %801 = vmatpush2.msra.mxu0 0.0
  %802 = vmatprep.subr.mxu0 0.0
  %803 = vmatpush2.msra.mxu0 0.0
  %804 = vmatprep.subr.mxu0 0.0
  %805 = vmatpush2.msra.mxu0 0.0
  %806 = vmatprep.subr.mxu0 0.0
  %807 = vmatpush2.msra.mxu0 0.0
  %808 = vmatprep.subr.mxu0 0.0
  %809 = vmatpush2.msra.mxu0 0.0
  %810 = vmatprep.subr.mxu0 0.0
  %811 = vmatpush2.msra.mxu0 0.0
  %812 = vmatprep.subr.mxu0 0.0
  %813 = vmatpush2.msra.mxu0 0.0
  %814 = vmatprep.subr.mxu0 0.0
  %815 = vmatpush2.msra.mxu0 0.0
  %816 = vmatprep.subr.mxu0 0.0
  %817 = vmatpush2.msra.mxu0 0.0
  %818 = vmatprep.subr.mxu0 0.0
  %819 = vmatpush2.msra.mxu0 0.0
  %820 = vmatprep.mubr.f32.mxu0 0.0
  %821 = vmatmul.mubr.f32.gmra.mxu0 %v160
  %v822 = vpop.f32.mrf.mxu0
  %v823 = vadd.f32 %v156, %v822
  %v824 = vpop.f32.mrf.mxu0
  %v825 = vadd.f32 %v156, %v824
  %826 = vdwg.mxu0
  %827 = vmatprep.subr.mxu0 0.0
  %828 = vmatpush1.msra.mxu0 0.0
  %829 = vmatprep.subr.mxu0 0.0
  %830 = vmatpush1.msra.mxu0 0.0
  %831 = vmatprep.subr.mxu0 0.0
  %832 = vmatpush1.msra.mxu0 0.0
  %833 = vmatprep.subr.mxu0 0.0
  %834 = vmatpush1.msra.mxu0 0.0
  %835 = vmatprep.subr.mxu0 0.0
  %836 = vmatpush1.msra.mxu0 0.0
  %837 = vmatprep.subr.mxu0 0.0
  %838 = vmatpush1.msra.mxu0 0.0
  %839 = vmatprep.subr.mxu0 0.0
  %840 = vmatpush1.msra.mxu0 0.0
  %841 = vmatprep.subr.mxu0 0.0
  %842 = vmatpush1.msra.mxu0 0.0
  %843 = vmatprep.subr.mxu0 0.0
  %844 = vmatpush1.msra.mxu0 0.0
  %845 = vmatprep.subr.mxu0 0.0
  %846 = vmatpush1.msra.mxu0 0.0
  %847 = vmatprep.subr.mxu0 0.0
  %848 = vmatpush1.msra.mxu0 0.0
  %849 = vmatprep.subr.mxu0 0.0
  %850 = vmatpush1.msra.mxu0 0.0
  %851 = vmatprep.subr.mxu0 %v215
  %852 = vmatpush1.msra.mxu0 %v212
  %853 = vmatprep.subr.mxu0 %v105
  %854 = vmatpush1.msra.mxu0 %v104
  %855 = vmatprep.subr.mxu0 %v73
  %856 = vmatpush1.msra.mxu0 %v72
  %857 = vmatprep.subr.mxu0 %v41
  %858 = vmatpush1.msra.mxu0 %v40
  %859 = vmatprep.subr.mxu0 0.0
  %860 = vmatpush2.msra.mxu0 0.0
  %861 = vmatprep.subr.mxu0 0.0
  %862 = vmatpush2.msra.mxu0 0.0
  %863 = vmatprep.subr.mxu0 0.0
  %864 = vmatpush2.msra.mxu0 0.0
  %865 = vmatprep.subr.mxu0 0.0
  %866 = vmatpush2.msra.mxu0 0.0
  %867 = vmatprep.subr.mxu0 0.0
  %868 = vmatpush2.msra.mxu0 0.0
  %869 = vmatprep.subr.mxu0 0.0
  %870 = vmatpush2.msra.mxu0 0.0
  %871 = vmatprep.subr.mxu0 0.0
  %872 = vmatpush2.msra.mxu0 0.0
  %873 = vmatprep.subr.mxu0 0.0
  %874 = vmatpush2.msra.mxu0 0.0
  %875 = vmatprep.subr.mxu0 0.0
  %876 = vmatpush2.msra.mxu0 0.0
  %877 = vmatprep.subr.mxu0 0.0
  %878 = vmatpush2.msra.mxu0 0.0
  %879 = vmatprep.subr.mxu0 0.0
  %880 = vmatpush2.msra.mxu0 0.0
  %881 = vmatprep.subr.mxu0 0.0
  %882 = vmatpush2.msra.mxu0 0.0
  %883 = vmatprep.subr.mxu0 0.0
  %884 = vmatpush2.msra.mxu0 0.0
  %885 = vmatprep.subr.mxu0 0.0
  %886 = vmatpush2.msra.mxu0 0.0
  %887 = vmatprep.subr.mxu0 0.0
  %888 = vmatpush2.msra.mxu0 0.0
  %889 = vmatprep.subr.mxu0 0.0
  %890 = vmatpush2.msra.mxu0 0.0
  %891 = vmatprep.mubr.f32.mxu0 0.0
  %892 = vmatmul.mubr.f32.gmra.mxu0 %v160
  %v893 = vpop.f32.mrf.mxu0
  %v894 = vadd.f32 %v156, %v893
  %v895 = vpop.f32.mrf.mxu0
  %v896 = vadd.f32 %v156, %v895
  %897 = vdwg.mxu0
  %898 = vmatprep.subr.mxu0 0.0
  %899 = vmatpush1.msra.mxu0 0.0
  %900 = vmatprep.subr.mxu0 0.0
  %901 = vmatpush1.msra.mxu0 0.0
  %902 = vmatprep.subr.mxu0 0.0
  %903 = vmatpush1.msra.mxu0 0.0
  %904 = vmatprep.subr.mxu0 0.0
  %905 = vmatpush1.msra.mxu0 0.0
  %906 = vmatprep.subr.mxu0 0.0
  %907 = vmatpush1.msra.mxu0 0.0
  %908 = vmatprep.subr.mxu0 0.0
  %909 = vmatpush1.msra.mxu0 0.0
  %910 = vmatprep.subr.mxu0 0.0
  %911 = vmatpush1.msra.mxu0 0.0
  %912 = vmatprep.subr.mxu0 0.0
  %913 = vmatpush1.msra.mxu0 0.0
  %914 = vmatprep.subr.mxu0 0.0
  %915 = vmatpush1.msra.mxu0 0.0
  %916 = vmatprep.subr.mxu0 0.0
  %917 = vmatpush1.msra.mxu0 0.0
  %918 = vmatprep.subr.mxu0 0.0
  %919 = vmatpush1.msra.mxu0 0.0
  %920 = vmatprep.subr.mxu0 0.0
  %921 = vmatpush1.msra.mxu0 0.0
  %922 = vmatprep.subr.mxu0 %v221
  %923 = vmatpush1.msra.mxu0 %v218
  %924 = vmatprep.subr.mxu0 %v107
  %925 = vmatpush1.msra.mxu0 %v106
  %926 = vmatprep.subr.mxu0 %v75
  %927 = vmatpush1.msra.mxu0 %v74
  %928 = vmatprep.subr.mxu0 %v43
  %929 = vmatpush1.msra.mxu0 %v42
  %930 = vmatprep.subr.mxu0 0.0
  %931 = vmatpush2.msra.mxu0 0.0
  %932 = vmatprep.subr.mxu0 0.0
  %933 = vmatpush2.msra.mxu0 0.0
  %934 = vmatprep.subr.mxu0 0.0
  %935 = vmatpush2.msra.mxu0 0.0
  %936 = vmatprep.subr.mxu0 0.0
  %937 = vmatpush2.msra.mxu0 0.0
  %938 = vmatprep.subr.mxu0 0.0
  %939 = vmatpush2.msra.mxu0 0.0
  %940 = vmatprep.subr.mxu0 0.0
  %941 = vmatpush2.msra.mxu0 0.0
  %942 = vmatprep.subr.mxu0 0.0
  %943 = vmatpush2.msra.mxu0 0.0
  %944 = vmatprep.subr.mxu0 0.0
  %945 = vmatpush2.msra.mxu0 0.0
  %946 = vmatprep.subr.mxu0 0.0
  %947 = vmatpush2.msra.mxu0 0.0
  %948 = vmatprep.subr.mxu0 0.0
  %949 = vmatpush2.msra.mxu0 0.0
  %950 = vmatprep.subr.mxu0 0.0
  %951 = vmatpush2.msra.mxu0 0.0
  %952 = vmatprep.subr.mxu0 0.0
  %953 = vmatpush2.msra.mxu0 0.0
  %954 = vmatprep.subr.mxu0 0.0
  %955 = vmatpush2.msra.mxu0 0.0
  %956 = vmatprep.subr.mxu0 0.0
  %957 = vmatpush2.msra.mxu0 0.0
  %958 = vmatprep.subr.mxu0 0.0
  %959 = vmatpush2.msra.mxu0 0.0
  %960 = vmatprep.subr.mxu0 0.0
  %961 = vmatpush2.msra.mxu0 0.0
  %962 = vmatprep.mubr.f32.mxu0 0.0
  %963 = vmatmul.mubr.f32.gmra.mxu0 %v160
  %v964 = vpop.f32.mrf.mxu0
  %v965 = vadd.f32 %v156, %v964
  %v966 = vpop.f32.mrf.mxu0
  %v967 = vadd.f32 %v156, %v966
  %968 = vdwg.mxu0
  %969 = vmatprep.subr.mxu0 0.0
  %970 = vmatpush1.msra.mxu0 0.0
  %971 = vmatprep.subr.mxu0 0.0
  %972 = vmatpush1.msra.mxu0 0.0
  %973 = vmatprep.subr.mxu0 0.0
  %974 = vmatpush1.msra.mxu0 0.0
  %975 = vmatprep.subr.mxu0 0.0
  %976 = vmatpush1.msra.mxu0 0.0
  %977 = vmatprep.subr.mxu0 0.0
  %978 = vmatpush1.msra.mxu0 0.0
  %979 = vmatprep.subr.mxu0 0.0
  %980 = vmatpush1.msra.mxu0 0.0
  %981 = vmatprep.subr.mxu0 0.0
  %982 = vmatpush1.msra.mxu0 0.0
  %983 = vmatprep.subr.mxu0 0.0
  %984 = vmatpush1.msra.mxu0 0.0
  %985 = vmatprep.subr.mxu0 0.0
  %986 = vmatpush1.msra.mxu0 0.0
  %987 = vmatprep.subr.mxu0 0.0
  %988 = vmatpush1.msra.mxu0 0.0
  %989 = vmatprep.subr.mxu0 0.0
  %990 = vmatpush1.msra.mxu0 0.0
  %991 = vmatprep.subr.mxu0 0.0
  %992 = vmatpush1.msra.mxu0 0.0
  %993 = vmatprep.subr.mxu0 %v227
  %994 = vmatpush1.msra.mxu0 %v224
  %995 = vmatprep.subr.mxu0 %v109
  %996 = vmatpush1.msra.mxu0 %v108
  %997 = vmatprep.subr.mxu0 %v77
  %998 = vmatpush1.msra.mxu0 %v76
  %999 = vmatprep.subr.mxu0 %v45
  %1000 = vmatpush1.msra.mxu0 %v44
  %1001 = vmatprep.subr.mxu0 0.0
  %1002 = vmatpush2.msra.mxu0 0.0
  %1003 = vmatprep.subr.mxu0 0.0
  %1004 = vmatpush2.msra.mxu0 0.0
  %1005 = vmatprep.subr.mxu0 0.0
  %1006 = vmatpush2.msra.mxu0 0.0
  %1007 = vmatprep.subr.mxu0 0.0
  %1008 = vmatpush2.msra.mxu0 0.0
  %1009 = vmatprep.subr.mxu0 0.0
  %1010 = vmatpush2.msra.mxu0 0.0
  %1011 = vmatprep.subr.mxu0 0.0
  %1012 = vmatpush2.msra.mxu0 0.0
  %1013 = vmatprep.subr.mxu0 0.0
  %1014 = vmatpush2.msra.mxu0 0.0
  %1015 = vmatprep.subr.mxu0 0.0
  %1016 = vmatpush2.msra.mxu0 0.0
  %1017 = vmatprep.subr.mxu0 0.0
  %1018 = vmatpush2.msra.mxu0 0.0
  %1019 = vmatprep.subr.mxu0 0.0
  %1020 = vmatpush2.msra.mxu0 0.0
  %1021 = vmatprep.subr.mxu0 0.0
  %1022 = vmatpush2.msra.mxu0 0.0
  %1023 = vmatprep.subr.mxu0 0.0
  %1024 = vmatpush2.msra.mxu0 0.0
  %1025 = vmatprep.subr.mxu0 0.0
  %1026 = vmatpush2.msra.mxu0 0.0
  %1027 = vmatprep.subr.mxu0 0.0
  %1028 = vmatpush2.msra.mxu0 0.0
  %1029 = vmatprep.subr.mxu0 0.0
  %1030 = vmatpush2.msra.mxu0 0.0
  %1031 = vmatprep.subr.mxu0 0.0
  %1032 = vmatpush2.msra.mxu0 0.0
  %1033 = vmatprep.mubr.f32.mxu0 0.0
  %1034 = vmatmul.mubr.f32.gmra.mxu0 %v160
  %v1035 = vpop.f32.mrf.mxu0
  %v1036 = vadd.f32 %v156, %v1035
  %v1037 = vpop.f32.mrf.mxu0
  %v1038 = vadd.f32 %v156, %v1037
  %1039 = vdwg.mxu0
  %1040 = vmatprep.subr.mxu0 0.0
  %1041 = vmatpush1.msra.mxu0 0.0
  %1042 = vmatprep.subr.mxu0 0.0
  %1043 = vmatpush1.msra.mxu0 0.0
  %1044 = vmatprep.subr.mxu0 0.0
  %1045 = vmatpush1.msra.mxu0 0.0
  %1046 = vmatprep.subr.mxu0 0.0
  %1047 = vmatpush1.msra.mxu0 0.0
  %1048 = vmatprep.subr.mxu0 0.0
  %1049 = vmatpush1.msra.mxu0 0.0
  %1050 = vmatprep.subr.mxu0 0.0
  %1051 = vmatpush1.msra.mxu0 0.0
  %1052 = vmatprep.subr.mxu0 0.0
  %1053 = vmatpush1.msra.mxu0 0.0
  %1054 = vmatprep.subr.mxu0 0.0
  %1055 = vmatpush1.msra.mxu0 0.0
  %1056 = vmatprep.subr.mxu0 0.0
  %1057 = vmatpush1.msra.mxu0 0.0
  %1058 = vmatprep.subr.mxu0 0.0
  %1059 = vmatpush1.msra.mxu0 0.0
  %1060 = vmatprep.subr.mxu0 0.0
  %1061 = vmatpush1.msra.mxu0 0.0
  %1062 = vmatprep.subr.mxu0 0.0
  %1063 = vmatpush1.msra.mxu0 0.0
  %1064 = vmatprep.subr.mxu0 %v233
  %1065 = vmatpush1.msra.mxu0 %v230
  %1066 = vmatprep.subr.mxu0 %v111
  %1067 = vmatpush1.msra.mxu0 %v110
  %1068 = vmatprep.subr.mxu0 %v79
  %1069 = vmatpush1.msra.mxu0 %v78
  %1070 = vmatprep.subr.mxu0 %v47
  %1071 = vmatpush1.msra.mxu0 %v46
  %1072 = vmatprep.subr.mxu0 0.0
  %1073 = vmatpush2.msra.mxu0 0.0
  %1074 = vmatprep.subr.mxu0 0.0
  %1075 = vmatpush2.msra.mxu0 0.0
  %1076 = vmatprep.subr.mxu0 0.0
  %1077 = vmatpush2.msra.mxu0 0.0
  %1078 = vmatprep.subr.mxu0 0.0
  %1079 = vmatpush2.msra.mxu0 0.0
  %1080 = vmatprep.subr.mxu0 0.0
  %1081 = vmatpush2.msra.mxu0 0.0
  %1082 = vmatprep.subr.mxu0 0.0
  %1083 = vmatpush2.msra.mxu0 0.0
  %1084 = vmatprep.subr.mxu0 0.0
  %1085 = vmatpush2.msra.mxu0 0.0
  %1086 = vmatprep.subr.mxu0 0.0
  %1087 = vmatpush2.msra.mxu0 0.0
  %1088 = vmatprep.subr.mxu0 0.0
  %1089 = vmatpush2.msra.mxu0 0.0
  %1090 = vmatprep.subr.mxu0 0.0
  %1091 = vmatpush2.msra.mxu0 0.0
  %1092 = vmatprep.subr.mxu0 0.0
  %1093 = vmatpush2.msra.mxu0 0.0
  %1094 = vmatprep.subr.mxu0 0.0
  %1095 = vmatpush2.msra.mxu0 0.0
  %1096 = vmatprep.subr.mxu0 0.0
  %1097 = vmatpush2.msra.mxu0 0.0
  %1098 = vmatprep.subr.mxu0 0.0
  %1099 = vmatpush2.msra.mxu0 0.0
  %1100 = vmatprep.subr.mxu0 0.0
  %1101 = vmatpush2.msra.mxu0 0.0
  %1102 = vmatprep.subr.mxu0 0.0
  %1103 = vmatpush2.msra.mxu0 0.0
  %1104 = vmatprep.mubr.f32.mxu0 0.0
  %1105 = vmatmul.mubr.f32.gmra.mxu0 %v160
  %v1106 = vpop.f32.mrf.mxu0
  %v1107 = vadd.f32 %v156, %v1106
  %v1108 = vpop.f32.mrf.mxu0
  %v1109 = vadd.f32 %v156, %v1108
  %1110 = vdwg.mxu0
  %1111 = vmatprep.subr.mxu0 0.0
  %1112 = vmatpush1.msra.mxu0 0.0
  %1113 = vmatprep.subr.mxu0 0.0
  %1114 = vmatpush1.msra.mxu0 0.0
  %1115 = vmatprep.subr.mxu0 0.0
  %1116 = vmatpush1.msra.mxu0 0.0
  %1117 = vmatprep.subr.mxu0 0.0
  %1118 = vmatpush1.msra.mxu0 0.0
  %1119 = vmatprep.subr.mxu0 0.0
  %1120 = vmatpush1.msra.mxu0 0.0
  %1121 = vmatprep.subr.mxu0 0.0
  %1122 = vmatpush1.msra.mxu0 0.0
  %1123 = vmatprep.subr.mxu0 0.0
  %1124 = vmatpush1.msra.mxu0 0.0
  %1125 = vmatprep.subr.mxu0 0.0
  %1126 = vmatpush1.msra.mxu0 0.0
  %1127 = vmatprep.subr.mxu0 0.0
  %1128 = vmatpush1.msra.mxu0 0.0
  %1129 = vmatprep.subr.mxu0 0.0
  %1130 = vmatpush1.msra.mxu0 0.0
  %1131 = vmatprep.subr.mxu0 0.0
  %1132 = vmatpush1.msra.mxu0 0.0
  %1133 = vmatprep.subr.mxu0 0.0
  %1134 = vmatpush1.msra.mxu0 0.0
  %1135 = vmatprep.subr.mxu0 %v239
  %1136 = vmatpush1.msra.mxu0 %v236
  %1137 = vmatprep.subr.mxu0 %v113
  %1138 = vmatpush1.msra.mxu0 %v112
  %1139 = vmatprep.subr.mxu0 %v81
  %1140 = vmatpush1.msra.mxu0 %v80
  %1141 = vmatprep.subr.mxu0 %v49
  %1142 = vmatpush1.msra.mxu0 %v48
  %1143 = vmatprep.subr.mxu0 0.0
  %1144 = vmatpush2.msra.mxu0 0.0
  %1145 = vmatprep.subr.mxu0 0.0
  %1146 = vmatpush2.msra.mxu0 0.0
  %1147 = vmatprep.subr.mxu0 0.0
  %1148 = vmatpush2.msra.mxu0 0.0
  %1149 = vmatprep.subr.mxu0 0.0
  %1150 = vmatpush2.msra.mxu0 0.0
  %1151 = vmatprep.subr.mxu0 0.0
  %1152 = vmatpush2.msra.mxu0 0.0
  %1153 = vmatprep.subr.mxu0 0.0
  %1154 = vmatpush2.msra.mxu0 0.0
  %1155 = vmatprep.subr.mxu0 0.0
  %1156 = vmatpush2.msra.mxu0 0.0
  %1157 = vmatprep.subr.mxu0 0.0
  %1158 = vmatpush2.msra.mxu0 0.0
  %1159 = vmatprep.subr.mxu0 0.0
  %1160 = vmatpush2.msra.mxu0 0.0
  %1161 = vmatprep.subr.mxu0 0.0
  %1162 = vmatpush2.msra.mxu0 0.0
  %1163 = vmatprep.subr.mxu0 0.0
  %1164 = vmatpush2.msra.mxu0 0.0
  %1165 = vmatprep.subr.mxu0 0.0
  %1166 = vmatpush2.msra.mxu0 0.0
  %1167 = vmatprep.subr.mxu0 0.0
  %1168 = vmatpush2.msra.mxu0 0.0
  %1169 = vmatprep.subr.mxu0 0.0
  %1170 = vmatpush2.msra.mxu0 0.0
  %1171 = vmatprep.subr.mxu0 0.0
  %1172 = vmatpush2.msra.mxu0 0.0
  %1173 = vmatprep.subr.mxu0 0.0
  %1174 = vmatpush2.msra.mxu0 0.0
  %1175 = vmatprep.mubr.f32.mxu0 0.0
  %1176 = vmatmul.mubr.f32.gmra.mxu0 %v160
  %v1177 = vpop.f32.mrf.mxu0
  %v1178 = vadd.f32 %v156, %v1177
  %v1179 = vpop.f32.mrf.mxu0
  %v1180 = vadd.f32 %v156, %v1179
  %1181 = vdwg.mxu0
  %1182 = vmatprep.subr.mxu0 0.0
  %1183 = vmatpush1.msra.mxu0 0.0
  %1184 = vmatprep.subr.mxu0 0.0
  %1185 = vmatpush1.msra.mxu0 0.0
  %1186 = vmatprep.subr.mxu0 0.0
  %1187 = vmatpush1.msra.mxu0 0.0
  %1188 = vmatprep.subr.mxu0 0.0
  %1189 = vmatpush1.msra.mxu0 0.0
  %1190 = vmatprep.subr.mxu0 0.0
  %1191 = vmatpush1.msra.mxu0 0.0
  %1192 = vmatprep.subr.mxu0 0.0
  %1193 = vmatpush1.msra.mxu0 0.0
  %1194 = vmatprep.subr.mxu0 0.0
  %1195 = vmatpush1.msra.mxu0 0.0
  %1196 = vmatprep.subr.mxu0 0.0
  %1197 = vmatpush1.msra.mxu0 0.0
  %1198 = vmatprep.subr.mxu0 0.0
  %1199 = vmatpush1.msra.mxu0 0.0
  %1200 = vmatprep.subr.mxu0 0.0
  %1201 = vmatpush1.msra.mxu0 0.0
  %1202 = vmatprep.subr.mxu0 0.0
  %1203 = vmatpush1.msra.mxu0 0.0
  %1204 = vmatprep.subr.mxu0 0.0
  %1205 = vmatpush1.msra.mxu0 0.0
  %1206 = vmatprep.subr.mxu0 %v245
  %1207 = vmatpush1.msra.mxu0 %v242
  %1208 = vmatprep.subr.mxu0 %v115
  %1209 = vmatpush1.msra.mxu0 %v114
  %1210 = vmatprep.subr.mxu0 %v83
  %1211 = vmatpush1.msra.mxu0 %v82
  %1212 = vmatprep.subr.mxu0 %v51
  %1213 = vmatpush1.msra.mxu0 %v50
  %1214 = vmatprep.subr.mxu0 0.0
  %1215 = vmatpush2.msra.mxu0 0.0
  %1216 = vmatprep.subr.mxu0 0.0
  %1217 = vmatpush2.msra.mxu0 0.0
  %1218 = vmatprep.subr.mxu0 0.0
  %1219 = vmatpush2.msra.mxu0 0.0
  %1220 = vmatprep.subr.mxu0 0.0
  %1221 = vmatpush2.msra.mxu0 0.0
  %1222 = vmatprep.subr.mxu0 0.0
  %1223 = vmatpush2.msra.mxu0 0.0
  %1224 = vmatprep.subr.mxu0 0.0
  %1225 = vmatpush2.msra.mxu0 0.0
  %1226 = vmatprep.subr.mxu0 0.0
  %1227 = vmatpush2.msra.mxu0 0.0
  %1228 = vmatprep.subr.mxu0 0.0
  %1229 = vmatpush2.msra.mxu0 0.0
  %1230 = vmatprep.subr.mxu0 0.0
  %1231 = vmatpush2.msra.mxu0 0.0
  %1232 = vmatprep.subr.mxu0 0.0
  %1233 = vmatpush2.msra.mxu0 0.0
  %1234 = vmatprep.subr.mxu0 0.0
  %1235 = vmatpush2.msra.mxu0 0.0
  %1236 = vmatprep.subr.mxu0 0.0
  %1237 = vmatpush2.msra.mxu0 0.0
  %1238 = vmatprep.subr.mxu0 0.0
  %1239 = vmatpush2.msra.mxu0 0.0
  %1240 = vmatprep.subr.mxu0 0.0
  %1241 = vmatpush2.msra.mxu0 0.0
  %1242 = vmatprep.subr.mxu0 0.0
  %1243 = vmatpush2.msra.mxu0 0.0
  %1244 = vmatprep.subr.mxu0 0.0
  %1245 = vmatpush2.msra.mxu0 0.0
  %1246 = vmatprep.mubr.f32.mxu0 0.0
  %1247 = vmatmul.mubr.f32.gmra.mxu0 %v160
  %v1248 = vpop.f32.mrf.mxu0
  %v1249 = vadd.f32 %v156, %v1248
  %v1250 = vpop.f32.mrf.mxu0
  %v1251 = vadd.f32 %v156, %v1250
  %1252 = vdwg.mxu0
  %1253 = vmatprep.subr.mxu0 0.0
  %1254 = vmatpush1.msra.mxu0 0.0
  %1255 = vmatprep.subr.mxu0 0.0
  %1256 = vmatpush1.msra.mxu0 0.0
  %1257 = vmatprep.subr.mxu0 0.0
  %1258 = vmatpush1.msra.mxu0 0.0
  %1259 = vmatprep.subr.mxu0 0.0
  %1260 = vmatpush1.msra.mxu0 0.0
  %1261 = vmatprep.subr.mxu0 0.0
  %1262 = vmatpush1.msra.mxu0 0.0
  %1263 = vmatprep.subr.mxu0 0.0
  %1264 = vmatpush1.msra.mxu0 0.0
  %1265 = vmatprep.subr.mxu0 0.0
  %1266 = vmatpush1.msra.mxu0 0.0
  %1267 = vmatprep.subr.mxu0 0.0
  %1268 = vmatpush1.msra.mxu0 0.0
  %1269 = vmatprep.subr.mxu0 0.0
  %1270 = vmatpush1.msra.mxu0 0.0
  %1271 = vmatprep.subr.mxu0 0.0
  %1272 = vmatpush1.msra.mxu0 0.0
  %1273 = vmatprep.subr.mxu0 0.0
  %1274 = vmatpush1.msra.mxu0 0.0
  %1275 = vmatprep.subr.mxu0 0.0
  %1276 = vmatpush1.msra.mxu0 0.0
  %1277 = vmatprep.subr.mxu0 %v251
  %1278 = vmatpush1.msra.mxu0 %v248
  %1279 = vmatprep.subr.mxu0 %v117
  %1280 = vmatpush1.msra.mxu0 %v116
  %1281 = vmatprep.subr.mxu0 %v85
  %1282 = vmatpush1.msra.mxu0 %v84
  %1283 = vmatprep.subr.mxu0 %v53
  %1284 = vmatpush1.msra.mxu0 %v52
  %1285 = vmatprep.subr.mxu0 0.0
  %1286 = vmatpush2.msra.mxu0 0.0
  %1287 = vmatprep.subr.mxu0 0.0
  %1288 = vmatpush2.msra.mxu0 0.0
  %1289 = vmatprep.subr.mxu0 0.0
  %1290 = vmatpush2.msra.mxu0 0.0
  %1291 = vmatprep.subr.mxu0 0.0
  %1292 = vmatpush2.msra.mxu0 0.0
  %1293 = vmatprep.subr.mxu0 0.0
  %1294 = vmatpush2.msra.mxu0 0.0
  %1295 = vmatprep.subr.mxu0 0.0
  %1296 = vmatpush2.msra.mxu0 0.0
  %1297 = vmatprep.subr.mxu0 0.0
  %1298 = vmatpush2.msra.mxu0 0.0
  %1299 = vmatprep.subr.mxu0 0.0
  %1300 = vmatpush2.msra.mxu0 0.0
  %1301 = vmatprep.subr.mxu0 0.0
  %1302 = vmatpush2.msra.mxu0 0.0
  %1303 = vmatprep.subr.mxu0 0.0
  %1304 = vmatpush2.msra.mxu0 0.0
  %1305 = vmatprep.subr.mxu0 0.0
  %1306 = vmatpush2.msra.mxu0 0.0
  %1307 = vmatprep.subr.mxu0 0.0
  %1308 = vmatpush2.msra.mxu0 0.0
  %1309 = vmatprep.subr.mxu0 0.0
  %1310 = vmatpush2.msra.mxu0 0.0
  %1311 = vmatprep.subr.mxu0 0.0
  %1312 = vmatpush2.msra.mxu0 0.0
  %1313 = vmatprep.subr.mxu0 0.0
  %1314 = vmatpush2.msra.mxu0 0.0
  %1315 = vmatprep.subr.mxu0 0.0
  %1316 = vmatpush2.msra.mxu0 0.0
  %1317 = vmatprep.mubr.f32.mxu0 0.0
  %1318 = vmatmul.mubr.f32.gmra.mxu0 %v160
  %v1319 = vpop.f32.mrf.mxu0
  %v1320 = vadd.f32 %v156, %v1319
  %v1321 = vpop.f32.mrf.mxu0
  %v1322 = vadd.f32 %v156, %v1321
  %1323 = vdwg.mxu0
  %1324 = vmatprep.subr.mxu0 0.0
  %1325 = vmatpush1.msra.mxu0 0.0
  %1326 = vmatprep.subr.mxu0 0.0
  %1327 = vmatpush1.msra.mxu0 0.0
  %1328 = vmatprep.subr.mxu0 0.0
  %1329 = vmatpush1.msra.mxu0 0.0
  %1330 = vmatprep.subr.mxu0 0.0
  %1331 = vmatpush1.msra.mxu0 0.0
  %1332 = vmatprep.subr.mxu0 0.0
  %1333 = vmatpush1.msra.mxu0 0.0
  %1334 = vmatprep.subr.mxu0 0.0
  %1335 = vmatpush1.msra.mxu0 0.0
  %1336 = vmatprep.subr.mxu0 0.0
  %1337 = vmatpush1.msra.mxu0 0.0
  %1338 = vmatprep.subr.mxu0 0.0
  %1339 = vmatpush1.msra.mxu0 0.0
  %1340 = vmatprep.subr.mxu0 0.0
  %1341 = vmatpush1.msra.mxu0 0.0
  %1342 = vmatprep.subr.mxu0 0.0
  %1343 = vmatpush1.msra.mxu0 0.0
  %1344 = vmatprep.subr.mxu0 0.0
  %1345 = vmatpush1.msra.mxu0 0.0
  %1346 = vmatprep.subr.mxu0 0.0
  %1347 = vmatpush1.msra.mxu0 0.0
  %1348 = vmatprep.subr.mxu0 %v257
  %1349 = vmatpush1.msra.mxu0 %v254
  %1350 = vmatprep.subr.mxu0 %v119
  %1351 = vmatpush1.msra.mxu0 %v118
  %1352 = vmatprep.subr.mxu0 %v87
  %1353 = vmatpush1.msra.mxu0 %v86
  %1354 = vmatprep.subr.mxu0 %v55
  %1355 = vmatpush1.msra.mxu0 %v54
  %1356 = vmatprep.subr.mxu0 0.0
  %1357 = vmatpush2.msra.mxu0 0.0
  %1358 = vmatprep.subr.mxu0 0.0
  %1359 = vmatpush2.msra.mxu0 0.0
  %1360 = vmatprep.subr.mxu0 0.0
  %1361 = vmatpush2.msra.mxu0 0.0
  %1362 = vmatprep.subr.mxu0 0.0
  %1363 = vmatpush2.msra.mxu0 0.0
  %1364 = vmatprep.subr.mxu0 0.0
  %1365 = vmatpush2.msra.mxu0 0.0
  %1366 = vmatprep.subr.mxu0 0.0
  %1367 = vmatpush2.msra.mxu0 0.0
  %1368 = vmatprep.subr.mxu0 0.0
  %1369 = vmatpush2.msra.mxu0 0.0
  %1370 = vmatprep.subr.mxu0 0.0
  %1371 = vmatpush2.msra.mxu0 0.0
  %1372 = vmatprep.subr.mxu0 0.0
  %1373 = vmatpush2.msra.mxu0 0.0
  %1374 = vmatprep.subr.mxu0 0.0
  %1375 = vmatpush2.msra.mxu0 0.0
  %1376 = vmatprep.subr.mxu0 0.0
  %1377 = vmatpush2.msra.mxu0 0.0
  %1378 = vmatprep.subr.mxu0 0.0
  %1379 = vmatpush2.msra.mxu0 0.0
  %1380 = vmatprep.subr.mxu0 0.0
  %1381 = vmatpush2.msra.mxu0 0.0
  %1382 = vmatprep.subr.mxu0 0.0
  %1383 = vmatpush2.msra.mxu0 0.0
  %1384 = vmatprep.subr.mxu0 0.0
  %1385 = vmatpush2.msra.mxu0 0.0
  %1386 = vmatprep.subr.mxu0 0.0
  %1387 = vmatpush2.msra.mxu0 0.0
  %1388 = vmatprep.mubr.f32.mxu0 0.0
  %1389 = vmatmul.mubr.f32.gmra.mxu0 %v160
  %v1390 = vpop.f32.mrf.mxu0
  %v1391 = vadd.f32 %v156, %v1390
  %v1392 = vpop.f32.mrf.mxu0
  %v1393 = vadd.f32 %v156, %v1392
  %1394 = vdwg.mxu0
  %v1395 = vmax.f32 %v326, 0.0
  %v1396 = vmax.f32 %v328, 0.0
  %v1397 = vmax.f32 %v397, 0.0
  %v1398 = vmax.f32 %v399, 0.0
  %v1399 = vmax.f32 %v468, 0.0
  %v1400 = vmax.f32 %v470, 0.0
  %v1401 = vmax.f32 %v539, 0.0
  %v1402 = vmax.f32 %v541, 0.0
  %v1403 = vmax.f32 %v610, 0.0
  %v1404 = vmax.f32 %v612, 0.0
  %v1405 = vmax.f32 %v681, 0.0
  %v1406 = vmax.f32 %v683, 0.0
  %v1407 = vmax.f32 %v752, 0.0
  %v1408 = vmax.f32 %v754, 0.0
  %v1409 = vmax.f32 %v823, 0.0
  %v1410 = vmax.f32 %v825, 0.0
  %v1411 = vmax.f32 %v894, 0.0
  %v1412 = vmax.f32 %v896, 0.0
  %v1413 = vmax.f32 %v965, 0.0
  %v1414 = vmax.f32 %v967, 0.0
  %v1415 = vmax.f32 %v1036, 0.0
  %v1416 = vmax.f32 %v1038, 0.0
  %v1417 = vmax.f32 %v1107, 0.0
  %v1418 = vmax.f32 %v1109, 0.0
  %v1419 = vmax.f32 %v1178, 0.0
  %v1420 = vmax.f32 %v1180, 0.0
  %v1421 = vmax.f32 %v1249, 0.0
  %v1422 = vmax.f32 %v1251, 0.0
  %v1423 = vmax.f32 %v1320, 0.0
  %v1424 = vmax.f32 %v1322, 0.0
  %v1425 = vmax.f32 %v1391, 0.0
  %v1426 = vmax.f32 %v1393, 0.0
  %v1427 = vld [vmem:[%s1] sm:$0xff]
  %v1428 = vld [vmem:[%s1 + $0x8] sm:$0xff]
  %v1429 = vld [vmem:[%s1 + $0x10] sm:$0xff]
  %v1430 = vld [vmem:[%s1 + $0x18] sm:$0xff]
  %v1431 = vld [vmem:[%s1 + $0x20] sm:$0xff]
  %v1432 = vld [vmem:[%s1 + $0x28] sm:$0xff]
  %v1433 = vld [vmem:[%s1 + $0x30] sm:$0xff]
  %v1434 = vld [vmem:[%s1 + $0x38] sm:$0xff]
  %v1435 = vld [vmem:[%s1 + $0x40] sm:$0xff]
  %v1436 = vld [vmem:[%s1 + $0x48] sm:$0xff]
  %v1437 = vld [vmem:[%s1 + $0x50] sm:$0xff]
  %v1438 = vld [vmem:[%s1 + $0x58] sm:$0xff]
  %v1439 = vld [vmem:[%s1 + $0x60] sm:$0xff]
  %v1440 = vld [vmem:[%s1 + $0x68] sm:$0xff]
  %v1441 = vld [vmem:[%s1 + $0x70] sm:$0xff]
  %v1442 = vld [vmem:[%s1 + $0x78] sm:$0xff]
  %v1443 = vld [vmem:[%s1 + $0x80] sm:$0xff]
  %v1444 = vld [vmem:[%s1 + $0x88] sm:$0xff]
  %v1445 = vld [vmem:[%s1 + $0x90] sm:$0xff]
  %v1446 = vld [vmem:[%s1 + $0x98] sm:$0xff]
  %v1447 = vld [vmem:[%s1 + $0xa0] sm:$0xff]
  %v1448 = vld [vmem:[%s1 + $0xa8] sm:$0xff]
  %v1449 = vld [vmem:[%s1 + $0xb0] sm:$0xff]
  %v1450 = vld [vmem:[%s1 + $0xb8] sm:$0xff]
  %v1451 = vld [vmem:[%s1 + $0xc0] sm:$0xff]
  %v1452 = vld [vmem:[%s1 + $0xc8] sm:$0xff]
  %v1453 = vld [vmem:[%s1 + $0xd0] sm:$0xff]
  %v1454 = vld [vmem:[%s1 + $0xd8] sm:$0xff]
  %v1455 = vld [vmem:[%s1 + $0xe0] sm:$0xff]
  %v1456 = vld [vmem:[%s1 + $0xe8] sm:$0xff]
  %v1457 = vld [vmem:[%s1 + $0xf0] sm:$0xff]
  %v1458 = vld [vmem:[%s1 + $0xf8] sm:$0xff]
  %v1459 = vld [vmem:[%s1 + $0x100] sm:$0xff]
  %v1460 = vld [vmem:[%s1 + $0x108] sm:$0xff]
  %v1461 = vld [vmem:[%s1 + $0x110] sm:$0xff]
  %v1462 = vld [vmem:[%s1 + $0x118] sm:$0xff]
  %v1463 = vld [vmem:[%s1 + $0x120] sm:$0xff]
  %v1464 = vld [vmem:[%s1 + $0x128] sm:$0xff]
  %v1465 = vld [vmem:[%s1 + $0x130] sm:$0xff]
  %v1466 = vld [vmem:[%s1 + $0x138] sm:$0xff]
  %v1467 = vld [vmem:[%s1 + $0x140] sm:$0xff]
  %v1468 = vld [vmem:[%s1 + $0x148] sm:$0xff]
  %v1469 = vld [vmem:[%s1 + $0x150] sm:$0xff]
  %v1470 = vld [vmem:[%s1 + $0x158] sm:$0xff]
  %v1471 = vld [vmem:[%s1 + $0x160] sm:$0xff]
  %v1472 = vld [vmem:[%s1 + $0x168] sm:$0xff]
  %v1473 = vld [vmem:[%s1 + $0x170] sm:$0xff]
  %v1474 = vld [vmem:[%s1 + $0x178] sm:$0xff]
  %v1475 = vld [vmem:[%s1 + $0x180] sm:$0xff]
  %v1476 = vld [vmem:[%s1 + $0x188] sm:$0xff]
  %v1477 = vld [vmem:[%s1 + $0x190] sm:$0xff]
  %v1478 = vld [vmem:[%s1 + $0x198] sm:$0xff]
  %v1479 = vld [vmem:[%s1 + $0x1a0] sm:$0xff]
  %v1480 = vld [vmem:[%s1 + $0x1a8] sm:$0xff]
  %v1481 = vld [vmem:[%s1 + $0x1b0] sm:$0xff]
  %v1482 = vld [vmem:[%s1 + $0x1b8] sm:$0xff]
  %v1483 = vld [vmem:[%s1 + $0x1c0] sm:$0xff]
  %v1484 = vld [vmem:[%s1 + $0x1c8] sm:$0xff]
  %v1485 = vld [vmem:[%s1 + $0x1d0] sm:$0xff]
  %v1486 = vld [vmem:[%s1 + $0x1d8] sm:$0xff]
  %v1487 = vld [vmem:[%s1 + $0x1e0] sm:$0xff]
  %v1488 = vld [vmem:[%s1 + $0x1e8] sm:$0xff]
  %v1489 = vld [vmem:[%s1 + $0x1f0] sm:$0xff]
  %v1490 = vld [vmem:[%s1 + $0x1f8] sm:$0xff]
  %v1491 = vld [vmem:[%s1 + $0x200] sm:$0xff]
  %v1492 = vld [vmem:[%s1 + $0x208] sm:$0xff]
  %v1493 = vld [vmem:[%s1 + $0x210] sm:$0xff]
  %v1494 = vld [vmem:[%s1 + $0x218] sm:$0xff]
  %v1495 = vld [vmem:[%s1 + $0x220] sm:$0xff]
  %v1496 = vld [vmem:[%s1 + $0x228] sm:$0xff]
  %v1497 = vld [vmem:[%s1 + $0x230] sm:$0xff]
  %v1498 = vld [vmem:[%s1 + $0x238] sm:$0xff]
  %v1499 = vld [vmem:[%s1 + $0x240] sm:$0xff]
  %v1500 = vld [vmem:[%s1 + $0x248] sm:$0xff]
  %v1501 = vld [vmem:[%s1 + $0x250] sm:$0xff]
  %v1502 = vld [vmem:[%s1 + $0x258] sm:$0xff]
  %v1503 = vld [vmem:[%s1 + $0x260] sm:$0xff]
  %v1504 = vld [vmem:[%s1 + $0x268] sm:$0xff]
  %v1505 = vld [vmem:[%s1 + $0x270] sm:$0xff]
  %v1506 = vld [vmem:[%s1 + $0x278] sm:$0xff]
  %v1507 = vld [vmem:[%s1 + $0x280] sm:$0xff]
  %v1508 = vld [vmem:[%s1 + $0x288] sm:$0xff]
  %v1509 = vld [vmem:[%s1 + $0x290] sm:$0xff]
  %v1510 = vld [vmem:[%s1 + $0x298] sm:$0xff]
  %v1511 = vld [vmem:[%s1 + $0x2a0] sm:$0xff]
  %v1512 = vld [vmem:[%s1 + $0x2a8] sm:$0xff]
  %v1513 = vld [vmem:[%s1 + $0x2b0] sm:$0xff]
  %v1514 = vld [vmem:[%s1 + $0x2b8] sm:$0xff]
  %v1515 = vld [vmem:[%s1 + $0x2c0] sm:$0xff]
  %v1516 = vld [vmem:[%s1 + $0x2c8] sm:$0xff]
  %v1517 = vld [vmem:[%s1 + $0x2d0] sm:$0xff]
  %v1518 = vld [vmem:[%s1 + $0x2d8] sm:$0xff]
  %v1519 = vld [vmem:[%s1 + $0x2e0] sm:$0xff]
  %v1520 = vld [vmem:[%s1 + $0x2e8] sm:$0xff]
  %v1521 = vld [vmem:[%s1 + $0x2f0] sm:$0xff]
  %v1522 = vld [vmem:[%s1 + $0x2f8] sm:$0xff]
  %v1523 = vld [vmem:[%s1 + $0x300] sm:$0xff]
  %v1524 = vld [vmem:[%s1 + $0x308] sm:$0xff]
  %v1525 = vld [vmem:[%s1 + $0x310] sm:$0xff]
  %v1526 = vld [vmem:[%s1 + $0x318] sm:$0xff]
  %v1527 = vld [vmem:[%s1 + $0x320] sm:$0xff]
  %v1528 = vld [vmem:[%s1 + $0x328] sm:$0xff]
  %v1529 = vld [vmem:[%s1 + $0x330] sm:$0xff]
  %v1530 = vld [vmem:[%s1 + $0x338] sm:$0xff]
  %v1531 = vld [vmem:[%s1 + $0x340] sm:$0xff]
  %v1532 = vld [vmem:[%s1 + $0x348] sm:$0xff]
  %v1533 = vld [vmem:[%s1 + $0x350] sm:$0xff]
  %v1534 = vld [vmem:[%s1 + $0x358] sm:$0xff]
  %v1535 = vld [vmem:[%s1 + $0x360] sm:$0xff]
  %v1536 = vld [vmem:[%s1 + $0x368] sm:$0xff]
  %v1537 = vld [vmem:[%s1 + $0x370] sm:$0xff]
  %v1538 = vld [vmem:[%s1 + $0x378] sm:$0xff]
  %v1539 = vld [vmem:[%s1 + $0x380] sm:$0xff]
  %v1540 = vld [vmem:[%s1 + $0x388] sm:$0xff]
  %v1541 = vld [vmem:[%s1 + $0x390] sm:$0xff]
  %v1542 = vld [vmem:[%s1 + $0x398] sm:$0xff]
  %v1543 = vld [vmem:[%s1 + $0x3a0] sm:$0xff]
  %v1544 = vld [vmem:[%s1 + $0x3a8] sm:$0xff]
  %v1545 = vld [vmem:[%s1 + $0x3b0] sm:$0xff]
  %v1546 = vld [vmem:[%s1 + $0x3b8] sm:$0xff]
  %v1547 = vld [vmem:[%s1 + $0x3c0] sm:$0xff]
  %v1548 = vld [vmem:[%s1 + $0x3c8] sm:$0xff]
  %v1549 = vld [vmem:[%s1 + $0x3d0] sm:$0xff]
  %v1550 = vld [vmem:[%s1 + $0x3d8] sm:$0xff]
  %v1551 = vld [vmem:[%s1 + $0x3e0] sm:$0xff]
  %v1552 = vld [vmem:[%s1 + $0x3e8] sm:$0xff]
  %v1553 = vld [vmem:[%s1 + $0x3f0] sm:$0xff]
  %v1554 = vld [vmem:[%s1 + $0x3f8] sm:$0xff]
  %v1555 = vld [vmem:[%s1 + $0x400] sm:$0xff]
  %v1556 = vld [vmem:[%s1 + $0x408] sm:$0xff]
  %v1557 = vld [vmem:[%s1 + $0x410] sm:$0xff]
  %v1558 = vld [vmem:[%s1 + $0x418] sm:$0xff]
  %v1559 = vld [vmem:[%s1 + $0x420] sm:$0xff]
  %v1560 = vld [vmem:[%s1 + $0x428] sm:$0xff]
  %v1561 = vld [vmem:[%s1 + $0x430] sm:$0xff]
  %v1562 = vld [vmem:[%s1 + $0x438] sm:$0xff]
  %v1563 = vld [vmem:[%s1 + $0x440] sm:$0xff]
  %v1564 = vld [vmem:[%s1 + $0x448] sm:$0xff]
  %v1565 = vld [vmem:[%s1 + $0x450] sm:$0xff]
  %v1566 = vld [vmem:[%s1 + $0x458] sm:$0xff]
  %v1567 = vld [vmem:[%s1 + $0x460] sm:$0xff]
  %v1568 = vld [vmem:[%s1 + $0x468] sm:$0xff]
  %v1569 = vld [vmem:[%s1 + $0x470] sm:$0xff]
  %v1570 = vld [vmem:[%s1 + $0x478] sm:$0xff]
  %v1571 = vld [vmem:[%s1 + $0x480] sm:$0xff]
  %v1572 = vld [vmem:[%s1 + $0x488] sm:$0xff]
  %v1573 = vld [vmem:[%s1 + $0x490] sm:$0xff]
  %v1574 = vld [vmem:[%s1 + $0x498] sm:$0xff]
  %v1575 = vld [vmem:[%s1 + $0x4a0] sm:$0xff]
  %v1576 = vld [vmem:[%s1 + $0x4a8] sm:$0xff]
  %v1577 = vld [vmem:[%s1 + $0x4b0] sm:$0xff]
  %v1578 = vld [vmem:[%s1 + $0x4b8] sm:$0xff]
  %v1579 = vld [vmem:[%s1 + $0x4c0] sm:$0xff]
  %v1580 = vld [vmem:[%s1 + $0x4c8] sm:$0xff]
  %v1581 = vld [vmem:[%s1 + $0x4d0] sm:$0xff]
  %v1582 = vld [vmem:[%s1 + $0x4d8] sm:$0xff]
  %v1583 = vld [vmem:[%s1 + $0x4e0] sm:$0xff]
  %v1584 = vld [vmem:[%s1 + $0x4e8] sm:$0xff]
  %v1585 = vld [vmem:[%s1 + $0x4f0] sm:$0xff]
  %v1586 = vld [vmem:[%s1 + $0x4f8] sm:$0xff]
  %v1587 = vld [vmem:[%s1 + $0x500] sm:$0xff]
  %v1588 = vld [vmem:[%s1 + $0x508] sm:$0xff]
  %v1589 = vld [vmem:[%s1 + $0x510] sm:$0xff]
  %v1590 = vld [vmem:[%s1 + $0x518] sm:$0xff]
  %v1591 = vld [vmem:[%s1 + $0x520] sm:$0xff]
  %v1592 = vld [vmem:[%s1 + $0x528] sm:$0xff]
  %v1593 = vld [vmem:[%s1 + $0x530] sm:$0xff]
  %v1594 = vld [vmem:[%s1 + $0x538] sm:$0xff]
  %v1595 = vld [vmem:[%s1 + $0x540] sm:$0xff]
  %v1596 = vld [vmem:[%s1 + $0x548] sm:$0xff]
  %v1597 = vld [vmem:[%s1 + $0x550] sm:$0xff]
  %v1598 = vld [vmem:[%s1 + $0x558] sm:$0xff]
  %v1599 = vld [vmem:[%s1 + $0x560] sm:$0xff]
  %v1600 = vld [vmem:[%s1 + $0x568] sm:$0xff]
  %v1601 = vld [vmem:[%s1 + $0x570] sm:$0xff]
  %v1602 = vld [vmem:[%s1 + $0x578] sm:$0xff]
  %v1603 = vld [vmem:[%s1 + $0x580] sm:$0xff]
  %v1604 = vld [vmem:[%s1 + $0x588] sm:$0xff]
  %v1605 = vld [vmem:[%s1 + $0x590] sm:$0xff]
  %v1606 = vld [vmem:[%s1 + $0x598] sm:$0xff]
  %v1607 = vld [vmem:[%s1 + $0x5a0] sm:$0xff]
  %v1608 = vld [vmem:[%s1 + $0x5a8] sm:$0xff]
  %v1609 = vld [vmem:[%s1 + $0x5b0] sm:$0xff]
  %v1610 = vld [vmem:[%s1 + $0x5b8] sm:$0xff]
  %v1611 = vld [vmem:[%s1 + $0x5c0] sm:$0xff]
  %v1612 = vld [vmem:[%s1 + $0x5c8] sm:$0xff]
  %v1613 = vld [vmem:[%s1 + $0x5d0] sm:$0xff]
  %v1614 = vld [vmem:[%s1 + $0x5d8] sm:$0xff]
  %v1615 = vld [vmem:[%s1 + $0x5e0] sm:$0xff]
  %v1616 = vld [vmem:[%s1 + $0x5e8] sm:$0xff]
  %v1617 = vld [vmem:[%s1 + $0x5f0] sm:$0xff]
  %v1618 = vld [vmem:[%s1 + $0x5f8] sm:$0xff]
  %v1619 = vld [vmem:[%s1 + $0x600] sm:$0xff]
  %v1620 = vld [vmem:[%s1 + $0x608] sm:$0xff]
  %v1621 = vld [vmem:[%s1 + $0x610] sm:$0xff]
  %v1622 = vld [vmem:[%s1 + $0x618] sm:$0xff]
  %v1623 = vld [vmem:[%s1 + $0x620] sm:$0xff]
  %v1624 = vld [vmem:[%s1 + $0x628] sm:$0xff]
  %v1625 = vld [vmem:[%s1 + $0x630] sm:$0xff]
  %v1626 = vld [vmem:[%s1 + $0x638] sm:$0xff]
  %v1627 = vld [vmem:[%s1 + $0x640] sm:$0xff]
  %v1628 = vld [vmem:[%s1 + $0x648] sm:$0xff]
  %v1629 = vld [vmem:[%s1 + $0x650] sm:$0xff]
  %v1630 = vld [vmem:[%s1 + $0x658] sm:$0xff]
  %v1631 = vld [vmem:[%s1 + $0x660] sm:$0xff]
  %v1632 = vld [vmem:[%s1 + $0x668] sm:$0xff]
  %v1633 = vld [vmem:[%s1 + $0x670] sm:$0xff]
  %v1634 = vld [vmem:[%s1 + $0x678] sm:$0xff]
  %v1635 = vld [vmem:[%s1 + $0x680] sm:$0xff]
  %v1636 = vld [vmem:[%s1 + $0x688] sm:$0xff]
  %v1637 = vld [vmem:[%s1 + $0x690] sm:$0xff]
  %v1638 = vld [vmem:[%s1 + $0x698] sm:$0xff]
  %v1639 = vld [vmem:[%s1 + $0x6a0] sm:$0xff]
  %v1640 = vld [vmem:[%s1 + $0x6a8] sm:$0xff]
  %v1641 = vld [vmem:[%s1 + $0x6b0] sm:$0xff]
  %v1642 = vld [vmem:[%s1 + $0x6b8] sm:$0xff]
  %v1643 = vld [vmem:[%s1 + $0x6c0] sm:$0xff]
  %v1644 = vld [vmem:[%s1 + $0x6c8] sm:$0xff]
  %v1645 = vld [vmem:[%s1 + $0x6d0] sm:$0xff]
  %v1646 = vld [vmem:[%s1 + $0x6d8] sm:$0xff]
  %v1647 = vld [vmem:[%s1 + $0x6e0] sm:$0xff]
  %v1648 = vld [vmem:[%s1 + $0x6e8] sm:$0xff]
  %v1649 = vld [vmem:[%s1 + $0x6f0] sm:$0xff]
  %v1650 = vld [vmem:[%s1 + $0x6f8] sm:$0xff]
  %v1651 = vld [vmem:[%s1 + $0x700] sm:$0xff]
  %v1652 = vld [vmem:[%s1 + $0x708] sm:$0xff]
  %v1653 = vld [vmem:[%s1 + $0x710] sm:$0xff]
  %v1654 = vld [vmem:[%s1 + $0x718] sm:$0xff]
  %v1655 = vld [vmem:[%s1 + $0x720] sm:$0xff]
  %v1656 = vld [vmem:[%s1 + $0x728] sm:$0xff]
  %v1657 = vld [vmem:[%s1 + $0x730] sm:$0xff]
  %v1658 = vld [vmem:[%s1 + $0x738] sm:$0xff]
  %v1659 = vld [vmem:[%s1 + $0x740] sm:$0xff]
  %v1660 = vld [vmem:[%s1 + $0x748] sm:$0xff]
  %v1661 = vld [vmem:[%s1 + $0x750] sm:$0xff]
  %v1662 = vld [vmem:[%s1 + $0x758] sm:$0xff]
  %v1663 = vld [vmem:[%s1 + $0x760] sm:$0xff]
  %v1664 = vld [vmem:[%s1 + $0x768] sm:$0xff]
  %v1665 = vld [vmem:[%s1 + $0x770] sm:$0xff]
  %v1666 = vld [vmem:[%s1 + $0x778] sm:$0xff]
  %v1667 = vld [vmem:[%s1 + $0x780] sm:$0xff]
  %v1668 = vld [vmem:[%s1 + $0x788] sm:$0xff]
  %v1669 = vld [vmem:[%s1 + $0x790] sm:$0xff]
  %v1670 = vld [vmem:[%s1 + $0x798] sm:$0xff]
  %v1671 = vld [vmem:[%s1 + $0x7a0] sm:$0xff]
  %v1672 = vld [vmem:[%s1 + $0x7a8] sm:$0xff]
  %v1673 = vld [vmem:[%s1 + $0x7b0] sm:$0xff]
  %v1674 = vld [vmem:[%s1 + $0x7b8] sm:$0xff]
  %v1675 = vld [vmem:[%s1 + $0x7c0] sm:$0xff]
  %v1676 = vld [vmem:[%s1 + $0x7c8] sm:$0xff]
  %v1677 = vld [vmem:[%s1 + $0x7d0] sm:$0xff]
  %v1678 = vld [vmem:[%s1 + $0x7d8] sm:$0xff]
  %v1679 = vld [vmem:[%s1 + $0x7e0] sm:$0xff]
  %v1680 = vld [vmem:[%s1 + $0x7e8] sm:$0xff]
  %v1681 = vld [vmem:[%s1 + $0x7f0] sm:$0xff]
  %v1682 = vld [vmem:[%s1 + $0x7f8] sm:$0xff]
  %v1683 = vld [vmem:[%s1 + $0x800] sm:$0xff]
  %v1684 = vld [vmem:[%s1 + $0x808] sm:$0xff]
  %v1685 = vld [vmem:[%s1 + $0x810] sm:$0xff]
  %v1686 = vld [vmem:[%s1 + $0x818] sm:$0xff]
  %v1687 = vld [vmem:[%s1 + $0x820] sm:$0xff]
  %v1688 = vld [vmem:[%s1 + $0x828] sm:$0xff]
  %v1689 = vld [vmem:[%s1 + $0x830] sm:$0xff]
  %v1690 = vld [vmem:[%s1 + $0x838] sm:$0xff]
  %v1691 = vld [vmem:[%s1 + $0x840] sm:$0xff]
  %v1692 = vld [vmem:[%s1 + $0x848] sm:$0xff]
  %v1693 = vld [vmem:[%s1 + $0x850] sm:$0xff]
  %v1694 = vld [vmem:[%s1 + $0x858] sm:$0xff]
  %v1695 = vld [vmem:[%s1 + $0x860] sm:$0xff]
  %v1696 = vld [vmem:[%s1 + $0x868] sm:$0xff]
  %v1697 = vld [vmem:[%s1 + $0x870] sm:$0xff]
  %v1698 = vld [vmem:[%s1 + $0x878] sm:$0xff]
  %v1699 = vld [vmem:[%s1 + $0x880] sm:$0xff]
  %v1700 = vld [vmem:[%s1 + $0x888] sm:$0xff]
  %v1701 = vld [vmem:[%s1 + $0x890] sm:$0xff]
  %v1702 = vld [vmem:[%s1 + $0x898] sm:$0xff]
  %v1703 = vld [vmem:[%s1 + $0x8a0] sm:$0xff]
  %v1704 = vld [vmem:[%s1 + $0x8a8] sm:$0xff]
  %v1705 = vld [vmem:[%s1 + $0x8b0] sm:$0xff]
  %v1706 = vld [vmem:[%s1 + $0x8b8] sm:$0xff]
  %v1707 = vld [vmem:[%s1 + $0x8c0] sm:$0xff]
  %v1708 = vld [vmem:[%s1 + $0x8c8] sm:$0xff]
  %v1709 = vld [vmem:[%s1 + $0x8d0] sm:$0xff]
  %v1710 = vld [vmem:[%s1 + $0x8d8] sm:$0xff]
  %v1711 = vld [vmem:[%s1 + $0x8e0] sm:$0xff]
  %v1712 = vld [vmem:[%s1 + $0x8e8] sm:$0xff]
  %v1713 = vld [vmem:[%s1 + $0x8f0] sm:$0xff]
  %v1714 = vld [vmem:[%s1 + $0x8f8] sm:$0xff]
  %v1715 = vld [vmem:[%s1 + $0x900] sm:$0xff]
  %v1716 = vld [vmem:[%s1 + $0x908] sm:$0xff]
  %v1717 = vld [vmem:[%s1 + $0x910] sm:$0xff]
  %v1718 = vld [vmem:[%s1 + $0x918] sm:$0xff]
  %v1719 = vld [vmem:[%s1 + $0x920] sm:$0xff]
  %v1720 = vld [vmem:[%s1 + $0x928] sm:$0xff]
  %v1721 = vld [vmem:[%s1 + $0x930] sm:$0xff]
  %v1722 = vld [vmem:[%s1 + $0x938] sm:$0xff]
  %v1723 = vld [vmem:[%s1 + $0x940] sm:$0xff]
  %v1724 = vld [vmem:[%s1 + $0x948] sm:$0xff]
  %v1725 = vld [vmem:[%s1 + $0x950] sm:$0xff]
  %v1726 = vld [vmem:[%s1 + $0x958] sm:$0xff]
  %v1727 = vld [vmem:[%s1 + $0x960] sm:$0xff]
  %v1728 = vld [vmem:[%s1 + $0x968] sm:$0xff]
  %v1729 = vld [vmem:[%s1 + $0x970] sm:$0xff]
  %v1730 = vld [vmem:[%s1 + $0x978] sm:$0xff]
  %v1731 = vld [vmem:[%s1 + $0x980] sm:$0xff]
  %v1732 = vld [vmem:[%s1 + $0x988] sm:$0xff]
  %v1733 = vld [vmem:[%s1 + $0x990] sm:$0xff]
  %v1734 = vld [vmem:[%s1 + $0x998] sm:$0xff]
  %v1735 = vld [vmem:[%s1 + $0x9a0] sm:$0xff]
  %v1736 = vld [vmem:[%s1 + $0x9a8] sm:$0xff]
  %v1737 = vld [vmem:[%s1 + $0x9b0] sm:$0xff]
  %v1738 = vld [vmem:[%s1 + $0x9b8] sm:$0xff]
  %v1739 = vld [vmem:[%s1 + $0x9c0] sm:$0xff]
  %v1740 = vld [vmem:[%s1 + $0x9c8] sm:$0xff]
  %v1741 = vld [vmem:[%s1 + $0x9d0] sm:$0xff]
  %v1742 = vld [vmem:[%s1 + $0x9d8] sm:$0xff]
  %v1743 = vld [vmem:[%s1 + $0x9e0] sm:$0xff]
  %v1744 = vld [vmem:[%s1 + $0x9e8] sm:$0xff]
  %v1745 = vld [vmem:[%s1 + $0x9f0] sm:$0xff]
  %v1746 = vld [vmem:[%s1 + $0x9f8] sm:$0xff]
  %v1747 = vld [vmem:[%s1 + $0xa00] sm:$0xff]
  %v1748 = vld [vmem:[%s1 + $0xa08] sm:$0xff]
  %v1749 = vld [vmem:[%s1 + $0xa10] sm:$0xff]
  %v1750 = vld [vmem:[%s1 + $0xa18] sm:$0xff]
  %v1751 = vld [vmem:[%s1 + $0xa20] sm:$0xff]
  %v1752 = vld [vmem:[%s1 + $0xa28] sm:$0xff]
  %v1753 = vld [vmem:[%s1 + $0xa30] sm:$0xff]
  %v1754 = vld [vmem:[%s1 + $0xa38] sm:$0xff]
  %v1755 = vld [vmem:[%s1 + $0xa40] sm:$0xff]
  %v1756 = vld [vmem:[%s1 + $0xa48] sm:$0xff]
  %v1757 = vld [vmem:[%s1 + $0xa50] sm:$0xff]
  %v1758 = vld [vmem:[%s1 + $0xa58] sm:$0xff]
  %v1759 = vld [vmem:[%s1 + $0xa60] sm:$0xff]
  %v1760 = vld [vmem:[%s1 + $0xa68] sm:$0xff]
  %v1761 = vld [vmem:[%s1 + $0xa70] sm:$0xff]
  %v1762 = vld [vmem:[%s1 + $0xa78] sm:$0xff]
  %v1763 = vld [vmem:[%s1 + $0xa80] sm:$0xff]
  %v1764 = vld [vmem:[%s1 + $0xa88] sm:$0xff]
  %v1765 = vld [vmem:[%s1 + $0xa90] sm:$0xff]
  %v1766 = vld [vmem:[%s1 + $0xa98] sm:$0xff]
  %v1767 = vld [vmem:[%s1 + $0xaa0] sm:$0xff]
  %v1768 = vld [vmem:[%s1 + $0xaa8] sm:$0xff]
  %v1769 = vld [vmem:[%s1 + $0xab0] sm:$0xff]
  %v1770 = vld [vmem:[%s1 + $0xab8] sm:$0xff]
  %v1771 = vld [vmem:[%s1 + $0xac0] sm:$0xff]
  %v1772 = vld [vmem:[%s1 + $0xac8] sm:$0xff]
  %v1773 = vld [vmem:[%s1 + $0xad0] sm:$0xff]
  %v1774 = vld [vmem:[%s1 + $0xad8] sm:$0xff]
  %v1775 = vld [vmem:[%s1 + $0xae0] sm:$0xff]
  %v1776 = vld [vmem:[%s1 + $0xae8] sm:$0xff]
  %v1777 = vld [vmem:[%s1 + $0xaf0] sm:$0xff]
  %v1778 = vld [vmem:[%s1 + $0xaf8] sm:$0xff]
  %v1779 = vld [vmem:[%s1 + $0xb00] sm:$0xff]
  %v1780 = vld [vmem:[%s1 + $0xb08] sm:$0xff]
  %v1781 = vld [vmem:[%s1 + $0xb10] sm:$0xff]
  %v1782 = vld [vmem:[%s1 + $0xb18] sm:$0xff]
  %v1783 = vld [vmem:[%s1 + $0xb20] sm:$0xff]
  %v1784 = vld [vmem:[%s1 + $0xb28] sm:$0xff]
  %v1785 = vld [vmem:[%s1 + $0xb30] sm:$0xff]
  %v1786 = vld [vmem:[%s1 + $0xb38] sm:$0xff]
  %v1787 = vld [vmem:[%s1 + $0xb40] sm:$0xff]
  %v1788 = vld [vmem:[%s1 + $0xb48] sm:$0xff]
  %v1789 = vld [vmem:[%s1 + $0xb50] sm:$0xff]
  %v1790 = vld [vmem:[%s1 + $0xb58] sm:$0xff]
  %v1791 = vld [vmem:[%s1 + $0xb60] sm:$0xff]
  %v1792 = vld [vmem:[%s1 + $0xb68] sm:$0xff]
  %v1793 = vld [vmem:[%s1 + $0xb70] sm:$0xff]
  %v1794 = vld [vmem:[%s1 + $0xb78] sm:$0xff]
  %v1795 = vld [vmem:[%s1 + $0xb80] sm:$0xff]
  %v1796 = vld [vmem:[%s1 + $0xb88] sm:$0xff]
  %v1797 = vld [vmem:[%s1 + $0xb90] sm:$0xff]
  %v1798 = vld [vmem:[%s1 + $0xb98] sm:$0xff]
  %v1799 = vld [vmem:[%s1 + $0xba0] sm:$0xff]
  %v1800 = vld [vmem:[%s1 + $0xba8] sm:$0xff]
  %v1801 = vld [vmem:[%s1 + $0xbb0] sm:$0xff]
  %v1802 = vld [vmem:[%s1 + $0xbb8] sm:$0xff]
  %v1803 = vld [vmem:[%s1 + $0xbc0] sm:$0xff]
  %v1804 = vld [vmem:[%s1 + $0xbc8] sm:$0xff]
  %v1805 = vld [vmem:[%s1 + $0xbd0] sm:$0xff]
  %v1806 = vld [vmem:[%s1 + $0xbd8] sm:$0xff]
  %v1807 = vld [vmem:[%s1 + $0xbe0] sm:$0xff]
  %v1808 = vld [vmem:[%s1 + $0xbe8] sm:$0xff]
  %v1809 = vld [vmem:[%s1 + $0xbf0] sm:$0xff]
  %v1810 = vld [vmem:[%s1 + $0xbf8] sm:$0xff]
  %v1811 = vld [vmem:[%s1 + $0xc00] sm:$0xff]
  %v1812 = vld [vmem:[%s1 + $0xc08] sm:$0xff]
  %v1813 = vld [vmem:[%s1 + $0xc10] sm:$0xff]
  %v1814 = vld [vmem:[%s1 + $0xc18] sm:$0xff]
  %v1815 = vld [vmem:[%s1 + $0xc20] sm:$0xff]
  %v1816 = vld [vmem:[%s1 + $0xc28] sm:$0xff]
  %v1817 = vld [vmem:[%s1 + $0xc30] sm:$0xff]
  %v1818 = vld [vmem:[%s1 + $0xc38] sm:$0xff]
  %v1819 = vld [vmem:[%s1 + $0xc40] sm:$0xff]
  %v1820 = vld [vmem:[%s1 + $0xc48] sm:$0xff]
  %v1821 = vld [vmem:[%s1 + $0xc50] sm:$0xff]
  %v1822 = vld [vmem:[%s1 + $0xc58] sm:$0xff]
  %v1823 = vld [vmem:[%s1 + $0xc60] sm:$0xff]
  %v1824 = vld [vmem:[%s1 + $0xc68] sm:$0xff]
  %v1825 = vld [vmem:[%s1 + $0xc70] sm:$0xff]
  %v1826 = vld [vmem:[%s1 + $0xc78] sm:$0xff]
  %v1827 = vld [vmem:[%s1 + $0xc80] sm:$0xff]
  %v1828 = vld [vmem:[%s1 + $0xc88] sm:$0xff]
  %v1829 = vld [vmem:[%s1 + $0xc90] sm:$0xff]
  %v1830 = vld [vmem:[%s1 + $0xc98] sm:$0xff]
  %v1831 = vld [vmem:[%s1 + $0xca0] sm:$0xff]
  %v1832 = vld [vmem:[%s1 + $0xca8] sm:$0xff]
  %v1833 = vld [vmem:[%s1 + $0xcb0] sm:$0xff]
  %v1834 = vld [vmem:[%s1 + $0xcb8] sm:$0xff]
  %v1835 = vld [vmem:[%s1 + $0xcc0] sm:$0xff]
  %v1836 = vld [vmem:[%s1 + $0xcc8] sm:$0xff]
  %v1837 = vld [vmem:[%s1 + $0xcd0] sm:$0xff]
  %v1838 = vld [vmem:[%s1 + $0xcd8] sm:$0xff]
  %v1839 = vld [vmem:[%s1 + $0xce0] sm:$0xff]
  %v1840 = vld [vmem:[%s1 + $0xce8] sm:$0xff]
  %v1841 = vld [vmem:[%s1 + $0xcf0] sm:$0xff]
  %v1842 = vld [vmem:[%s1 + $0xcf8] sm:$0xff]
  %v1843 = vld [vmem:[%s1 + $0xd00] sm:$0xff]
  %v1844 = vld [vmem:[%s1 + $0xd08] sm:$0xff]
  %v1845 = vld [vmem:[%s1 + $0xd10] sm:$0xff]
  %v1846 = vld [vmem:[%s1 + $0xd18] sm:$0xff]
  %v1847 = vld [vmem:[%s1 + $0xd20] sm:$0xff]
  %v1848 = vld [vmem:[%s1 + $0xd28] sm:$0xff]
  %v1849 = vld [vmem:[%s1 + $0xd30] sm:$0xff]
  %v1850 = vld [vmem:[%s1 + $0xd38] sm:$0xff]
  %v1851 = vld [vmem:[%s1 + $0xd40] sm:$0xff]
  %v1852 = vld [vmem:[%s1 + $0xd48] sm:$0xff]
  %v1853 = vld [vmem:[%s1 + $0xd50] sm:$0xff]
  %v1854 = vld [vmem:[%s1 + $0xd58] sm:$0xff]
  %v1855 = vld [vmem:[%s1 + $0xd60] sm:$0xff]
  %v1856 = vld [vmem:[%s1 + $0xd68] sm:$0xff]
  %v1857 = vld [vmem:[%s1 + $0xd70] sm:$0xff]
  %v1858 = vld [vmem:[%s1 + $0xd78] sm:$0xff]
  %v1859 = vld [vmem:[%s1 + $0xd80] sm:$0xff]
  %v1860 = vld [vmem:[%s1 + $0xd88] sm:$0xff]
  %v1861 = vld [vmem:[%s1 + $0xd90] sm:$0xff]
  %v1862 = vld [vmem:[%s1 + $0xd98] sm:$0xff]
  %v1863 = vld [vmem:[%s1 + $0xda0] sm:$0xff]
  %v1864 = vld [vmem:[%s1 + $0xda8] sm:$0xff]
  %v1865 = vld [vmem:[%s1 + $0xdb0] sm:$0xff]
  %v1866 = vld [vmem:[%s1 + $0xdb8] sm:$0xff]
  %v1867 = vld [vmem:[%s1 + $0xdc0] sm:$0xff]
  %v1868 = vld [vmem:[%s1 + $0xdc8] sm:$0xff]
  %v1869 = vld [vmem:[%s1 + $0xdd0] sm:$0xff]
  %v1870 = vld [vmem:[%s1 + $0xdd8] sm:$0xff]
  %v1871 = vld [vmem:[%s1 + $0xde0] sm:$0xff]
  %v1872 = vld [vmem:[%s1 + $0xde8] sm:$0xff]
  %v1873 = vld [vmem:[%s1 + $0xdf0] sm:$0xff]
  %v1874 = vld [vmem:[%s1 + $0xdf8] sm:$0xff]
  %v1875 = vld [vmem:[%s1 + $0xe00] sm:$0xff]
  %v1876 = vld [vmem:[%s1 + $0xe08] sm:$0xff]
  %v1877 = vld [vmem:[%s1 + $0xe10] sm:$0xff]
  %v1878 = vld [vmem:[%s1 + $0xe18] sm:$0xff]
  %v1879 = vld [vmem:[%s1 + $0xe20] sm:$0xff]
  %v1880 = vld [vmem:[%s1 + $0xe28] sm:$0xff]
  %v1881 = vld [vmem:[%s1 + $0xe30] sm:$0xff]
  %v1882 = vld [vmem:[%s1 + $0xe38] sm:$0xff]
  %v1883 = vld [vmem:[%s1 + $0xe40] sm:$0xff]
  %v1884 = vld [vmem:[%s1 + $0xe48] sm:$0xff]
  %v1885 = vld [vmem:[%s1 + $0xe50] sm:$0xff]
  %v1886 = vld [vmem:[%s1 + $0xe58] sm:$0xff]
  %v1887 = vld [vmem:[%s1 + $0xe60] sm:$0xff]
  %v1888 = vld [vmem:[%s1 + $0xe68] sm:$0xff]
  %v1889 = vld [vmem:[%s1 + $0xe70] sm:$0xff]
  %v1890 = vld [vmem:[%s1 + $0xe78] sm:$0xff]
  %v1891 = vld [vmem:[%s1 + $0xe80] sm:$0xff]
  %v1892 = vld [vmem:[%s1 + $0xe88] sm:$0xff]
  %v1893 = vld [vmem:[%s1 + $0xe90] sm:$0xff]
  %v1894 = vld [vmem:[%s1 + $0xe98] sm:$0xff]
  %v1895 = vld [vmem:[%s1 + $0xea0] sm:$0xff]
  %v1896 = vld [vmem:[%s1 + $0xea8] sm:$0xff]
  %v1897 = vld [vmem:[%s1 + $0xeb0] sm:$0xff]
  %v1898 = vld [vmem:[%s1 + $0xeb8] sm:$0xff]
  %v1899 = vld [vmem:[%s1 + $0xec0] sm:$0xff]
  %v1900 = vld [vmem:[%s1 + $0xec8] sm:$0xff]
  %v1901 = vld [vmem:[%s1 + $0xed0] sm:$0xff]
  %v1902 = vld [vmem:[%s1 + $0xed8] sm:$0xff]
  %v1903 = vld [vmem:[%s1 + $0xee0] sm:$0xff]
  %v1904 = vld [vmem:[%s1 + $0xee8] sm:$0xff]
  %v1905 = vld [vmem:[%s1 + $0xef0] sm:$0xff]
  %v1906 = vld [vmem:[%s1 + $0xef8] sm:$0xff]
  %v1907 = vld [vmem:[%s1 + $0xf00] sm:$0xff]
  %v1908 = vld [vmem:[%s1 + $0xf08] sm:$0xff]
  %v1909 = vld [vmem:[%s1 + $0xf10] sm:$0xff]
  %v1910 = vld [vmem:[%s1 + $0xf18] sm:$0xff]
  %v1911 = vld [vmem:[%s1 + $0xf20] sm:$0xff]
  %v1912 = vld [vmem:[%s1 + $0xf28] sm:$0xff]
  %v1913 = vld [vmem:[%s1 + $0xf30] sm:$0xff]
  %v1914 = vld [vmem:[%s1 + $0xf38] sm:$0xff]
  %v1915 = vld [vmem:[%s1 + $0xf40] sm:$0xff]
  %v1916 = vld [vmem:[%s1 + $0xf48] sm:$0xff]
  %v1917 = vld [vmem:[%s1 + $0xf50] sm:$0xff]
  %v1918 = vld [vmem:[%s1 + $0xf58] sm:$0xff]
  %v1919 = vld [vmem:[%s1 + $0xf60] sm:$0xff]
  %v1920 = vld [vmem:[%s1 + $0xf68] sm:$0xff]
  %v1921 = vld [vmem:[%s1 + $0xf70] sm:$0xff]
  %v1922 = vld [vmem:[%s1 + $0xf78] sm:$0xff]
  %v1923 = vld [vmem:[%s1 + $0xf80] sm:$0xff]
  %v1924 = vld [vmem:[%s1 + $0xf88] sm:$0xff]
  %v1925 = vld [vmem:[%s1 + $0xf90] sm:$0xff]
  %v1926 = vld [vmem:[%s1 + $0xf98] sm:$0xff]
  %v1927 = vld [vmem:[%s1 + $0xfa0] sm:$0xff]
  %v1928 = vld [vmem:[%s1 + $0xfa8] sm:$0xff]
  %v1929 = vld [vmem:[%s1 + $0xfb0] sm:$0xff]
  %v1930 = vld [vmem:[%s1 + $0xfb8] sm:$0xff]
  %v1931 = vld [vmem:[%s1 + $0xfc0] sm:$0xff]
  %v1932 = vld [vmem:[%s1 + $0xfc8] sm:$0xff]
  %v1933 = vld [vmem:[%s1 + $0xfd0] sm:$0xff]
  %v1934 = vld [vmem:[%s1 + $0xfd8] sm:$0xff]
  %v1935 = vld [vmem:[%s1 + $0xfe0] sm:$0xff]
  %v1936 = vld [vmem:[%s1 + $0xfe8] sm:$0xff]
  %v1937 = vld [vmem:[%s1 + $0xff0] sm:$0xff]
  %v1938 = vld [vmem:[%s1 + $0xff8] sm:$0xff]
  %1939 = vmatprep.subr.mxu0 0.0
  %1940 = vmatpush1.msra.mxu0 %v1442
  %1941 = vmatprep.subr.mxu0 0.0
  %1942 = vmatpush1.msra.mxu0 %v1441
  %1943 = vmatprep.subr.mxu0 0.0
  %1944 = vmatpush1.msra.mxu0 %v1440
  %1945 = vmatprep.subr.mxu0 0.0
  %1946 = vmatpush1.msra.mxu0 %v1439
  %1947 = vmatprep.subr.mxu0 0.0
  %1948 = vmatpush1.msra.mxu0 %v1438
  %1949 = vmatprep.subr.mxu0 0.0
  %1950 = vmatpush1.msra.mxu0 %v1437
  %1951 = vmatprep.subr.mxu0 0.0
  %1952 = vmatpush1.msra.mxu0 %v1436
  %1953 = vmatprep.subr.mxu0 0.0
  %1954 = vmatpush1.msra.mxu0 %v1435
  %1955 = vmatprep.subr.mxu0 0.0
  %1956 = vmatpush1.msra.mxu0 %v1434
  %1957 = vmatprep.subr.mxu0 0.0
  %1958 = vmatpush1.msra.mxu0 %v1433
  %1959 = vmatprep.subr.mxu0 0.0
  %1960 = vmatpush1.msra.mxu0 %v1432
  %1961 = vmatprep.subr.mxu0 0.0
  %1962 = vmatpush1.msra.mxu0 %v1431
  %1963 = vmatprep.subr.mxu0 0.0
  %1964 = vmatpush1.msra.mxu0 %v1430
  %1965 = vmatprep.subr.mxu0 0.0
  %1966 = vmatpush1.msra.mxu0 %v1429
  %1967 = vmatprep.subr.mxu0 0.0
  %1968 = vmatpush1.msra.mxu0 %v1428
  %1969 = vmatprep.subr.mxu0 0.0
  %1970 = vmatpush1.msra.mxu0 %v1427
  %1971 = vmatprep.subr.mxu0 0.0
  %1972 = vmatpush2.msra.mxu0 %v1458
  %1973 = vmatprep.subr.mxu0 0.0
  %1974 = vmatpush2.msra.mxu0 %v1457
  %1975 = vmatprep.subr.mxu0 0.0
  %1976 = vmatpush2.msra.mxu0 %v1456
  %1977 = vmatprep.subr.mxu0 0.0
  %1978 = vmatpush2.msra.mxu0 %v1455
  %1979 = vmatprep.subr.mxu0 0.0
  %1980 = vmatpush2.msra.mxu0 %v1454
  %1981 = vmatprep.subr.mxu0 0.0
  %1982 = vmatpush2.msra.mxu0 %v1453
  %1983 = vmatprep.subr.mxu0 0.0
  %1984 = vmatpush2.msra.mxu0 %v1452
  %1985 = vmatprep.subr.mxu0 0.0
  %1986 = vmatpush2.msra.mxu0 %v1451
  %1987 = vmatprep.subr.mxu0 0.0
  %1988 = vmatpush2.msra.mxu0 %v1450
  %1989 = vmatprep.subr.mxu0 0.0
  %1990 = vmatpush2.msra.mxu0 %v1449
  %1991 = vmatprep.subr.mxu0 0.0
  %1992 = vmatpush2.msra.mxu0 %v1448
  %1993 = vmatprep.subr.mxu0 0.0
  %1994 = vmatpush2.msra.mxu0 %v1447
  %1995 = vmatprep.subr.mxu0 0.0
  %1996 = vmatpush2.msra.mxu0 %v1446
  %1997 = vmatprep.subr.mxu0 0.0
  %1998 = vmatpush2.msra.mxu0 %v1445
  %1999 = vmatprep.subr.mxu0 0.0
  %2000 = vmatpush2.msra.mxu0 %v1444
  %2001 = vmatprep.subr.mxu0 0.0
  %2002 = vmatpush2.msra.mxu0 %v1443
  %2003 = vmatprep.mubr.f32.mxu0 %v1396
  %2004 = vmatmul.mubr.f32.gmra.mxu0 %v1395
  %v2005 = vpop.f32.mrf.mxu0
  %v2006 = vadd.f32 0.0, %v2005
  %v2007 = vpop.f32.mrf.mxu0
  %2008 = vdwg.mxu0
  %2009 = vmatprep.subr.mxu0 0.0
  %2010 = vmatpush1.msra.mxu0 %v1474
  %2011 = vmatprep.subr.mxu0 0.0
  %2012 = vmatpush1.msra.mxu0 %v1473
  %2013 = vmatprep.subr.mxu0 0.0
  %2014 = vmatpush1.msra.mxu0 %v1472
  %2015 = vmatprep.subr.mxu0 0.0
  %2016 = vmatpush1.msra.mxu0 %v1471
  %2017 = vmatprep.subr.mxu0 0.0
  %2018 = vmatpush1.msra.mxu0 %v1470
  %2019 = vmatprep.subr.mxu0 0.0
  %2020 = vmatpush1.msra.mxu0 %v1469
  %2021 = vmatprep.subr.mxu0 0.0
  %2022 = vmatpush1.msra.mxu0 %v1468
  %2023 = vmatprep.subr.mxu0 0.0
  %2024 = vmatpush1.msra.mxu0 %v1467
  %2025 = vmatprep.subr.mxu0 0.0
  %2026 = vmatpush1.msra.mxu0 %v1466
  %2027 = vmatprep.subr.mxu0 0.0
  %2028 = vmatpush1.msra.mxu0 %v1465
  %2029 = vmatprep.subr.mxu0 0.0
  %2030 = vmatpush1.msra.mxu0 %v1464
  %2031 = vmatprep.subr.mxu0 0.0
  %2032 = vmatpush1.msra.mxu0 %v1463
  %2033 = vmatprep.subr.mxu0 0.0
  %2034 = vmatpush1.msra.mxu0 %v1462
  %2035 = vmatprep.subr.mxu0 0.0
  %2036 = vmatpush1.msra.mxu0 %v1461
  %2037 = vmatprep.subr.mxu0 0.0
  %2038 = vmatpush1.msra.mxu0 %v1460
  %2039 = vmatprep.subr.mxu0 0.0
  %2040 = vmatpush1.msra.mxu0 %v1459
  %2041 = vmatprep.subr.mxu0 0.0
  %2042 = vmatpush2.msra.mxu0 %v1490
  %2043 = vmatprep.subr.mxu0 0.0
  %2044 = vmatpush2.msra.mxu0 %v1489
  %2045 = vmatprep.subr.mxu0 0.0
  %2046 = vmatpush2.msra.mxu0 %v1488
  %2047 = vmatprep.subr.mxu0 0.0
  %2048 = vmatpush2.msra.mxu0 %v1487
  %2049 = vmatprep.subr.mxu0 0.0
  %2050 = vmatpush2.msra.mxu0 %v1486
  %2051 = vmatprep.subr.mxu0 0.0
  %2052 = vmatpush2.msra.mxu0 %v1485
  %2053 = vmatprep.subr.mxu0 0.0
  %2054 = vmatpush2.msra.mxu0 %v1484
  %2055 = vmatprep.subr.mxu0 0.0
  %2056 = vmatpush2.msra.mxu0 %v1483
  %2057 = vmatprep.subr.mxu0 0.0
  %2058 = vmatpush2.msra.mxu0 %v1482
  %2059 = vmatprep.subr.mxu0 0.0
  %2060 = vmatpush2.msra.mxu0 %v1481
  %2061 = vmatprep.subr.mxu0 0.0
  %2062 = vmatpush2.msra.mxu0 %v1480
  %2063 = vmatprep.subr.mxu0 0.0
  %2064 = vmatpush2.msra.mxu0 %v1479
  %2065 = vmatprep.subr.mxu0 0.0
  %2066 = vmatpush2.msra.mxu0 %v1478
  %2067 = vmatprep.subr.mxu0 0.0
  %2068 = vmatpush2.msra.mxu0 %v1477
  %2069 = vmatprep.subr.mxu0 0.0
  %2070 = vmatpush2.msra.mxu0 %v1476
  %2071 = vmatprep.subr.mxu0 0.0
  %2072 = vmatpush2.msra.mxu0 %v1475
  %2073 = vmatprep.mubr.f32.mxu0 %v1398
  %2074 = vmatmul.mubr.f32.gmra.mxu0 %v1397
  %v2075 = vpop.f32.mrf.mxu0
  %v2076 = vadd.f32 %v2006, %v2075
  %v2077 = vpop.f32.mrf.mxu0
  %2078 = vdwg.mxu0
  %2079 = vmatprep.subr.mxu0 0.0
  %2080 = vmatpush1.msra.mxu0 %v1506
  %2081 = vmatprep.subr.mxu0 0.0
  %2082 = vmatpush1.msra.mxu0 %v1505
  %2083 = vmatprep.subr.mxu0 0.0
  %2084 = vmatpush1.msra.mxu0 %v1504
  %2085 = vmatprep.subr.mxu0 0.0
  %2086 = vmatpush1.msra.mxu0 %v1503
  %2087 = vmatprep.subr.mxu0 0.0
  %2088 = vmatpush1.msra.mxu0 %v1502
  %2089 = vmatprep.subr.mxu0 0.0
  %2090 = vmatpush1.msra.mxu0 %v1501
  %2091 = vmatprep.subr.mxu0 0.0
  %2092 = vmatpush1.msra.mxu0 %v1500
  %2093 = vmatprep.subr.mxu0 0.0
  %2094 = vmatpush1.msra.mxu0 %v1499
  %2095 = vmatprep.subr.mxu0 0.0
  %2096 = vmatpush1.msra.mxu0 %v1498
  %2097 = vmatprep.subr.mxu0 0.0
  %2098 = vmatpush1.msra.mxu0 %v1497
  %2099 = vmatprep.subr.mxu0 0.0
  %2100 = vmatpush1.msra.mxu0 %v1496
  %2101 = vmatprep.subr.mxu0 0.0
  %2102 = vmatpush1.msra.mxu0 %v1495
  %2103 = vmatprep.subr.mxu0 0.0
  %2104 = vmatpush1.msra.mxu0 %v1494
  %2105 = vmatprep.subr.mxu0 0.0
  %2106 = vmatpush1.msra.mxu0 %v1493
  %2107 = vmatprep.subr.mxu0 0.0
  %2108 = vmatpush1.msra.mxu0 %v1492
  %2109 = vmatprep.subr.mxu0 0.0
  %2110 = vmatpush1.msra.mxu0 %v1491
  %2111 = vmatprep.subr.mxu0 0.0
  %2112 = vmatpush2.msra.mxu0 %v1522
  %2113 = vmatprep.subr.mxu0 0.0
  %2114 = vmatpush2.msra.mxu0 %v1521
  %2115 = vmatprep.subr.mxu0 0.0
  %2116 = vmatpush2.msra.mxu0 %v1520
  %2117 = vmatprep.subr.mxu0 0.0
  %2118 = vmatpush2.msra.mxu0 %v1519
  %2119 = vmatprep.subr.mxu0 0.0
  %2120 = vmatpush2.msra.mxu0 %v1518
  %2121 = vmatprep.subr.mxu0 0.0
  %2122 = vmatpush2.msra.mxu0 %v1517
  %2123 = vmatprep.subr.mxu0 0.0
  %2124 = vmatpush2.msra.mxu0 %v1516
  %2125 = vmatprep.subr.mxu0 0.0
  %2126 = vmatpush2.msra.mxu0 %v1515
  %2127 = vmatprep.subr.mxu0 0.0
  %2128 = vmatpush2.msra.mxu0 %v1514
  %2129 = vmatprep.subr.mxu0 0.0
  %2130 = vmatpush2.msra.mxu0 %v1513
  %2131 = vmatprep.subr.mxu0 0.0
  %2132 = vmatpush2.msra.mxu0 %v1512
  %2133 = vmatprep.subr.mxu0 0.0
  %2134 = vmatpush2.msra.mxu0 %v1511
  %2135 = vmatprep.subr.mxu0 0.0
  %2136 = vmatpush2.msra.mxu0 %v1510
  %2137 = vmatprep.subr.mxu0 0.0
  %2138 = vmatpush2.msra.mxu0 %v1509
  %2139 = vmatprep.subr.mxu0 0.0
  %2140 = vmatpush2.msra.mxu0 %v1508
  %2141 = vmatprep.subr.mxu0 0.0
  %2142 = vmatpush2.msra.mxu0 %v1507
  %2143 = vmatprep.mubr.f32.mxu0 %v1400
  %2144 = vmatmul.mubr.f32.gmra.mxu0 %v1399
  %v2145 = vpop.f32.mrf.mxu0
  %v2146 = vadd.f32 %v2076, %v2145
  %v2147 = vpop.f32.mrf.mxu0
  %2148 = vdwg.mxu0
  %2149 = vmatprep.subr.mxu0 0.0
  %2150 = vmatpush1.msra.mxu0 %v1538
  %2151 = vmatprep.subr.mxu0 0.0
  %2152 = vmatpush1.msra.mxu0 %v1537
  %2153 = vmatprep.subr.mxu0 0.0
  %2154 = vmatpush1.msra.mxu0 %v1536
  %2155 = vmatprep.subr.mxu0 0.0
  %2156 = vmatpush1.msra.mxu0 %v1535
  %2157 = vmatprep.subr.mxu0 0.0
  %2158 = vmatpush1.msra.mxu0 %v1534
  %2159 = vmatprep.subr.mxu0 0.0
  %2160 = vmatpush1.msra.mxu0 %v1533
  %2161 = vmatprep.subr.mxu0 0.0
  %2162 = vmatpush1.msra.mxu0 %v1532
  %2163 = vmatprep.subr.mxu0 0.0
  %2164 = vmatpush1.msra.mxu0 %v1531
  %2165 = vmatprep.subr.mxu0 0.0
  %2166 = vmatpush1.msra.mxu0 %v1530
  %2167 = vmatprep.subr.mxu0 0.0
  %2168 = vmatpush1.msra.mxu0 %v1529
  %2169 = vmatprep.subr.mxu0 0.0
  %2170 = vmatpush1.msra.mxu0 %v1528
  %2171 = vmatprep.subr.mxu0 0.0
  %2172 = vmatpush1.msra.mxu0 %v1527
  %2173 = vmatprep.subr.mxu0 0.0
  %2174 = vmatpush1.msra.mxu0 %v1526
  %2175 = vmatprep.subr.mxu0 0.0
  %2176 = vmatpush1.msra.mxu0 %v1525
  %2177 = vmatprep.subr.mxu0 0.0
  %2178 = vmatpush1.msra.mxu0 %v1524
  %2179 = vmatprep.subr.mxu0 0.0
  %2180 = vmatpush1.msra.mxu0 %v1523
  %2181 = vmatprep.subr.mxu0 0.0
  %2182 = vmatpush2.msra.mxu0 %v1554
  %2183 = vmatprep.subr.mxu0 0.0
  %2184 = vmatpush2.msra.mxu0 %v1553
  %2185 = vmatprep.subr.mxu0 0.0
  %2186 = vmatpush2.msra.mxu0 %v1552
  %2187 = vmatprep.subr.mxu0 0.0
  %2188 = vmatpush2.msra.mxu0 %v1551
  %2189 = vmatprep.subr.mxu0 0.0
  %2190 = vmatpush2.msra.mxu0 %v1550
  %2191 = vmatprep.subr.mxu0 0.0
  %2192 = vmatpush2.msra.mxu0 %v1549
  %2193 = vmatprep.subr.mxu0 0.0
  %2194 = vmatpush2.msra.mxu0 %v1548
  %2195 = vmatprep.subr.mxu0 0.0
  %2196 = vmatpush2.msra.mxu0 %v1547
  %2197 = vmatprep.subr.mxu0 0.0
  %2198 = vmatpush2.msra.mxu0 %v1546
  %2199 = vmatprep.subr.mxu0 0.0
  %2200 = vmatpush2.msra.mxu0 %v1545
  %2201 = vmatprep.subr.mxu0 0.0
  %2202 = vmatpush2.msra.mxu0 %v1544
  %2203 = vmatprep.subr.mxu0 0.0
  %2204 = vmatpush2.msra.mxu0 %v1543
  %2205 = vmatprep.subr.mxu0 0.0
  %2206 = vmatpush2.msra.mxu0 %v1542
  %2207 = vmatprep.subr.mxu0 0.0
  %2208 = vmatpush2.msra.mxu0 %v1541
  %2209 = vmatprep.subr.mxu0 0.0
  %2210 = vmatpush2.msra.mxu0 %v1540
  %2211 = vmatprep.subr.mxu0 0.0
  %2212 = vmatpush2.msra.mxu0 %v1539
  %2213 = vmatprep.mubr.f32.mxu0 %v1402
  %2214 = vmatmul.mubr.f32.gmra.mxu0 %v1401
  %v2215 = vpop.f32.mrf.mxu0
  %v2216 = vadd.f32 %v2146, %v2215
  %v2217 = vpop.f32.mrf.mxu0
  %2218 = vdwg.mxu0
  %2219 = vmatprep.subr.mxu0 0.0
  %2220 = vmatpush1.msra.mxu0 %v1570
  %2221 = vmatprep.subr.mxu0 0.0
  %2222 = vmatpush1.msra.mxu0 %v1569
  %2223 = vmatprep.subr.mxu0 0.0
  %2224 = vmatpush1.msra.mxu0 %v1568
  %2225 = vmatprep.subr.mxu0 0.0
  %2226 = vmatpush1.msra.mxu0 %v1567
  %2227 = vmatprep.subr.mxu0 0.0
  %2228 = vmatpush1.msra.mxu0 %v1566
  %2229 = vmatprep.subr.mxu0 0.0
  %2230 = vmatpush1.msra.mxu0 %v1565
  %2231 = vmatprep.subr.mxu0 0.0
  %2232 = vmatpush1.msra.mxu0 %v1564
  %2233 = vmatprep.subr.mxu0 0.0
  %2234 = vmatpush1.msra.mxu0 %v1563
  %2235 = vmatprep.subr.mxu0 0.0
  %2236 = vmatpush1.msra.mxu0 %v1562
  %2237 = vmatprep.subr.mxu0 0.0
  %2238 = vmatpush1.msra.mxu0 %v1561
  %2239 = vmatprep.subr.mxu0 0.0
  %2240 = vmatpush1.msra.mxu0 %v1560
  %2241 = vmatprep.subr.mxu0 0.0
  %2242 = vmatpush1.msra.mxu0 %v1559
  %2243 = vmatprep.subr.mxu0 0.0
  %2244 = vmatpush1.msra.mxu0 %v1558
  %2245 = vmatprep.subr.mxu0 0.0
  %2246 = vmatpush1.msra.mxu0 %v1557
  %2247 = vmatprep.subr.mxu0 0.0
  %2248 = vmatpush1.msra.mxu0 %v1556
  %2249 = vmatprep.subr.mxu0 0.0
  %2250 = vmatpush1.msra.mxu0 %v1555
  %2251 = vmatprep.subr.mxu0 0.0
  %2252 = vmatpush2.msra.mxu0 %v1586
  %2253 = vmatprep.subr.mxu0 0.0
  %2254 = vmatpush2.msra.mxu0 %v1585
  %2255 = vmatprep.subr.mxu0 0.0
  %2256 = vmatpush2.msra.mxu0 %v1584
  %2257 = vmatprep.subr.mxu0 0.0
  %2258 = vmatpush2.msra.mxu0 %v1583
  %2259 = vmatprep.subr.mxu0 0.0
  %2260 = vmatpush2.msra.mxu0 %v1582
  %2261 = vmatprep.subr.mxu0 0.0
  %2262 = vmatpush2.msra.mxu0 %v1581
  %2263 = vmatprep.subr.mxu0 0.0
  %2264 = vmatpush2.msra.mxu0 %v1580
  %2265 = vmatprep.subr.mxu0 0.0
  %2266 = vmatpush2.msra.mxu0 %v1579
  %2267 = vmatprep.subr.mxu0 0.0
  %2268 = vmatpush2.msra.mxu0 %v1578
  %2269 = vmatprep.subr.mxu0 0.0
  %2270 = vmatpush2.msra.mxu0 %v1577
  %2271 = vmatprep.subr.mxu0 0.0
  %2272 = vmatpush2.msra.mxu0 %v1576
  %2273 = vmatprep.subr.mxu0 0.0
  %2274 = vmatpush2.msra.mxu0 %v1575
  %2275 = vmatprep.subr.mxu0 0.0
  %2276 = vmatpush2.msra.mxu0 %v1574
  %2277 = vmatprep.subr.mxu0 0.0
  %2278 = vmatpush2.msra.mxu0 %v1573
  %2279 = vmatprep.subr.mxu0 0.0
  %2280 = vmatpush2.msra.mxu0 %v1572
  %2281 = vmatprep.subr.mxu0 0.0
  %2282 = vmatpush2.msra.mxu0 %v1571
  %2283 = vmatprep.mubr.f32.mxu0 %v1404
  %2284 = vmatmul.mubr.f32.gmra.mxu0 %v1403
  %v2285 = vpop.f32.mrf.mxu0
  %v2286 = vadd.f32 %v2216, %v2285
  %v2287 = vpop.f32.mrf.mxu0
  %2288 = vdwg.mxu0
  %2289 = vmatprep.subr.mxu0 0.0
  %2290 = vmatpush1.msra.mxu0 %v1602
  %2291 = vmatprep.subr.mxu0 0.0
  %2292 = vmatpush1.msra.mxu0 %v1601
  %2293 = vmatprep.subr.mxu0 0.0
  %2294 = vmatpush1.msra.mxu0 %v1600
  %2295 = vmatprep.subr.mxu0 0.0
  %2296 = vmatpush1.msra.mxu0 %v1599
  %2297 = vmatprep.subr.mxu0 0.0
  %2298 = vmatpush1.msra.mxu0 %v1598
  %2299 = vmatprep.subr.mxu0 0.0
  %2300 = vmatpush1.msra.mxu0 %v1597
  %2301 = vmatprep.subr.mxu0 0.0
  %2302 = vmatpush1.msra.mxu0 %v1596
  %2303 = vmatprep.subr.mxu0 0.0
  %2304 = vmatpush1.msra.mxu0 %v1595
  %2305 = vmatprep.subr.mxu0 0.0
  %2306 = vmatpush1.msra.mxu0 %v1594
  %2307 = vmatprep.subr.mxu0 0.0
  %2308 = vmatpush1.msra.mxu0 %v1593
  %2309 = vmatprep.subr.mxu0 0.0
  %2310 = vmatpush1.msra.mxu0 %v1592
  %2311 = vmatprep.subr.mxu0 0.0
  %2312 = vmatpush1.msra.mxu0 %v1591
  %2313 = vmatprep.subr.mxu0 0.0
  %2314 = vmatpush1.msra.mxu0 %v1590
  %2315 = vmatprep.subr.mxu0 0.0
  %2316 = vmatpush1.msra.mxu0 %v1589
  %2317 = vmatprep.subr.mxu0 0.0
  %2318 = vmatpush1.msra.mxu0 %v1588
  %2319 = vmatprep.subr.mxu0 0.0
  %2320 = vmatpush1.msra.mxu0 %v1587
  %2321 = vmatprep.subr.mxu0 0.0
  %2322 = vmatpush2.msra.mxu0 %v1618
  %2323 = vmatprep.subr.mxu0 0.0
  %2324 = vmatpush2.msra.mxu0 %v1617
  %2325 = vmatprep.subr.mxu0 0.0
  %2326 = vmatpush2.msra.mxu0 %v1616
  %2327 = vmatprep.subr.mxu0 0.0
  %2328 = vmatpush2.msra.mxu0 %v1615
  %2329 = vmatprep.subr.mxu0 0.0
  %2330 = vmatpush2.msra.mxu0 %v1614
  %2331 = vmatprep.subr.mxu0 0.0
  %2332 = vmatpush2.msra.mxu0 %v1613
  %2333 = vmatprep.subr.mxu0 0.0
  %2334 = vmatpush2.msra.mxu0 %v1612
  %2335 = vmatprep.subr.mxu0 0.0
  %2336 = vmatpush2.msra.mxu0 %v1611
  %2337 = vmatprep.subr.mxu0 0.0
  %2338 = vmatpush2.msra.mxu0 %v1610
  %2339 = vmatprep.subr.mxu0 0.0
  %2340 = vmatpush2.msra.mxu0 %v1609
  %2341 = vmatprep.subr.mxu0 0.0
  %2342 = vmatpush2.msra.mxu0 %v1608
  %2343 = vmatprep.subr.mxu0 0.0
  %2344 = vmatpush2.msra.mxu0 %v1607
  %2345 = vmatprep.subr.mxu0 0.0
  %2346 = vmatpush2.msra.mxu0 %v1606
  %2347 = vmatprep.subr.mxu0 0.0
  %2348 = vmatpush2.msra.mxu0 %v1605
  %2349 = vmatprep.subr.mxu0 0.0
  %2350 = vmatpush2.msra.mxu0 %v1604
  %2351 = vmatprep.subr.mxu0 0.0
  %2352 = vmatpush2.msra.mxu0 %v1603
  %2353 = vmatprep.mubr.f32.mxu0 %v1406
  %2354 = vmatmul.mubr.f32.gmra.mxu0 %v1405
  %v2355 = vpop.f32.mrf.mxu0
  %v2356 = vadd.f32 %v2286, %v2355
  %v2357 = vpop.f32.mrf.mxu0
  %2358 = vdwg.mxu0
  %2359 = vmatprep.subr.mxu0 0.0
  %2360 = vmatpush1.msra.mxu0 %v1634
  %2361 = vmatprep.subr.mxu0 0.0
  %2362 = vmatpush1.msra.mxu0 %v1633
  %2363 = vmatprep.subr.mxu0 0.0
  %2364 = vmatpush1.msra.mxu0 %v1632
  %2365 = vmatprep.subr.mxu0 0.0
  %2366 = vmatpush1.msra.mxu0 %v1631
  %2367 = vmatprep.subr.mxu0 0.0
  %2368 = vmatpush1.msra.mxu0 %v1630
  %2369 = vmatprep.subr.mxu0 0.0
  %2370 = vmatpush1.msra.mxu0 %v1629
  %2371 = vmatprep.subr.mxu0 0.0
  %2372 = vmatpush1.msra.mxu0 %v1628
  %2373 = vmatprep.subr.mxu0 0.0
  %2374 = vmatpush1.msra.mxu0 %v1627
  %2375 = vmatprep.subr.mxu0 0.0
  %2376 = vmatpush1.msra.mxu0 %v1626
  %2377 = vmatprep.subr.mxu0 0.0
  %2378 = vmatpush1.msra.mxu0 %v1625
  %2379 = vmatprep.subr.mxu0 0.0
  %2380 = vmatpush1.msra.mxu0 %v1624
  %2381 = vmatprep.subr.mxu0 0.0
  %2382 = vmatpush1.msra.mxu0 %v1623
  %2383 = vmatprep.subr.mxu0 0.0
  %2384 = vmatpush1.msra.mxu0 %v1622
  %2385 = vmatprep.subr.mxu0 0.0
  %2386 = vmatpush1.msra.mxu0 %v1621
  %2387 = vmatprep.subr.mxu0 0.0
  %2388 = vmatpush1.msra.mxu0 %v1620
  %2389 = vmatprep.subr.mxu0 0.0
  %2390 = vmatpush1.msra.mxu0 %v1619
  %2391 = vmatprep.subr.mxu0 0.0
  %2392 = vmatpush2.msra.mxu0 %v1650
  %2393 = vmatprep.subr.mxu0 0.0
  %2394 = vmatpush2.msra.mxu0 %v1649
  %2395 = vmatprep.subr.mxu0 0.0
  %2396 = vmatpush2.msra.mxu0 %v1648
  %2397 = vmatprep.subr.mxu0 0.0
  %2398 = vmatpush2.msra.mxu0 %v1647
  %2399 = vmatprep.subr.mxu0 0.0
  %2400 = vmatpush2.msra.mxu0 %v1646
  %2401 = vmatprep.subr.mxu0 0.0
  %2402 = vmatpush2.msra.mxu0 %v1645
  %2403 = vmatprep.subr.mxu0 0.0
  %2404 = vmatpush2.msra.mxu0 %v1644
  %2405 = vmatprep.subr.mxu0 0.0
  %2406 = vmatpush2.msra.mxu0 %v1643
  %2407 = vmatprep.subr.mxu0 0.0
  %2408 = vmatpush2.msra.mxu0 %v1642
  %2409 = vmatprep.subr.mxu0 0.0
  %2410 = vmatpush2.msra.mxu0 %v1641
  %2411 = vmatprep.subr.mxu0 0.0
  %2412 = vmatpush2.msra.mxu0 %v1640
  %2413 = vmatprep.subr.mxu0 0.0
  %2414 = vmatpush2.msra.mxu0 %v1639
  %2415 = vmatprep.subr.mxu0 0.0
  %2416 = vmatpush2.msra.mxu0 %v1638
  %2417 = vmatprep.subr.mxu0 0.0
  %2418 = vmatpush2.msra.mxu0 %v1637
  %2419 = vmatprep.subr.mxu0 0.0
  %2420 = vmatpush2.msra.mxu0 %v1636
  %2421 = vmatprep.subr.mxu0 0.0
  %2422 = vmatpush2.msra.mxu0 %v1635
  %2423 = vmatprep.mubr.f32.mxu0 %v1408
  %2424 = vmatmul.mubr.f32.gmra.mxu0 %v1407
  %v2425 = vpop.f32.mrf.mxu0
  %v2426 = vadd.f32 %v2356, %v2425
  %v2427 = vpop.f32.mrf.mxu0
  %2428 = vdwg.mxu0
  %2429 = vmatprep.subr.mxu0 0.0
  %2430 = vmatpush1.msra.mxu0 %v1666
  %2431 = vmatprep.subr.mxu0 0.0
  %2432 = vmatpush1.msra.mxu0 %v1665
  %2433 = vmatprep.subr.mxu0 0.0
  %2434 = vmatpush1.msra.mxu0 %v1664
  %2435 = vmatprep.subr.mxu0 0.0
  %2436 = vmatpush1.msra.mxu0 %v1663
  %2437 = vmatprep.subr.mxu0 0.0
  %2438 = vmatpush1.msra.mxu0 %v1662
  %2439 = vmatprep.subr.mxu0 0.0
  %2440 = vmatpush1.msra.mxu0 %v1661
  %2441 = vmatprep.subr.mxu0 0.0
  %2442 = vmatpush1.msra.mxu0 %v1660
  %2443 = vmatprep.subr.mxu0 0.0
  %2444 = vmatpush1.msra.mxu0 %v1659
  %2445 = vmatprep.subr.mxu0 0.0
  %2446 = vmatpush1.msra.mxu0 %v1658
  %2447 = vmatprep.subr.mxu0 0.0
  %2448 = vmatpush1.msra.mxu0 %v1657
  %2449 = vmatprep.subr.mxu0 0.0
  %2450 = vmatpush1.msra.mxu0 %v1656
  %2451 = vmatprep.subr.mxu0 0.0
  %2452 = vmatpush1.msra.mxu0 %v1655
  %2453 = vmatprep.subr.mxu0 0.0
  %2454 = vmatpush1.msra.mxu0 %v1654
  %2455 = vmatprep.subr.mxu0 0.0
  %2456 = vmatpush1.msra.mxu0 %v1653
  %2457 = vmatprep.subr.mxu0 0.0
  %2458 = vmatpush1.msra.mxu0 %v1652
  %2459 = vmatprep.subr.mxu0 0.0
  %2460 = vmatpush1.msra.mxu0 %v1651
  %2461 = vmatprep.subr.mxu0 0.0
  %2462 = vmatpush2.msra.mxu0 %v1682
  %2463 = vmatprep.subr.mxu0 0.0
  %2464 = vmatpush2.msra.mxu0 %v1681
  %2465 = vmatprep.subr.mxu0 0.0
  %2466 = vmatpush2.msra.mxu0 %v1680
  %2467 = vmatprep.subr.mxu0 0.0
  %2468 = vmatpush2.msra.mxu0 %v1679
  %2469 = vmatprep.subr.mxu0 0.0
  %2470 = vmatpush2.msra.mxu0 %v1678
  %2471 = vmatprep.subr.mxu0 0.0
  %2472 = vmatpush2.msra.mxu0 %v1677
  %2473 = vmatprep.subr.mxu0 0.0
  %2474 = vmatpush2.msra.mxu0 %v1676
  %2475 = vmatprep.subr.mxu0 0.0
  %2476 = vmatpush2.msra.mxu0 %v1675
  %2477 = vmatprep.subr.mxu0 0.0
  %2478 = vmatpush2.msra.mxu0 %v1674
  %2479 = vmatprep.subr.mxu0 0.0
  %2480 = vmatpush2.msra.mxu0 %v1673
  %2481 = vmatprep.subr.mxu0 0.0
  %2482 = vmatpush2.msra.mxu0 %v1672
  %2483 = vmatprep.subr.mxu0 0.0
  %2484 = vmatpush2.msra.mxu0 %v1671
  %2485 = vmatprep.subr.mxu0 0.0
  %2486 = vmatpush2.msra.mxu0 %v1670
  %2487 = vmatprep.subr.mxu0 0.0
  %2488 = vmatpush2.msra.mxu0 %v1669
  %2489 = vmatprep.subr.mxu0 0.0
  %2490 = vmatpush2.msra.mxu0 %v1668
  %2491 = vmatprep.subr.mxu0 0.0
  %2492 = vmatpush2.msra.mxu0 %v1667
  %2493 = vmatprep.mubr.f32.mxu0 %v1410
  %2494 = vmatmul.mubr.f32.gmra.mxu0 %v1409
  %v2495 = vpop.f32.mrf.mxu0
  %v2496 = vadd.f32 %v2426, %v2495
  %v2497 = vpop.f32.mrf.mxu0
  %2498 = vdwg.mxu0
  %2499 = vmatprep.subr.mxu0 0.0
  %2500 = vmatpush1.msra.mxu0 %v1698
  %2501 = vmatprep.subr.mxu0 0.0
  %2502 = vmatpush1.msra.mxu0 %v1697
  %2503 = vmatprep.subr.mxu0 0.0
  %2504 = vmatpush1.msra.mxu0 %v1696
  %2505 = vmatprep.subr.mxu0 0.0
  %2506 = vmatpush1.msra.mxu0 %v1695
  %2507 = vmatprep.subr.mxu0 0.0
  %2508 = vmatpush1.msra.mxu0 %v1694
  %2509 = vmatprep.subr.mxu0 0.0
  %2510 = vmatpush1.msra.mxu0 %v1693
  %2511 = vmatprep.subr.mxu0 0.0
  %2512 = vmatpush1.msra.mxu0 %v1692
  %2513 = vmatprep.subr.mxu0 0.0
  %2514 = vmatpush1.msra.mxu0 %v1691
  %2515 = vmatprep.subr.mxu0 0.0
  %2516 = vmatpush1.msra.mxu0 %v1690
  %2517 = vmatprep.subr.mxu0 0.0
  %2518 = vmatpush1.msra.mxu0 %v1689
  %2519 = vmatprep.subr.mxu0 0.0
  %2520 = vmatpush1.msra.mxu0 %v1688
  %2521 = vmatprep.subr.mxu0 0.0
  %2522 = vmatpush1.msra.mxu0 %v1687
  %2523 = vmatprep.subr.mxu0 0.0
  %2524 = vmatpush1.msra.mxu0 %v1686
  %2525 = vmatprep.subr.mxu0 0.0
  %2526 = vmatpush1.msra.mxu0 %v1685
  %2527 = vmatprep.subr.mxu0 0.0
  %2528 = vmatpush1.msra.mxu0 %v1684
  %2529 = vmatprep.subr.mxu0 0.0
  %2530 = vmatpush1.msra.mxu0 %v1683
  %2531 = vmatprep.subr.mxu0 0.0
  %2532 = vmatpush2.msra.mxu0 %v1714
  %2533 = vmatprep.subr.mxu0 0.0
  %2534 = vmatpush2.msra.mxu0 %v1713
  %2535 = vmatprep.subr.mxu0 0.0
  %2536 = vmatpush2.msra.mxu0 %v1712
  %2537 = vmatprep.subr.mxu0 0.0
  %2538 = vmatpush2.msra.mxu0 %v1711
  %2539 = vmatprep.subr.mxu0 0.0
  %2540 = vmatpush2.msra.mxu0 %v1710
  %2541 = vmatprep.subr.mxu0 0.0
  %2542 = vmatpush2.msra.mxu0 %v1709
  %2543 = vmatprep.subr.mxu0 0.0
  %2544 = vmatpush2.msra.mxu0 %v1708
  %2545 = vmatprep.subr.mxu0 0.0
  %2546 = vmatpush2.msra.mxu0 %v1707
  %2547 = vmatprep.subr.mxu0 0.0
  %2548 = vmatpush2.msra.mxu0 %v1706
  %2549 = vmatprep.subr.mxu0 0.0
  %2550 = vmatpush2.msra.mxu0 %v1705
  %2551 = vmatprep.subr.mxu0 0.0
  %2552 = vmatpush2.msra.mxu0 %v1704
  %2553 = vmatprep.subr.mxu0 0.0
  %2554 = vmatpush2.msra.mxu0 %v1703
  %2555 = vmatprep.subr.mxu0 0.0
  %2556 = vmatpush2.msra.mxu0 %v1702
  %2557 = vmatprep.subr.mxu0 0.0
  %2558 = vmatpush2.msra.mxu0 %v1701
  %2559 = vmatprep.subr.mxu0 0.0
  %2560 = vmatpush2.msra.mxu0 %v1700
  %2561 = vmatprep.subr.mxu0 0.0
  %2562 = vmatpush2.msra.mxu0 %v1699
  %2563 = vmatprep.mubr.f32.mxu0 %v1412
  %2564 = vmatmul.mubr.f32.gmra.mxu0 %v1411
  %v2565 = vpop.f32.mrf.mxu0
  %v2566 = vadd.f32 %v2496, %v2565
  %v2567 = vpop.f32.mrf.mxu0
  %2568 = vdwg.mxu0
  %2569 = vmatprep.subr.mxu0 0.0
  %2570 = vmatpush1.msra.mxu0 %v1730
  %2571 = vmatprep.subr.mxu0 0.0
  %2572 = vmatpush1.msra.mxu0 %v1729
  %2573 = vmatprep.subr.mxu0 0.0
  %2574 = vmatpush1.msra.mxu0 %v1728
  %2575 = vmatprep.subr.mxu0 0.0
  %2576 = vmatpush1.msra.mxu0 %v1727
  %2577 = vmatprep.subr.mxu0 0.0
  %2578 = vmatpush1.msra.mxu0 %v1726
  %2579 = vmatprep.subr.mxu0 0.0
  %2580 = vmatpush1.msra.mxu0 %v1725
  %2581 = vmatprep.subr.mxu0 0.0
  %2582 = vmatpush1.msra.mxu0 %v1724
  %2583 = vmatprep.subr.mxu0 0.0
  %2584 = vmatpush1.msra.mxu0 %v1723
  %2585 = vmatprep.subr.mxu0 0.0
  %2586 = vmatpush1.msra.mxu0 %v1722
  %2587 = vmatprep.subr.mxu0 0.0
  %2588 = vmatpush1.msra.mxu0 %v1721
  %2589 = vmatprep.subr.mxu0 0.0
  %2590 = vmatpush1.msra.mxu0 %v1720
  %2591 = vmatprep.subr.mxu0 0.0
  %2592 = vmatpush1.msra.mxu0 %v1719
  %2593 = vmatprep.subr.mxu0 0.0
  %2594 = vmatpush1.msra.mxu0 %v1718
  %2595 = vmatprep.subr.mxu0 0.0
  %2596 = vmatpush1.msra.mxu0 %v1717
  %2597 = vmatprep.subr.mxu0 0.0
  %2598 = vmatpush1.msra.mxu0 %v1716
  %2599 = vmatprep.subr.mxu0 0.0
  %2600 = vmatpush1.msra.mxu0 %v1715
  %2601 = vmatprep.subr.mxu0 0.0
  %2602 = vmatpush2.msra.mxu0 %v1746
  %2603 = vmatprep.subr.mxu0 0.0
  %2604 = vmatpush2.msra.mxu0 %v1745
  %2605 = vmatprep.subr.mxu0 0.0
  %2606 = vmatpush2.msra.mxu0 %v1744
  %2607 = vmatprep.subr.mxu0 0.0
  %2608 = vmatpush2.msra.mxu0 %v1743
  %2609 = vmatprep.subr.mxu0 0.0
  %2610 = vmatpush2.msra.mxu0 %v1742
  %2611 = vmatprep.subr.mxu0 0.0
  %2612 = vmatpush2.msra.mxu0 %v1741
  %2613 = vmatprep.subr.mxu0 0.0
  %2614 = vmatpush2.msra.mxu0 %v1740
  %2615 = vmatprep.subr.mxu0 0.0
  %2616 = vmatpush2.msra.mxu0 %v1739
  %2617 = vmatprep.subr.mxu0 0.0
  %2618 = vmatpush2.msra.mxu0 %v1738
  %2619 = vmatprep.subr.mxu0 0.0
  %2620 = vmatpush2.msra.mxu0 %v1737
  %2621 = vmatprep.subr.mxu0 0.0
  %2622 = vmatpush2.msra.mxu0 %v1736
  %2623 = vmatprep.subr.mxu0 0.0
  %2624 = vmatpush2.msra.mxu0 %v1735
  %2625 = vmatprep.subr.mxu0 0.0
  %2626 = vmatpush2.msra.mxu0 %v1734
  %2627 = vmatprep.subr.mxu0 0.0
  %2628 = vmatpush2.msra.mxu0 %v1733
  %2629 = vmatprep.subr.mxu0 0.0
  %2630 = vmatpush2.msra.mxu0 %v1732
  %2631 = vmatprep.subr.mxu0 0.0
  %2632 = vmatpush2.msra.mxu0 %v1731
  %2633 = vmatprep.mubr.f32.mxu0 %v1414
  %2634 = vmatmul.mubr.f32.gmra.mxu0 %v1413
  %v2635 = vpop.f32.mrf.mxu0
  %v2636 = vadd.f32 %v2566, %v2635
  %v2637 = vpop.f32.mrf.mxu0
  %2638 = vdwg.mxu0
  %2639 = vmatprep.subr.mxu0 0.0
  %2640 = vmatpush1.msra.mxu0 %v1762
  %2641 = vmatprep.subr.mxu0 0.0
  %2642 = vmatpush1.msra.mxu0 %v1761
  %2643 = vmatprep.subr.mxu0 0.0
  %2644 = vmatpush1.msra.mxu0 %v1760
  %2645 = vmatprep.subr.mxu0 0.0
  %2646 = vmatpush1.msra.mxu0 %v1759
  %2647 = vmatprep.subr.mxu0 0.0
  %2648 = vmatpush1.msra.mxu0 %v1758
  %2649 = vmatprep.subr.mxu0 0.0
  %2650 = vmatpush1.msra.mxu0 %v1757
  %2651 = vmatprep.subr.mxu0 0.0
  %2652 = vmatpush1.msra.mxu0 %v1756
  %2653 = vmatprep.subr.mxu0 0.0
  %2654 = vmatpush1.msra.mxu0 %v1755
  %2655 = vmatprep.subr.mxu0 0.0
  %2656 = vmatpush1.msra.mxu0 %v1754
  %2657 = vmatprep.subr.mxu0 0.0
  %2658 = vmatpush1.msra.mxu0 %v1753
  %2659 = vmatprep.subr.mxu0 0.0
  %2660 = vmatpush1.msra.mxu0 %v1752
  %2661 = vmatprep.subr.mxu0 0.0
  %2662 = vmatpush1.msra.mxu0 %v1751
  %2663 = vmatprep.subr.mxu0 0.0
  %2664 = vmatpush1.msra.mxu0 %v1750
  %2665 = vmatprep.subr.mxu0 0.0
  %2666 = vmatpush1.msra.mxu0 %v1749
  %2667 = vmatprep.subr.mxu0 0.0
  %2668 = vmatpush1.msra.mxu0 %v1748
  %2669 = vmatprep.subr.mxu0 0.0
  %2670 = vmatpush1.msra.mxu0 %v1747
  %2671 = vmatprep.subr.mxu0 0.0
  %2672 = vmatpush2.msra.mxu0 %v1778
  %2673 = vmatprep.subr.mxu0 0.0
  %2674 = vmatpush2.msra.mxu0 %v1777
  %2675 = vmatprep.subr.mxu0 0.0
  %2676 = vmatpush2.msra.mxu0 %v1776
  %2677 = vmatprep.subr.mxu0 0.0
  %2678 = vmatpush2.msra.mxu0 %v1775
  %2679 = vmatprep.subr.mxu0 0.0
  %2680 = vmatpush2.msra.mxu0 %v1774
  %2681 = vmatprep.subr.mxu0 0.0
  %2682 = vmatpush2.msra.mxu0 %v1773
  %2683 = vmatprep.subr.mxu0 0.0
  %2684 = vmatpush2.msra.mxu0 %v1772
  %2685 = vmatprep.subr.mxu0 0.0
  %2686 = vmatpush2.msra.mxu0 %v1771
  %2687 = vmatprep.subr.mxu0 0.0
  %2688 = vmatpush2.msra.mxu0 %v1770
  %2689 = vmatprep.subr.mxu0 0.0
  %2690 = vmatpush2.msra.mxu0 %v1769
  %2691 = vmatprep.subr.mxu0 0.0
  %2692 = vmatpush2.msra.mxu0 %v1768
  %2693 = vmatprep.subr.mxu0 0.0
  %2694 = vmatpush2.msra.mxu0 %v1767
  %2695 = vmatprep.subr.mxu0 0.0
  %2696 = vmatpush2.msra.mxu0 %v1766
  %2697 = vmatprep.subr.mxu0 0.0
  %2698 = vmatpush2.msra.mxu0 %v1765
  %2699 = vmatprep.subr.mxu0 0.0
  %2700 = vmatpush2.msra.mxu0 %v1764
  %2701 = vmatprep.subr.mxu0 0.0
  %2702 = vmatpush2.msra.mxu0 %v1763
  %2703 = vmatprep.mubr.f32.mxu0 %v1416
  %2704 = vmatmul.mubr.f32.gmra.mxu0 %v1415
  %v2705 = vpop.f32.mrf.mxu0
  %v2706 = vadd.f32 %v2636, %v2705
  %v2707 = vpop.f32.mrf.mxu0
  %2708 = vdwg.mxu0
  %2709 = vmatprep.subr.mxu0 0.0
  %2710 = vmatpush1.msra.mxu0 %v1794
  %2711 = vmatprep.subr.mxu0 0.0
  %2712 = vmatpush1.msra.mxu0 %v1793
  %2713 = vmatprep.subr.mxu0 0.0
  %2714 = vmatpush1.msra.mxu0 %v1792
  %2715 = vmatprep.subr.mxu0 0.0
  %2716 = vmatpush1.msra.mxu0 %v1791
  %2717 = vmatprep.subr.mxu0 0.0
  %2718 = vmatpush1.msra.mxu0 %v1790
  %2719 = vmatprep.subr.mxu0 0.0
  %2720 = vmatpush1.msra.mxu0 %v1789
  %2721 = vmatprep.subr.mxu0 0.0
  %2722 = vmatpush1.msra.mxu0 %v1788
  %2723 = vmatprep.subr.mxu0 0.0
  %2724 = vmatpush1.msra.mxu0 %v1787
  %2725 = vmatprep.subr.mxu0 0.0
  %2726 = vmatpush1.msra.mxu0 %v1786
  %2727 = vmatprep.subr.mxu0 0.0
  %2728 = vmatpush1.msra.mxu0 %v1785
  %2729 = vmatprep.subr.mxu0 0.0
  %2730 = vmatpush1.msra.mxu0 %v1784
  %2731 = vmatprep.subr.mxu0 0.0
  %2732 = vmatpush1.msra.mxu0 %v1783
  %2733 = vmatprep.subr.mxu0 0.0
  %2734 = vmatpush1.msra.mxu0 %v1782
  %2735 = vmatprep.subr.mxu0 0.0
  %2736 = vmatpush1.msra.mxu0 %v1781
  %2737 = vmatprep.subr.mxu0 0.0
  %2738 = vmatpush1.msra.mxu0 %v1780
  %2739 = vmatprep.subr.mxu0 0.0
  %2740 = vmatpush1.msra.mxu0 %v1779
  %2741 = vmatprep.subr.mxu0 0.0
  %2742 = vmatpush2.msra.mxu0 %v1810
  %2743 = vmatprep.subr.mxu0 0.0
  %2744 = vmatpush2.msra.mxu0 %v1809
  %2745 = vmatprep.subr.mxu0 0.0
  %2746 = vmatpush2.msra.mxu0 %v1808
  %2747 = vmatprep.subr.mxu0 0.0
  %2748 = vmatpush2.msra.mxu0 %v1807
  %2749 = vmatprep.subr.mxu0 0.0
  %2750 = vmatpush2.msra.mxu0 %v1806
  %2751 = vmatprep.subr.mxu0 0.0
  %2752 = vmatpush2.msra.mxu0 %v1805
  %2753 = vmatprep.subr.mxu0 0.0
  %2754 = vmatpush2.msra.mxu0 %v1804
  %2755 = vmatprep.subr.mxu0 0.0
  %2756 = vmatpush2.msra.mxu0 %v1803
  %2757 = vmatprep.subr.mxu0 0.0
  %2758 = vmatpush2.msra.mxu0 %v1802
  %2759 = vmatprep.subr.mxu0 0.0
  %2760 = vmatpush2.msra.mxu0 %v1801
  %2761 = vmatprep.subr.mxu0 0.0
  %2762 = vmatpush2.msra.mxu0 %v1800
  %2763 = vmatprep.subr.mxu0 0.0
  %2764 = vmatpush2.msra.mxu0 %v1799
  %2765 = vmatprep.subr.mxu0 0.0
  %2766 = vmatpush2.msra.mxu0 %v1798
  %2767 = vmatprep.subr.mxu0 0.0
  %2768 = vmatpush2.msra.mxu0 %v1797
  %2769 = vmatprep.subr.mxu0 0.0
  %2770 = vmatpush2.msra.mxu0 %v1796
  %2771 = vmatprep.subr.mxu0 0.0
  %2772 = vmatpush2.msra.mxu0 %v1795
  %2773 = vmatprep.mubr.f32.mxu0 %v1418
  %2774 = vmatmul.mubr.f32.gmra.mxu0 %v1417
  %v2775 = vpop.f32.mrf.mxu0
  %v2776 = vadd.f32 %v2706, %v2775
  %v2777 = vpop.f32.mrf.mxu0
  %2778 = vdwg.mxu0
  %2779 = vmatprep.subr.mxu0 0.0
  %2780 = vmatpush1.msra.mxu0 %v1826
  %2781 = vmatprep.subr.mxu0 0.0
  %2782 = vmatpush1.msra.mxu0 %v1825
  %2783 = vmatprep.subr.mxu0 0.0
  %2784 = vmatpush1.msra.mxu0 %v1824
  %2785 = vmatprep.subr.mxu0 0.0
  %2786 = vmatpush1.msra.mxu0 %v1823
  %2787 = vmatprep.subr.mxu0 0.0
  %2788 = vmatpush1.msra.mxu0 %v1822
  %2789 = vmatprep.subr.mxu0 0.0
  %2790 = vmatpush1.msra.mxu0 %v1821
  %2791 = vmatprep.subr.mxu0 0.0
  %2792 = vmatpush1.msra.mxu0 %v1820
  %2793 = vmatprep.subr.mxu0 0.0
  %2794 = vmatpush1.msra.mxu0 %v1819
  %2795 = vmatprep.subr.mxu0 0.0
  %2796 = vmatpush1.msra.mxu0 %v1818
  %2797 = vmatprep.subr.mxu0 0.0
  %2798 = vmatpush1.msra.mxu0 %v1817
  %2799 = vmatprep.subr.mxu0 0.0
  %2800 = vmatpush1.msra.mxu0 %v1816
  %2801 = vmatprep.subr.mxu0 0.0
  %2802 = vmatpush1.msra.mxu0 %v1815
  %2803 = vmatprep.subr.mxu0 0.0
  %2804 = vmatpush1.msra.mxu0 %v1814
  %2805 = vmatprep.subr.mxu0 0.0
  %2806 = vmatpush1.msra.mxu0 %v1813
  %2807 = vmatprep.subr.mxu0 0.0
  %2808 = vmatpush1.msra.mxu0 %v1812
  %2809 = vmatprep.subr.mxu0 0.0
  %2810 = vmatpush1.msra.mxu0 %v1811
  %2811 = vmatprep.subr.mxu0 0.0
  %2812 = vmatpush2.msra.mxu0 %v1842
  %2813 = vmatprep.subr.mxu0 0.0
  %2814 = vmatpush2.msra.mxu0 %v1841
  %2815 = vmatprep.subr.mxu0 0.0
  %2816 = vmatpush2.msra.mxu0 %v1840
  %2817 = vmatprep.subr.mxu0 0.0
  %2818 = vmatpush2.msra.mxu0 %v1839
  %2819 = vmatprep.subr.mxu0 0.0
  %2820 = vmatpush2.msra.mxu0 %v1838
  %2821 = vmatprep.subr.mxu0 0.0
  %2822 = vmatpush2.msra.mxu0 %v1837
  %2823 = vmatprep.subr.mxu0 0.0
  %2824 = vmatpush2.msra.mxu0 %v1836
  %2825 = vmatprep.subr.mxu0 0.0
  %2826 = vmatpush2.msra.mxu0 %v1835
  %2827 = vmatprep.subr.mxu0 0.0
  %2828 = vmatpush2.msra.mxu0 %v1834
  %2829 = vmatprep.subr.mxu0 0.0
  %2830 = vmatpush2.msra.mxu0 %v1833
  %2831 = vmatprep.subr.mxu0 0.0
  %2832 = vmatpush2.msra.mxu0 %v1832
  %2833 = vmatprep.subr.mxu0 0.0
  %2834 = vmatpush2.msra.mxu0 %v1831
  %2835 = vmatprep.subr.mxu0 0.0
  %2836 = vmatpush2.msra.mxu0 %v1830
  %2837 = vmatprep.subr.mxu0 0.0
  %2838 = vmatpush2.msra.mxu0 %v1829
  %2839 = vmatprep.subr.mxu0 0.0
  %2840 = vmatpush2.msra.mxu0 %v1828
  %2841 = vmatprep.subr.mxu0 0.0
  %2842 = vmatpush2.msra.mxu0 %v1827
  %2843 = vmatprep.mubr.f32.mxu0 %v1420
  %2844 = vmatmul.mubr.f32.gmra.mxu0 %v1419
  %v2845 = vpop.f32.mrf.mxu0
  %v2846 = vadd.f32 %v2776, %v2845
  %v2847 = vpop.f32.mrf.mxu0
  %2848 = vdwg.mxu0
  %2849 = vmatprep.subr.mxu0 0.0
  %2850 = vmatpush1.msra.mxu0 %v1858
  %2851 = vmatprep.subr.mxu0 0.0
  %2852 = vmatpush1.msra.mxu0 %v1857
  %2853 = vmatprep.subr.mxu0 0.0
  %2854 = vmatpush1.msra.mxu0 %v1856
  %2855 = vmatprep.subr.mxu0 0.0
  %2856 = vmatpush1.msra.mxu0 %v1855
  %2857 = vmatprep.subr.mxu0 0.0
  %2858 = vmatpush1.msra.mxu0 %v1854
  %2859 = vmatprep.subr.mxu0 0.0
  %2860 = vmatpush1.msra.mxu0 %v1853
  %2861 = vmatprep.subr.mxu0 0.0
  %2862 = vmatpush1.msra.mxu0 %v1852
  %2863 = vmatprep.subr.mxu0 0.0
  %2864 = vmatpush1.msra.mxu0 %v1851
  %2865 = vmatprep.subr.mxu0 0.0
  %2866 = vmatpush1.msra.mxu0 %v1850
  %2867 = vmatprep.subr.mxu0 0.0
  %2868 = vmatpush1.msra.mxu0 %v1849
  %2869 = vmatprep.subr.mxu0 0.0
  %2870 = vmatpush1.msra.mxu0 %v1848
  %2871 = vmatprep.subr.mxu0 0.0
  %2872 = vmatpush1.msra.mxu0 %v1847
  %2873 = vmatprep.subr.mxu0 0.0
  %2874 = vmatpush1.msra.mxu0 %v1846
  %2875 = vmatprep.subr.mxu0 0.0
  %2876 = vmatpush1.msra.mxu0 %v1845
  %2877 = vmatprep.subr.mxu0 0.0
  %2878 = vmatpush1.msra.mxu0 %v1844
  %2879 = vmatprep.subr.mxu0 0.0
  %2880 = vmatpush1.msra.mxu0 %v1843
  %2881 = vmatprep.subr.mxu0 0.0
  %2882 = vmatpush2.msra.mxu0 %v1874
  %2883 = vmatprep.subr.mxu0 0.0
  %2884 = vmatpush2.msra.mxu0 %v1873
  %2885 = vmatprep.subr.mxu0 0.0
  %2886 = vmatpush2.msra.mxu0 %v1872
  %2887 = vmatprep.subr.mxu0 0.0
  %2888 = vmatpush2.msra.mxu0 %v1871
  %2889 = vmatprep.subr.mxu0 0.0
  %2890 = vmatpush2.msra.mxu0 %v1870
  %2891 = vmatprep.subr.mxu0 0.0
  %2892 = vmatpush2.msra.mxu0 %v1869
  %2893 = vmatprep.subr.mxu0 0.0
  %2894 = vmatpush2.msra.mxu0 %v1868
  %2895 = vmatprep.subr.mxu0 0.0
  %2896 = vmatpush2.msra.mxu0 %v1867
  %2897 = vmatprep.subr.mxu0 0.0
  %2898 = vmatpush2.msra.mxu0 %v1866
  %2899 = vmatprep.subr.mxu0 0.0
  %2900 = vmatpush2.msra.mxu0 %v1865
  %2901 = vmatprep.subr.mxu0 0.0
  %2902 = vmatpush2.msra.mxu0 %v1864
  %2903 = vmatprep.subr.mxu0 0.0
  %2904 = vmatpush2.msra.mxu0 %v1863
  %2905 = vmatprep.subr.mxu0 0.0
  %2906 = vmatpush2.msra.mxu0 %v1862
  %2907 = vmatprep.subr.mxu0 0.0
  %2908 = vmatpush2.msra.mxu0 %v1861
  %2909 = vmatprep.subr.mxu0 0.0
  %2910 = vmatpush2.msra.mxu0 %v1860
  %2911 = vmatprep.subr.mxu0 0.0
  %2912 = vmatpush2.msra.mxu0 %v1859
  %2913 = vmatprep.mubr.f32.mxu0 %v1422
  %2914 = vmatmul.mubr.f32.gmra.mxu0 %v1421
  %v2915 = vpop.f32.mrf.mxu0
  %v2916 = vadd.f32 %v2846, %v2915
  %v2917 = vpop.f32.mrf.mxu0
  %2918 = vdwg.mxu0
  %2919 = vmatprep.subr.mxu0 0.0
  %2920 = vmatpush1.msra.mxu0 %v1890
  %2921 = vmatprep.subr.mxu0 0.0
  %2922 = vmatpush1.msra.mxu0 %v1889
  %2923 = vmatprep.subr.mxu0 0.0
  %2924 = vmatpush1.msra.mxu0 %v1888
  %2925 = vmatprep.subr.mxu0 0.0
  %2926 = vmatpush1.msra.mxu0 %v1887
  %2927 = vmatprep.subr.mxu0 0.0
  %2928 = vmatpush1.msra.mxu0 %v1886
  %2929 = vmatprep.subr.mxu0 0.0
  %2930 = vmatpush1.msra.mxu0 %v1885
  %2931 = vmatprep.subr.mxu0 0.0
  %2932 = vmatpush1.msra.mxu0 %v1884
  %2933 = vmatprep.subr.mxu0 0.0
  %2934 = vmatpush1.msra.mxu0 %v1883
  %2935 = vmatprep.subr.mxu0 0.0
  %2936 = vmatpush1.msra.mxu0 %v1882
  %2937 = vmatprep.subr.mxu0 0.0
  %2938 = vmatpush1.msra.mxu0 %v1881
  %2939 = vmatprep.subr.mxu0 0.0
  %2940 = vmatpush1.msra.mxu0 %v1880
  %2941 = vmatprep.subr.mxu0 0.0
  %2942 = vmatpush1.msra.mxu0 %v1879
  %2943 = vmatprep.subr.mxu0 0.0
  %2944 = vmatpush1.msra.mxu0 %v1878
  %2945 = vmatprep.subr.mxu0 0.0
  %2946 = vmatpush1.msra.mxu0 %v1877
  %2947 = vmatprep.subr.mxu0 0.0
  %2948 = vmatpush1.msra.mxu0 %v1876
  %2949 = vmatprep.subr.mxu0 0.0
  %2950 = vmatpush1.msra.mxu0 %v1875
  %2951 = vmatprep.subr.mxu0 0.0
  %2952 = vmatpush2.msra.mxu0 %v1906
  %2953 = vmatprep.subr.mxu0 0.0
  %2954 = vmatpush2.msra.mxu0 %v1905
  %2955 = vmatprep.subr.mxu0 0.0
  %2956 = vmatpush2.msra.mxu0 %v1904
  %2957 = vmatprep.subr.mxu0 0.0
  %2958 = vmatpush2.msra.mxu0 %v1903
  %2959 = vmatprep.subr.mxu0 0.0
  %2960 = vmatpush2.msra.mxu0 %v1902
  %2961 = vmatprep.subr.mxu0 0.0
  %2962 = vmatpush2.msra.mxu0 %v1901
  %2963 = vmatprep.subr.mxu0 0.0
  %2964 = vmatpush2.msra.mxu0 %v1900
  %2965 = vmatprep.subr.mxu0 0.0
  %2966 = vmatpush2.msra.mxu0 %v1899
  %2967 = vmatprep.subr.mxu0 0.0
  %2968 = vmatpush2.msra.mxu0 %v1898
  %2969 = vmatprep.subr.mxu0 0.0
  %2970 = vmatpush2.msra.mxu0 %v1897
  %2971 = vmatprep.subr.mxu0 0.0
  %2972 = vmatpush2.msra.mxu0 %v1896
  %2973 = vmatprep.subr.mxu0 0.0
  %2974 = vmatpush2.msra.mxu0 %v1895
  %2975 = vmatprep.subr.mxu0 0.0
  %2976 = vmatpush2.msra.mxu0 %v1894
  %2977 = vmatprep.subr.mxu0 0.0
  %2978 = vmatpush2.msra.mxu0 %v1893
  %2979 = vmatprep.subr.mxu0 0.0
  %2980 = vmatpush2.msra.mxu0 %v1892
  %2981 = vmatprep.subr.mxu0 0.0
  %2982 = vmatpush2.msra.mxu0 %v1891
  %2983 = vmatprep.mubr.f32.mxu0 %v1424
  %2984 = vmatmul.mubr.f32.gmra.mxu0 %v1423
  %v2985 = vpop.f32.mrf.mxu0
  %v2986 = vadd.f32 %v2916, %v2985
  %v2987 = vpop.f32.mrf.mxu0
  %2988 = vdwg.mxu0
  %2989 = vmatprep.subr.mxu0 0.0
  %2990 = vmatpush1.msra.mxu0 %v1922
  %2991 = vmatprep.subr.mxu0 0.0
  %2992 = vmatpush1.msra.mxu0 %v1921
  %2993 = vmatprep.subr.mxu0 0.0
  %2994 = vmatpush1.msra.mxu0 %v1920
  %2995 = vmatprep.subr.mxu0 0.0
  %2996 = vmatpush1.msra.mxu0 %v1919
  %2997 = vmatprep.subr.mxu0 0.0
  %2998 = vmatpush1.msra.mxu0 %v1918
  %2999 = vmatprep.subr.mxu0 0.0
  %3000 = vmatpush1.msra.mxu0 %v1917
  %3001 = vmatprep.subr.mxu0 0.0
  %3002 = vmatpush1.msra.mxu0 %v1916
  %3003 = vmatprep.subr.mxu0 0.0
  %3004 = vmatpush1.msra.mxu0 %v1915
  %3005 = vmatprep.subr.mxu0 0.0
  %3006 = vmatpush1.msra.mxu0 %v1914
  %3007 = vmatprep.subr.mxu0 0.0
  %3008 = vmatpush1.msra.mxu0 %v1913
  %3009 = vmatprep.subr.mxu0 0.0
  %3010 = vmatpush1.msra.mxu0 %v1912
  %3011 = vmatprep.subr.mxu0 0.0
  %3012 = vmatpush1.msra.mxu0 %v1911
  %3013 = vmatprep.subr.mxu0 0.0
  %3014 = vmatpush1.msra.mxu0 %v1910
  %3015 = vmatprep.subr.mxu0 0.0
  %3016 = vmatpush1.msra.mxu0 %v1909
  %3017 = vmatprep.subr.mxu0 0.0
  %3018 = vmatpush1.msra.mxu0 %v1908
  %3019 = vmatprep.subr.mxu0 0.0
  %3020 = vmatpush1.msra.mxu0 %v1907
  %3021 = vmatprep.subr.mxu0 0.0
  %3022 = vmatpush2.msra.mxu0 %v1938
  %3023 = vmatprep.subr.mxu0 0.0
  %3024 = vmatpush2.msra.mxu0 %v1937
  %3025 = vmatprep.subr.mxu0 0.0
  %3026 = vmatpush2.msra.mxu0 %v1936
  %3027 = vmatprep.subr.mxu0 0.0
  %3028 = vmatpush2.msra.mxu0 %v1935
  %3029 = vmatprep.subr.mxu0 0.0
  %3030 = vmatpush2.msra.mxu0 %v1934
  %3031 = vmatprep.subr.mxu0 0.0
  %3032 = vmatpush2.msra.mxu0 %v1933
  %3033 = vmatprep.subr.mxu0 0.0
  %3034 = vmatpush2.msra.mxu0 %v1932
  %3035 = vmatprep.subr.mxu0 0.0
  %3036 = vmatpush2.msra.mxu0 %v1931
  %3037 = vmatprep.subr.mxu0 0.0
  %3038 = vmatpush2.msra.mxu0 %v1930
  %3039 = vmatprep.subr.mxu0 0.0
  %3040 = vmatpush2.msra.mxu0 %v1929
  %3041 = vmatprep.subr.mxu0 0.0
  %3042 = vmatpush2.msra.mxu0 %v1928
  %3043 = vmatprep.subr.mxu0 0.0
  %3044 = vmatpush2.msra.mxu0 %v1927
  %3045 = vmatprep.subr.mxu0 0.0
  %3046 = vmatpush2.msra.mxu0 %v1926
  %3047 = vmatprep.subr.mxu0 0.0
  %3048 = vmatpush2.msra.mxu0 %v1925
  %3049 = vmatprep.subr.mxu0 0.0
  %3050 = vmatpush2.msra.mxu0 %v1924
  %3051 = vmatprep.subr.mxu0 0.0
  %3052 = vmatpush2.msra.mxu0 %v1923
  %3053 = vmatprep.mubr.f32.mxu0 %v1426
  %3054 = vmatmul.mubr.f32.gmra.mxu0 %v1425
  %v3055 = vpop.f32.mrf.mxu0
  %v3056 = vadd.f32 %v2986, %v3055
  %v3057 = vpop.f32.mrf.mxu0
  %3058 = vdwg.mxu0
  %v3059 = vld [vmem:[%s4] sm:$0xff]
  %v3060 = vld [vmem:[%s4 + $0x8] sm:$0xff]
  %v3061 = vld [vmem:[%s4 + $0x10] sm:$0xff]
  %v3062 = vld [vmem:[%s4 + $0x18] sm:$0xff]
  %v3063 = vld [vmem:[%s5] sm:$0xff]
  %v3064 = vld [vmem:[%s5 + $0x8] sm:$0xff]
  %v3065 = vld [vmem:[%s5 + $0x10] sm:$0xff]
  %v3066 = vld [vmem:[%s5 + $0x18] sm:$0xff]
  %3068 = vset.pattern.permute.xlu0 0
  %3069 = vperm.xlu0 %3068, %v3063
  %v3070 = vpop.permute.xlu0 %3069
  %3073 = vset.pattern.permute.xlu0 0
  %3074 = vperm.xlu0 %3073, %v3064
  %v3075 = vpop.permute.xlu0 %3074
  %3078 = vset.pattern.permute.xlu0 0
  %3079 = vperm.xlu0 %3078, %v3065
  %v3080 = vpop.permute.xlu0 %3079
  %3083 = vset.pattern.permute.xlu0 0
  %3084 = vperm.xlu0 %3083, %v3066
  %v3085 = vpop.permute.xlu0 %3084
  %vm3087 = vcmask 64512
  %v3089 = vsel %vm3087, %v3059, 0
  %v3092 = vsel %vm3087, %v3060, 0
  %v3095 = vsel %vm3087, %v3061, 0
  %v3098 = vsel %vm3087, %v3062, 0
  %3100 = vmatprep.subr.mxu0 0.0
  %3101 = vmatpush1.msra.mxu0 0.0
  %3102 = vmatprep.subr.mxu0 0.0
  %3103 = vmatpush1.msra.mxu0 0.0
  %3104 = vmatprep.subr.mxu0 0.0
  %3105 = vmatpush1.msra.mxu0 0.0
  %3106 = vmatprep.subr.mxu0 0.0
  %3107 = vmatpush1.msra.mxu0 0.0
  %3108 = vmatprep.subr.mxu0 0.0
  %3109 = vmatpush1.msra.mxu0 0.0
  %3110 = vmatprep.subr.mxu0 0.0
  %3111 = vmatpush1.msra.mxu0 0.0
  %3112 = vmatprep.subr.mxu0 0.0
  %3113 = vmatpush1.msra.mxu0 0.0
  %3114 = vmatprep.subr.mxu0 0.0
  %3115 = vmatpush1.msra.mxu0 0.0
  %3116 = vmatprep.subr.mxu0 0.0
  %3117 = vmatpush1.msra.mxu0 0.0
  %3118 = vmatprep.subr.mxu0 0.0
  %3119 = vmatpush1.msra.mxu0 0.0
  %3120 = vmatprep.subr.mxu0 0.0
  %3121 = vmatpush1.msra.mxu0 0.0
  %3122 = vmatprep.subr.mxu0 0.0
  %3123 = vmatpush1.msra.mxu0 0.0
  %3124 = vmatprep.subr.mxu0 0.0
  %3125 = vmatpush1.msra.mxu0 0.0
  %3126 = vmatprep.subr.mxu0 0.0
  %3127 = vmatpush1.msra.mxu0 0.0
  %3128 = vmatprep.subr.mxu0 0.0
  %3129 = vmatpush1.msra.mxu0 0.0
  %3130 = vmatprep.subr.mxu0 0.0
  %3131 = vmatpush1.msra.mxu0 %v3056
  %3132 = vmatprep.subr.mxu0 0.0
  %3133 = vmatpush2.msra.mxu0 0.0
  %3134 = vmatprep.subr.mxu0 0.0
  %3135 = vmatpush2.msra.mxu0 0.0
  %3136 = vmatprep.subr.mxu0 0.0
  %3137 = vmatpush2.msra.mxu0 0.0
  %3138 = vmatprep.subr.mxu0 0.0
  %3139 = vmatpush2.msra.mxu0 0.0
  %3140 = vmatprep.subr.mxu0 0.0
  %3141 = vmatpush2.msra.mxu0 0.0
  %3142 = vmatprep.subr.mxu0 0.0
  %3143 = vmatpush2.msra.mxu0 0.0
  %3144 = vmatprep.subr.mxu0 0.0
  %3145 = vmatpush2.msra.mxu0 0.0
  %3146 = vmatprep.subr.mxu0 0.0
  %3147 = vmatpush2.msra.mxu0 0.0
  %3148 = vmatprep.subr.mxu0 0.0
  %3149 = vmatpush2.msra.mxu0 0.0
  %3150 = vmatprep.subr.mxu0 0.0
  %3151 = vmatpush2.msra.mxu0 0.0
  %3152 = vmatprep.subr.mxu0 0.0
  %3153 = vmatpush2.msra.mxu0 0.0
  %3154 = vmatprep.subr.mxu0 0.0
  %3155 = vmatpush2.msra.mxu0 0.0
  %3156 = vmatprep.subr.mxu0 0.0
  %3157 = vmatpush2.msra.mxu0 0.0
  %3158 = vmatprep.subr.mxu0 0.0
  %3159 = vmatpush2.msra.mxu0 0.0
  %3160 = vmatprep.subr.mxu0 0.0
  %3161 = vmatpush2.msra.mxu0 0.0
  %3162 = vmatprep.subr.mxu0 0.0
  %3163 = vmatpush2.msra.mxu0 0.0
  %3164 = vmatprep.mubr.f32.mxu0 0.0
  %3165 = vmatmul.mubr.f32.gmra.mxu0 %v3089
  %v3166 = vpop.f32.mrf.mxu0
  %v3167 = vadd.f32 %v3070, %v3166
  %v3168 = vpop.f32.mrf.mxu0
  %3169 = vmatprep.mubr.f32.mxu0 0.0
  %3170 = vmatmul.mubr.f32.gmra.mxu0 %v3092
  %v3171 = vpop.f32.mrf.mxu0
  %v3172 = vadd.f32 %v3075, %v3171
  %v3173 = vpop.f32.mrf.mxu0
  %3174 = vmatprep.mubr.f32.mxu0 0.0
  %3175 = vmatmul.mubr.f32.gmra.mxu0 %v3095
  %v3176 = vpop.f32.mrf.mxu0
  %v3177 = vadd.f32 %v3080, %v3176
  %v3178 = vpop.f32.mrf.mxu0
  %3179 = vmatprep.mubr.f32.mxu0 0.0
  %3180 = vmatmul.mubr.f32.gmra.mxu0 %v3098
  %v3181 = vpop.f32.mrf.mxu0
  %v3182 = vadd.f32 %v3085, %v3181
  %v3183 = vpop.f32.mrf.mxu0
  %3184 = vdwg.mxu0
  %v3185 = vmax.f32 %v3167, 0.0
  %v3186 = vmax.f32 %v3172, 0.0
  %v3187 = vmax.f32 %v3177, 0.0
  %v3188 = vmax.f32 %v3182, 0.0
  %vm3189 = vcmask 130048
  %3190 = vst.msk [vmem:[%s6] sm:$0xff] %vm3189, %v3185
  %3191 = vst.msk [vmem:[%s6 + $0x8] sm:$0xff] %vm3189, %v3186
  %3192 = vst.msk [vmem:[%s6 + $0x10] sm:$0xff] %vm3189, %v3187
  %3193 = vst.msk [vmem:[%s6 + $0x18] sm:$0xff] %vm3189, %v3188
  // Predicated region
  $region26: #{spatial_temporal_forward.2} parent=0 // pred_check
    _
  $region27: #{spatial_temporal_forward.2} parent=0 // pred_check_branch
    %3195 = sbr.rel (0) target = $region29
  $region28: #{spatial_temporal_forward.2} parent=0 // pred_region
    _
  $region29: #{spatial_temporal_forward.2} parent=0 // pred_fallthru
    _
  // Predicated region
  $region30: #{spatial_temporal_forward.2} parent=0 // pred_check
    _
  $region31: #{spatial_temporal_forward.2} parent=0 // pred_check_branch
    %3197 = sbr.rel (0) target = $region33
  $region32: #{spatial_temporal_forward.2} parent=0 // pred_region
    _
  $region33: #{spatial_temporal_forward.2} parent=0 // pred_fallthru
    _

// kernel: spatial_temporal_forward.3
$region0: #{spatial_temporal_forward.3}
  #allocation0 [shape = 'u32[]', space=smem, size = 0x4, offset = 0x4, fixed_abs, tag = 'smem constant byte address 0x4 - core index']
  #allocation1 [shape = 'u32[144,128]{1,0:T(1,128)}', space=vmem, size = 0x12000, scoped, tag = 'internal scratch']
  #allocation2 [shape = 'f32[8,2,32]{2,1,0:T(2,128)}', space=vmem, size = 0x2000, scoped, tag = 'scratch operand']
  #allocation3 [shape = 'f32[8,2,32]{2,1,0:T(2,128)}', space=vmem, size = 0x2000, scoped, tag = 'scratch operand']
  %s0 = inlined_call_operand.vmem [shape: f32[8,2,32], index: 0, kind: input, shape index: {}]
  %s1 = inlined_call_operand.vmem [shape: f32[64,96], index: 1, kind: input, shape index: {}]
  %s2 = inlined_call_operand.vmem [shape: f32[64,96], index: 2, kind: input, shape index: {}]
  %s3 = inlined_call_operand.vmem [shape: f32[4,96], index: 3, kind: input, shape index: {}]
  %s4 = inlined_call_operand.vmem [shape: f32[4,96], index: 4, kind: input, shape index: {}]
  %s5 = inlined_call_operand.vmem [shape: f32[64,5], index: 5, kind: input, shape index: {}]
  %s6 = inlined_call_operand.vmem [shape: f32[1,5], index: 6, kind: input, shape index: {}]
  %s7 = inlined_call_operand.vmem [shape: f32[8,2,5], index: 7, kind: output, shape index: {}]
  %s8 = sld [smem:[#allocation0]]
  $region38: #{spatial_temporal_forward.3} parent=0
    _
  %s10 = ssub.s32 1, %s8
  %s11 = scalar_select 0, %s10, %s8
  // Predicated region
  $region2: #{spatial_temporal_forward.3} parent=0 // pred_check
    _
  $region3: #{spatial_temporal_forward.3} parent=0 // pred_check_branch
    %13 = sbr.rel (0) target = $region5
  $region4: #{spatial_temporal_forward.3} parent=0 // pred_region
    _
  $region5: #{spatial_temporal_forward.3} parent=0 // pred_fallthru
    _
  // Predicated region
  $region6: #{spatial_temporal_forward.3} parent=0 // pred_check
    _
  $region7: #{spatial_temporal_forward.3} parent=0 // pred_check_branch
    %15 = sbr.rel (0) target = $region9
  $region8: #{spatial_temporal_forward.3} parent=0 // pred_region
    _
  $region9: #{spatial_temporal_forward.3} parent=0 // pred_fallthru
    _
  // Predicated region
  $region10: #{spatial_temporal_forward.3} parent=0 // pred_check
    _
  $region11: #{spatial_temporal_forward.3} parent=0 // pred_check_branch
    %17 = sbr.rel (0) target = $region13
  $region12: #{spatial_temporal_forward.3} parent=0 // pred_region
    _
  $region13: #{spatial_temporal_forward.3} parent=0 // pred_fallthru
    _
  // Predicated region
  $region14: #{spatial_temporal_forward.3} parent=0 // pred_check
    _
  $region15: #{spatial_temporal_forward.3} parent=0 // pred_check_branch
    %19 = sbr.rel (0) target = $region17
  $region16: #{spatial_temporal_forward.3} parent=0 // pred_region
    _
  $region17: #{spatial_temporal_forward.3} parent=0 // pred_fallthru
    _
  // Predicated region
  $region18: #{spatial_temporal_forward.3} parent=0 // pred_check
    _
  $region19: #{spatial_temporal_forward.3} parent=0 // pred_check_branch
    %21 = sbr.rel (0) target = $region21
  $region20: #{spatial_temporal_forward.3} parent=0 // pred_region
    _
  $region21: #{spatial_temporal_forward.3} parent=0 // pred_fallthru
    _
  // Predicated region
  $region22: #{spatial_temporal_forward.3} parent=0 // pred_check
    _
  $region23: #{spatial_temporal_forward.3} parent=0 // pred_check_branch
    %23 = sbr.rel (0) target = $region25
  $region24: #{spatial_temporal_forward.3} parent=0 // pred_region
    _
  $region25: #{spatial_temporal_forward.3} parent=0 // pred_fallthru
    _
  // Predicated region
  $region26: #{spatial_temporal_forward.3} parent=0 // pred_check
    _
  $region27: #{spatial_temporal_forward.3} parent=0 // pred_check_branch
    %25 = sbr.rel (0) target = $region29
  $region28: #{spatial_temporal_forward.3} parent=0 // pred_region
    _
  $region29: #{spatial_temporal_forward.3} parent=0 // pred_fallthru
    _
  %v26 = vld [vmem:[%s1] sm:$0xff]
  %v27 = vld [vmem:[%s1 + $0x8] sm:$0xff]
  %v28 = vld [vmem:[%s1 + $0x10] sm:$0xff]
  %v29 = vld [vmem:[%s1 + $0x18] sm:$0xff]
  %v30 = vld [vmem:[%s1 + $0x20] sm:$0xff]
  %v31 = vld [vmem:[%s1 + $0x28] sm:$0xff]
  %v32 = vld [vmem:[%s1 + $0x30] sm:$0xff]
  %v33 = vld [vmem:[%s1 + $0x38] sm:$0xff]
  %v34 = vld [vmem:[%s2] sm:$0xff]
  %v35 = vld [vmem:[%s2 + $0x8] sm:$0xff]
  %v36 = vld [vmem:[%s2 + $0x10] sm:$0xff]
  %v37 = vld [vmem:[%s2 + $0x18] sm:$0xff]
  %v38 = vld [vmem:[%s2 + $0x20] sm:$0xff]
  %v39 = vld [vmem:[%s2 + $0x28] sm:$0xff]
  %v40 = vld [vmem:[%s2 + $0x30] sm:$0xff]
  %v41 = vld [vmem:[%s2 + $0x38] sm:$0xff]
  %v42 = vld [vmem:[%s3] sm:$0xf]
  %v43 = vld [vmem:[%s4] sm:$0xf]
  %v44 = vld [vmem:[%s0] sm:$0x3]
  %s45 = scalar_lea.vmem %s0, 14
  %v46 = vld [vmem:[%s45] sm:$0x3]
  %vm47 = vcmask 261120
  %v48 = vsel %vm47, %v44, 0.0
  %50 = vrot.lane.b32.xlu0 %v46, 32
  %v51 = vpop.permute.xlu0 %50
  %v53 = vsel %vm47, 0.0, %v51
  %v55 = vrot.slane %v53, 6
  %vm57 = vcmask 1041408
  %v58 = vsel %vm57, %v48, %v55
  %v60 = vrot.slane 0.0, 6
  %v62 = vsel %vm57, 0.0, %v60
  %vm63 = vcmask 523264
  %v65 = vsel %vm63, %v58, 0
  %67 = vmatprep.subr.mxu0 0.0
  %68 = vmatpush1.msra.mxu0 0.0
  %69 = vmatprep.subr.mxu0 0.0
  %70 = vmatpush1.msra.mxu0 0.0
  %71 = vmatprep.subr.mxu0 0.0
  %72 = vmatpush1.msra.mxu0 0.0
  %73 = vmatprep.subr.mxu0 0.0
  %74 = vmatpush1.msra.mxu0 0.0
  %75 = vmatprep.subr.mxu0 0.0
  %76 = vmatpush1.msra.mxu0 0.0
  %77 = vmatprep.subr.mxu0 0.0
  %78 = vmatpush1.msra.mxu0 0.0
  %79 = vmatprep.subr.mxu0 0.0
  %80 = vmatpush1.msra.mxu0 0.0
  %81 = vmatprep.subr.mxu0 0.0
  %82 = vmatpush1.msra.mxu0 0.0
  %83 = vmatprep.subr.mxu0 0.0
  %84 = vmatpush1.msra.mxu0 %v33
  %85 = vmatprep.subr.mxu0 0.0
  %86 = vmatpush1.msra.mxu0 %v32
  %87 = vmatprep.subr.mxu0 0.0
  %88 = vmatpush1.msra.mxu0 %v31
  %89 = vmatprep.subr.mxu0 0.0
  %90 = vmatpush1.msra.mxu0 %v30
  %91 = vmatprep.subr.mxu0 0.0
  %92 = vmatpush1.msra.mxu0 %v29
  %93 = vmatprep.subr.mxu0 0.0
  %94 = vmatpush1.msra.mxu0 %v28
  %95 = vmatprep.subr.mxu0 0.0
  %96 = vmatpush1.msra.mxu0 %v27
  %97 = vmatprep.subr.mxu0 0.0
  %98 = vmatpush1.msra.mxu0 %v26
  %99 = vmatprep.subr.mxu0 0.0
  %100 = vmatpush2.msra.mxu0 0.0
  %101 = vmatprep.subr.mxu0 0.0
  %102 = vmatpush2.msra.mxu0 0.0
  %103 = vmatprep.subr.mxu0 0.0
  %104 = vmatpush2.msra.mxu0 0.0
  %105 = vmatprep.subr.mxu0 0.0
  %106 = vmatpush2.msra.mxu0 0.0
  %107 = vmatprep.subr.mxu0 0.0
  %108 = vmatpush2.msra.mxu0 0.0
  %109 = vmatprep.subr.mxu0 0.0
  %110 = vmatpush2.msra.mxu0 0.0
  %111 = vmatprep.subr.mxu0 0.0
  %112 = vmatpush2.msra.mxu0 0.0
  %113 = vmatprep.subr.mxu0 0.0
  %114 = vmatpush2.msra.mxu0 0.0
  %115 = vmatprep.subr.mxu0 0.0
  %116 = vmatpush2.msra.mxu0 0.0
  %117 = vmatprep.subr.mxu0 0.0
  %118 = vmatpush2.msra.mxu0 0.0
  %119 = vmatprep.subr.mxu0 0.0
  %120 = vmatpush2.msra.mxu0 0.0
  %121 = vmatprep.subr.mxu0 0.0
  %122 = vmatpush2.msra.mxu0 0.0
  %123 = vmatprep.subr.mxu0 0.0
  %124 = vmatpush2.msra.mxu0 0.0
  %125 = vmatprep.subr.mxu0 0.0
  %126 = vmatpush2.msra.mxu0 0.0
  %127 = vmatprep.subr.mxu0 0.0
  %128 = vmatpush2.msra.mxu0 0.0
  %129 = vmatprep.subr.mxu0 0.0
  %130 = vmatpush2.msra.mxu0 0.0
  %131 = vmatprep.mubr.f32.mxu0 0.0
  %132 = vmatmul.mubr.f32.gmra.mxu0 %v65
  %v133 = vpop.f32.mrf.mxu0
  %v134 = vadd.f32 %v42, %v133
  %v135 = vpop.f32.mrf.mxu0
  %136 = vdwg.mxu0
  %v138 = vsel %vm63, %v62, 0
  %140 = vmatprep.subr.mxu0 0.0
  %141 = vmatpush1.msra.mxu0 0.0
  %142 = vmatprep.subr.mxu0 0.0
  %143 = vmatpush1.msra.mxu0 0.0
  %144 = vmatprep.subr.mxu0 0.0
  %145 = vmatpush1.msra.mxu0 0.0
  %146 = vmatprep.subr.mxu0 0.0
  %147 = vmatpush1.msra.mxu0 0.0
  %148 = vmatprep.subr.mxu0 0.0
  %149 = vmatpush1.msra.mxu0 0.0
  %150 = vmatprep.subr.mxu0 0.0
  %151 = vmatpush1.msra.mxu0 0.0
  %152 = vmatprep.subr.mxu0 0.0
  %153 = vmatpush1.msra.mxu0 0.0
  %154 = vmatprep.subr.mxu0 0.0
  %155 = vmatpush1.msra.mxu0 0.0
  %156 = vmatprep.subr.mxu0 0.0
  %157 = vmatpush1.msra.mxu0 %v41
  %158 = vmatprep.subr.mxu0 0.0
  %159 = vmatpush1.msra.mxu0 %v40
  %160 = vmatprep.subr.mxu0 0.0
  %161 = vmatpush1.msra.mxu0 %v39
  %162 = vmatprep.subr.mxu0 0.0
  %163 = vmatpush1.msra.mxu0 %v38
  %164 = vmatprep.subr.mxu0 0.0
  %165 = vmatpush1.msra.mxu0 %v37
  %166 = vmatprep.subr.mxu0 0.0
  %167 = vmatpush1.msra.mxu0 %v36
  %168 = vmatprep.subr.mxu0 0.0
  %169 = vmatpush1.msra.mxu0 %v35
  %170 = vmatprep.subr.mxu0 0.0
  %171 = vmatpush1.msra.mxu0 %v34
  %172 = vmatprep.subr.mxu0 0.0
  %173 = vmatpush2.msra.mxu0 0.0
  %174 = vmatprep.subr.mxu0 0.0
  %175 = vmatpush2.msra.mxu0 0.0
  %176 = vmatprep.subr.mxu0 0.0
  %177 = vmatpush2.msra.mxu0 0.0
  %178 = vmatprep.subr.mxu0 0.0
  %179 = vmatpush2.msra.mxu0 0.0
  %180 = vmatprep.subr.mxu0 0.0
  %181 = vmatpush2.msra.mxu0 0.0
  %182 = vmatprep.subr.mxu0 0.0
  %183 = vmatpush2.msra.mxu0 0.0
  %184 = vmatprep.subr.mxu0 0.0
  %185 = vmatpush2.msra.mxu0 0.0
  %186 = vmatprep.subr.mxu0 0.0
  %187 = vmatpush2.msra.mxu0 0.0
  %188 = vmatprep.subr.mxu0 0.0
  %189 = vmatpush2.msra.mxu0 0.0
  %190 = vmatprep.subr.mxu0 0.0
  %191 = vmatpush2.msra.mxu0 0.0
  %192 = vmatprep.subr.mxu0 0.0
  %193 = vmatpush2.msra.mxu0 0.0
  %194 = vmatprep.subr.mxu0 0.0
  %195 = vmatpush2.msra.mxu0 0.0
  %196 = vmatprep.subr.mxu0 0.0
  %197 = vmatpush2.msra.mxu0 0.0
  %198 = vmatprep.subr.mxu0 0.0
  %199 = vmatpush2.msra.mxu0 0.0
  %200 = vmatprep.subr.mxu0 0.0
  %201 = vmatpush2.msra.mxu0 0.0
  %202 = vmatprep.subr.mxu0 0.0
  %203 = vmatpush2.msra.mxu0 0.0
  %204 = vmatprep.mubr.f32.mxu0 0.0
  %205 = vmatmul.mubr.f32.gmra.mxu0 %v138
  %v206 = vpop.f32.mrf.mxu0
  %v207 = vadd.f32 %v43, %v206
  %v208 = vpop.f32.mrf.mxu0
  %209 = vdwg.mxu0
  %v210 = vadd.f32 %v134, %v207
  %v211 = vxor.u32 %v210, 2147483648
  %v212 = vmul.f32 %v211, 1.442695
  %v213 = vpow.pop %v212
  %v214 = vadd.f32 %v213, 1.0
  %v215 = vrcp.pop %v214
  %v216 = vmul.f32 1.0, %v215
  %218 = vrot.lane.b32.xlu0 %v207, 64
  %v219 = vpop.permute.xlu0 %218
  %v221 = vmul.f32 %v216, %v219
  %223 = vrot.lane.b32.xlu0 %v221, 64
  %v224 = vpop.permute.xlu0 %223
  %v226 = vadd.f32 %v134, %v224
  %v227 = vtanh.pop %v226
  %v228 = vsub.f32 1.0, %v216
  %230 = vrot.lane.b32.xlu0 %v227, 96
  %v231 = vpop.permute.xlu0 %230
  %v233 = vmul.f32 %v228, %v231
  %v234 = vmul.f32 %v216, 0.0
  %v235 = vadd.f32 %v233, %v234
  %237 = vrot.lane.b32.xlu0 %v235, 96
  %v238 = vpop.permute.xlu0 %237
  %vm240 = vcmask 254976
  %241 = vst.msk [vmem:[#allocation2] sm:$0x3] %vm240, %v238
  %s242 = scalar_lea.vmem [#allocation3], 14
  %vm243 = vcmask 257026
  %244 = vst.msk [vmem:[%s242 - $0x2] sm:$0xc] %vm243, %v238
  %s245 = scalar_lea.vmem %s0, 2
  %v246 = vld [vmem:[%s245] sm:$0x3]
  %s247 = scalar_lea.vmem %s0, 12
  %v248 = vld [vmem:[%s247] sm:$0x3]
  %v249 = vsel %vm47, %v246, 0.0
  %251 = vrot.lane.b32.xlu0 %v248, 32
  %v252 = vpop.permute.xlu0 %251
  %v254 = vsel %vm47, 0.0, %v252
  %v256 = vrot.slane %v254, 6
  %v258 = vsel %vm57, %v249, %v256
  %v259 = vsel %vm47, %v238, 0.0
  %v260 = vrot.slane %v235, 2
  %v262 = vsel %vm47, 0.0, %v260
  %v264 = vrot.slane %v262, 6
  %v266 = vsel %vm57, %v259, %v264
  %v268 = vsel %vm63, %v258, 0
  %270 = vmatprep.subr.mxu0 0.0
  %271 = vmatpush1.msra.mxu0 0.0
  %272 = vmatprep.subr.mxu0 0.0
  %273 = vmatpush1.msra.mxu0 0.0
  %274 = vmatprep.subr.mxu0 0.0
  %275 = vmatpush1.msra.mxu0 0.0
  %276 = vmatprep.subr.mxu0 0.0
  %277 = vmatpush1.msra.mxu0 0.0
  %278 = vmatprep.subr.mxu0 0.0
  %279 = vmatpush1.msra.mxu0 0.0
  %280 = vmatprep.subr.mxu0 0.0
  %281 = vmatpush1.msra.mxu0 0.0
  %282 = vmatprep.subr.mxu0 0.0
  %283 = vmatpush1.msra.mxu0 0.0
  %284 = vmatprep.subr.mxu0 0.0
  %285 = vmatpush1.msra.mxu0 0.0
  %286 = vmatprep.subr.mxu0 0.0
  %287 = vmatpush1.msra.mxu0 %v33
  %288 = vmatprep.subr.mxu0 0.0
  %289 = vmatpush1.msra.mxu0 %v32
  %290 = vmatprep.subr.mxu0 0.0
  %291 = vmatpush1.msra.mxu0 %v31
  %292 = vmatprep.subr.mxu0 0.0
  %293 = vmatpush1.msra.mxu0 %v30
  %294 = vmatprep.subr.mxu0 0.0
  %295 = vmatpush1.msra.mxu0 %v29
  %296 = vmatprep.subr.mxu0 0.0
  %297 = vmatpush1.msra.mxu0 %v28
  %298 = vmatprep.subr.mxu0 0.0
  %299 = vmatpush1.msra.mxu0 %v27
  %300 = vmatprep.subr.mxu0 0.0
  %301 = vmatpush1.msra.mxu0 %v26
  %302 = vmatprep.subr.mxu0 0.0
  %303 = vmatpush2.msra.mxu0 0.0
  %304 = vmatprep.subr.mxu0 0.0
  %305 = vmatpush2.msra.mxu0 0.0
  %306 = vmatprep.subr.mxu0 0.0
  %307 = vmatpush2.msra.mxu0 0.0
  %308 = vmatprep.subr.mxu0 0.0
  %309 = vmatpush2.msra.mxu0 0.0
  %310 = vmatprep.subr.mxu0 0.0
  %311 = vmatpush2.msra.mxu0 0.0
  %312 = vmatprep.subr.mxu0 0.0
  %313 = vmatpush2.msra.mxu0 0.0
  %314 = vmatprep.subr.mxu0 0.0
  %315 = vmatpush2.msra.mxu0 0.0
  %316 = vmatprep.subr.mxu0 0.0
  %317 = vmatpush2.msra.mxu0 0.0
  %318 = vmatprep.subr.mxu0 0.0
  %319 = vmatpush2.msra.mxu0 0.0
  %320 = vmatprep.subr.mxu0 0.0
  %321 = vmatpush2.msra.mxu0 0.0
  %322 = vmatprep.subr.mxu0 0.0
  %323 = vmatpush2.msra.mxu0 0.0
  %324 = vmatprep.subr.mxu0 0.0
  %325 = vmatpush2.msra.mxu0 0.0
  %326 = vmatprep.subr.mxu0 0.0
  %327 = vmatpush2.msra.mxu0 0.0
  %328 = vmatprep.subr.mxu0 0.0
  %329 = vmatpush2.msra.mxu0 0.0
  %330 = vmatprep.subr.mxu0 0.0
  %331 = vmatpush2.msra.mxu0 0.0
  %332 = vmatprep.subr.mxu0 0.0
  %333 = vmatpush2.msra.mxu0 0.0
  %334 = vmatprep.mubr.f32.mxu0 0.0
  %335 = vmatmul.mubr.f32.gmra.mxu0 %v268
  %v336 = vpop.f32.mrf.mxu0
  %v337 = vadd.f32 %v42, %v336
  %v338 = vpop.f32.mrf.mxu0
  %339 = vdwg.mxu0
  %v341 = vsel %vm63, %v266, 0
  %343 = vmatprep.subr.mxu0 0.0
  %344 = vmatpush1.msra.mxu0 0.0
  %345 = vmatprep.subr.mxu0 0.0
  %346 = vmatpush1.msra.mxu0 0.0
  %347 = vmatprep.subr.mxu0 0.0
  %348 = vmatpush1.msra.mxu0 0.0
  %349 = vmatprep.subr.mxu0 0.0
  %350 = vmatpush1.msra.mxu0 0.0
  %351 = vmatprep.subr.mxu0 0.0
  %352 = vmatpush1.msra.mxu0 0.0
  %353 = vmatprep.subr.mxu0 0.0
  %354 = vmatpush1.msra.mxu0 0.0
  %355 = vmatprep.subr.mxu0 0.0
  %356 = vmatpush1.msra.mxu0 0.0
  %357 = vmatprep.subr.mxu0 0.0
  %358 = vmatpush1.msra.mxu0 0.0
  %359 = vmatprep.subr.mxu0 0.0
  %360 = vmatpush1.msra.mxu0 %v41
  %361 = vmatprep.subr.mxu0 0.0
  %362 = vmatpush1.msra.mxu0 %v40
  %363 = vmatprep.subr.mxu0 0.0
  %364 = vmatpush1.msra.mxu0 %v39
  %365 = vmatprep.subr.mxu0 0.0
  %366 = vmatpush1.msra.mxu0 %v38
  %367 = vmatprep.subr.mxu0 0.0
  %368 = vmatpush1.msra.mxu0 %v37
  %369 = vmatprep.subr.mxu0 0.0
  %370 = vmatpush1.msra.mxu0 %v36
  %371 = vmatprep.subr.mxu0 0.0
  %372 = vmatpush1.msra.mxu0 %v35
  %373 = vmatprep.subr.mxu0 0.0
  %374 = vmatpush1.msra.mxu0 %v34
  %375 = vmatprep.subr.mxu0 0.0
  %376 = vmatpush2.msra.mxu0 0.0
  %377 = vmatprep.subr.mxu0 0.0
  %378 = vmatpush2.msra.mxu0 0.0
  %379 = vmatprep.subr.mxu0 0.0
  %380 = vmatpush2.msra.mxu0 0.0
  %381 = vmatprep.subr.mxu0 0.0
  %382 = vmatpush2.msra.mxu0 0.0
  %383 = vmatprep.subr.mxu0 0.0
  %384 = vmatpush2.msra.mxu0 0.0
  %385 = vmatprep.subr.mxu0 0.0
  %386 = vmatpush2.msra.mxu0 0.0
  %387 = vmatprep.subr.mxu0 0.0
  %388 = vmatpush2.msra.mxu0 0.0
  %389 = vmatprep.subr.mxu0 0.0
  %390 = vmatpush2.msra.mxu0 0.0
  %391 = vmatprep.subr.mxu0 0.0
  %392 = vmatpush2.msra.mxu0 0.0
  %393 = vmatprep.subr.mxu0 0.0
  %394 = vmatpush2.msra.mxu0 0.0
  %395 = vmatprep.subr.mxu0 0.0
  %396 = vmatpush2.msra.mxu0 0.0
  %397 = vmatprep.subr.mxu0 0.0
  %398 = vmatpush2.msra.mxu0 0.0
  %399 = vmatprep.subr.mxu0 0.0
  %400 = vmatpush2.msra.mxu0 0.0
  %401 = vmatprep.subr.mxu0 0.0
  %402 = vmatpush2.msra.mxu0 0.0
  %403 = vmatprep.subr.mxu0 0.0
  %404 = vmatpush2.msra.mxu0 0.0
  %405 = vmatprep.subr.mxu0 0.0
  %406 = vmatpush2.msra.mxu0 0.0
  %407 = vmatprep.mubr.f32.mxu0 0.0
  %408 = vmatmul.mubr.f32.gmra.mxu0 %v341
  %v409 = vpop.f32.mrf.mxu0
  %v410 = vadd.f32 %v43, %v409
  %v411 = vpop.f32.mrf.mxu0
  %412 = vdwg.mxu0
  %v413 = vadd.f32 %v337, %v410
  %v414 = vxor.u32 %v413, 2147483648
  %v415 = vmul.f32 %v414, 1.442695
  %v416 = vpow.pop %v415
  %v417 = vadd.f32 %v416, 1.0
  %v418 = vrcp.pop %v417
  %v419 = vmul.f32 1.0, %v418
  %421 = vrot.lane.b32.xlu0 %v410, 64
  %v422 = vpop.permute.xlu0 %421
  %v424 = vmul.f32 %v419, %v422
  %426 = vrot.lane.b32.xlu0 %v424, 64
  %v427 = vpop.permute.xlu0 %426
  %v429 = vadd.f32 %v337, %v427
  %v430 = vtanh.pop %v429
  %v431 = vsub.f32 1.0, %v419
  %433 = vrot.lane.b32.xlu0 %v430, 96
  %v434 = vpop.permute.xlu0 %433
  %v436 = vmul.f32 %v431, %v434
  %v437 = vmul.f32 %v419, %v235
  %v438 = vadd.f32 %v436, %v437
  %440 = vrot.lane.b32.xlu0 %v438, 96
  %v441 = vpop.permute.xlu0 %440
  %s443 = scalar_lea.vmem [#allocation2], 2
  %444 = vst.msk [vmem:[%s443] sm:$0x3] %vm240, %v441
  %s445 = scalar_lea.vmem [#allocation3], 12
  %446 = vst.msk [vmem:[%s445 - $0x2] sm:$0xc] %vm243, %v441
  %s447 = scalar_lea.vmem %s0, 4
  %v448 = vld [vmem:[%s447] sm:$0x3]
  %s449 = scalar_lea.vmem %s0, 10
  %v450 = vld [vmem:[%s449] sm:$0x3]
  %v451 = vsel %vm47, %v448, 0.0
  %453 = vrot.lane.b32.xlu0 %v450, 32
  %v454 = vpop.permute.xlu0 %453
  %v456 = vsel %vm47, 0.0, %v454
  %v458 = vrot.slane %v456, 6
  %v460 = vsel %vm57, %v451, %v458
  %v461 = vsel %vm47, %v441, 0.0
  %v462 = vrot.slane %v438, 2
  %v464 = vsel %vm47, 0.0, %v462
  %v466 = vrot.slane %v464, 6
  %v468 = vsel %vm57, %v461, %v466
  %v470 = vsel %vm63, %v460, 0
  %472 = vmatprep.subr.mxu0 0.0
  %473 = vmatpush1.msra.mxu0 0.0
  %474 = vmatprep.subr.mxu0 0.0
  %475 = vmatpush1.msra.mxu0 0.0
  %476 = vmatprep.subr.mxu0 0.0
  %477 = vmatpush1.msra.mxu0 0.0
  %478 = vmatprep.subr.mxu0 0.0
  %479 = vmatpush1.msra.mxu0 0.0
  %480 = vmatprep.subr.mxu0 0.0
  %481 = vmatpush1.msra.mxu0 0.0
  %482 = vmatprep.subr.mxu0 0.0
  %483 = vmatpush1.msra.mxu0 0.0
  %484 = vmatprep.subr.mxu0 0.0
  %485 = vmatpush1.msra.mxu0 0.0
  %486 = vmatprep.subr.mxu0 0.0
  %487 = vmatpush1.msra.mxu0 0.0
  %488 = vmatprep.subr.mxu0 0.0
  %489 = vmatpush1.msra.mxu0 %v33
  %490 = vmatprep.subr.mxu0 0.0
  %491 = vmatpush1.msra.mxu0 %v32
  %492 = vmatprep.subr.mxu0 0.0
  %493 = vmatpush1.msra.mxu0 %v31
  %494 = vmatprep.subr.mxu0 0.0
  %495 = vmatpush1.msra.mxu0 %v30
  %496 = vmatprep.subr.mxu0 0.0
  %497 = vmatpush1.msra.mxu0 %v29
  %498 = vmatprep.subr.mxu0 0.0
  %499 = vmatpush1.msra.mxu0 %v28
  %500 = vmatprep.subr.mxu0 0.0
  %501 = vmatpush1.msra.mxu0 %v27
  %502 = vmatprep.subr.mxu0 0.0
  %503 = vmatpush1.msra.mxu0 %v26
  %504 = vmatprep.subr.mxu0 0.0
  %505 = vmatpush2.msra.mxu0 0.0
  %506 = vmatprep.subr.mxu0 0.0
  %507 = vmatpush2.msra.mxu0 0.0
  %508 = vmatprep.subr.mxu0 0.0
  %509 = vmatpush2.msra.mxu0 0.0
  %510 = vmatprep.subr.mxu0 0.0
  %511 = vmatpush2.msra.mxu0 0.0
  %512 = vmatprep.subr.mxu0 0.0
  %513 = vmatpush2.msra.mxu0 0.0
  %514 = vmatprep.subr.mxu0 0.0
  %515 = vmatpush2.msra.mxu0 0.0
  %516 = vmatprep.subr.mxu0 0.0
  %517 = vmatpush2.msra.mxu0 0.0
  %518 = vmatprep.subr.mxu0 0.0
  %519 = vmatpush2.msra.mxu0 0.0
  %520 = vmatprep.subr.mxu0 0.0
  %521 = vmatpush2.msra.mxu0 0.0
  %522 = vmatprep.subr.mxu0 0.0
  %523 = vmatpush2.msra.mxu0 0.0
  %524 = vmatprep.subr.mxu0 0.0
  %525 = vmatpush2.msra.mxu0 0.0
  %526 = vmatprep.subr.mxu0 0.0
  %527 = vmatpush2.msra.mxu0 0.0
  %528 = vmatprep.subr.mxu0 0.0
  %529 = vmatpush2.msra.mxu0 0.0
  %530 = vmatprep.subr.mxu0 0.0
  %531 = vmatpush2.msra.mxu0 0.0
  %532 = vmatprep.subr.mxu0 0.0
  %533 = vmatpush2.msra.mxu0 0.0
  %534 = vmatprep.subr.mxu0 0.0
  %535 = vmatpush2.msra.mxu0 0.0
  %536 = vmatprep.mubr.f32.mxu0 0.0
  %537 = vmatmul.mubr.f32.gmra.mxu0 %v470
  %v538 = vpop.f32.mrf.mxu0
  %v539 = vadd.f32 %v42, %v538
  %v540 = vpop.f32.mrf.mxu0
  %541 = vdwg.mxu0
  %v543 = vsel %vm63, %v468, 0
  %545 = vmatprep.subr.mxu0 0.0
  %546 = vmatpush1.msra.mxu0 0.0
  %547 = vmatprep.subr.mxu0 0.0
  %548 = vmatpush1.msra.mxu0 0.0
  %549 = vmatprep.subr.mxu0 0.0
  %550 = vmatpush1.msra.mxu0 0.0
  %551 = vmatprep.subr.mxu0 0.0
  %552 = vmatpush1.msra.mxu0 0.0
  %553 = vmatprep.subr.mxu0 0.0
  %554 = vmatpush1.msra.mxu0 0.0
  %555 = vmatprep.subr.mxu0 0.0
  %556 = vmatpush1.msra.mxu0 0.0
  %557 = vmatprep.subr.mxu0 0.0
  %558 = vmatpush1.msra.mxu0 0.0
  %559 = vmatprep.subr.mxu0 0.0
  %560 = vmatpush1.msra.mxu0 0.0
  %561 = vmatprep.subr.mxu0 0.0
  %562 = vmatpush1.msra.mxu0 %v41
  %563 = vmatprep.subr.mxu0 0.0
  %564 = vmatpush1.msra.mxu0 %v40
  %565 = vmatprep.subr.mxu0 0.0
  %566 = vmatpush1.msra.mxu0 %v39
  %567 = vmatprep.subr.mxu0 0.0
  %568 = vmatpush1.msra.mxu0 %v38
  %569 = vmatprep.subr.mxu0 0.0
  %570 = vmatpush1.msra.mxu0 %v37
  %571 = vmatprep.subr.mxu0 0.0
  %572 = vmatpush1.msra.mxu0 %v36
  %573 = vmatprep.subr.mxu0 0.0
  %574 = vmatpush1.msra.mxu0 %v35
  %575 = vmatprep.subr.mxu0 0.0
  %576 = vmatpush1.msra.mxu0 %v34
  %577 = vmatprep.subr.mxu0 0.0
  %578 = vmatpush2.msra.mxu0 0.0
  %579 = vmatprep.subr.mxu0 0.0
  %580 = vmatpush2.msra.mxu0 0.0
  %581 = vmatprep.subr.mxu0 0.0
  %582 = vmatpush2.msra.mxu0 0.0
  %583 = vmatprep.subr.mxu0 0.0
  %584 = vmatpush2.msra.mxu0 0.0
  %585 = vmatprep.subr.mxu0 0.0
  %586 = vmatpush2.msra.mxu0 0.0
  %587 = vmatprep.subr.mxu0 0.0
  %588 = vmatpush2.msra.mxu0 0.0
  %589 = vmatprep.subr.mxu0 0.0
  %590 = vmatpush2.msra.mxu0 0.0
  %591 = vmatprep.subr.mxu0 0.0
  %592 = vmatpush2.msra.mxu0 0.0
  %593 = vmatprep.subr.mxu0 0.0
  %594 = vmatpush2.msra.mxu0 0.0
  %595 = vmatprep.subr.mxu0 0.0
  %596 = vmatpush2.msra.mxu0 0.0
  %597 = vmatprep.subr.mxu0 0.0
  %598 = vmatpush2.msra.mxu0 0.0
  %599 = vmatprep.subr.mxu0 0.0
  %600 = vmatpush2.msra.mxu0 0.0
  %601 = vmatprep.subr.mxu0 0.0
  %602 = vmatpush2.msra.mxu0 0.0
  %603 = vmatprep.subr.mxu0 0.0
  %604 = vmatpush2.msra.mxu0 0.0
  %605 = vmatprep.subr.mxu0 0.0
  %606 = vmatpush2.msra.mxu0 0.0
  %607 = vmatprep.subr.mxu0 0.0
  %608 = vmatpush2.msra.mxu0 0.0
  %609 = vmatprep.mubr.f32.mxu0 0.0
  %610 = vmatmul.mubr.f32.gmra.mxu0 %v543
  %v611 = vpop.f32.mrf.mxu0
  %v612 = vadd.f32 %v43, %v611
  %v613 = vpop.f32.mrf.mxu0
  %614 = vdwg.mxu0
  %v615 = vadd.f32 %v539, %v612
  %v616 = vxor.u32 %v615, 2147483648
  %v617 = vmul.f32 %v616, 1.442695
  %v618 = vpow.pop %v617
  %v619 = vadd.f32 %v618, 1.0
  %v620 = vrcp.pop %v619
  %v621 = vmul.f32 1.0, %v620
  %623 = vrot.lane.b32.xlu0 %v612, 64
  %v624 = vpop.permute.xlu0 %623
  %v626 = vmul.f32 %v621, %v624
  %628 = vrot.lane.b32.xlu0 %v626, 64
  %v629 = vpop.permute.xlu0 %628
  %v631 = vadd.f32 %v539, %v629
  %v632 = vtanh.pop %v631
  %v633 = vsub.f32 1.0, %v621
  %635 = vrot.lane.b32.xlu0 %v632, 96
  %v636 = vpop.permute.xlu0 %635
  %v638 = vmul.f32 %v633, %v636
  %v639 = vmul.f32 %v621, %v438
  %v640 = vadd.f32 %v638, %v639
  %642 = vrot.lane.b32.xlu0 %v640, 96
  %v643 = vpop.permute.xlu0 %642
  %s645 = scalar_lea.vmem [#allocation2], 4
  %646 = vst.msk [vmem:[%s645] sm:$0x3] %vm240, %v643
  %s647 = scalar_lea.vmem [#allocation3], 10
  %648 = vst.msk [vmem:[%s647 - $0x2] sm:$0xc] %vm243, %v643
  %s649 = scalar_lea.vmem %s0, 6
  %v650 = vld [vmem:[%s649] sm:$0x3]
  %s651 = scalar_lea.vmem %s0, 8
  %v652 = vld [vmem:[%s651] sm:$0x3]
  %v653 = vsel %vm47, %v650, 0.0
  %655 = vrot.lane.b32.xlu0 %v652, 32
  %v656 = vpop.permute.xlu0 %655
  %v658 = vsel %vm47, 0.0, %v656
  %v660 = vrot.slane %v658, 6
  %v662 = vsel %vm57, %v653, %v660
  %v663 = vsel %vm47, %v643, 0.0
  %v664 = vrot.slane %v640, 2
  %v666 = vsel %vm47, 0.0, %v664
  %v668 = vrot.slane %v666, 6
  %v670 = vsel %vm57, %v663, %v668
  %v672 = vsel %vm63, %v662, 0
  %674 = vmatprep.subr.mxu0 0.0
  %675 = vmatpush1.msra.mxu0 0.0
  %676 = vmatprep.subr.mxu0 0.0
  %677 = vmatpush1.msra.mxu0 0.0
  %678 = vmatprep.subr.mxu0 0.0
  %679 = vmatpush1.msra.mxu0 0.0
  %680 = vmatprep.subr.mxu0 0.0
  %681 = vmatpush1.msra.mxu0 0.0
  %682 = vmatprep.subr.mxu0 0.0
  %683 = vmatpush1.msra.mxu0 0.0
  %684 = vmatprep.subr.mxu0 0.0
  %685 = vmatpush1.msra.mxu0 0.0
  %686 = vmatprep.subr.mxu0 0.0
  %687 = vmatpush1.msra.mxu0 0.0
  %688 = vmatprep.subr.mxu0 0.0
  %689 = vmatpush1.msra.mxu0 0.0
  %690 = vmatprep.subr.mxu0 0.0
  %691 = vmatpush1.msra.mxu0 %v33
  %692 = vmatprep.subr.mxu0 0.0
  %693 = vmatpush1.msra.mxu0 %v32
  %694 = vmatprep.subr.mxu0 0.0
  %695 = vmatpush1.msra.mxu0 %v31
  %696 = vmatprep.subr.mxu0 0.0
  %697 = vmatpush1.msra.mxu0 %v30
  %698 = vmatprep.subr.mxu0 0.0
  %699 = vmatpush1.msra.mxu0 %v29
  %700 = vmatprep.subr.mxu0 0.0
  %701 = vmatpush1.msra.mxu0 %v28
  %702 = vmatprep.subr.mxu0 0.0
  %703 = vmatpush1.msra.mxu0 %v27
  %704 = vmatprep.subr.mxu0 0.0
  %705 = vmatpush1.msra.mxu0 %v26
  %706 = vmatprep.subr.mxu0 0.0
  %707 = vmatpush2.msra.mxu0 0.0
  %708 = vmatprep.subr.mxu0 0.0
  %709 = vmatpush2.msra.mxu0 0.0
  %710 = vmatprep.subr.mxu0 0.0
  %711 = vmatpush2.msra.mxu0 0.0
  %712 = vmatprep.subr.mxu0 0.0
  %713 = vmatpush2.msra.mxu0 0.0
  %714 = vmatprep.subr.mxu0 0.0
  %715 = vmatpush2.msra.mxu0 0.0
  %716 = vmatprep.subr.mxu0 0.0
  %717 = vmatpush2.msra.mxu0 0.0
  %718 = vmatprep.subr.mxu0 0.0
  %719 = vmatpush2.msra.mxu0 0.0
  %720 = vmatprep.subr.mxu0 0.0
  %721 = vmatpush2.msra.mxu0 0.0
  %722 = vmatprep.subr.mxu0 0.0
  %723 = vmatpush2.msra.mxu0 0.0
  %724 = vmatprep.subr.mxu0 0.0
  %725 = vmatpush2.msra.mxu0 0.0
  %726 = vmatprep.subr.mxu0 0.0
  %727 = vmatpush2.msra.mxu0 0.0
  %728 = vmatprep.subr.mxu0 0.0
  %729 = vmatpush2.msra.mxu0 0.0
  %730 = vmatprep.subr.mxu0 0.0
  %731 = vmatpush2.msra.mxu0 0.0
  %732 = vmatprep.subr.mxu0 0.0
  %733 = vmatpush2.msra.mxu0 0.0
  %734 = vmatprep.subr.mxu0 0.0
  %735 = vmatpush2.msra.mxu0 0.0
  %736 = vmatprep.subr.mxu0 0.0
  %737 = vmatpush2.msra.mxu0 0.0
  %738 = vmatprep.mubr.f32.mxu0 0.0
  %739 = vmatmul.mubr.f32.gmra.mxu0 %v672
  %v740 = vpop.f32.mrf.mxu0
  %v741 = vadd.f32 %v42, %v740
  %v742 = vpop.f32.mrf.mxu0
  %743 = vdwg.mxu0
  %v745 = vsel %vm63, %v670, 0
  %747 = vmatprep.subr.mxu0 0.0
  %748 = vmatpush1.msra.mxu0 0.0
  %749 = vmatprep.subr.mxu0 0.0
  %750 = vmatpush1.msra.mxu0 0.0
  %751 = vmatprep.subr.mxu0 0.0
  %752 = vmatpush1.msra.mxu0 0.0
  %753 = vmatprep.subr.mxu0 0.0
  %754 = vmatpush1.msra.mxu0 0.0
  %755 = vmatprep.subr.mxu0 0.0
  %756 = vmatpush1.msra.mxu0 0.0
  %757 = vmatprep.subr.mxu0 0.0
  %758 = vmatpush1.msra.mxu0 0.0
  %759 = vmatprep.subr.mxu0 0.0
  %760 = vmatpush1.msra.mxu0 0.0
  %761 = vmatprep.subr.mxu0 0.0
  %762 = vmatpush1.msra.mxu0 0.0
  %763 = vmatprep.subr.mxu0 0.0
  %764 = vmatpush1.msra.mxu0 %v41
  %765 = vmatprep.subr.mxu0 0.0
  %766 = vmatpush1.msra.mxu0 %v40
  %767 = vmatprep.subr.mxu0 0.0
  %768 = vmatpush1.msra.mxu0 %v39
  %769 = vmatprep.subr.mxu0 0.0
  %770 = vmatpush1.msra.mxu0 %v38
  %771 = vmatprep.subr.mxu0 0.0
  %772 = vmatpush1.msra.mxu0 %v37
  %773 = vmatprep.subr.mxu0 0.0
  %774 = vmatpush1.msra.mxu0 %v36
  %775 = vmatprep.subr.mxu0 0.0
  %776 = vmatpush1.msra.mxu0 %v35
  %777 = vmatprep.subr.mxu0 0.0
  %778 = vmatpush1.msra.mxu0 %v34
  %779 = vmatprep.subr.mxu0 0.0
  %780 = vmatpush2.msra.mxu0 0.0
  %781 = vmatprep.subr.mxu0 0.0
  %782 = vmatpush2.msra.mxu0 0.0
  %783 = vmatprep.subr.mxu0 0.0
  %784 = vmatpush2.msra.mxu0 0.0
  %785 = vmatprep.subr.mxu0 0.0
  %786 = vmatpush2.msra.mxu0 0.0
  %787 = vmatprep.subr.mxu0 0.0
  %788 = vmatpush2.msra.mxu0 0.0
  %789 = vmatprep.subr.mxu0 0.0
  %790 = vmatpush2.msra.mxu0 0.0
  %791 = vmatprep.subr.mxu0 0.0
  %792 = vmatpush2.msra.mxu0 0.0
  %793 = vmatprep.subr.mxu0 0.0
  %794 = vmatpush2.msra.mxu0 0.0
  %795 = vmatprep.subr.mxu0 0.0
  %796 = vmatpush2.msra.mxu0 0.0
  %797 = vmatprep.subr.mxu0 0.0
  %798 = vmatpush2.msra.mxu0 0.0
  %799 = vmatprep.subr.mxu0 0.0
  %800 = vmatpush2.msra.mxu0 0.0
  %801 = vmatprep.subr.mxu0 0.0
  %802 = vmatpush2.msra.mxu0 0.0
  %803 = vmatprep.subr.mxu0 0.0
  %804 = vmatpush2.msra.mxu0 0.0
  %805 = vmatprep.subr.mxu0 0.0
  %806 = vmatpush2.msra.mxu0 0.0
  %807 = vmatprep.subr.mxu0 0.0
  %808 = vmatpush2.msra.mxu0 0.0
  %809 = vmatprep.subr.mxu0 0.0
  %810 = vmatpush2.msra.mxu0 0.0
  %811 = vmatprep.mubr.f32.mxu0 0.0
  %812 = vmatmul.mubr.f32.gmra.mxu0 %v745
  %v813 = vpop.f32.mrf.mxu0
  %v814 = vadd.f32 %v43, %v813
  %v815 = vpop.f32.mrf.mxu0
  %816 = vdwg.mxu0
  %v817 = vadd.f32 %v741, %v814
  %v818 = vxor.u32 %v817, 2147483648
  %v819 = vmul.f32 %v818, 1.442695
  %v820 = vpow.pop %v819
  %v821 = vadd.f32 %v820, 1.0
  %v822 = vrcp.pop %v821
  %v823 = vmul.f32 1.0, %v822
  %825 = vrot.lane.b32.xlu0 %v814, 64
  %v826 = vpop.permute.xlu0 %825
  %v828 = vmul.f32 %v823, %v826
  %830 = vrot.lane.b32.xlu0 %v828, 64
  %v831 = vpop.permute.xlu0 %830
  %v833 = vadd.f32 %v741, %v831
  %v834 = vtanh.pop %v833
  %v835 = vsub.f32 1.0, %v823
  %837 = vrot.lane.b32.xlu0 %v834, 96
  %v838 = vpop.permute.xlu0 %837
  %v840 = vmul.f32 %v835, %v838
  %v841 = vmul.f32 %v823, %v640
  %v842 = vadd.f32 %v840, %v841
  %844 = vrot.lane.b32.xlu0 %v842, 96
  %v845 = vpop.permute.xlu0 %844
  %s847 = scalar_lea.vmem [#allocation2], 6
  %848 = vst.msk [vmem:[%s847] sm:$0x3] %vm240, %v845
  %s849 = scalar_lea.vmem [#allocation3], 8
  %850 = vst.msk [vmem:[%s849 - $0x2] sm:$0xc] %vm243, %v845
  %v851 = vld [vmem:[%s651] sm:$0x3]
  %v852 = vld [vmem:[%s649] sm:$0x3]
  %v853 = vsel %vm47, %v851, 0.0
  %855 = vrot.lane.b32.xlu0 %v852, 32
  %v856 = vpop.permute.xlu0 %855
  %v858 = vsel %vm47, 0.0, %v856
  %v860 = vrot.slane %v858, 6
  %v862 = vsel %vm57, %v853, %v860
  %v863 = vsel %vm47, %v845, 0.0
  %v864 = vrot.slane %v842, 2
  %v866 = vsel %vm47, 0.0, %v864
  %v868 = vrot.slane %v866, 6
  %v870 = vsel %vm57, %v863, %v868
  %v872 = vsel %vm63, %v862, 0
  %874 = vmatprep.subr.mxu0 0.0
  %875 = vmatpush1.msra.mxu0 0.0
  %876 = vmatprep.subr.mxu0 0.0
  %877 = vmatpush1.msra.mxu0 0.0
  %878 = vmatprep.subr.mxu0 0.0
  %879 = vmatpush1.msra.mxu0 0.0
  %880 = vmatprep.subr.mxu0 0.0
  %881 = vmatpush1.msra.mxu0 0.0
  %882 = vmatprep.subr.mxu0 0.0
  %883 = vmatpush1.msra.mxu0 0.0
  %884 = vmatprep.subr.mxu0 0.0
  %885 = vmatpush1.msra.mxu0 0.0
  %886 = vmatprep.subr.mxu0 0.0
  %887 = vmatpush1.msra.mxu0 0.0
  %888 = vmatprep.subr.mxu0 0.0
  %889 = vmatpush1.msra.mxu0 0.0
  %890 = vmatprep.subr.mxu0 0.0
  %891 = vmatpush1.msra.mxu0 %v33
  %892 = vmatprep.subr.mxu0 0.0
  %893 = vmatpush1.msra.mxu0 %v32
  %894 = vmatprep.subr.mxu0 0.0
  %895 = vmatpush1.msra.mxu0 %v31
  %896 = vmatprep.subr.mxu0 0.0
  %897 = vmatpush1.msra.mxu0 %v30
  %898 = vmatprep.subr.mxu0 0.0
  %899 = vmatpush1.msra.mxu0 %v29
  %900 = vmatprep.subr.mxu0 0.0
  %901 = vmatpush1.msra.mxu0 %v28
  %902 = vmatprep.subr.mxu0 0.0
  %903 = vmatpush1.msra.mxu0 %v27
  %904 = vmatprep.subr.mxu0 0.0
  %905 = vmatpush1.msra.mxu0 %v26
  %906 = vmatprep.subr.mxu0 0.0
  %907 = vmatpush2.msra.mxu0 0.0
  %908 = vmatprep.subr.mxu0 0.0
  %909 = vmatpush2.msra.mxu0 0.0
  %910 = vmatprep.subr.mxu0 0.0
  %911 = vmatpush2.msra.mxu0 0.0
  %912 = vmatprep.subr.mxu0 0.0
  %913 = vmatpush2.msra.mxu0 0.0
  %914 = vmatprep.subr.mxu0 0.0
  %915 = vmatpush2.msra.mxu0 0.0
  %916 = vmatprep.subr.mxu0 0.0
  %917 = vmatpush2.msra.mxu0 0.0
  %918 = vmatprep.subr.mxu0 0.0
  %919 = vmatpush2.msra.mxu0 0.0
  %920 = vmatprep.subr.mxu0 0.0
  %921 = vmatpush2.msra.mxu0 0.0
  %922 = vmatprep.subr.mxu0 0.0
  %923 = vmatpush2.msra.mxu0 0.0
  %924 = vmatprep.subr.mxu0 0.0
  %925 = vmatpush2.msra.mxu0 0.0
  %926 = vmatprep.subr.mxu0 0.0
  %927 = vmatpush2.msra.mxu0 0.0
  %928 = vmatprep.subr.mxu0 0.0
  %929 = vmatpush2.msra.mxu0 0.0
  %930 = vmatprep.subr.mxu0 0.0
  %931 = vmatpush2.msra.mxu0 0.0
  %932 = vmatprep.subr.mxu0 0.0
  %933 = vmatpush2.msra.mxu0 0.0
  %934 = vmatprep.subr.mxu0 0.0
  %935 = vmatpush2.msra.mxu0 0.0
  %936 = vmatprep.subr.mxu0 0.0
  %937 = vmatpush2.msra.mxu0 0.0
  %938 = vmatprep.mubr.f32.mxu0 0.0
  %939 = vmatmul.mubr.f32.gmra.mxu0 %v872
  %v940 = vpop.f32.mrf.mxu0
  %v941 = vadd.f32 %v42, %v940
  %v942 = vpop.f32.mrf.mxu0
  %943 = vdwg.mxu0
  %v945 = vsel %vm63, %v870, 0
  %947 = vmatprep.subr.mxu0 0.0
  %948 = vmatpush1.msra.mxu0 0.0
  %949 = vmatprep.subr.mxu0 0.0
  %950 = vmatpush1.msra.mxu0 0.0
  %951 = vmatprep.subr.mxu0 0.0
  %952 = vmatpush1.msra.mxu0 0.0
  %953 = vmatprep.subr.mxu0 0.0
  %954 = vmatpush1.msra.mxu0 0.0
  %955 = vmatprep.subr.mxu0 0.0
  %956 = vmatpush1.msra.mxu0 0.0
  %957 = vmatprep.subr.mxu0 0.0
  %958 = vmatpush1.msra.mxu0 0.0
  %959 = vmatprep.subr.mxu0 0.0
  %960 = vmatpush1.msra.mxu0 0.0
  %961 = vmatprep.subr.mxu0 0.0
  %962 = vmatpush1.msra.mxu0 0.0
  %963 = vmatprep.subr.mxu0 0.0
  %964 = vmatpush1.msra.mxu0 %v41
  %965 = vmatprep.subr.mxu0 0.0
  %966 = vmatpush1.msra.mxu0 %v40
  %967 = vmatprep.subr.mxu0 0.0
  %968 = vmatpush1.msra.mxu0 %v39
  %969 = vmatprep.subr.mxu0 0.0
  %970 = vmatpush1.msra.mxu0 %v38
  %971 = vmatprep.subr.mxu0 0.0
  %972 = vmatpush1.msra.mxu0 %v37
  %973 = vmatprep.subr.mxu0 0.0
  %974 = vmatpush1.msra.mxu0 %v36
  %975 = vmatprep.subr.mxu0 0.0
  %976 = vmatpush1.msra.mxu0 %v35
  %977 = vmatprep.subr.mxu0 0.0
  %978 = vmatpush1.msra.mxu0 %v34
  %979 = vmatprep.subr.mxu0 0.0
  %980 = vmatpush2.msra.mxu0 0.0
  %981 = vmatprep.subr.mxu0 0.0
  %982 = vmatpush2.msra.mxu0 0.0
  %983 = vmatprep.subr.mxu0 0.0
  %984 = vmatpush2.msra.mxu0 0.0
  %985 = vmatprep.subr.mxu0 0.0
  %986 = vmatpush2.msra.mxu0 0.0
  %987 = vmatprep.subr.mxu0 0.0
  %988 = vmatpush2.msra.mxu0 0.0
  %989 = vmatprep.subr.mxu0 0.0
  %990 = vmatpush2.msra.mxu0 0.0
  %991 = vmatprep.subr.mxu0 0.0
  %992 = vmatpush2.msra.mxu0 0.0
  %993 = vmatprep.subr.mxu0 0.0
  %994 = vmatpush2.msra.mxu0 0.0
  %995 = vmatprep.subr.mxu0 0.0
  %996 = vmatpush2.msra.mxu0 0.0
  %997 = vmatprep.subr.mxu0 0.0
  %998 = vmatpush2.msra.mxu0 0.0
  %999 = vmatprep.subr.mxu0 0.0
  %1000 = vmatpush2.msra.mxu0 0.0
  %1001 = vmatprep.subr.mxu0 0.0
  %1002 = vmatpush2.msra.mxu0 0.0
  %1003 = vmatprep.subr.mxu0 0.0
  %1004 = vmatpush2.msra.mxu0 0.0
  %1005 = vmatprep.subr.mxu0 0.0
  %1006 = vmatpush2.msra.mxu0 0.0
  %1007 = vmatprep.subr.mxu0 0.0
  %1008 = vmatpush2.msra.mxu0 0.0
  %1009 = vmatprep.subr.mxu0 0.0
  %1010 = vmatpush2.msra.mxu0 0.0
  %1011 = vmatprep.mubr.f32.mxu0 0.0
  %1012 = vmatmul.mubr.f32.gmra.mxu0 %v945
  %v1013 = vpop.f32.mrf.mxu0
  %v1014 = vadd.f32 %v43, %v1013
  %v1015 = vpop.f32.mrf.mxu0
  %1016 = vdwg.mxu0
  %v1017 = vadd.f32 %v941, %v1014
  %v1018 = vxor.u32 %v1017, 2147483648
  %v1019 = vmul.f32 %v1018, 1.442695
  %v1020 = vpow.pop %v1019
  %v1021 = vadd.f32 %v1020, 1.0
  %v1022 = vrcp.pop %v1021
  %v1023 = vmul.f32 1.0, %v1022
  %1025 = vrot.lane.b32.xlu0 %v1014, 64
  %v1026 = vpop.permute.xlu0 %1025
  %v1028 = vmul.f32 %v1023, %v1026
  %1030 = vrot.lane.b32.xlu0 %v1028, 64
  %v1031 = vpop.permute.xlu0 %1030
  %v1033 = vadd.f32 %v941, %v1031
  %v1034 = vtanh.pop %v1033
  %v1035 = vsub.f32 1.0, %v1023
  %1037 = vrot.lane.b32.xlu0 %v1034, 96
  %v1038 = vpop.permute.xlu0 %1037
  %v1040 = vmul.f32 %v1035, %v1038
  %v1041 = vmul.f32 %v1023, %v842
  %v1042 = vadd.f32 %v1040, %v1041
  %1044 = vrot.lane.b32.xlu0 %v1042, 96
  %v1045 = vpop.permute.xlu0 %1044
  %s1047 = scalar_lea.vmem [#allocation2], 8
  %1048 = vst.msk [vmem:[%s1047] sm:$0x3] %vm240, %v1045
  %s1049 = scalar_lea.vmem [#allocation3], 6
  %1050 = vst.msk [vmem:[%s1049 - $0x2] sm:$0xc] %vm243, %v1045
  %v1051 = vld [vmem:[%s449] sm:$0x3]
  %v1052 = vld [vmem:[%s447] sm:$0x3]
  %v1053 = vsel %vm47, %v1051, 0.0
  %1055 = vrot.lane.b32.xlu0 %v1052, 32
  %v1056 = vpop.permute.xlu0 %1055
  %v1058 = vsel %vm47, 0.0, %v1056
  %v1060 = vrot.slane %v1058, 6
  %v1062 = vsel %vm57, %v1053, %v1060
  %v1063 = vsel %vm47, %v1045, 0.0
  %v1064 = vrot.slane %v1042, 2
  %v1066 = vsel %vm47, 0.0, %v1064
  %v1068 = vrot.slane %v1066, 6
  %v1070 = vsel %vm57, %v1063, %v1068
  %v1072 = vsel %vm63, %v1062, 0
  %1074 = vmatprep.subr.mxu0 0.0
  %1075 = vmatpush1.msra.mxu0 0.0
  %1076 = vmatprep.subr.mxu0 0.0
  %1077 = vmatpush1.msra.mxu0 0.0
  %1078 = vmatprep.subr.mxu0 0.0
  %1079 = vmatpush1.msra.mxu0 0.0
  %1080 = vmatprep.subr.mxu0 0.0
  %1081 = vmatpush1.msra.mxu0 0.0
  %1082 = vmatprep.subr.mxu0 0.0
  %1083 = vmatpush1.msra.mxu0 0.0
  %1084 = vmatprep.subr.mxu0 0.0
  %1085 = vmatpush1.msra.mxu0 0.0
  %1086 = vmatprep.subr.mxu0 0.0
  %1087 = vmatpush1.msra.mxu0 0.0
  %1088 = vmatprep.subr.mxu0 0.0
  %1089 = vmatpush1.msra.mxu0 0.0
  %1090 = vmatprep.subr.mxu0 0.0
  %1091 = vmatpush1.msra.mxu0 %v33
  %1092 = vmatprep.subr.mxu0 0.0
  %1093 = vmatpush1.msra.mxu0 %v32
  %1094 = vmatprep.subr.mxu0 0.0
  %1095 = vmatpush1.msra.mxu0 %v31
  %1096 = vmatprep.subr.mxu0 0.0
  %1097 = vmatpush1.msra.mxu0 %v30
  %1098 = vmatprep.subr.mxu0 0.0
  %1099 = vmatpush1.msra.mxu0 %v29
  %1100 = vmatprep.subr.mxu0 0.0
  %1101 = vmatpush1.msra.mxu0 %v28
  %1102 = vmatprep.subr.mxu0 0.0
  %1103 = vmatpush1.msra.mxu0 %v27
  %1104 = vmatprep.subr.mxu0 0.0
  %1105 = vmatpush1.msra.mxu0 %v26
  %1106 = vmatprep.subr.mxu0 0.0
  %1107 = vmatpush2.msra.mxu0 0.0
  %1108 = vmatprep.subr.mxu0 0.0
  %1109 = vmatpush2.msra.mxu0 0.0
  %1110 = vmatprep.subr.mxu0 0.0
  %1111 = vmatpush2.msra.mxu0 0.0
  %1112 = vmatprep.subr.mxu0 0.0
  %1113 = vmatpush2.msra.mxu0 0.0
  %1114 = vmatprep.subr.mxu0 0.0
  %1115 = vmatpush2.msra.mxu0 0.0
  %1116 = vmatprep.subr.mxu0 0.0
  %1117 = vmatpush2.msra.mxu0 0.0
  %1118 = vmatprep.subr.mxu0 0.0
  %1119 = vmatpush2.msra.mxu0 0.0
  %1120 = vmatprep.subr.mxu0 0.0
  %1121 = vmatpush2.msra.mxu0 0.0
  %1122 = vmatprep.subr.mxu0 0.0
  %1123 = vmatpush2.msra.mxu0 0.0
  %1124 = vmatprep.subr.mxu0 0.0
  %1125 = vmatpush2.msra.mxu0 0.0
  %1126 = vmatprep.subr.mxu0 0.0
  %1127 = vmatpush2.msra.mxu0 0.0
  %1128 = vmatprep.subr.mxu0 0.0
  %1129 = vmatpush2.msra.mxu0 0.0
  %1130 = vmatprep.subr.mxu0 0.0
  %1131 = vmatpush2.msra.mxu0 0.0
  %1132 = vmatprep.subr.mxu0 0.0
  %1133 = vmatpush2.msra.mxu0 0.0
  %1134 = vmatprep.subr.mxu0 0.0
  %1135 = vmatpush2.msra.mxu0 0.0
  %1136 = vmatprep.subr.mxu0 0.0
  %1137 = vmatpush2.msra.mxu0 0.0
  %1138 = vmatprep.mubr.f32.mxu0 0.0
  %1139 = vmatmul.mubr.f32.gmra.mxu0 %v1072
  %v1140 = vpop.f32.mrf.mxu0
  %v1141 = vadd.f32 %v42, %v1140
  %v1142 = vpop.f32.mrf.mxu0
  %1143 = vdwg.mxu0
  %v1145 = vsel %vm63, %v1070, 0
  %1147 = vmatprep.subr.mxu0 0.0
  %1148 = vmatpush1.msra.mxu0 0.0
  %1149 = vmatprep.subr.mxu0 0.0
  %1150 = vmatpush1.msra.mxu0 0.0
  %1151 = vmatprep.subr.mxu0 0.0
  %1152 = vmatpush1.msra.mxu0 0.0
  %1153 = vmatprep.subr.mxu0 0.0
  %1154 = vmatpush1.msra.mxu0 0.0
  %1155 = vmatprep.subr.mxu0 0.0
  %1156 = vmatpush1.msra.mxu0 0.0
  %1157 = vmatprep.subr.mxu0 0.0
  %1158 = vmatpush1.msra.mxu0 0.0
  %1159 = vmatprep.subr.mxu0 0.0
  %1160 = vmatpush1.msra.mxu0 0.0
  %1161 = vmatprep.subr.mxu0 0.0
  %1162 = vmatpush1.msra.mxu0 0.0
  %1163 = vmatprep.subr.mxu0 0.0
  %1164 = vmatpush1.msra.mxu0 %v41
  %1165 = vmatprep.subr.mxu0 0.0
  %1166 = vmatpush1.msra.mxu0 %v40
  %1167 = vmatprep.subr.mxu0 0.0
  %1168 = vmatpush1.msra.mxu0 %v39
  %1169 = vmatprep.subr.mxu0 0.0
  %1170 = vmatpush1.msra.mxu0 %v38
  %1171 = vmatprep.subr.mxu0 0.0
  %1172 = vmatpush1.msra.mxu0 %v37
  %1173 = vmatprep.subr.mxu0 0.0
  %1174 = vmatpush1.msra.mxu0 %v36
  %1175 = vmatprep.subr.mxu0 0.0
  %1176 = vmatpush1.msra.mxu0 %v35
  %1177 = vmatprep.subr.mxu0 0.0
  %1178 = vmatpush1.msra.mxu0 %v34
  %1179 = vmatprep.subr.mxu0 0.0
  %1180 = vmatpush2.msra.mxu0 0.0
  %1181 = vmatprep.subr.mxu0 0.0
  %1182 = vmatpush2.msra.mxu0 0.0
  %1183 = vmatprep.subr.mxu0 0.0
  %1184 = vmatpush2.msra.mxu0 0.0
  %1185 = vmatprep.subr.mxu0 0.0
  %1186 = vmatpush2.msra.mxu0 0.0
  %1187 = vmatprep.subr.mxu0 0.0
  %1188 = vmatpush2.msra.mxu0 0.0
  %1189 = vmatprep.subr.mxu0 0.0
  %1190 = vmatpush2.msra.mxu0 0.0
  %1191 = vmatprep.subr.mxu0 0.0
  %1192 = vmatpush2.msra.mxu0 0.0
  %1193 = vmatprep.subr.mxu0 0.0
  %1194 = vmatpush2.msra.mxu0 0.0
  %1195 = vmatprep.subr.mxu0 0.0
  %1196 = vmatpush2.msra.mxu0 0.0
  %1197 = vmatprep.subr.mxu0 0.0
  %1198 = vmatpush2.msra.mxu0 0.0
  %1199 = vmatprep.subr.mxu0 0.0
  %1200 = vmatpush2.msra.mxu0 0.0
  %1201 = vmatprep.subr.mxu0 0.0
  %1202 = vmatpush2.msra.mxu0 0.0
  %1203 = vmatprep.subr.mxu0 0.0
  %1204 = vmatpush2.msra.mxu0 0.0
  %1205 = vmatprep.subr.mxu0 0.0
  %1206 = vmatpush2.msra.mxu0 0.0
  %1207 = vmatprep.subr.mxu0 0.0
  %1208 = vmatpush2.msra.mxu0 0.0
  %1209 = vmatprep.subr.mxu0 0.0
  %1210 = vmatpush2.msra.mxu0 0.0
  %1211 = vmatprep.mubr.f32.mxu0 0.0
  %1212 = vmatmul.mubr.f32.gmra.mxu0 %v1145
  %v1213 = vpop.f32.mrf.mxu0
  %v1214 = vadd.f32 %v43, %v1213
  %v1215 = vpop.f32.mrf.mxu0
  %1216 = vdwg.mxu0
  %v1217 = vadd.f32 %v1141, %v1214
  %v1218 = vxor.u32 %v1217, 2147483648
  %v1219 = vmul.f32 %v1218, 1.442695
  %v1220 = vpow.pop %v1219
  %v1221 = vadd.f32 %v1220, 1.0
  %v1222 = vrcp.pop %v1221
  %v1223 = vmul.f32 1.0, %v1222
  %1225 = vrot.lane.b32.xlu0 %v1214, 64
  %v1226 = vpop.permute.xlu0 %1225
  %v1228 = vmul.f32 %v1223, %v1226
  %1230 = vrot.lane.b32.xlu0 %v1228, 64
  %v1231 = vpop.permute.xlu0 %1230
  %v1233 = vadd.f32 %v1141, %v1231
  %v1234 = vtanh.pop %v1233
  %v1235 = vsub.f32 1.0, %v1223
  %1237 = vrot.lane.b32.xlu0 %v1234, 96
  %v1238 = vpop.permute.xlu0 %1237
  %v1240 = vmul.f32 %v1235, %v1238
  %v1241 = vmul.f32 %v1223, %v1042
  %v1242 = vadd.f32 %v1240, %v1241
  %1244 = vrot.lane.b32.xlu0 %v1242, 96
  %v1245 = vpop.permute.xlu0 %1244
  %s1247 = scalar_lea.vmem [#allocation2], 10
  %1248 = vst.msk [vmem:[%s1247] sm:$0x3] %vm240, %v1245
  %s1249 = scalar_lea.vmem [#allocation3], 4
  %1250 = vst.msk [vmem:[%s1249 - $0x2] sm:$0xc] %vm243, %v1245
  %v1251 = vld [vmem:[%s247] sm:$0x3]
  %v1252 = vld [vmem:[%s245] sm:$0x3]
  %v1253 = vsel %vm47, %v1251, 0.0
  %1255 = vrot.lane.b32.xlu0 %v1252, 32
  %v1256 = vpop.permute.xlu0 %1255
  %v1258 = vsel %vm47, 0.0, %v1256
  %v1260 = vrot.slane %v1258, 6
  %v1262 = vsel %vm57, %v1253, %v1260
  %v1263 = vsel %vm47, %v1245, 0.0
  %v1264 = vrot.slane %v1242, 2
  %v1266 = vsel %vm47, 0.0, %v1264
  %v1268 = vrot.slane %v1266, 6
  %v1270 = vsel %vm57, %v1263, %v1268
  %v1272 = vsel %vm63, %v1262, 0
  %1274 = vmatprep.subr.mxu0 0.0
  %1275 = vmatpush1.msra.mxu0 0.0
  %1276 = vmatprep.subr.mxu0 0.0
  %1277 = vmatpush1.msra.mxu0 0.0
  %1278 = vmatprep.subr.mxu0 0.0
  %1279 = vmatpush1.msra.mxu0 0.0
  %1280 = vmatprep.subr.mxu0 0.0
  %1281 = vmatpush1.msra.mxu0 0.0
  %1282 = vmatprep.subr.mxu0 0.0
  %1283 = vmatpush1.msra.mxu0 0.0
  %1284 = vmatprep.subr.mxu0 0.0
  %1285 = vmatpush1.msra.mxu0 0.0
  %1286 = vmatprep.subr.mxu0 0.0
  %1287 = vmatpush1.msra.mxu0 0.0
  %1288 = vmatprep.subr.mxu0 0.0
  %1289 = vmatpush1.msra.mxu0 0.0
  %1290 = vmatprep.subr.mxu0 0.0
  %1291 = vmatpush1.msra.mxu0 %v33
  %1292 = vmatprep.subr.mxu0 0.0
  %1293 = vmatpush1.msra.mxu0 %v32
  %1294 = vmatprep.subr.mxu0 0.0
  %1295 = vmatpush1.msra.mxu0 %v31
  %1296 = vmatprep.subr.mxu0 0.0
  %1297 = vmatpush1.msra.mxu0 %v30
  %1298 = vmatprep.subr.mxu0 0.0
  %1299 = vmatpush1.msra.mxu0 %v29
  %1300 = vmatprep.subr.mxu0 0.0
  %1301 = vmatpush1.msra.mxu0 %v28
  %1302 = vmatprep.subr.mxu0 0.0
  %1303 = vmatpush1.msra.mxu0 %v27
  %1304 = vmatprep.subr.mxu0 0.0
  %1305 = vmatpush1.msra.mxu0 %v26
  %1306 = vmatprep.subr.mxu0 0.0
  %1307 = vmatpush2.msra.mxu0 0.0
  %1308 = vmatprep.subr.mxu0 0.0
  %1309 = vmatpush2.msra.mxu0 0.0
  %1310 = vmatprep.subr.mxu0 0.0
  %1311 = vmatpush2.msra.mxu0 0.0
  %1312 = vmatprep.subr.mxu0 0.0
  %1313 = vmatpush2.msra.mxu0 0.0
  %1314 = vmatprep.subr.mxu0 0.0
  %1315 = vmatpush2.msra.mxu0 0.0
  %1316 = vmatprep.subr.mxu0 0.0
  %1317 = vmatpush2.msra.mxu0 0.0
  %1318 = vmatprep.subr.mxu0 0.0
  %1319 = vmatpush2.msra.mxu0 0.0
  %1320 = vmatprep.subr.mxu0 0.0
  %1321 = vmatpush2.msra.mxu0 0.0
  %1322 = vmatprep.subr.mxu0 0.0
  %1323 = vmatpush2.msra.mxu0 0.0
  %1324 = vmatprep.subr.mxu0 0.0
  %1325 = vmatpush2.msra.mxu0 0.0
  %1326 = vmatprep.subr.mxu0 0.0
  %1327 = vmatpush2.msra.mxu0 0.0
  %1328 = vmatprep.subr.mxu0 0.0
  %1329 = vmatpush2.msra.mxu0 0.0
  %1330 = vmatprep.subr.mxu0 0.0
  %1331 = vmatpush2.msra.mxu0 0.0
  %1332 = vmatprep.subr.mxu0 0.0
  %1333 = vmatpush2.msra.mxu0 0.0
  %1334 = vmatprep.subr.mxu0 0.0
  %1335 = vmatpush2.msra.mxu0 0.0
  %1336 = vmatprep.subr.mxu0 0.0
  %1337 = vmatpush2.msra.mxu0 0.0
  %1338 = vmatprep.mubr.f32.mxu0 0.0
  %1339 = vmatmul.mubr.f32.gmra.mxu0 %v1272
  %v1340 = vpop.f32.mrf.mxu0
  %v1341 = vadd.f32 %v42, %v1340
  %v1342 = vpop.f32.mrf.mxu0
  %1343 = vdwg.mxu0
  %v1345 = vsel %vm63, %v1270, 0
  %1347 = vmatprep.subr.mxu0 0.0
  %1348 = vmatpush1.msra.mxu0 0.0
  %1349 = vmatprep.subr.mxu0 0.0
  %1350 = vmatpush1.msra.mxu0 0.0
  %1351 = vmatprep.subr.mxu0 0.0
  %1352 = vmatpush1.msra.mxu0 0.0
  %1353 = vmatprep.subr.mxu0 0.0
  %1354 = vmatpush1.msra.mxu0 0.0
  %1355 = vmatprep.subr.mxu0 0.0
  %1356 = vmatpush1.msra.mxu0 0.0
  %1357 = vmatprep.subr.mxu0 0.0
  %1358 = vmatpush1.msra.mxu0 0.0
  %1359 = vmatprep.subr.mxu0 0.0
  %1360 = vmatpush1.msra.mxu0 0.0
  %1361 = vmatprep.subr.mxu0 0.0
  %1362 = vmatpush1.msra.mxu0 0.0
  %1363 = vmatprep.subr.mxu0 0.0
  %1364 = vmatpush1.msra.mxu0 %v41
  %1365 = vmatprep.subr.mxu0 0.0
  %1366 = vmatpush1.msra.mxu0 %v40
  %1367 = vmatprep.subr.mxu0 0.0
  %1368 = vmatpush1.msra.mxu0 %v39
  %1369 = vmatprep.subr.mxu0 0.0
  %1370 = vmatpush1.msra.mxu0 %v38
  %1371 = vmatprep.subr.mxu0 0.0
  %1372 = vmatpush1.msra.mxu0 %v37
  %1373 = vmatprep.subr.mxu0 0.0
  %1374 = vmatpush1.msra.mxu0 %v36
  %1375 = vmatprep.subr.mxu0 0.0
  %1376 = vmatpush1.msra.mxu0 %v35
  %1377 = vmatprep.subr.mxu0 0.0
  %1378 = vmatpush1.msra.mxu0 %v34
  %1379 = vmatprep.subr.mxu0 0.0
  %1380 = vmatpush2.msra.mxu0 0.0
  %1381 = vmatprep.subr.mxu0 0.0
  %1382 = vmatpush2.msra.mxu0 0.0
  %1383 = vmatprep.subr.mxu0 0.0
  %1384 = vmatpush2.msra.mxu0 0.0
  %1385 = vmatprep.subr.mxu0 0.0
  %1386 = vmatpush2.msra.mxu0 0.0
  %1387 = vmatprep.subr.mxu0 0.0
  %1388 = vmatpush2.msra.mxu0 0.0
  %1389 = vmatprep.subr.mxu0 0.0
  %1390 = vmatpush2.msra.mxu0 0.0
  %1391 = vmatprep.subr.mxu0 0.0
  %1392 = vmatpush2.msra.mxu0 0.0
  %1393 = vmatprep.subr.mxu0 0.0
  %1394 = vmatpush2.msra.mxu0 0.0
  %1395 = vmatprep.subr.mxu0 0.0
  %1396 = vmatpush2.msra.mxu0 0.0
  %1397 = vmatprep.subr.mxu0 0.0
  %1398 = vmatpush2.msra.mxu0 0.0
  %1399 = vmatprep.subr.mxu0 0.0
  %1400 = vmatpush2.msra.mxu0 0.0
  %1401 = vmatprep.subr.mxu0 0.0
  %1402 = vmatpush2.msra.mxu0 0.0
  %1403 = vmatprep.subr.mxu0 0.0
  %1404 = vmatpush2.msra.mxu0 0.0
  %1405 = vmatprep.subr.mxu0 0.0
  %1406 = vmatpush2.msra.mxu0 0.0
  %1407 = vmatprep.subr.mxu0 0.0
  %1408 = vmatpush2.msra.mxu0 0.0
  %1409 = vmatprep.subr.mxu0 0.0
  %1410 = vmatpush2.msra.mxu0 0.0
  %1411 = vmatprep.mubr.f32.mxu0 0.0
  %1412 = vmatmul.mubr.f32.gmra.mxu0 %v1345
  %v1413 = vpop.f32.mrf.mxu0
  %v1414 = vadd.f32 %v43, %v1413
  %v1415 = vpop.f32.mrf.mxu0
  %1416 = vdwg.mxu0
  %v1417 = vadd.f32 %v1341, %v1414
  %v1418 = vxor.u32 %v1417, 2147483648
  %v1419 = vmul.f32 %v1418, 1.442695
  %v1420 = vpow.pop %v1419
  %v1421 = vadd.f32 %v1420, 1.0
  %v1422 = vrcp.pop %v1421
  %v1423 = vmul.f32 1.0, %v1422
  %1425 = vrot.lane.b32.xlu0 %v1414, 64
  %v1426 = vpop.permute.xlu0 %1425
  %v1428 = vmul.f32 %v1423, %v1426
  %1430 = vrot.lane.b32.xlu0 %v1428, 64
  %v1431 = vpop.permute.xlu0 %1430
  %v1433 = vadd.f32 %v1341, %v1431
  %v1434 = vtanh.pop %v1433
  %v1435 = vsub.f32 1.0, %v1423
  %1437 = vrot.lane.b32.xlu0 %v1434, 96
  %v1438 = vpop.permute.xlu0 %1437
  %v1440 = vmul.f32 %v1435, %v1438
  %v1441 = vmul.f32 %v1423, %v1242
  %v1442 = vadd.f32 %v1440, %v1441
  %1444 = vrot.lane.b32.xlu0 %v1442, 96
  %v1445 = vpop.permute.xlu0 %1444
  %s1447 = scalar_lea.vmem [#allocation2], 12
  %1448 = vst.msk [vmem:[%s1447] sm:$0x3] %vm240, %v1445
  %s1449 = scalar_lea.vmem [#allocation3], 2
  %1450 = vst.msk [vmem:[%s1449 - $0x2] sm:$0xc] %vm243, %v1445
  %v1451 = vld [vmem:[%s45] sm:$0x3]
  %v1452 = vld [vmem:[%s0] sm:$0x3]
  %v1453 = vsel %vm47, %v1451, 0.0
  %1455 = vrot.lane.b32.xlu0 %v1452, 32
  %v1456 = vpop.permute.xlu0 %1455
  %v1458 = vsel %vm47, 0.0, %v1456
  %v1460 = vrot.slane %v1458, 6
  %v1462 = vsel %vm57, %v1453, %v1460
  %v1463 = vsel %vm47, %v1445, 0.0
  %v1464 = vrot.slane %v1442, 2
  %v1466 = vsel %vm47, 0.0, %v1464
  %v1468 = vrot.slane %v1466, 6
  %v1470 = vsel %vm57, %v1463, %v1468
  %v1472 = vsel %vm63, %v1462, 0
  %1474 = vmatprep.subr.mxu0 0.0
  %1475 = vmatpush1.msra.mxu0 0.0
  %1476 = vmatprep.subr.mxu0 0.0
  %1477 = vmatpush1.msra.mxu0 0.0
  %1478 = vmatprep.subr.mxu0 0.0
  %1479 = vmatpush1.msra.mxu0 0.0
  %1480 = vmatprep.subr.mxu0 0.0
  %1481 = vmatpush1.msra.mxu0 0.0
  %1482 = vmatprep.subr.mxu0 0.0
  %1483 = vmatpush1.msra.mxu0 0.0
  %1484 = vmatprep.subr.mxu0 0.0
  %1485 = vmatpush1.msra.mxu0 0.0
  %1486 = vmatprep.subr.mxu0 0.0
  %1487 = vmatpush1.msra.mxu0 0.0
  %1488 = vmatprep.subr.mxu0 0.0
  %1489 = vmatpush1.msra.mxu0 0.0
  %1490 = vmatprep.subr.mxu0 0.0
  %1491 = vmatpush1.msra.mxu0 %v33
  %1492 = vmatprep.subr.mxu0 0.0
  %1493 = vmatpush1.msra.mxu0 %v32
  %1494 = vmatprep.subr.mxu0 0.0
  %1495 = vmatpush1.msra.mxu0 %v31
  %1496 = vmatprep.subr.mxu0 0.0
  %1497 = vmatpush1.msra.mxu0 %v30
  %1498 = vmatprep.subr.mxu0 0.0
  %1499 = vmatpush1.msra.mxu0 %v29
  %1500 = vmatprep.subr.mxu0 0.0
  %1501 = vmatpush1.msra.mxu0 %v28
  %1502 = vmatprep.subr.mxu0 0.0
  %1503 = vmatpush1.msra.mxu0 %v27
  %1504 = vmatprep.subr.mxu0 0.0
  %1505 = vmatpush1.msra.mxu0 %v26
  %1506 = vmatprep.subr.mxu0 0.0
  %1507 = vmatpush2.msra.mxu0 0.0
  %1508 = vmatprep.subr.mxu0 0.0
  %1509 = vmatpush2.msra.mxu0 0.0
  %1510 = vmatprep.subr.mxu0 0.0
  %1511 = vmatpush2.msra.mxu0 0.0
  %1512 = vmatprep.subr.mxu0 0.0
  %1513 = vmatpush2.msra.mxu0 0.0
  %1514 = vmatprep.subr.mxu0 0.0
  %1515 = vmatpush2.msra.mxu0 0.0
  %1516 = vmatprep.subr.mxu0 0.0
  %1517 = vmatpush2.msra.mxu0 0.0
  %1518 = vmatprep.subr.mxu0 0.0
  %1519 = vmatpush2.msra.mxu0 0.0
  %1520 = vmatprep.subr.mxu0 0.0
  %1521 = vmatpush2.msra.mxu0 0.0
  %1522 = vmatprep.subr.mxu0 0.0
  %1523 = vmatpush2.msra.mxu0 0.0
  %1524 = vmatprep.subr.mxu0 0.0
  %1525 = vmatpush2.msra.mxu0 0.0
  %1526 = vmatprep.subr.mxu0 0.0
  %1527 = vmatpush2.msra.mxu0 0.0
  %1528 = vmatprep.subr.mxu0 0.0
  %1529 = vmatpush2.msra.mxu0 0.0
  %1530 = vmatprep.subr.mxu0 0.0
  %1531 = vmatpush2.msra.mxu0 0.0
  %1532 = vmatprep.subr.mxu0 0.0
  %1533 = vmatpush2.msra.mxu0 0.0
  %1534 = vmatprep.subr.mxu0 0.0
  %1535 = vmatpush2.msra.mxu0 0.0
  %1536 = vmatprep.subr.mxu0 0.0
  %1537 = vmatpush2.msra.mxu0 0.0
  %1538 = vmatprep.mubr.f32.mxu0 0.0
  %1539 = vmatmul.mubr.f32.gmra.mxu0 %v1472
  %v1540 = vpop.f32.mrf.mxu0
  %v1541 = vadd.f32 %v42, %v1540
  %v1542 = vpop.f32.mrf.mxu0
  %1543 = vdwg.mxu0
  %v1545 = vsel %vm63, %v1470, 0
  %1547 = vmatprep.subr.mxu0 0.0
  %1548 = vmatpush1.msra.mxu0 0.0
  %1549 = vmatprep.subr.mxu0 0.0
  %1550 = vmatpush1.msra.mxu0 0.0
  %1551 = vmatprep.subr.mxu0 0.0
  %1552 = vmatpush1.msra.mxu0 0.0
  %1553 = vmatprep.subr.mxu0 0.0
  %1554 = vmatpush1.msra.mxu0 0.0
  %1555 = vmatprep.subr.mxu0 0.0
  %1556 = vmatpush1.msra.mxu0 0.0
  %1557 = vmatprep.subr.mxu0 0.0
  %1558 = vmatpush1.msra.mxu0 0.0
  %1559 = vmatprep.subr.mxu0 0.0
  %1560 = vmatpush1.msra.mxu0 0.0
  %1561 = vmatprep.subr.mxu0 0.0
  %1562 = vmatpush1.msra.mxu0 0.0
  %1563 = vmatprep.subr.mxu0 0.0
  %1564 = vmatpush1.msra.mxu0 %v41
  %1565 = vmatprep.subr.mxu0 0.0
  %1566 = vmatpush1.msra.mxu0 %v40
  %1567 = vmatprep.subr.mxu0 0.0
  %1568 = vmatpush1.msra.mxu0 %v39
  %1569 = vmatprep.subr.mxu0 0.0
  %1570 = vmatpush1.msra.mxu0 %v38
  %1571 = vmatprep.subr.mxu0 0.0
  %1572 = vmatpush1.msra.mxu0 %v37
  %1573 = vmatprep.subr.mxu0 0.0
  %1574 = vmatpush1.msra.mxu0 %v36
  %1575 = vmatprep.subr.mxu0 0.0
  %1576 = vmatpush1.msra.mxu0 %v35
  %1577 = vmatprep.subr.mxu0 0.0
  %1578 = vmatpush1.msra.mxu0 %v34
  %1579 = vmatprep.subr.mxu0 0.0
  %1580 = vmatpush2.msra.mxu0 0.0
  %1581 = vmatprep.subr.mxu0 0.0
  %1582 = vmatpush2.msra.mxu0 0.0
  %1583 = vmatprep.subr.mxu0 0.0
  %1584 = vmatpush2.msra.mxu0 0.0
  %1585 = vmatprep.subr.mxu0 0.0
  %1586 = vmatpush2.msra.mxu0 0.0
  %1587 = vmatprep.subr.mxu0 0.0
  %1588 = vmatpush2.msra.mxu0 0.0
  %1589 = vmatprep.subr.mxu0 0.0
  %1590 = vmatpush2.msra.mxu0 0.0
  %1591 = vmatprep.subr.mxu0 0.0
  %1592 = vmatpush2.msra.mxu0 0.0
  %1593 = vmatprep.subr.mxu0 0.0
  %1594 = vmatpush2.msra.mxu0 0.0
  %1595 = vmatprep.subr.mxu0 0.0
  %1596 = vmatpush2.msra.mxu0 0.0
  %1597 = vmatprep.subr.mxu0 0.0
  %1598 = vmatpush2.msra.mxu0 0.0
  %1599 = vmatprep.subr.mxu0 0.0
  %1600 = vmatpush2.msra.mxu0 0.0
  %1601 = vmatprep.subr.mxu0 0.0
  %1602 = vmatpush2.msra.mxu0 0.0
  %1603 = vmatprep.subr.mxu0 0.0
  %1604 = vmatpush2.msra.mxu0 0.0
  %1605 = vmatprep.subr.mxu0 0.0
  %1606 = vmatpush2.msra.mxu0 0.0
  %1607 = vmatprep.subr.mxu0 0.0
  %1608 = vmatpush2.msra.mxu0 0.0
  %1609 = vmatprep.subr.mxu0 0.0
  %1610 = vmatpush2.msra.mxu0 0.0
  %1611 = vmatprep.mubr.f32.mxu0 0.0
  %1612 = vmatmul.mubr.f32.gmra.mxu0 %v1545
  %v1613 = vpop.f32.mrf.mxu0
  %v1614 = vadd.f32 %v43, %v1613
  %v1615 = vpop.f32.mrf.mxu0
  %1616 = vdwg.mxu0
  %v1617 = vadd.f32 %v1541, %v1614
  %v1618 = vxor.u32 %v1617, 2147483648
  %v1619 = vmul.f32 %v1618, 1.442695
  %v1620 = vpow.pop %v1619
  %v1621 = vadd.f32 %v1620, 1.0
  %v1622 = vrcp.pop %v1621
  %v1623 = vmul.f32 1.0, %v1622
  %1625 = vrot.lane.b32.xlu0 %v1614, 64
  %v1626 = vpop.permute.xlu0 %1625
  %v1628 = vmul.f32 %v1623, %v1626
  %1630 = vrot.lane.b32.xlu0 %v1628, 64
  %v1631 = vpop.permute.xlu0 %1630
  %v1633 = vadd.f32 %v1541, %v1631
  %v1634 = vtanh.pop %v1633
  %v1635 = vsub.f32 1.0, %v1623
  %1637 = vrot.lane.b32.xlu0 %v1634, 96
  %v1638 = vpop.permute.xlu0 %1637
  %v1640 = vmul.f32 %v1635, %v1638
  %v1641 = vmul.f32 %v1623, %v1442
  %v1642 = vadd.f32 %v1640, %v1641
  %1644 = vrot.lane.b32.xlu0 %v1642, 96
  %v1645 = vpop.permute.xlu0 %1644
  %s1647 = scalar_lea.vmem [#allocation2], 14
  %1648 = vst.msk [vmem:[%s1647] sm:$0x3] %vm240, %v1645
  %1649 = vst.msk [vmem:[#allocation3 - $0x2] sm:$0xc] %vm243, %v1645
  %v1650 = vld [vmem:[%s5] sm:$0xff]
  %v1651 = vld [vmem:[%s5 + $0x8] sm:$0xff]
  %v1652 = vld [vmem:[%s5 + $0x10] sm:$0xff]
  %v1653 = vld [vmem:[%s5 + $0x18] sm:$0xff]
  %v1654 = vld [vmem:[%s5 + $0x20] sm:$0xff]
  %v1655 = vld [vmem:[%s5 + $0x28] sm:$0xff]
  %v1656 = vld [vmem:[%s5 + $0x30] sm:$0xff]
  %v1657 = vld [vmem:[%s5 + $0x38] sm:$0xff]
  %v1658 = vld [vmem:[%s6] sm:$0x1]
  %v1659 = vld [vmem:[#allocation2] sm:$0x3]
  %v1660 = vld [vmem:[#allocation3] sm:$0x3]
  %v1662 = vsel %vm47, %v1660, 0
  %1664 = vmatprep.subr.mxu0 0.0
  %1665 = vmatpush1.msra.mxu0 0.0
  %1666 = vmatprep.subr.mxu0 0.0
  %1667 = vmatpush1.msra.mxu0 0.0
  %1668 = vmatprep.subr.mxu0 0.0
  %1669 = vmatpush1.msra.mxu0 0.0
  %1670 = vmatprep.subr.mxu0 0.0
  %1671 = vmatpush1.msra.mxu0 0.0
  %1672 = vmatprep.subr.mxu0 0.0
  %1673 = vmatpush1.msra.mxu0 0.0
  %1674 = vmatprep.subr.mxu0 0.0
  %1675 = vmatpush1.msra.mxu0 0.0
  %1676 = vmatprep.subr.mxu0 0.0
  %1677 = vmatpush1.msra.mxu0 0.0
  %1678 = vmatprep.subr.mxu0 0.0
  %1679 = vmatpush1.msra.mxu0 0.0
  %1680 = vmatprep.subr.mxu0 0.0
  %1681 = vmatpush1.msra.mxu0 0.0
  %1682 = vmatprep.subr.mxu0 0.0
  %1683 = vmatpush1.msra.mxu0 0.0
  %1684 = vmatprep.subr.mxu0 0.0
  %1685 = vmatpush1.msra.mxu0 0.0
  %1686 = vmatprep.subr.mxu0 0.0
  %1687 = vmatpush1.msra.mxu0 0.0
  %1688 = vmatprep.subr.mxu0 0.0
  %1689 = vmatpush1.msra.mxu0 %v1657
  %1690 = vmatprep.subr.mxu0 0.0
  %1691 = vmatpush1.msra.mxu0 %v1656
  %1692 = vmatprep.subr.mxu0 0.0
  %1693 = vmatpush1.msra.mxu0 %v1655
  %1694 = vmatprep.subr.mxu0 0.0
  %1695 = vmatpush1.msra.mxu0 %v1654
  %1696 = vmatprep.subr.mxu0 0.0
  %1697 = vmatpush2.msra.mxu0 0.0
  %1698 = vmatprep.subr.mxu0 0.0
  %1699 = vmatpush2.msra.mxu0 0.0
  %1700 = vmatprep.subr.mxu0 0.0
  %1701 = vmatpush2.msra.mxu0 0.0
  %1702 = vmatprep.subr.mxu0 0.0
  %1703 = vmatpush2.msra.mxu0 0.0
  %1704 = vmatprep.subr.mxu0 0.0
  %1705 = vmatpush2.msra.mxu0 0.0
  %1706 = vmatprep.subr.mxu0 0.0
  %1707 = vmatpush2.msra.mxu0 0.0
  %1708 = vmatprep.subr.mxu0 0.0
  %1709 = vmatpush2.msra.mxu0 0.0
  %1710 = vmatprep.subr.mxu0 0.0
  %1711 = vmatpush2.msra.mxu0 0.0
  %1712 = vmatprep.subr.mxu0 0.0
  %1713 = vmatpush2.msra.mxu0 0.0
  %1714 = vmatprep.subr.mxu0 0.0
  %1715 = vmatpush2.msra.mxu0 0.0
  %1716 = vmatprep.subr.mxu0 0.0
  %1717 = vmatpush2.msra.mxu0 0.0
  %1718 = vmatprep.subr.mxu0 0.0
  %1719 = vmatpush2.msra.mxu0 0.0
  %1720 = vmatprep.subr.mxu0 0.0
  %1721 = vmatpush2.msra.mxu0 0.0
  %1722 = vmatprep.subr.mxu0 0.0
  %1723 = vmatpush2.msra.mxu0 0.0
  %1724 = vmatprep.subr.mxu0 0.0
  %1725 = vmatpush2.msra.mxu0 0.0
  %1726 = vmatprep.subr.mxu0 0.0
  %1727 = vmatpush2.msra.mxu0 0.0
  %1728 = vmatprep.mubr.f32.mxu0 0.0
  %1729 = vmatmul.mubr.f32.gmra.mxu0 %v1662
  %v1730 = vpop.f32.mrf.mxu0
  %v1731 = vadd.f32 0.0, %v1730
  %v1732 = vpop.f32.mrf.mxu0
  %1733 = vdwg.mxu0
  %v1735 = vsel %vm47, %v1659, 0
  %1737 = vmatprep.subr.mxu0 0.0
  %1738 = vmatpush1.msra.mxu0 0.0
  %1739 = vmatprep.subr.mxu0 0.0
  %1740 = vmatpush1.msra.mxu0 0.0
  %1741 = vmatprep.subr.mxu0 0.0
  %1742 = vmatpush1.msra.mxu0 0.0
  %1743 = vmatprep.subr.mxu0 0.0
  %1744 = vmatpush1.msra.mxu0 0.0
  %1745 = vmatprep.subr.mxu0 0.0
  %1746 = vmatpush1.msra.mxu0 0.0
  %1747 = vmatprep.subr.mxu0 0.0
  %1748 = vmatpush1.msra.mxu0 0.0
  %1749 = vmatprep.subr.mxu0 0.0
  %1750 = vmatpush1.msra.mxu0 0.0
  %1751 = vmatprep.subr.mxu0 0.0
  %1752 = vmatpush1.msra.mxu0 0.0
  %1753 = vmatprep.subr.mxu0 0.0
  %1754 = vmatpush1.msra.mxu0 0.0
  %1755 = vmatprep.subr.mxu0 0.0
  %1756 = vmatpush1.msra.mxu0 0.0
  %1757 = vmatprep.subr.mxu0 0.0
  %1758 = vmatpush1.msra.mxu0 0.0
  %1759 = vmatprep.subr.mxu0 0.0
  %1760 = vmatpush1.msra.mxu0 0.0
  %1761 = vmatprep.subr.mxu0 0.0
  %1762 = vmatpush1.msra.mxu0 %v1653
  %1763 = vmatprep.subr.mxu0 0.0
  %1764 = vmatpush1.msra.mxu0 %v1652
  %1765 = vmatprep.subr.mxu0 0.0
  %1766 = vmatpush1.msra.mxu0 %v1651
  %1767 = vmatprep.subr.mxu0 0.0
  %1768 = vmatpush1.msra.mxu0 %v1650
  %1769 = vmatprep.subr.mxu0 0.0
  %1770 = vmatpush2.msra.mxu0 0.0
  %1771 = vmatprep.subr.mxu0 0.0
  %1772 = vmatpush2.msra.mxu0 0.0
  %1773 = vmatprep.subr.mxu0 0.0
  %1774 = vmatpush2.msra.mxu0 0.0
  %1775 = vmatprep.subr.mxu0 0.0
  %1776 = vmatpush2.msra.mxu0 0.0
  %1777 = vmatprep.subr.mxu0 0.0
  %1778 = vmatpush2.msra.mxu0 0.0
  %1779 = vmatprep.subr.mxu0 0.0
  %1780 = vmatpush2.msra.mxu0 0.0
  %1781 = vmatprep.subr.mxu0 0.0
  %1782 = vmatpush2.msra.mxu0 0.0
  %1783 = vmatprep.subr.mxu0 0.0
  %1784 = vmatpush2.msra.mxu0 0.0
  %1785 = vmatprep.subr.mxu0 0.0
  %1786 = vmatpush2.msra.mxu0 0.0
  %1787 = vmatprep.subr.mxu0 0.0
  %1788 = vmatpush2.msra.mxu0 0.0
  %1789 = vmatprep.subr.mxu0 0.0
  %1790 = vmatpush2.msra.mxu0 0.0
  %1791 = vmatprep.subr.mxu0 0.0
  %1792 = vmatpush2.msra.mxu0 0.0
  %1793 = vmatprep.subr.mxu0 0.0
  %1794 = vmatpush2.msra.mxu0 0.0
  %1795 = vmatprep.subr.mxu0 0.0
  %1796 = vmatpush2.msra.mxu0 0.0
  %1797 = vmatprep.subr.mxu0 0.0
  %1798 = vmatpush2.msra.mxu0 0.0
  %1799 = vmatprep.subr.mxu0 0.0
  %1800 = vmatpush2.msra.mxu0 0.0
  %1801 = vmatprep.mubr.f32.mxu0 0.0
  %1802 = vmatmul.mubr.f32.gmra.mxu0 %v1735
  %v1803 = vpop.f32.mrf.mxu0
  %v1804 = vadd.f32 %v1731, %v1803
  %v1805 = vpop.f32.mrf.mxu0
  %1806 = vdwg.mxu0
  %v1808 = vlaneseq
  %v1809 = vshrl.u32 %v1808, 7
  %v1810 = vsub.s32 0, %v1809
  %v1811 = vrot.slane %v1658, %v1810
  %v1813 = vadd.f32 %v1804, %v1811
  %vm1814 = vcmask 33792
  %1815 = vst.msk [vmem:[%s7] sm:$0x3] %vm1814, %v1813
  %v1816 = vld [vmem:[%s443] sm:$0x3]
  %v1817 = vld [vmem:[%s1449] sm:$0x3]
  %v1819 = vsel %vm47, %v1817, 0
  %1821 = vmatprep.subr.mxu0 0.0
  %1822 = vmatpush1.msra.mxu0 0.0
  %1823 = vmatprep.subr.mxu0 0.0
  %1824 = vmatpush1.msra.mxu0 0.0
  %1825 = vmatprep.subr.mxu0 0.0
  %1826 = vmatpush1.msra.mxu0 0.0
  %1827 = vmatprep.subr.mxu0 0.0
  %1828 = vmatpush1.msra.mxu0 0.0
  %1829 = vmatprep.subr.mxu0 0.0
  %1830 = vmatpush1.msra.mxu0 0.0
  %1831 = vmatprep.subr.mxu0 0.0
  %1832 = vmatpush1.msra.mxu0 0.0
  %1833 = vmatprep.subr.mxu0 0.0
  %1834 = vmatpush1.msra.mxu0 0.0
  %1835 = vmatprep.subr.mxu0 0.0
  %1836 = vmatpush1.msra.mxu0 0.0
  %1837 = vmatprep.subr.mxu0 0.0
  %1838 = vmatpush1.msra.mxu0 0.0
  %1839 = vmatprep.subr.mxu0 0.0
  %1840 = vmatpush1.msra.mxu0 0.0
  %1841 = vmatprep.subr.mxu0 0.0
  %1842 = vmatpush1.msra.mxu0 0.0
  %1843 = vmatprep.subr.mxu0 0.0
  %1844 = vmatpush1.msra.mxu0 0.0
  %1845 = vmatprep.subr.mxu0 0.0
  %1846 = vmatpush1.msra.mxu0 %v1657
  %1847 = vmatprep.subr.mxu0 0.0
  %1848 = vmatpush1.msra.mxu0 %v1656
  %1849 = vmatprep.subr.mxu0 0.0
  %1850 = vmatpush1.msra.mxu0 %v1655
  %1851 = vmatprep.subr.mxu0 0.0
  %1852 = vmatpush1.msra.mxu0 %v1654
  %1853 = vmatprep.subr.mxu0 0.0
  %1854 = vmatpush2.msra.mxu0 0.0
  %1855 = vmatprep.subr.mxu0 0.0
  %1856 = vmatpush2.msra.mxu0 0.0
  %1857 = vmatprep.subr.mxu0 0.0
  %1858 = vmatpush2.msra.mxu0 0.0
  %1859 = vmatprep.subr.mxu0 0.0
  %1860 = vmatpush2.msra.mxu0 0.0
  %1861 = vmatprep.subr.mxu0 0.0
  %1862 = vmatpush2.msra.mxu0 0.0
  %1863 = vmatprep.subr.mxu0 0.0
  %1864 = vmatpush2.msra.mxu0 0.0
  %1865 = vmatprep.subr.mxu0 0.0
  %1866 = vmatpush2.msra.mxu0 0.0
  %1867 = vmatprep.subr.mxu0 0.0
  %1868 = vmatpush2.msra.mxu0 0.0
  %1869 = vmatprep.subr.mxu0 0.0
  %1870 = vmatpush2.msra.mxu0 0.0
  %1871 = vmatprep.subr.mxu0 0.0
  %1872 = vmatpush2.msra.mxu0 0.0
  %1873 = vmatprep.subr.mxu0 0.0
  %1874 = vmatpush2.msra.mxu0 0.0
  %1875 = vmatprep.subr.mxu0 0.0
  %1876 = vmatpush2.msra.mxu0 0.0
  %1877 = vmatprep.subr.mxu0 0.0
  %1878 = vmatpush2.msra.mxu0 0.0
  %1879 = vmatprep.subr.mxu0 0.0
  %1880 = vmatpush2.msra.mxu0 0.0
  %1881 = vmatprep.subr.mxu0 0.0
  %1882 = vmatpush2.msra.mxu0 0.0
  %1883 = vmatprep.subr.mxu0 0.0
  %1884 = vmatpush2.msra.mxu0 0.0
  %1885 = vmatprep.mubr.f32.mxu0 0.0
  %1886 = vmatmul.mubr.f32.gmra.mxu0 %v1819
  %v1887 = vpop.f32.mrf.mxu0
  %v1888 = vadd.f32 0.0, %v1887
  %v1889 = vpop.f32.mrf.mxu0
  %1890 = vdwg.mxu0
  %v1892 = vsel %vm47, %v1816, 0
  %1894 = vmatprep.subr.mxu0 0.0
  %1895 = vmatpush1.msra.mxu0 0.0
  %1896 = vmatprep.subr.mxu0 0.0
  %1897 = vmatpush1.msra.mxu0 0.0
  %1898 = vmatprep.subr.mxu0 0.0
  %1899 = vmatpush1.msra.mxu0 0.0
  %1900 = vmatprep.subr.mxu0 0.0
  %1901 = vmatpush1.msra.mxu0 0.0
  %1902 = vmatprep.subr.mxu0 0.0
  %1903 = vmatpush1.msra.mxu0 0.0
  %1904 = vmatprep.subr.mxu0 0.0
  %1905 = vmatpush1.msra.mxu0 0.0
  %1906 = vmatprep.subr.mxu0 0.0
  %1907 = vmatpush1.msra.mxu0 0.0
  %1908 = vmatprep.subr.mxu0 0.0
  %1909 = vmatpush1.msra.mxu0 0.0
  %1910 = vmatprep.subr.mxu0 0.0
  %1911 = vmatpush1.msra.mxu0 0.0
  %1912 = vmatprep.subr.mxu0 0.0
  %1913 = vmatpush1.msra.mxu0 0.0
  %1914 = vmatprep.subr.mxu0 0.0
  %1915 = vmatpush1.msra.mxu0 0.0
  %1916 = vmatprep.subr.mxu0 0.0
  %1917 = vmatpush1.msra.mxu0 0.0
  %1918 = vmatprep.subr.mxu0 0.0
  %1919 = vmatpush1.msra.mxu0 %v1653
  %1920 = vmatprep.subr.mxu0 0.0
  %1921 = vmatpush1.msra.mxu0 %v1652
  %1922 = vmatprep.subr.mxu0 0.0
  %1923 = vmatpush1.msra.mxu0 %v1651
  %1924 = vmatprep.subr.mxu0 0.0
  %1925 = vmatpush1.msra.mxu0 %v1650
  %1926 = vmatprep.subr.mxu0 0.0
  %1927 = vmatpush2.msra.mxu0 0.0
  %1928 = vmatprep.subr.mxu0 0.0
  %1929 = vmatpush2.msra.mxu0 0.0
  %1930 = vmatprep.subr.mxu0 0.0
  %1931 = vmatpush2.msra.mxu0 0.0
  %1932 = vmatprep.subr.mxu0 0.0
  %1933 = vmatpush2.msra.mxu0 0.0
  %1934 = vmatprep.subr.mxu0 0.0
  %1935 = vmatpush2.msra.mxu0 0.0
  %1936 = vmatprep.subr.mxu0 0.0
  %1937 = vmatpush2.msra.mxu0 0.0
  %1938 = vmatprep.subr.mxu0 0.0
  %1939 = vmatpush2.msra.mxu0 0.0
  %1940 = vmatprep.subr.mxu0 0.0
  %1941 = vmatpush2.msra.mxu0 0.0
  %1942 = vmatprep.subr.mxu0 0.0
  %1943 = vmatpush2.msra.mxu0 0.0
  %1944 = vmatprep.subr.mxu0 0.0
  %1945 = vmatpush2.msra.mxu0 0.0
  %1946 = vmatprep.subr.mxu0 0.0
  %1947 = vmatpush2.msra.mxu0 0.0
  %1948 = vmatprep.subr.mxu0 0.0
  %1949 = vmatpush2.msra.mxu0 0.0
  %1950 = vmatprep.subr.mxu0 0.0
  %1951 = vmatpush2.msra.mxu0 0.0
  %1952 = vmatprep.subr.mxu0 0.0
  %1953 = vmatpush2.msra.mxu0 0.0
  %1954 = vmatprep.subr.mxu0 0.0
  %1955 = vmatpush2.msra.mxu0 0.0
  %1956 = vmatprep.subr.mxu0 0.0
  %1957 = vmatpush2.msra.mxu0 0.0
  %1958 = vmatprep.mubr.f32.mxu0 0.0
  %1959 = vmatmul.mubr.f32.gmra.mxu0 %v1892
  %v1960 = vpop.f32.mrf.mxu0
  %v1961 = vadd.f32 %v1888, %v1960
  %v1962 = vpop.f32.mrf.mxu0
  %1963 = vdwg.mxu0
  %v1964 = vadd.f32 %v1961, %v1811
  %s1965 = scalar_lea.vmem %s7, 2
  %1966 = vst.msk [vmem:[%s1965] sm:$0x3] %vm1814, %v1964
  %v1967 = vld [vmem:[%s645] sm:$0x3]
  %v1968 = vld [vmem:[%s1249] sm:$0x3]
  %v1970 = vsel %vm47, %v1968, 0
  %1972 = vmatprep.subr.mxu0 0.0
  %1973 = vmatpush1.msra.mxu0 0.0
  %1974 = vmatprep.subr.mxu0 0.0
  %1975 = vmatpush1.msra.mxu0 0.0
  %1976 = vmatprep.subr.mxu0 0.0
  %1977 = vmatpush1.msra.mxu0 0.0
  %1978 = vmatprep.subr.mxu0 0.0
  %1979 = vmatpush1.msra.mxu0 0.0
  %1980 = vmatprep.subr.mxu0 0.0
  %1981 = vmatpush1.msra.mxu0 0.0
  %1982 = vmatprep.subr.mxu0 0.0
  %1983 = vmatpush1.msra.mxu0 0.0
  %1984 = vmatprep.subr.mxu0 0.0
  %1985 = vmatpush1.msra.mxu0 0.0
  %1986 = vmatprep.subr.mxu0 0.0
  %1987 = vmatpush1.msra.mxu0 0.0
  %1988 = vmatprep.subr.mxu0 0.0
  %1989 = vmatpush1.msra.mxu0 0.0
  %1990 = vmatprep.subr.mxu0 0.0
  %1991 = vmatpush1.msra.mxu0 0.0
  %1992 = vmatprep.subr.mxu0 0.0
  %1993 = vmatpush1.msra.mxu0 0.0
  %1994 = vmatprep.subr.mxu0 0.0
  %1995 = vmatpush1.msra.mxu0 0.0
  %1996 = vmatprep.subr.mxu0 0.0
  %1997 = vmatpush1.msra.mxu0 %v1657
  %1998 = vmatprep.subr.mxu0 0.0
  %1999 = vmatpush1.msra.mxu0 %v1656
  %2000 = vmatprep.subr.mxu0 0.0
  %2001 = vmatpush1.msra.mxu0 %v1655
  %2002 = vmatprep.subr.mxu0 0.0
  %2003 = vmatpush1.msra.mxu0 %v1654
  %2004 = vmatprep.subr.mxu0 0.0
  %2005 = vmatpush2.msra.mxu0 0.0
  %2006 = vmatprep.subr.mxu0 0.0
  %2007 = vmatpush2.msra.mxu0 0.0
  %2008 = vmatprep.subr.mxu0 0.0
  %2009 = vmatpush2.msra.mxu0 0.0
  %2010 = vmatprep.subr.mxu0 0.0
  %2011 = vmatpush2.msra.mxu0 0.0
  %2012 = vmatprep.subr.mxu0 0.0
  %2013 = vmatpush2.msra.mxu0 0.0
  %2014 = vmatprep.subr.mxu0 0.0
  %2015 = vmatpush2.msra.mxu0 0.0
  %2016 = vmatprep.subr.mxu0 0.0
  %2017 = vmatpush2.msra.mxu0 0.0
  %2018 = vmatprep.subr.mxu0 0.0
  %2019 = vmatpush2.msra.mxu0 0.0
  %2020 = vmatprep.subr.mxu0 0.0
  %2021 = vmatpush2.msra.mxu0 0.0
  %2022 = vmatprep.subr.mxu0 0.0
  %2023 = vmatpush2.msra.mxu0 0.0
  %2024 = vmatprep.subr.mxu0 0.0
  %2025 = vmatpush2.msra.mxu0 0.0
  %2026 = vmatprep.subr.mxu0 0.0
  %2027 = vmatpush2.msra.mxu0 0.0
  %2028 = vmatprep.subr.mxu0 0.0
  %2029 = vmatpush2.msra.mxu0 0.0
  %2030 = vmatprep.subr.mxu0 0.0
  %2031 = vmatpush2.msra.mxu0 0.0
  %2032 = vmatprep.subr.mxu0 0.0
  %2033 = vmatpush2.msra.mxu0 0.0
  %2034 = vmatprep.subr.mxu0 0.0
  %2035 = vmatpush2.msra.mxu0 0.0
  %2036 = vmatprep.mubr.f32.mxu0 0.0
  %2037 = vmatmul.mubr.f32.gmra.mxu0 %v1970
  %v2038 = vpop.f32.mrf.mxu0
  %v2039 = vadd.f32 0.0, %v2038
  %v2040 = vpop.f32.mrf.mxu0
  %2041 = vdwg.mxu0
  %v2043 = vsel %vm47, %v1967, 0
  %2045 = vmatprep.subr.mxu0 0.0
  %2046 = vmatpush1.msra.mxu0 0.0
  %2047 = vmatprep.subr.mxu0 0.0
  %2048 = vmatpush1.msra.mxu0 0.0
  %2049 = vmatprep.subr.mxu0 0.0
  %2050 = vmatpush1.msra.mxu0 0.0
  %2051 = vmatprep.subr.mxu0 0.0
  %2052 = vmatpush1.msra.mxu0 0.0
  %2053 = vmatprep.subr.mxu0 0.0
  %2054 = vmatpush1.msra.mxu0 0.0
  %2055 = vmatprep.subr.mxu0 0.0
  %2056 = vmatpush1.msra.mxu0 0.0
  %2057 = vmatprep.subr.mxu0 0.0
  %2058 = vmatpush1.msra.mxu0 0.0
  %2059 = vmatprep.subr.mxu0 0.0
  %2060 = vmatpush1.msra.mxu0 0.0
  %2061 = vmatprep.subr.mxu0 0.0
  %2062 = vmatpush1.msra.mxu0 0.0
  %2063 = vmatprep.subr.mxu0 0.0
  %2064 = vmatpush1.msra.mxu0 0.0
  %2065 = vmatprep.subr.mxu0 0.0
  %2066 = vmatpush1.msra.mxu0 0.0
  %2067 = vmatprep.subr.mxu0 0.0
  %2068 = vmatpush1.msra.mxu0 0.0
  %2069 = vmatprep.subr.mxu0 0.0
  %2070 = vmatpush1.msra.mxu0 %v1653
  %2071 = vmatprep.subr.mxu0 0.0
  %2072 = vmatpush1.msra.mxu0 %v1652
  %2073 = vmatprep.subr.mxu0 0.0
  %2074 = vmatpush1.msra.mxu0 %v1651
  %2075 = vmatprep.subr.mxu0 0.0
  %2076 = vmatpush1.msra.mxu0 %v1650
  %2077 = vmatprep.subr.mxu0 0.0
  %2078 = vmatpush2.msra.mxu0 0.0
  %2079 = vmatprep.subr.mxu0 0.0
  %2080 = vmatpush2.msra.mxu0 0.0
  %2081 = vmatprep.subr.mxu0 0.0
  %2082 = vmatpush2.msra.mxu0 0.0
  %2083 = vmatprep.subr.mxu0 0.0
  %2084 = vmatpush2.msra.mxu0 0.0
  %2085 = vmatprep.subr.mxu0 0.0
  %2086 = vmatpush2.msra.mxu0 0.0
  %2087 = vmatprep.subr.mxu0 0.0
  %2088 = vmatpush2.msra.mxu0 0.0
  %2089 = vmatprep.subr.mxu0 0.0
  %2090 = vmatpush2.msra.mxu0 0.0
  %2091 = vmatprep.subr.mxu0 0.0
  %2092 = vmatpush2.msra.mxu0 0.0
  %2093 = vmatprep.subr.mxu0 0.0
  %2094 = vmatpush2.msra.mxu0 0.0
  %2095 = vmatprep.subr.mxu0 0.0
  %2096 = vmatpush2.msra.mxu0 0.0
  %2097 = vmatprep.subr.mxu0 0.0
  %2098 = vmatpush2.msra.mxu0 0.0
  %2099 = vmatprep.subr.mxu0 0.0
  %2100 = vmatpush2.msra.mxu0 0.0
  %2101 = vmatprep.subr.mxu0 0.0
  %2102 = vmatpush2.msra.mxu0 0.0
  %2103 = vmatprep.subr.mxu0 0.0
  %2104 = vmatpush2.msra.mxu0 0.0
  %2105 = vmatprep.subr.mxu0 0.0
  %2106 = vmatpush2.msra.mxu0 0.0
  %2107 = vmatprep.subr.mxu0 0.0
  %2108 = vmatpush2.msra.mxu0 0.0
  %2109 = vmatprep.mubr.f32.mxu0 0.0
  %2110 = vmatmul.mubr.f32.gmra.mxu0 %v2043
  %v2111 = vpop.f32.mrf.mxu0
  %v2112 = vadd.f32 %v2039, %v2111
  %v2113 = vpop.f32.mrf.mxu0
  %2114 = vdwg.mxu0
  %v2115 = vadd.f32 %v2112, %v1811
  %s2116 = scalar_lea.vmem %s7, 4
  %2117 = vst.msk [vmem:[%s2116] sm:$0x3] %vm1814, %v2115
  %v2118 = vld [vmem:[%s847] sm:$0x3]
  %v2119 = vld [vmem:[%s1049] sm:$0x3]
  %v2121 = vsel %vm47, %v2119, 0
  %2123 = vmatprep.subr.mxu0 0.0
  %2124 = vmatpush1.msra.mxu0 0.0
  %2125 = vmatprep.subr.mxu0 0.0
  %2126 = vmatpush1.msra.mxu0 0.0
  %2127 = vmatprep.subr.mxu0 0.0
  %2128 = vmatpush1.msra.mxu0 0.0
  %2129 = vmatprep.subr.mxu0 0.0
  %2130 = vmatpush1.msra.mxu0 0.0
  %2131 = vmatprep.subr.mxu0 0.0
  %2132 = vmatpush1.msra.mxu0 0.0
  %2133 = vmatprep.subr.mxu0 0.0
  %2134 = vmatpush1.msra.mxu0 0.0
  %2135 = vmatprep.subr.mxu0 0.0
  %2136 = vmatpush1.msra.mxu0 0.0
  %2137 = vmatprep.subr.mxu0 0.0
  %2138 = vmatpush1.msra.mxu0 0.0
  %2139 = vmatprep.subr.mxu0 0.0
  %2140 = vmatpush1.msra.mxu0 0.0
  %2141 = vmatprep.subr.mxu0 0.0
  %2142 = vmatpush1.msra.mxu0 0.0
  %2143 = vmatprep.subr.mxu0 0.0
  %2144 = vmatpush1.msra.mxu0 0.0
  %2145 = vmatprep.subr.mxu0 0.0
  %2146 = vmatpush1.msra.mxu0 0.0
  %2147 = vmatprep.subr.mxu0 0.0
  %2148 = vmatpush1.msra.mxu0 %v1657
  %2149 = vmatprep.subr.mxu0 0.0
  %2150 = vmatpush1.msra.mxu0 %v1656
  %2151 = vmatprep.subr.mxu0 0.0
  %2152 = vmatpush1.msra.mxu0 %v1655
  %2153 = vmatprep.subr.mxu0 0.0
  %2154 = vmatpush1.msra.mxu0 %v1654
  %2155 = vmatprep.subr.mxu0 0.0
  %2156 = vmatpush2.msra.mxu0 0.0
  %2157 = vmatprep.subr.mxu0 0.0
  %2158 = vmatpush2.msra.mxu0 0.0
  %2159 = vmatprep.subr.mxu0 0.0
  %2160 = vmatpush2.msra.mxu0 0.0
  %2161 = vmatprep.subr.mxu0 0.0
  %2162 = vmatpush2.msra.mxu0 0.0
  %2163 = vmatprep.subr.mxu0 0.0
  %2164 = vmatpush2.msra.mxu0 0.0
  %2165 = vmatprep.subr.mxu0 0.0
  %2166 = vmatpush2.msra.mxu0 0.0
  %2167 = vmatprep.subr.mxu0 0.0
  %2168 = vmatpush2.msra.mxu0 0.0
  %2169 = vmatprep.subr.mxu0 0.0
  %2170 = vmatpush2.msra.mxu0 0.0
  %2171 = vmatprep.subr.mxu0 0.0
  %2172 = vmatpush2.msra.mxu0 0.0
  %2173 = vmatprep.subr.mxu0 0.0
  %2174 = vmatpush2.msra.mxu0 0.0
  %2175 = vmatprep.subr.mxu0 0.0
  %2176 = vmatpush2.msra.mxu0 0.0
  %2177 = vmatprep.subr.mxu0 0.0
  %2178 = vmatpush2.msra.mxu0 0.0
  %2179 = vmatprep.subr.mxu0 0.0
  %2180 = vmatpush2.msra.mxu0 0.0
  %2181 = vmatprep.subr.mxu0 0.0
  %2182 = vmatpush2.msra.mxu0 0.0
  %2183 = vmatprep.subr.mxu0 0.0
  %2184 = vmatpush2.msra.mxu0 0.0
  %2185 = vmatprep.subr.mxu0 0.0
  %2186 = vmatpush2.msra.mxu0 0.0
  %2187 = vmatprep.mubr.f32.mxu0 0.0
  %2188 = vmatmul.mubr.f32.gmra.mxu0 %v2121
  %v2189 = vpop.f32.mrf.mxu0
  %v2190 = vadd.f32 0.0, %v2189
  %v2191 = vpop.f32.mrf.mxu0
  %2192 = vdwg.mxu0
  %v2194 = vsel %vm47, %v2118, 0
  %2196 = vmatprep.subr.mxu0 0.0
  %2197 = vmatpush1.msra.mxu0 0.0
  %2198 = vmatprep.subr.mxu0 0.0
  %2199 = vmatpush1.msra.mxu0 0.0
  %2200 = vmatprep.subr.mxu0 0.0
  %2201 = vmatpush1.msra.mxu0 0.0
  %2202 = vmatprep.subr.mxu0 0.0
  %2203 = vmatpush1.msra.mxu0 0.0
  %2204 = vmatprep.subr.mxu0 0.0
  %2205 = vmatpush1.msra.mxu0 0.0
  %2206 = vmatprep.subr.mxu0 0.0
  %2207 = vmatpush1.msra.mxu0 0.0
  %2208 = vmatprep.subr.mxu0 0.0
  %2209 = vmatpush1.msra.mxu0 0.0
  %2210 = vmatprep.subr.mxu0 0.0
  %2211 = vmatpush1.msra.mxu0 0.0
  %2212 = vmatprep.subr.mxu0 0.0
  %2213 = vmatpush1.msra.mxu0 0.0
  %2214 = vmatprep.subr.mxu0 0.0
  %2215 = vmatpush1.msra.mxu0 0.0
  %2216 = vmatprep.subr.mxu0 0.0
  %2217 = vmatpush1.msra.mxu0 0.0
  %2218 = vmatprep.subr.mxu0 0.0
  %2219 = vmatpush1.msra.mxu0 0.0
  %2220 = vmatprep.subr.mxu0 0.0
  %2221 = vmatpush1.msra.mxu0 %v1653
  %2222 = vmatprep.subr.mxu0 0.0
  %2223 = vmatpush1.msra.mxu0 %v1652
  %2224 = vmatprep.subr.mxu0 0.0
  %2225 = vmatpush1.msra.mxu0 %v1651
  %2226 = vmatprep.subr.mxu0 0.0
  %2227 = vmatpush1.msra.mxu0 %v1650
  %2228 = vmatprep.subr.mxu0 0.0
  %2229 = vmatpush2.msra.mxu0 0.0
  %2230 = vmatprep.subr.mxu0 0.0
  %2231 = vmatpush2.msra.mxu0 0.0
  %2232 = vmatprep.subr.mxu0 0.0
  %2233 = vmatpush2.msra.mxu0 0.0
  %2234 = vmatprep.subr.mxu0 0.0
  %2235 = vmatpush2.msra.mxu0 0.0
  %2236 = vmatprep.subr.mxu0 0.0
  %2237 = vmatpush2.msra.mxu0 0.0
  %2238 = vmatprep.subr.mxu0 0.0
  %2239 = vmatpush2.msra.mxu0 0.0
  %2240 = vmatprep.subr.mxu0 0.0
  %2241 = vmatpush2.msra.mxu0 0.0
  %2242 = vmatprep.subr.mxu0 0.0
  %2243 = vmatpush2.msra.mxu0 0.0
  %2244 = vmatprep.subr.mxu0 0.0
  %2245 = vmatpush2.msra.mxu0 0.0
  %2246 = vmatprep.subr.mxu0 0.0
  %2247 = vmatpush2.msra.mxu0 0.0
  %2248 = vmatprep.subr.mxu0 0.0
  %2249 = vmatpush2.msra.mxu0 0.0
  %2250 = vmatprep.subr.mxu0 0.0
  %2251 = vmatpush2.msra.mxu0 0.0
  %2252 = vmatprep.subr.mxu0 0.0
  %2253 = vmatpush2.msra.mxu0 0.0
  %2254 = vmatprep.subr.mxu0 0.0
  %2255 = vmatpush2.msra.mxu0 0.0
  %2256 = vmatprep.subr.mxu0 0.0
  %2257 = vmatpush2.msra.mxu0 0.0
  %2258 = vmatprep.subr.mxu0 0.0
  %2259 = vmatpush2.msra.mxu0 0.0
  %2260 = vmatprep.mubr.f32.mxu0 0.0
  %2261 = vmatmul.mubr.f32.gmra.mxu0 %v2194
  %v2262 = vpop.f32.mrf.mxu0
  %v2263 = vadd.f32 %v2190, %v2262
  %v2264 = vpop.f32.mrf.mxu0
  %2265 = vdwg.mxu0
  %v2266 = vadd.f32 %v2263, %v1811
  %s2267 = scalar_lea.vmem %s7, 6
  %2268 = vst.msk [vmem:[%s2267] sm:$0x3] %vm1814, %v2266
  %v2269 = vld [vmem:[%s1047] sm:$0x3]
  %v2270 = vld [vmem:[%s849] sm:$0x3]
  %v2272 = vsel %vm47, %v2270, 0
  %2274 = vmatprep.subr.mxu0 0.0
  %2275 = vmatpush1.msra.mxu0 0.0
  %2276 = vmatprep.subr.mxu0 0.0
  %2277 = vmatpush1.msra.mxu0 0.0
  %2278 = vmatprep.subr.mxu0 0.0
  %2279 = vmatpush1.msra.mxu0 0.0
  %2280 = vmatprep.subr.mxu0 0.0
  %2281 = vmatpush1.msra.mxu0 0.0
  %2282 = vmatprep.subr.mxu0 0.0
  %2283 = vmatpush1.msra.mxu0 0.0
  %2284 = vmatprep.subr.mxu0 0.0
  %2285 = vmatpush1.msra.mxu0 0.0
  %2286 = vmatprep.subr.mxu0 0.0
  %2287 = vmatpush1.msra.mxu0 0.0
  %2288 = vmatprep.subr.mxu0 0.0
  %2289 = vmatpush1.msra.mxu0 0.0
  %2290 = vmatprep.subr.mxu0 0.0
  %2291 = vmatpush1.msra.mxu0 0.0
  %2292 = vmatprep.subr.mxu0 0.0
  %2293 = vmatpush1.msra.mxu0 0.0
  %2294 = vmatprep.subr.mxu0 0.0
  %2295 = vmatpush1.msra.mxu0 0.0
  %2296 = vmatprep.subr.mxu0 0.0
  %2297 = vmatpush1.msra.mxu0 0.0
  %2298 = vmatprep.subr.mxu0 0.0
  %2299 = vmatpush1.msra.mxu0 %v1657
  %2300 = vmatprep.subr.mxu0 0.0
  %2301 = vmatpush1.msra.mxu0 %v1656
  %2302 = vmatprep.subr.mxu0 0.0
  %2303 = vmatpush1.msra.mxu0 %v1655
  %2304 = vmatprep.subr.mxu0 0.0
  %2305 = vmatpush1.msra.mxu0 %v1654
  %2306 = vmatprep.subr.mxu0 0.0
  %2307 = vmatpush2.msra.mxu0 0.0
  %2308 = vmatprep.subr.mxu0 0.0
  %2309 = vmatpush2.msra.mxu0 0.0
  %2310 = vmatprep.subr.mxu0 0.0
  %2311 = vmatpush2.msra.mxu0 0.0
  %2312 = vmatprep.subr.mxu0 0.0
  %2313 = vmatpush2.msra.mxu0 0.0
  %2314 = vmatprep.subr.mxu0 0.0
  %2315 = vmatpush2.msra.mxu0 0.0
  %2316 = vmatprep.subr.mxu0 0.0
  %2317 = vmatpush2.msra.mxu0 0.0
  %2318 = vmatprep.subr.mxu0 0.0
  %2319 = vmatpush2.msra.mxu0 0.0
  %2320 = vmatprep.subr.mxu0 0.0
  %2321 = vmatpush2.msra.mxu0 0.0
  %2322 = vmatprep.subr.mxu0 0.0
  %2323 = vmatpush2.msra.mxu0 0.0
  %2324 = vmatprep.subr.mxu0 0.0
  %2325 = vmatpush2.msra.mxu0 0.0
  %2326 = vmatprep.subr.mxu0 0.0
  %2327 = vmatpush2.msra.mxu0 0.0
  %2328 = vmatprep.subr.mxu0 0.0
  %2329 = vmatpush2.msra.mxu0 0.0
  %2330 = vmatprep.subr.mxu0 0.0
  %2331 = vmatpush2.msra.mxu0 0.0
  %2332 = vmatprep.subr.mxu0 0.0
  %2333 = vmatpush2.msra.mxu0 0.0
  %2334 = vmatprep.subr.mxu0 0.0
  %2335 = vmatpush2.msra.mxu0 0.0
  %2336 = vmatprep.subr.mxu0 0.0
  %2337 = vmatpush2.msra.mxu0 0.0
  %2338 = vmatprep.mubr.f32.mxu0 0.0
  %2339 = vmatmul.mubr.f32.gmra.mxu0 %v2272
  %v2340 = vpop.f32.mrf.mxu0
  %v2341 = vadd.f32 0.0, %v2340
  %v2342 = vpop.f32.mrf.mxu0
  %2343 = vdwg.mxu0
  %v2345 = vsel %vm47, %v2269, 0
  %2347 = vmatprep.subr.mxu0 0.0
  %2348 = vmatpush1.msra.mxu0 0.0
  %2349 = vmatprep.subr.mxu0 0.0
  %2350 = vmatpush1.msra.mxu0 0.0
  %2351 = vmatprep.subr.mxu0 0.0
  %2352 = vmatpush1.msra.mxu0 0.0
  %2353 = vmatprep.subr.mxu0 0.0
  %2354 = vmatpush1.msra.mxu0 0.0
  %2355 = vmatprep.subr.mxu0 0.0
  %2356 = vmatpush1.msra.mxu0 0.0
  %2357 = vmatprep.subr.mxu0 0.0
  %2358 = vmatpush1.msra.mxu0 0.0
  %2359 = vmatprep.subr.mxu0 0.0
  %2360 = vmatpush1.msra.mxu0 0.0
  %2361 = vmatprep.subr.mxu0 0.0
  %2362 = vmatpush1.msra.mxu0 0.0
  %2363 = vmatprep.subr.mxu0 0.0
  %2364 = vmatpush1.msra.mxu0 0.0
  %2365 = vmatprep.subr.mxu0 0.0
  %2366 = vmatpush1.msra.mxu0 0.0
  %2367 = vmatprep.subr.mxu0 0.0
  %2368 = vmatpush1.msra.mxu0 0.0
  %2369 = vmatprep.subr.mxu0 0.0
  %2370 = vmatpush1.msra.mxu0 0.0
  %2371 = vmatprep.subr.mxu0 0.0
  %2372 = vmatpush1.msra.mxu0 %v1653
  %2373 = vmatprep.subr.mxu0 0.0
  %2374 = vmatpush1.msra.mxu0 %v1652
  %2375 = vmatprep.subr.mxu0 0.0
  %2376 = vmatpush1.msra.mxu0 %v1651
  %2377 = vmatprep.subr.mxu0 0.0
  %2378 = vmatpush1.msra.mxu0 %v1650
  %2379 = vmatprep.subr.mxu0 0.0
  %2380 = vmatpush2.msra.mxu0 0.0
  %2381 = vmatprep.subr.mxu0 0.0
  %2382 = vmatpush2.msra.mxu0 0.0
  %2383 = vmatprep.subr.mxu0 0.0
  %2384 = vmatpush2.msra.mxu0 0.0
  %2385 = vmatprep.subr.mxu0 0.0
  %2386 = vmatpush2.msra.mxu0 0.0
  %2387 = vmatprep.subr.mxu0 0.0
  %2388 = vmatpush2.msra.mxu0 0.0
  %2389 = vmatprep.subr.mxu0 0.0
  %2390 = vmatpush2.msra.mxu0 0.0
  %2391 = vmatprep.subr.mxu0 0.0
  %2392 = vmatpush2.msra.mxu0 0.0
  %2393 = vmatprep.subr.mxu0 0.0
  %2394 = vmatpush2.msra.mxu0 0.0
  %2395 = vmatprep.subr.mxu0 0.0
  %2396 = vmatpush2.msra.mxu0 0.0
  %2397 = vmatprep.subr.mxu0 0.0
  %2398 = vmatpush2.msra.mxu0 0.0
  %2399 = vmatprep.subr.mxu0 0.0
  %2400 = vmatpush2.msra.mxu0 0.0
  %2401 = vmatprep.subr.mxu0 0.0
  %2402 = vmatpush2.msra.mxu0 0.0
  %2403 = vmatprep.subr.mxu0 0.0
  %2404 = vmatpush2.msra.mxu0 0.0
  %2405 = vmatprep.subr.mxu0 0.0
  %2406 = vmatpush2.msra.mxu0 0.0
  %2407 = vmatprep.subr.mxu0 0.0
  %2408 = vmatpush2.msra.mxu0 0.0
  %2409 = vmatprep.subr.mxu0 0.0
  %2410 = vmatpush2.msra.mxu0 0.0
  %2411 = vmatprep.mubr.f32.mxu0 0.0
  %2412 = vmatmul.mubr.f32.gmra.mxu0 %v2345
  %v2413 = vpop.f32.mrf.mxu0
  %v2414 = vadd.f32 %v2341, %v2413
  %v2415 = vpop.f32.mrf.mxu0
  %2416 = vdwg.mxu0
  %v2417 = vadd.f32 %v2414, %v1811
  %s2418 = scalar_lea.vmem %s7, 8
  %2419 = vst.msk [vmem:[%s2418] sm:$0x3] %vm1814, %v2417
  %v2420 = vld [vmem:[%s1247] sm:$0x3]
  %v2421 = vld [vmem:[%s647] sm:$0x3]
  %v2423 = vsel %vm47, %v2421, 0
  %2425 = vmatprep.subr.mxu0 0.0
  %2426 = vmatpush1.msra.mxu0 0.0
  %2427 = vmatprep.subr.mxu0 0.0
  %2428 = vmatpush1.msra.mxu0 0.0
  %2429 = vmatprep.subr.mxu0 0.0
  %2430 = vmatpush1.msra.mxu0 0.0
  %2431 = vmatprep.subr.mxu0 0.0
  %2432 = vmatpush1.msra.mxu0 0.0
  %2433 = vmatprep.subr.mxu0 0.0
  %2434 = vmatpush1.msra.mxu0 0.0
  %2435 = vmatprep.subr.mxu0 0.0
  %2436 = vmatpush1.msra.mxu0 0.0
  %2437 = vmatprep.subr.mxu0 0.0
  %2438 = vmatpush1.msra.mxu0 0.0
  %2439 = vmatprep.subr.mxu0 0.0
  %2440 = vmatpush1.msra.mxu0 0.0
  %2441 = vmatprep.subr.mxu0 0.0
  %2442 = vmatpush1.msra.mxu0 0.0
  %2443 = vmatprep.subr.mxu0 0.0
  %2444 = vmatpush1.msra.mxu0 0.0
  %2445 = vmatprep.subr.mxu0 0.0
  %2446 = vmatpush1.msra.mxu0 0.0
  %2447 = vmatprep.subr.mxu0 0.0
  %2448 = vmatpush1.msra.mxu0 0.0
  %2449 = vmatprep.subr.mxu0 0.0
  %2450 = vmatpush1.msra.mxu0 %v1657
  %2451 = vmatprep.subr.mxu0 0.0
  %2452 = vmatpush1.msra.mxu0 %v1656
  %2453 = vmatprep.subr.mxu0 0.0
  %2454 = vmatpush1.msra.mxu0 %v1655
  %2455 = vmatprep.subr.mxu0 0.0
  %2456 = vmatpush1.msra.mxu0 %v1654
  %2457 = vmatprep.subr.mxu0 0.0
  %2458 = vmatpush2.msra.mxu0 0.0
  %2459 = vmatprep.subr.mxu0 0.0
  %2460 = vmatpush2.msra.mxu0 0.0
  %2461 = vmatprep.subr.mxu0 0.0
  %2462 = vmatpush2.msra.mxu0 0.0
  %2463 = vmatprep.subr.mxu0 0.0
  %2464 = vmatpush2.msra.mxu0 0.0
  %2465 = vmatprep.subr.mxu0 0.0
  %2466 = vmatpush2.msra.mxu0 0.0
  %2467 = vmatprep.subr.mxu0 0.0
  %2468 = vmatpush2.msra.mxu0 0.0
  %2469 = vmatprep.subr.mxu0 0.0
  %2470 = vmatpush2.msra.mxu0 0.0
  %2471 = vmatprep.subr.mxu0 0.0
  %2472 = vmatpush2.msra.mxu0 0.0
  %2473 = vmatprep.subr.mxu0 0.0
  %2474 = vmatpush2.msra.mxu0 0.0
  %2475 = vmatprep.subr.mxu0 0.0
  %2476 = vmatpush2.msra.mxu0 0.0
  %2477 = vmatprep.subr.mxu0 0.0
  %2478 = vmatpush2.msra.mxu0 0.0
  %2479 = vmatprep.subr.mxu0 0.0
  %2480 = vmatpush2.msra.mxu0 0.0
  %2481 = vmatprep.subr.mxu0 0.0
  %2482 = vmatpush2.msra.mxu0 0.0
  %2483 = vmatprep.subr.mxu0 0.0
  %2484 = vmatpush2.msra.mxu0 0.0
  %2485 = vmatprep.subr.mxu0 0.0
  %2486 = vmatpush2.msra.mxu0 0.0
  %2487 = vmatprep.subr.mxu0 0.0
  %2488 = vmatpush2.msra.mxu0 0.0
  %2489 = vmatprep.mubr.f32.mxu0 0.0
  %2490 = vmatmul.mubr.f32.gmra.mxu0 %v2423
  %v2491 = vpop.f32.mrf.mxu0
  %v2492 = vadd.f32 0.0, %v2491
  %v2493 = vpop.f32.mrf.mxu0
  %2494 = vdwg.mxu0
  %v2496 = vsel %vm47, %v2420, 0
  %2498 = vmatprep.subr.mxu0 0.0
  %2499 = vmatpush1.msra.mxu0 0.0
  %2500 = vmatprep.subr.mxu0 0.0
  %2501 = vmatpush1.msra.mxu0 0.0
  %2502 = vmatprep.subr.mxu0 0.0
  %2503 = vmatpush1.msra.mxu0 0.0
  %2504 = vmatprep.subr.mxu0 0.0
  %2505 = vmatpush1.msra.mxu0 0.0
  %2506 = vmatprep.subr.mxu0 0.0
  %2507 = vmatpush1.msra.mxu0 0.0
  %2508 = vmatprep.subr.mxu0 0.0
  %2509 = vmatpush1.msra.mxu0 0.0
  %2510 = vmatprep.subr.mxu0 0.0
  %2511 = vmatpush1.msra.mxu0 0.0
  %2512 = vmatprep.subr.mxu0 0.0
  %2513 = vmatpush1.msra.mxu0 0.0
  %2514 = vmatprep.subr.mxu0 0.0
  %2515 = vmatpush1.msra.mxu0 0.0
  %2516 = vmatprep.subr.mxu0 0.0
  %2517 = vmatpush1.msra.mxu0 0.0
  %2518 = vmatprep.subr.mxu0 0.0
  %2519 = vmatpush1.msra.mxu0 0.0
  %2520 = vmatprep.subr.mxu0 0.0
  %2521 = vmatpush1.msra.mxu0 0.0
  %2522 = vmatprep.subr.mxu0 0.0
  %2523 = vmatpush1.msra.mxu0 %v1653
  %2524 = vmatprep.subr.mxu0 0.0
  %2525 = vmatpush1.msra.mxu0 %v1652
  %2526 = vmatprep.subr.mxu0 0.0
  %2527 = vmatpush1.msra.mxu0 %v1651
  %2528 = vmatprep.subr.mxu0 0.0
  %2529 = vmatpush1.msra.mxu0 %v1650
  %2530 = vmatprep.subr.mxu0 0.0
  %2531 = vmatpush2.msra.mxu0 0.0
  %2532 = vmatprep.subr.mxu0 0.0
  %2533 = vmatpush2.msra.mxu0 0.0
  %2534 = vmatprep.subr.mxu0 0.0
  %2535 = vmatpush2.msra.mxu0 0.0
  %2536 = vmatprep.subr.mxu0 0.0
  %2537 = vmatpush2.msra.mxu0 0.0
  %2538 = vmatprep.subr.mxu0 0.0
  %2539 = vmatpush2.msra.mxu0 0.0
  %2540 = vmatprep.subr.mxu0 0.0
  %2541 = vmatpush2.msra.mxu0 0.0
  %2542 = vmatprep.subr.mxu0 0.0
  %2543 = vmatpush2.msra.mxu0 0.0
  %2544 = vmatprep.subr.mxu0 0.0
  %2545 = vmatpush2.msra.mxu0 0.0
  %2546 = vmatprep.subr.mxu0 0.0
  %2547 = vmatpush2.msra.mxu0 0.0
  %2548 = vmatprep.subr.mxu0 0.0
  %2549 = vmatpush2.msra.mxu0 0.0
  %2550 = vmatprep.subr.mxu0 0.0
  %2551 = vmatpush2.msra.mxu0 0.0
  %2552 = vmatprep.subr.mxu0 0.0
  %2553 = vmatpush2.msra.mxu0 0.0
  %2554 = vmatprep.subr.mxu0 0.0
  %2555 = vmatpush2.msra.mxu0 0.0
  %2556 = vmatprep.subr.mxu0 0.0
  %2557 = vmatpush2.msra.mxu0 0.0
  %2558 = vmatprep.subr.mxu0 0.0
  %2559 = vmatpush2.msra.mxu0 0.0
  %2560 = vmatprep.subr.mxu0 0.0
  %2561 = vmatpush2.msra.mxu0 0.0
  %2562 = vmatprep.mubr.f32.mxu0 0.0
  %2563 = vmatmul.mubr.f32.gmra.mxu0 %v2496
  %v2564 = vpop.f32.mrf.mxu0
  %v2565 = vadd.f32 %v2492, %v2564
  %v2566 = vpop.f32.mrf.mxu0
  %2567 = vdwg.mxu0
  %v2568 = vadd.f32 %v2565, %v1811
  %s2569 = scalar_lea.vmem %s7, 10
  %2570 = vst.msk [vmem:[%s2569] sm:$0x3] %vm1814, %v2568
  %v2571 = vld [vmem:[%s1447] sm:$0x3]
  %v2572 = vld [vmem:[%s445] sm:$0x3]
  %v2574 = vsel %vm47, %v2572, 0
  %2576 = vmatprep.subr.mxu0 0.0
  %2577 = vmatpush1.msra.mxu0 0.0
  %2578 = vmatprep.subr.mxu0 0.0
  %2579 = vmatpush1.msra.mxu0 0.0
  %2580 = vmatprep.subr.mxu0 0.0
  %2581 = vmatpush1.msra.mxu0 0.0
  %2582 = vmatprep.subr.mxu0 0.0
  %2583 = vmatpush1.msra.mxu0 0.0
  %2584 = vmatprep.subr.mxu0 0.0
  %2585 = vmatpush1.msra.mxu0 0.0
  %2586 = vmatprep.subr.mxu0 0.0
  %2587 = vmatpush1.msra.mxu0 0.0
  %2588 = vmatprep.subr.mxu0 0.0
  %2589 = vmatpush1.msra.mxu0 0.0
  %2590 = vmatprep.subr.mxu0 0.0
  %2591 = vmatpush1.msra.mxu0 0.0
  %2592 = vmatprep.subr.mxu0 0.0
  %2593 = vmatpush1.msra.mxu0 0.0
  %2594 = vmatprep.subr.mxu0 0.0
  %2595 = vmatpush1.msra.mxu0 0.0
  %2596 = vmatprep.subr.mxu0 0.0
  %2597 = vmatpush1.msra.mxu0 0.0
  %2598 = vmatprep.subr.mxu0 0.0
  %2599 = vmatpush1.msra.mxu0 0.0
  %2600 = vmatprep.subr.mxu0 0.0
  %2601 = vmatpush1.msra.mxu0 %v1657
  %2602 = vmatprep.subr.mxu0 0.0
  %2603 = vmatpush1.msra.mxu0 %v1656
  %2604 = vmatprep.subr.mxu0 0.0
  %2605 = vmatpush1.msra.mxu0 %v1655
  %2606 = vmatprep.subr.mxu0 0.0
  %2607 = vmatpush1.msra.mxu0 %v1654
  %2608 = vmatprep.subr.mxu0 0.0
  %2609 = vmatpush2.msra.mxu0 0.0
  %2610 = vmatprep.subr.mxu0 0.0
  %2611 = vmatpush2.msra.mxu0 0.0
  %2612 = vmatprep.subr.mxu0 0.0
  %2613 = vmatpush2.msra.mxu0 0.0
  %2614 = vmatprep.subr.mxu0 0.0
  %2615 = vmatpush2.msra.mxu0 0.0
  %2616 = vmatprep.subr.mxu0 0.0
  %2617 = vmatpush2.msra.mxu0 0.0
  %2618 = vmatprep.subr.mxu0 0.0
  %2619 = vmatpush2.msra.mxu0 0.0
  %2620 = vmatprep.subr.mxu0 0.0
  %2621 = vmatpush2.msra.mxu0 0.0
  %2622 = vmatprep.subr.mxu0 0.0
  %2623 = vmatpush2.msra.mxu0 0.0
  %2624 = vmatprep.subr.mxu0 0.0
  %2625 = vmatpush2.msra.mxu0 0.0
  %2626 = vmatprep.subr.mxu0 0.0
  %2627 = vmatpush2.msra.mxu0 0.0
  %2628 = vmatprep.subr.mxu0 0.0
  %2629 = vmatpush2.msra.mxu0 0.0
  %2630 = vmatprep.subr.mxu0 0.0
  %2631 = vmatpush2.msra.mxu0 0.0
  %2632 = vmatprep.subr.mxu0 0.0
  %2633 = vmatpush2.msra.mxu0 0.0
  %2634 = vmatprep.subr.mxu0 0.0
  %2635 = vmatpush2.msra.mxu0 0.0
  %2636 = vmatprep.subr.mxu0 0.0
  %2637 = vmatpush2.msra.mxu0 0.0
  %2638 = vmatprep.subr.mxu0 0.0
  %2639 = vmatpush2.msra.mxu0 0.0
  %2640 = vmatprep.mubr.f32.mxu0 0.0
  %2641 = vmatmul.mubr.f32.gmra.mxu0 %v2574
  %v2642 = vpop.f32.mrf.mxu0
  %v2643 = vadd.f32 0.0, %v2642
  %v2644 = vpop.f32.mrf.mxu0
  %2645 = vdwg.mxu0
  %v2647 = vsel %vm47, %v2571, 0
  %2649 = vmatprep.subr.mxu0 0.0
  %2650 = vmatpush1.msra.mxu0 0.0
  %2651 = vmatprep.subr.mxu0 0.0
  %2652 = vmatpush1.msra.mxu0 0.0
  %2653 = vmatprep.subr.mxu0 0.0
  %2654 = vmatpush1.msra.mxu0 0.0
  %2655 = vmatprep.subr.mxu0 0.0
  %2656 = vmatpush1.msra.mxu0 0.0
  %2657 = vmatprep.subr.mxu0 0.0
  %2658 = vmatpush1.msra.mxu0 0.0
  %2659 = vmatprep.subr.mxu0 0.0
  %2660 = vmatpush1.msra.mxu0 0.0
  %2661 = vmatprep.subr.mxu0 0.0
  %2662 = vmatpush1.msra.mxu0 0.0
  %2663 = vmatprep.subr.mxu0 0.0
  %2664 = vmatpush1.msra.mxu0 0.0
  %2665 = vmatprep.subr.mxu0 0.0
  %2666 = vmatpush1.msra.mxu0 0.0
  %2667 = vmatprep.subr.mxu0 0.0
  %2668 = vmatpush1.msra.mxu0 0.0
  %2669 = vmatprep.subr.mxu0 0.0
  %2670 = vmatpush1.msra.mxu0 0.0
  %2671 = vmatprep.subr.mxu0 0.0
  %2672 = vmatpush1.msra.mxu0 0.0
  %2673 = vmatprep.subr.mxu0 0.0
  %2674 = vmatpush1.msra.mxu0 %v1653
  %2675 = vmatprep.subr.mxu0 0.0
  %2676 = vmatpush1.msra.mxu0 %v1652
  %2677 = vmatprep.subr.mxu0 0.0
  %2678 = vmatpush1.msra.mxu0 %v1651
  %2679 = vmatprep.subr.mxu0 0.0
  %2680 = vmatpush1.msra.mxu0 %v1650
  %2681 = vmatprep.subr.mxu0 0.0
  %2682 = vmatpush2.msra.mxu0 0.0
  %2683 = vmatprep.subr.mxu0 0.0
  %2684 = vmatpush2.msra.mxu0 0.0
  %2685 = vmatprep.subr.mxu0 0.0
  %2686 = vmatpush2.msra.mxu0 0.0
  %2687 = vmatprep.subr.mxu0 0.0
  %2688 = vmatpush2.msra.mxu0 0.0
  %2689 = vmatprep.subr.mxu0 0.0
  %2690 = vmatpush2.msra.mxu0 0.0
  %2691 = vmatprep.subr.mxu0 0.0
  %2692 = vmatpush2.msra.mxu0 0.0
  %2693 = vmatprep.subr.mxu0 0.0
  %2694 = vmatpush2.msra.mxu0 0.0
  %2695 = vmatprep.subr.mxu0 0.0
  %2696 = vmatpush2.msra.mxu0 0.0
  %2697 = vmatprep.subr.mxu0 0.0
  %2698 = vmatpush2.msra.mxu0 0.0
  %2699 = vmatprep.subr.mxu0 0.0
  %2700 = vmatpush2.msra.mxu0 0.0
  %2701 = vmatprep.subr.mxu0 0.0
  %2702 = vmatpush2.msra.mxu0 0.0
  %2703 = vmatprep.subr.mxu0 0.0
  %2704 = vmatpush2.msra.mxu0 0.0
  %2705 = vmatprep.subr.mxu0 0.0
  %2706 = vmatpush2.msra.mxu0 0.0
  %2707 = vmatprep.subr.mxu0 0.0
  %2708 = vmatpush2.msra.mxu0 0.0
  %2709 = vmatprep.subr.mxu0 0.0
  %2710 = vmatpush2.msra.mxu0 0.0
  %2711 = vmatprep.subr.mxu0 0.0
  %2712 = vmatpush2.msra.mxu0 0.0
  %2713 = vmatprep.mubr.f32.mxu0 0.0
  %2714 = vmatmul.mubr.f32.gmra.mxu0 %v2647
  %v2715 = vpop.f32.mrf.mxu0
  %v2716 = vadd.f32 %v2643, %v2715
  %v2717 = vpop.f32.mrf.mxu0
  %2718 = vdwg.mxu0
  %v2719 = vadd.f32 %v2716, %v1811
  %s2720 = scalar_lea.vmem %s7, 12
  %2721 = vst.msk [vmem:[%s2720] sm:$0x3] %vm1814, %v2719
  %v2722 = vld [vmem:[%s1647] sm:$0x3]
  %v2723 = vld [vmem:[%s242] sm:$0x3]
  %v2725 = vsel %vm47, %v2723, 0
  %2727 = vmatprep.subr.mxu0 0.0
  %2728 = vmatpush1.msra.mxu0 0.0
  %2729 = vmatprep.subr.mxu0 0.0
  %2730 = vmatpush1.msra.mxu0 0.0
  %2731 = vmatprep.subr.mxu0 0.0
  %2732 = vmatpush1.msra.mxu0 0.0
  %2733 = vmatprep.subr.mxu0 0.0
  %2734 = vmatpush1.msra.mxu0 0.0
  %2735 = vmatprep.subr.mxu0 0.0
  %2736 = vmatpush1.msra.mxu0 0.0
  %2737 = vmatprep.subr.mxu0 0.0
  %2738 = vmatpush1.msra.mxu0 0.0
  %2739 = vmatprep.subr.mxu0 0.0
  %2740 = vmatpush1.msra.mxu0 0.0
  %2741 = vmatprep.subr.mxu0 0.0
  %2742 = vmatpush1.msra.mxu0 0.0
  %2743 = vmatprep.subr.mxu0 0.0
  %2744 = vmatpush1.msra.mxu0 0.0
  %2745 = vmatprep.subr.mxu0 0.0
  %2746 = vmatpush1.msra.mxu0 0.0
  %2747 = vmatprep.subr.mxu0 0.0
  %2748 = vmatpush1.msra.mxu0 0.0
  %2749 = vmatprep.subr.mxu0 0.0
  %2750 = vmatpush1.msra.mxu0 0.0
  %2751 = vmatprep.subr.mxu0 0.0
  %2752 = vmatpush1.msra.mxu0 %v1657
  %2753 = vmatprep.subr.mxu0 0.0
  %2754 = vmatpush1.msra.mxu0 %v1656
  %2755 = vmatprep.subr.mxu0 0.0
  %2756 = vmatpush1.msra.mxu0 %v1655
  %2757 = vmatprep.subr.mxu0 0.0
  %2758 = vmatpush1.msra.mxu0 %v1654
  %2759 = vmatprep.subr.mxu0 0.0
  %2760 = vmatpush2.msra.mxu0 0.0
  %2761 = vmatprep.subr.mxu0 0.0
  %2762 = vmatpush2.msra.mxu0 0.0
  %2763 = vmatprep.subr.mxu0 0.0
  %2764 = vmatpush2.msra.mxu0 0.0
  %2765 = vmatprep.subr.mxu0 0.0
  %2766 = vmatpush2.msra.mxu0 0.0
  %2767 = vmatprep.subr.mxu0 0.0
  %2768 = vmatpush2.msra.mxu0 0.0
  %2769 = vmatprep.subr.mxu0 0.0
  %2770 = vmatpush2.msra.mxu0 0.0
  %2771 = vmatprep.subr.mxu0 0.0
  %2772 = vmatpush2.msra.mxu0 0.0
  %2773 = vmatprep.subr.mxu0 0.0
  %2774 = vmatpush2.msra.mxu0 0.0
  %2775 = vmatprep.subr.mxu0 0.0
  %2776 = vmatpush2.msra.mxu0 0.0
  %2777 = vmatprep.subr.mxu0 0.0
  %2778 = vmatpush2.msra.mxu0 0.0
  %2779 = vmatprep.subr.mxu0 0.0
  %2780 = vmatpush2.msra.mxu0 0.0
  %2781 = vmatprep.subr.mxu0 0.0
  %2782 = vmatpush2.msra.mxu0 0.0
  %2783 = vmatprep.subr.mxu0 0.0
  %2784 = vmatpush2.msra.mxu0 0.0
  %2785 = vmatprep.subr.mxu0 0.0
  %2786 = vmatpush2.msra.mxu0 0.0
  %2787 = vmatprep.subr.mxu0 0.0
  %2788 = vmatpush2.msra.mxu0 0.0
  %2789 = vmatprep.subr.mxu0 0.0
  %2790 = vmatpush2.msra.mxu0 0.0
  %2791 = vmatprep.mubr.f32.mxu0 0.0
  %2792 = vmatmul.mubr.f32.gmra.mxu0 %v2725
  %v2793 = vpop.f32.mrf.mxu0
  %v2794 = vadd.f32 0.0, %v2793
  %v2795 = vpop.f32.mrf.mxu0
  %2796 = vdwg.mxu0
  %v2798 = vsel %vm47, %v2722, 0
  %2800 = vmatprep.subr.mxu0 0.0
  %2801 = vmatpush1.msra.mxu0 0.0
  %2802 = vmatprep.subr.mxu0 0.0
  %2803 = vmatpush1.msra.mxu0 0.0
  %2804 = vmatprep.subr.mxu0 0.0
  %2805 = vmatpush1.msra.mxu0 0.0
  %2806 = vmatprep.subr.mxu0 0.0
  %2807 = vmatpush1.msra.mxu0 0.0
  %2808 = vmatprep.subr.mxu0 0.0
  %2809 = vmatpush1.msra.mxu0 0.0
  %2810 = vmatprep.subr.mxu0 0.0
  %2811 = vmatpush1.msra.mxu0 0.0
  %2812 = vmatprep.subr.mxu0 0.0
  %2813 = vmatpush1.msra.mxu0 0.0
  %2814 = vmatprep.subr.mxu0 0.0
  %2815 = vmatpush1.msra.mxu0 0.0
  %2816 = vmatprep.subr.mxu0 0.0
  %2817 = vmatpush1.msra.mxu0 0.0
  %2818 = vmatprep.subr.mxu0 0.0
  %2819 = vmatpush1.msra.mxu0 0.0
  %2820 = vmatprep.subr.mxu0 0.0
  %2821 = vmatpush1.msra.mxu0 0.0
  %2822 = vmatprep.subr.mxu0 0.0
  %2823 = vmatpush1.msra.mxu0 0.0
  %2824 = vmatprep.subr.mxu0 0.0
  %2825 = vmatpush1.msra.mxu0 %v1653
  %2826 = vmatprep.subr.mxu0 0.0
  %2827 = vmatpush1.msra.mxu0 %v1652
  %2828 = vmatprep.subr.mxu0 0.0
  %2829 = vmatpush1.msra.mxu0 %v1651
  %2830 = vmatprep.subr.mxu0 0.0
  %2831 = vmatpush1.msra.mxu0 %v1650
  %2832 = vmatprep.subr.mxu0 0.0
  %2833 = vmatpush2.msra.mxu0 0.0
  %2834 = vmatprep.subr.mxu0 0.0
  %2835 = vmatpush2.msra.mxu0 0.0
  %2836 = vmatprep.subr.mxu0 0.0
  %2837 = vmatpush2.msra.mxu0 0.0
  %2838 = vmatprep.subr.mxu0 0.0
  %2839 = vmatpush2.msra.mxu0 0.0
  %2840 = vmatprep.subr.mxu0 0.0
  %2841 = vmatpush2.msra.mxu0 0.0
  %2842 = vmatprep.subr.mxu0 0.0
  %2843 = vmatpush2.msra.mxu0 0.0
  %2844 = vmatprep.subr.mxu0 0.0
  %2845 = vmatpush2.msra.mxu0 0.0
  %2846 = vmatprep.subr.mxu0 0.0
  %2847 = vmatpush2.msra.mxu0 0.0
  %2848 = vmatprep.subr.mxu0 0.0
  %2849 = vmatpush2.msra.mxu0 0.0
  %2850 = vmatprep.subr.mxu0 0.0
  %2851 = vmatpush2.msra.mxu0 0.0
  %2852 = vmatprep.subr.mxu0 0.0
  %2853 = vmatpush2.msra.mxu0 0.0
  %2854 = vmatprep.subr.mxu0 0.0
  %2855 = vmatpush2.msra.mxu0 0.0
  %2856 = vmatprep.subr.mxu0 0.0
  %2857 = vmatpush2.msra.mxu0 0.0
  %2858 = vmatprep.subr.mxu0 0.0
  %2859 = vmatpush2.msra.mxu0 0.0
  %2860 = vmatprep.subr.mxu0 0.0
  %2861 = vmatpush2.msra.mxu0 0.0
  %2862 = vmatprep.subr.mxu0 0.0
  %2863 = vmatpush2.msra.mxu0 0.0
  %2864 = vmatprep.mubr.f32.mxu0 0.0
  %2865 = vmatmul.mubr.f32.gmra.mxu0 %v2798
  %v2866 = vpop.f32.mrf.mxu0
  %v2867 = vadd.f32 %v2794, %v2866
  %v2868 = vpop.f32.mrf.mxu0
  %2869 = vdwg.mxu0
  %v2870 = vadd.f32 %v2867, %v1811
  %s2871 = scalar_lea.vmem %s7, 14
  %2872 = vst.msk [vmem:[%s2871] sm:$0x3] %vm1814, %v2870
  // Predicated region
  $region30: #{spatial_temporal_forward.3} parent=0 // pred_check
    _
  $region31: #{spatial_temporal_forward.3} parent=0 // pred_check_branch
    %2874 = sbr.rel (0) target = $region33
  $region32: #{spatial_temporal_forward.3} parent=0 // pred_region
    _
  $region33: #{spatial_temporal_forward.3} parent=0 // pred_fallthru
    _
  // Predicated region
  $region34: #{spatial_temporal_forward.3} parent=0 // pred_check
    _
  $region35: #{spatial_temporal_forward.3} parent=0 // pred_check_branch
    %2876 = sbr.rel (0) target = $region37
  $region36: #{spatial_temporal_forward.3} parent=0 // pred_region
    _
  $region37: #{spatial_temporal_forward.3} parent=0 // pred_fallthru
    _

</llo_original>
